<compile_context>
chip_gen: v5e
topology: v5e:2x2
jax: 0.10.0
libtpu: 0.0.40
codegen_flags: <defaults>
</compile_context>

<pallas_src>
import numpy as np
import jax
import jax.numpy as jnp
from jax.experimental import pallas as pl
from jax.experimental.pallas import tpu as pltpu


def classify_kernel(x_ref, w_ref, b_ref, lw_ref, lb_ref, o_ref):
    """One image per grid step.

    x_ref  : [HW, C_in]     channels-last, spatially flattened image
    w_ref  : [C_in, C_hid]  1x1 conv weight, BN scale pre-folded, pre-transposed
    b_ref  : [1, C_hid]     folded BN bias (row)
    lw_ref : [C_hid, C2]    classifier weight, pre-transposed
    lb_ref : [1, C2]        classifier bias (row)
    o_ref  : [1, C2]        softmax probabilities for this image
    """
    hw = x_ref.shape[0]

    # 1x1 conv (+ folded BN scale) as one MXU matmul -> [HW, C_hid]
    y = jnp.dot(x_ref[...], w_ref[...], preferred_element_type=jnp.float32)
    y = y + b_ref[...]                           # folded BN bias (row broadcast)
    y = y * (1.0 / (1.0 + jnp.exp(-y)))          # SiLU (exp/recip hit the EUP)

    # AdaptiveAvgPool2d(1): mean over HW as a matmul against a constant 1/HW
    # row -> stays on the MXU, result is a lane-dense [1, C_hid] row.
    pool = jnp.full((1, hw), 1.0 / hw, dtype=jnp.float32)
    pooled = jnp.dot(pool, y, preferred_element_type=jnp.float32)

    # Dropout(p=0.0) is the identity.  Linear: [1, C_hid] @ [C_hid, C2].
    logits = jnp.dot(pooled, lw_ref[...], preferred_element_type=jnp.float32)
    logits = logits + lb_ref[...]

    # softmax over classes (lane axis)
    m = jnp.max(logits, axis=-1, keepdims=True)
    e = jnp.exp(logits - m)
    probs = e / jnp.sum(e, axis=-1, keepdims=True)
    o_ref[...] = probs.astype(o_ref.dtype)


def classify_forward(x, conv_w, bn_gamma, bn_beta, bn_mean, bn_var,
                     lin_w, lin_b, eps=1e-5, compute_dtype=jnp.float32):
    """Eval-mode forward of ultralytics Classify as a Pallas TPU kernel."""
    if isinstance(x, (list, tuple)):             # Classify supports list inputs
        x = jnp.concatenate(x, axis=1)
    N, C_in, H, W = x.shape
    C_hid = conv_w.shape[0]
    C2 = lin_w.shape[0]
    HW = H * W

    # Fold inference BatchNorm into the conv weight (scale) and a bias row.
    scale = bn_gamma / jnp.sqrt(bn_var + eps)                       # [C_hid]
    bias = bn_beta - bn_mean * scale                                # [C_hid]
    w_t = (conv_w.reshape(C_hid, C_in) * scale[:, None]).T          # [C_in, C_hid]
    w_t = w_t.astype(compute_dtype)
    bias_row = bias.reshape(1, C_hid).astype(jnp.float32)
    lw_t = lin_w.T.astype(compute_dtype)                            # [C_hid, C2]
    lb_row = lin_b.reshape(1, C2).astype(jnp.float32)

    # Layout plumbing outside the kernel: channels-last, spatially flattened.
    x_flat = x.reshape(N, C_in, HW).transpose(0, 2, 1)              # [N, HW, C_in]
    x_flat = x_flat.astype(compute_dtype)

    out = pl.pallas_call(
        classify_kernel,
        out_shape=jax.ShapeDtypeStruct((N, 1, C2), jnp.float32),
        grid_spec=pltpu.PrefetchScalarGridSpec(
            num_scalar_prefetch=0,
            grid=(N,),
            in_specs=[
                pl.BlockSpec((pl.Squeezed(), HW, C_in), lambda n: (n, 0, 0)),
                pl.BlockSpec((C_in, C_hid), lambda n: (0, 0)),
                pl.BlockSpec((1, C_hid), lambda n: (0, 0)),
                pl.BlockSpec((C_hid, C2), lambda n: (0, 0)),
                pl.BlockSpec((1, C2), lambda n: (0, 0)),
            ],
            out_specs=pl.BlockSpec((pl.Squeezed(), 1, C2),
                                   lambda n: (n, 0, 0)),
        ),
        compiler_params=pltpu.CompilerParams(
            dimension_semantics=("parallel",)),
    )(x_flat, w_t, bias_row, lw_t, lb_row)
    return out.reshape(N, C2)


def _reference(x, conv_w, bn_gamma, bn_beta, bn_mean, bn_var,
               lin_w, lin_b, eps=1e-5):
    """Pure-JAX reference matching PyTorch Classify.forward (eval mode)."""
    N, C_in, H, W = x.shape
    C_hid = conv_w.shape[0]
    w2 = conv_w.reshape(C_hid, C_in)
    y = jnp.einsum('oc,nchw->nohw', w2, x)                          # 1x1 conv
    scale = bn_gamma / jnp.sqrt(bn_var + eps)
    bias = bn_beta - bn_mean * scale
    y = y * scale[None, :, None, None] + bias[None, :, None, None]  # BN (eval)
    y = y * jax.nn.sigmoid(y)                                       # SiLU
    p = y.mean(axis=(2, 3))                                         # avgpool+flatten
    logits = p @ lin_w.T + lin_b                                    # dropout p=0 = id
    return jax.nn.softmax(logits, axis=1)


if __name__ == "__main__":
    key = jax.random.PRNGKey(0)
    k1, k2, k3, k4, k5, k6, k7 = jax.random.split(key, 7)

    # Small shapes consistent with the module: x(b, c1, H, W) -> (b, c2),
    # with the hard-coded hidden width c_ = 1280 from Classify.
    N, C_in, H, W = 2, 4, 16, 16
    C_hid, C2 = 1280, 32

    x = jax.random.normal(k1, (N, C_in, H, W), dtype=jnp.float32)
    conv_w = jax.random.normal(k2, (C_hid, C_in, 1, 1), jnp.float32) / np.sqrt(C_in)
    bn_gamma = 1.0 + 0.1 * jax.random.normal(k3, (C_hid,), jnp.float32)
    bn_beta = 0.1 * jax.random.normal(k4, (C_hid,), jnp.float32)
    bn_mean = 0.05 * jax.random.normal(k5, (C_hid,), jnp.float32)
    bn_var = jnp.ones((C_hid,), jnp.float32) * 1.2
    lin_w = jax.random.normal(k6, (C2, C_hid), jnp.float32) / np.sqrt(C_hid)
    lin_b = 0.1 * jax.random.normal(k7, (C2,), jnp.float32)

    out = classify_forward(x, conv_w, bn_gamma, bn_beta, bn_mean, bn_var,
                           lin_w, lin_b)
    out = jax.block_until_ready(out)

    ref = _reference(x, conv_w, bn_gamma, bn_beta, bn_mean, bn_var,
                     lin_w, lin_b)
    assert out.shape == (N, C2), out.shape
    np.testing.assert_allclose(np.asarray(out).sum(axis=1),
                               np.ones(N, np.float32), rtol=1e-5, atol=1e-5)
    np.testing.assert_allclose(np.asarray(out), np.asarray(ref),
                               rtol=1e-4, atol=1e-5)
    print("KERNEL_OK")
</pallas_src>

<mosaic_0001>
module attributes {stable_mosaic.version = 11 : i64} {
  func.func @classify_kernel(%arg0: i32, %arg1: memref<1x256x4xf32, #tpu.memory_space<vmem>>, %arg2: memref<4x1280xf32, #tpu.memory_space<vmem>>, %arg3: memref<1x1280xf32, #tpu.memory_space<vmem>>, %arg4: memref<1280x32xf32, #tpu.memory_space<vmem>>, %arg5: memref<1x32xf32, #tpu.memory_space<vmem>>, %arg6: memref<1x1x32xf32, #tpu.memory_space<vmem>>) attributes {dimension_semantics = [#tpu.dimension_semantics<parallel>], iteration_bounds = array<i64: 2>, scalar_prefetch = 0 : i64, scratch_operands = 0 : i64, tpu.core_type = #tpu.core_type<tc>, window_params = [{transform_indices = @transform_0, window_bounds = array<i64: 1, 256, 4>}, {pipeline_mode = #tpu.pipeline_mode<synchronous>, transform_indices = @transform_1, window_bounds = array<i64: 4, 1280>}, {pipeline_mode = #tpu.pipeline_mode<synchronous>, transform_indices = @transform_2, window_bounds = array<i64: 1, 1280>}, {pipeline_mode = #tpu.pipeline_mode<synchronous>, transform_indices = @transform_3, window_bounds = array<i64: 1280, 32>}, {pipeline_mode = #tpu.pipeline_mode<synchronous>, transform_indices = @transform_4, window_bounds = array<i64: 1, 32>}, {transform_indices = @transform_5, window_bounds = array<i64: 1, 1, 32>}]} {
    %c0 = arith.constant 0 : index
    %c0_0 = arith.constant 0 : index
    %c0_1 = arith.constant 0 : index
    %0 = vector.load %arg1[%c0, %c0_0, %c0_1] : memref<1x256x4xf32, #tpu.memory_space<vmem>>, vector<1x256x4xf32>
    %1 = vector.shape_cast %0 : vector<1x256x4xf32> to vector<256x4xf32>
    %c0_2 = arith.constant 0 : index
    %c0_3 = arith.constant 0 : index
    %2 = vector.load %arg2[%c0_2, %c0_3] : memref<4x1280xf32, #tpu.memory_space<vmem>>, vector<4x1280xf32>
    %cst = arith.constant dense<0.000000e+00> : vector<256x1280xf32>
    %3 = tpu.matmul %1, %2, %cst {dimension_numbers = #tpu.dot_dimension_numbers<[1], [0], [0], [1], [0, 0, 1, 1], [], []>} : vector<256x4xf32>, vector<4x1280xf32>, vector<256x1280xf32> -> vector<256x1280xf32>
    %c0_4 = arith.constant 0 : index
    %c0_5 = arith.constant 0 : index
    %4 = vector.load %arg3[%c0_4, %c0_5] : memref<1x1280xf32, #tpu.memory_space<vmem>>, vector<1x1280xf32>
    %5 = vector.broadcast %4 : vector<1x1280xf32> to vector<256x1280xf32>
    %6 = arith.addf %3, %5 : vector<256x1280xf32>
    %cst_6 = arith.constant 0.000000e+00 : f32
    %7 = vector.broadcast %cst_6 : f32 to vector<256x1280xf32>
    %8 = arith.subf %7, %6 : vector<256x1280xf32>
    %9 = math.exp %8 : vector<256x1280xf32>
    %cst_7 = arith.constant 1.000000e+00 : f32
    %10 = vector.broadcast %cst_7 : f32 to vector<256x1280xf32>
    %11 = arith.addf %10, %9 : vector<256x1280xf32>
    %cst_8 = arith.constant 1.000000e+00 : f32
    %12 = vector.broadcast %cst_8 : f32 to vector<256x1280xf32>
    %13 = arith.divf %12, %11 : vector<256x1280xf32>
    %14 = arith.mulf %6, %13 : vector<256x1280xf32>
    %cst_9 = arith.constant 3.906250e-03 : f32
    %15 = vector.broadcast %cst_9 : f32 to vector<1x256xf32>
    %cst_10 = arith.constant dense<0.000000e+00> : vector<1x1280xf32>
    %16 = tpu.matmul %15, %14, %cst_10 {dimension_numbers = #tpu.dot_dimension_numbers<[1], [0], [0], [1], [0, 0, 1, 1], [], []>} : vector<1x256xf32>, vector<256x1280xf32>, vector<1x1280xf32> -> vector<1x1280xf32>
    %c0_11 = arith.constant 0 : index
    %c0_12 = arith.constant 0 : index
    %17 = vector.load %arg4[%c0_11, %c0_12] : memref<1280x32xf32, #tpu.memory_space<vmem>>, vector<1280x32xf32>
    %cst_13 = arith.constant dense<0.000000e+00> : vector<1x32xf32>
    %18 = tpu.matmul %16, %17, %cst_13 {dimension_numbers = #tpu.dot_dimension_numbers<[1], [0], [0], [1], [0, 0, 1, 1], [], []>} : vector<1x1280xf32>, vector<1280x32xf32>, vector<1x32xf32> -> vector<1x32xf32>
    %c0_14 = arith.constant 0 : index
    %c0_15 = arith.constant 0 : index
    %19 = vector.load %arg5[%c0_14, %c0_15] : memref<1x32xf32, #tpu.memory_space<vmem>>, vector<1x32xf32>
    %20 = arith.addf %18, %19 : vector<1x32xf32>
    %cst_16 = arith.constant dense<0xFF800000> : vector<1xf32>
    %21 = vector.multi_reduction <maximumf>, %20, %cst_16 [1] : vector<1x32xf32> to vector<1xf32>
    %22 = vector.shape_cast %21 : vector<1xf32> to vector<1x1xf32>
    %23 = vector.broadcast %22 : vector<1x1xf32> to vector<1x32xf32>
    %24 = arith.subf %20, %23 : vector<1x32xf32>
    %25 = math.exp %24 : vector<1x32xf32>
    %cst_17 = arith.constant dense<0.000000e+00> : vector<1xf32>
    %26 = vector.multi_reduction <add>, %25, %cst_17 [1] : vector<1x32xf32> to vector<1xf32>
    %27 = vector.shape_cast %26 : vector<1xf32> to vector<1x1xf32>
    %28 = vector.broadcast %27 : vector<1x1xf32> to vector<1x32xf32>
    %29 = arith.divf %25, %28 : vector<1x32xf32>
    %c0_18 = arith.constant 0 : index
    %c0_19 = arith.constant 0 : index
    %c0_20 = arith.constant 0 : index
    %30 = vector.load %arg6[%c0_18, %c0_19, %c0_20] : memref<1x1x32xf32, #tpu.memory_space<vmem>>, vector<1x1x32xf32>
    %31 = vector.shape_cast %30 : vector<1x1x32xf32> to vector<1x32xf32>
    %32 = vector.shape_cast %29 : vector<1x32xf32> to vector<1x1x32xf32>
    tpu.vector_store %arg6[%c0_18, %c0_19, %c0_20], %32 {strides = array<i32>} : memref<1x1x32xf32, #tpu.memory_space<vmem>>, vector<1x1x32xf32>,
    return
  }
  func.func @transform_0(%arg0: i32) -> (i32, i32, i32) {
    %c0_i32 = arith.constant 0 : i32
    %c0_i32_0 = arith.constant 0 : i32
    %c0_i32_1 = arith.constant 0 : i32
    return %arg0, %c0_i32, %c0_i32_0 : i32, i32, i32
  }
  func.func @transform_1(%arg0: i32) -> (i32, i32) {
    %c0_i32 = arith.constant 0 : i32
    %c0_i32_0 = arith.constant 0 : i32
    %c0_i32_1 = arith.constant 0 : i32
    return %c0_i32, %c0_i32_0 : i32, i32
  }
  func.func @transform_2(%arg0: i32) -> (i32, i32) {
    %c0_i32 = arith.constant 0 : i32
    %c0_i32_0 = arith.constant 0 : i32
    %c0_i32_1 = arith.constant 0 : i32
    return %c0_i32, %c0_i32_0 : i32, i32
  }
  func.func @transform_3(%arg0: i32) -> (i32, i32) {
    %c0_i32 = arith.constant 0 : i32
    %c0_i32_0 = arith.constant 0 : i32
    %c0_i32_1 = arith.constant 0 : i32
    return %c0_i32, %c0_i32_0 : i32, i32
  }
  func.func @transform_4(%arg0: i32) -> (i32, i32) {
    %c0_i32 = arith.constant 0 : i32
    %c0_i32_0 = arith.constant 0 : i32
    %c0_i32_1 = arith.constant 0 : i32
    return %c0_i32, %c0_i32_0 : i32, i32
  }
  func.func @transform_5(%arg0: i32) -> (i32, i32, i32) {
    %c0_i32 = arith.constant 0 : i32
    %c0_i32_0 = arith.constant 0 : i32
    %c0_i32_1 = arith.constant 0 : i32
    return %arg0, %c0_i32, %c0_i32_0 : i32, i32, i32
  }
}

</mosaic_0001>

<llo_original>
// kernel: tpu_custom_call.1
$region0: #{tpu_custom_call.1}
  #allocation0 [shape = 'u32[]', space=smem, size = 0x4, offset = 0x4, fixed_abs, tag = 'smem constant byte address 0x4 - core index']
  #allocation1 [shape = 'u32[72,128]{1,0:T(1,128)}', space=vmem, size = 0x9000, scoped, tag = 'internal scratch']
  %s0 = inlined_call_operand.vmem [shape: f32[2,256,4], index: 0, kind: input, shape index: {}]
  %s1 = inlined_call_operand.vmem [shape: f32[4,1280], index: 1, kind: input, shape index: {}]
  %s2 = inlined_call_operand.vmem [shape: f32[1,1280], index: 2, kind: input, shape index: {}]
  %s3 = inlined_call_operand.vmem [shape: f32[1280,32], index: 3, kind: input, shape index: {}]
  %s4 = inlined_call_operand.vmem [shape: f32[1,32], index: 4, kind: input, shape index: {}]
  %s5 = inlined_call_operand.hbm [shape: f32[2,1,32], index: 5, kind: output, shape index: {}]
  %s6 = sld [smem:[#allocation0]]
  $region53: #{tpu_custom_call.1} parent=0
    _
  %s8 = ssub.s32 1, %s6
  %s9 = scalar_select 0, %s8, %s6
  $region1: #{tpu_custom_call.1} parent=0
    #allocation2 [shape = 'u8[1024]{0}', space=vmem, size = 0x400, scoped, tag = 'output window, operand 0']
    #allocation3 [shape = 's32[2]{0}', space=sflag, size = 0x8, scoped, tag = 'scoped memory for tpu_custom_call.1']
    %10 = vsyncpa [#allocation3], 0
    %s11 = scalar_lea.sflag [#allocation3], 1
    %12 = vsyncpa %s11, 0
    loop: start=0, step=1, limit=4
    $region2: #{tpu_custom_call.1} parent=1 // loop_pre_header
      _
    $region3: #{tpu_custom_call.1} parent=1 // loop_header
      %s14 = sphi 0, %s18
      %p15 = scmp.ge.s32.totalorder %s14, 4
      %s24 = sphi 0, %s26
      %s27 = sphi 0, %s24
      %s28 = sphi 0, %s27
      %s44 = sphi 0, %s28
      %s48 = sphi 0, %s48
      %s50 = sphi 0, %s48
      %s51 = sphi 0, %s50
      %s65 = sphi 0, %s51
      %s69 = sphi 0, %s69
      %s71 = sphi 0, %s69
      %s72 = sphi 0, %s71
      %s86 = sphi 0, %s72
      %s90 = sphi 0, %s90
      %s92 = sphi 0, %s90
      %s93 = sphi 0, %s92
      %s107 = sphi 0, %s93
      %s111 = sphi 0, %s111
      %s113 = sphi 0, %s111
      %s114 = sphi 0, %s113
      %s128 = sphi 0, %s114
      %s134 = sphi 0, %s136
      %s137 = sphi 0, %s134
      %s138 = sphi 0, %s137
      %s154 = sphi 0, %s138
    $region4: #{tpu_custom_call.1} parent=1 // loop_header_branch
      %17 = sbr.rel (%p15) target = $region8
    $region5: #{tpu_custom_call.1} parent=1 // loop_body
      %s19 = ssub.s32 %s14, 1
      %s20 = ssub.s32 %s14, 2
      %s21 = sadd.s32 %s14, 1
      %s22 = ssub.s32 %s14, %s21
      %p23 = scmp.eq.s32.totalorder %s22, 0
      %s25 = sadd.s32 %s24, 1
      %s26 = scalar_select %p23, %s24, %s25
      %p29 = pneg %p23
      %p30 = scmp.eq.s32.totalorder %s14, 1
      %p31 = por %p29, %p30
      %p32 = scmp.ne.s32.totalorder %s24, %s27
      %p33 = scmp.eq.s32.totalorder %s14, 0
      %p34 = por %p32, %p33
      %p35 = scmp.ne.s32.totalorder %s24, %s27
      %p36 = scmp.eq.s32.totalorder %s19, 1
      %p37 = por %p35, %p36
      %p38 = scmp.ne.s32.totalorder %s27, %s28
      %p39 = scmp.eq.s32.totalorder %s19, 0
      %p40 = por %p38, %p39
      %p41 = scmp.ne.s32.totalorder %s27, %s28
      %p42 = scmp.eq.s32.totalorder %s20, 1
      %p43 = por %p41, %p42
      %p45 = scmp.ne.s32.totalorder %s28, %s44
      %p46 = scmp.eq.s32.totalorder %s20, 0
      %p47 = por %p45, %p46
      %s49 = sadd.s32 %s48, 1
      %p52 = scmp.eq.s32.totalorder %s14, 1
      %p53 = scmp.ne.s32.totalorder %s48, %s50
      %p54 = scmp.eq.s32.totalorder %s14, 0
      %p55 = por %p53, %p54
      %p56 = scmp.ne.s32.totalorder %s48, %s50
      %p57 = scmp.eq.s32.totalorder %s19, 1
      %p58 = por %p56, %p57
      %p59 = scmp.ne.s32.totalorder %s50, %s51
      %p60 = scmp.eq.s32.totalorder %s19, 0
      %p61 = por %p59, %p60
      %p62 = scmp.ne.s32.totalorder %s50, %s51
      %p63 = scmp.eq.s32.totalorder %s20, 1
      %p64 = por %p62, %p63
      %p66 = scmp.ne.s32.totalorder %s51, %s65
      %p67 = scmp.eq.s32.totalorder %s20, 0
      %p68 = por %p66, %p67
      %s70 = sadd.s32 %s69, 1
      %p73 = scmp.eq.s32.totalorder %s14, 1
      %p74 = scmp.ne.s32.totalorder %s69, %s71
      %p75 = scmp.eq.s32.totalorder %s14, 0
      %p76 = por %p74, %p75
      %p77 = scmp.ne.s32.totalorder %s69, %s71
      %p78 = scmp.eq.s32.totalorder %s19, 1
      %p79 = por %p77, %p78
      %p80 = scmp.ne.s32.totalorder %s71, %s72
      %p81 = scmp.eq.s32.totalorder %s19, 0
      %p82 = por %p80, %p81
      %p83 = scmp.ne.s32.totalorder %s71, %s72
      %p84 = scmp.eq.s32.totalorder %s20, 1
      %p85 = por %p83, %p84
      %p87 = scmp.ne.s32.totalorder %s72, %s86
      %p88 = scmp.eq.s32.totalorder %s20, 0
      %p89 = por %p87, %p88
      %s91 = sadd.s32 %s90, 1
      %p94 = scmp.eq.s32.totalorder %s14, 1
      %p95 = scmp.ne.s32.totalorder %s90, %s92
      %p96 = scmp.eq.s32.totalorder %s14, 0
      %p97 = por %p95, %p96
      %p98 = scmp.ne.s32.totalorder %s90, %s92
      %p99 = scmp.eq.s32.totalorder %s19, 1
      %p100 = por %p98, %p99
      %p101 = scmp.ne.s32.totalorder %s92, %s93
      %p102 = scmp.eq.s32.totalorder %s19, 0
      %p103 = por %p101, %p102
      %p104 = scmp.ne.s32.totalorder %s92, %s93
      %p105 = scmp.eq.s32.totalorder %s20, 1
      %p106 = por %p104, %p105
      %p108 = scmp.ne.s32.totalorder %s93, %s107
      %p109 = scmp.eq.s32.totalorder %s20, 0
      %p110 = por %p108, %p109
      %s112 = sadd.s32 %s111, 1
      %p115 = scmp.eq.s32.totalorder %s14, 1
      %p116 = scmp.ne.s32.totalorder %s111, %s113
      %p117 = scmp.eq.s32.totalorder %s14, 0
      %p118 = por %p116, %p117
      %p119 = scmp.ne.s32.totalorder %s111, %s113
      %p120 = scmp.eq.s32.totalorder %s19, 1
      %p121 = por %p119, %p120
      %p122 = scmp.ne.s32.totalorder %s113, %s114
      %p123 = scmp.eq.s32.totalorder %s19, 0
      %p124 = por %p122, %p123
      %p125 = scmp.ne.s32.totalorder %s113, %s114
      %p126 = scmp.eq.s32.totalorder %s20, 1
      %p127 = por %p125, %p126
      %p129 = scmp.ne.s32.totalorder %s114, %s128
      %p130 = scmp.eq.s32.totalorder %s20, 0
      %p131 = por %p129, %p130
      %s132 = ssub.s32 %s14, %s21
      %p133 = scmp.eq.s32.totalorder %s132, 0
      %s135 = sadd.s32 %s134, 1
      %s136 = scalar_select %p133, %s134, %s135
      %p139 = pneg %p133
      %p140 = scmp.eq.s32.totalorder %s14, 1
      %p141 = por %p139, %p140
      %p142 = scmp.ne.s32.totalorder %s134, %s137
      %p143 = scmp.eq.s32.totalorder %s14, 0
      %p144 = por %p142, %p143
      %p145 = scmp.ne.s32.totalorder %s134, %s137
      %p146 = scmp.eq.s32.totalorder %s19, 1
      %p147 = por %p145, %p146
      %p148 = scmp.ne.s32.totalorder %s137, %s138
      %p149 = scmp.eq.s32.totalorder %s19, 0
      %p150 = por %p148, %p149
      %p151 = scmp.ne.s32.totalorder %s137, %s138
      %p152 = scmp.eq.s32.totalorder %s20, 1
      %p153 = por %p151, %p152
      %p155 = scmp.ne.s32.totalorder %s138, %s154
      %p156 = scmp.eq.s32.totalorder %s20, 0
      %p157 = por %p155, %p156
      %p158 = scmp.le.s32.totalorder 1, %s14
      %p159 = scmp.lt.s32.totalorder %s14, 3
      %p160 = pnand %p158, %p159
      %p161 = pneg %p160
      // Predicated region
      $region9: #{tpu_custom_call.1} parent=5 // pred_check
        _
      $region10: #{tpu_custom_call.1} parent=5 // pred_check_branch
        %163 = sbr.rel (%p160) target = $region12
      $region11: #{tpu_custom_call.1} parent=5 // pred_region
        %s164 = ssub.s32 %s14, 1
        // Predicated region
        $region13: #{tpu_custom_call.1} parent=11 // pred_check
          %p165 = pneg %p61
        $region14: #{tpu_custom_call.1} parent=11 // pred_check_branch
          %167 = sbr.rel (%p165) target = $region16
        $region15: #{tpu_custom_call.1} parent=11 // pred_region
          _
        $region16: #{tpu_custom_call.1} parent=11 // pred_fallthru
          _
        // Predicated region
        $region17: #{tpu_custom_call.1} parent=11 // pred_check
          %p168 = pneg %p82
        $region18: #{tpu_custom_call.1} parent=11 // pred_check_branch
          %170 = sbr.rel (%p168) target = $region20
        $region19: #{tpu_custom_call.1} parent=11 // pred_region
          _
        $region20: #{tpu_custom_call.1} parent=11 // pred_fallthru
          _
        // Predicated region
        $region21: #{tpu_custom_call.1} parent=11 // pred_check
          %p171 = pneg %p103
        $region22: #{tpu_custom_call.1} parent=11 // pred_check_branch
          %173 = sbr.rel (%p171) target = $region24
        $region23: #{tpu_custom_call.1} parent=11 // pred_region
          _
        $region24: #{tpu_custom_call.1} parent=11 // pred_fallthru
          _
        // Predicated region
        $region25: #{tpu_custom_call.1} parent=11 // pred_check
          %p174 = pneg %p124
        $region26: #{tpu_custom_call.1} parent=11 // pred_check_branch
          %176 = sbr.rel (%p174) target = $region28
        $region27: #{tpu_custom_call.1} parent=11 // pred_region
          _
        $region28: #{tpu_custom_call.1} parent=11 // pred_fallthru
          _
      $region12: #{tpu_custom_call.1} parent=5 // pred_fallthru
        _
      %p177 = scmp.lt.s32.totalorder %s14, 2
      // Predicated region
      $region29: #{tpu_custom_call.1} parent=5 // pred_check
        %p178 = pneg %p177
      $region30: #{tpu_custom_call.1} parent=5 // pred_check_branch
        %180 = sbr.rel (%p178) target = $region32
      $region31: #{tpu_custom_call.1} parent=5 // pred_region
        // Predicated region
        $region33: #{tpu_custom_call.1} parent=31 // pred_check
          %p181 = pneg %p34
        $region34: #{tpu_custom_call.1} parent=31 // pred_check_branch
          %183 = sbr.rel (%p181) target = $region36
        $region35: #{tpu_custom_call.1} parent=31 // pred_region
          %p184 = scmp.lt.s32.totalorder %s14, 1
          %s185 = scalar_select %p184, %s14, 1
          %s186 = smul.addr %s185, 32
          %s187 = smul.addr %s186, 8
          %s188 = scalar_lea.vmem %s0, %s187
        $region36: #{tpu_custom_call.1} parent=31 // pred_fallthru
          _
      $region32: #{tpu_custom_call.1} parent=5 // pred_fallthru
        _
      %p189 = scmp.le.s32.totalorder 1, %s14
      %p190 = scmp.lt.s32.totalorder %s14, 3
      %p191 = pnand %p189, %p190
      %p192 = pneg %p191
      // Predicated region
      $region37: #{tpu_custom_call.1} parent=5 // pred_check
        _
      $region38: #{tpu_custom_call.1} parent=5 // pred_check_branch
        %194 = sbr.rel (%p191) target = $region40
      $region39: #{tpu_custom_call.1} parent=5 // pred_region
        %s195 = ssub.s32 %s14, 1
        %p196 = scmp.lt.s32.totalorder %s19, 1
        %s197 = scalar_select %p196, %s19, 1
        %s198 = smul.addr %s197, 32
        %s199 = smul.addr %s198, 8
        %s200 = scalar_lea.vmem %s0, %s199
        %p201 = pneg %p40
        %p202 = pneg %p37
        %p203 = pneg %p61
        %p204 = pneg %p58
        %p205 = pneg %p82
        %p206 = pneg %p79
        %p207 = pneg %p103
        %p208 = pneg %p100
        %p209 = pneg %p124
        %p210 = pneg %p121
        %p211 = pneg %p150
        %p212 = pneg %p147
        %s213 = sand.u32 %s137, 1
        %s214 = scalar_lea.sflag [#allocation3], %s213
        %s215 = sand.u32 %s137, 1
        %s216 = scalar_lea.vmem [#allocation2], %s215
        %p217 = scmp.lt.s32.totalorder %s19, 1
        %s218 = scalar_select %p217, %s19, 1
        %s219 = smul.addr %s218, 32
        %s220 = smul.addr %s219, 8
        %s221 = scalar_lea.vmem %s0, %s220
        %v222 = vld [vmem:[%s221] sm:$0xff]
        %v223 = vld [vmem:[%s221 + $0x8] sm:$0xff]
        %v224 = vld [vmem:[%s221 + $0x10] sm:$0xff]
        %v225 = vld [vmem:[%s221 + $0x18] sm:$0xff]
        %v226 = vld [vmem:[%s221 + $0x20] sm:$0xff]
        %v227 = vld [vmem:[%s221 + $0x28] sm:$0xff]
        %v228 = vld [vmem:[%s221 + $0x30] sm:$0xff]
        %v229 = vld [vmem:[%s221 + $0x38] sm:$0xff]
        %v230 = vld [vmem:[%s221 + $0x40] sm:$0xff]
        %v231 = vld [vmem:[%s221 + $0x48] sm:$0xff]
        %v232 = vld [vmem:[%s221 + $0x50] sm:$0xff]
        %v233 = vld [vmem:[%s221 + $0x58] sm:$0xff]
        %v234 = vld [vmem:[%s221 + $0x60] sm:$0xff]
        %v235 = vld [vmem:[%s221 + $0x68] sm:$0xff]
        %v236 = vld [vmem:[%s221 + $0x70] sm:$0xff]
        %v237 = vld [vmem:[%s221 + $0x78] sm:$0xff]
        %v238 = vld [vmem:[%s221 + $0x80] sm:$0xff]
        %v239 = vld [vmem:[%s221 + $0x88] sm:$0xff]
        %v240 = vld [vmem:[%s221 + $0x90] sm:$0xff]
        %v241 = vld [vmem:[%s221 + $0x98] sm:$0xff]
        %v242 = vld [vmem:[%s221 + $0xa0] sm:$0xff]
        %v243 = vld [vmem:[%s221 + $0xa8] sm:$0xff]
        %v244 = vld [vmem:[%s221 + $0xb0] sm:$0xff]
        %v245 = vld [vmem:[%s221 + $0xb8] sm:$0xff]
        %v246 = vld [vmem:[%s221 + $0xc0] sm:$0xff]
        %v247 = vld [vmem:[%s221 + $0xc8] sm:$0xff]
        %v248 = vld [vmem:[%s221 + $0xd0] sm:$0xff]
        %v249 = vld [vmem:[%s221 + $0xd8] sm:$0xff]
        %v250 = vld [vmem:[%s221 + $0xe0] sm:$0xff]
        %v251 = vld [vmem:[%s221 + $0xe8] sm:$0xff]
        %v252 = vld [vmem:[%s221 + $0xf0] sm:$0xff]
        %v253 = vld [vmem:[%s221 + $0xf8] sm:$0xff]
        %v254 = vld [vmem:[%s1] sm:$0xff]
        %v255 = vld [vmem:[%s1 + $0x8] sm:$0xff]
        %v256 = vld [vmem:[%s1 + $0x10] sm:$0xff]
        %v257 = vld [vmem:[%s1 + $0x18] sm:$0xff]
        %v258 = vld [vmem:[%s1 + $0x20] sm:$0xff]
        %v259 = vld [vmem:[%s2] sm:$0xff]
        %v260 = vld [vmem:[%s2 + $0x8] sm:$0x3]
        %v263 = vperm.slane %v259, 0
        %v264 = vperm.slane %v259, 1
        %v265 = vperm.slane %v259, 2
        %v266 = vperm.slane %v259, 3
        %v267 = vperm.slane %v259, 4
        %v268 = vperm.slane %v259, 5
        %v269 = vperm.slane %v259, 6
        %v270 = vperm.slane %v259, 7
        %v271 = vperm.slane %v260, 0
        %v272 = vperm.slane %v260, 1
        %288 = vst [vmem:[#allocation1] ss:$2 sm:$0xff] %v254
        %s289 = scalar_lea.vmem [#allocation1], 16
        %290 = vst [vmem:[%s289] ss:$2 sm:$0xff] %v255
        %s291 = scalar_lea.vmem [#allocation1], 32
        %292 = vst [vmem:[%s291] ss:$2 sm:$0xff] %v256
        %s293 = scalar_lea.vmem [#allocation1], 48
        %294 = vst [vmem:[%s293] ss:$2 sm:$0xff] %v257
        %v295 = vld.sshfl [vmem:[#allocation1] sm:$0xff pattern:$0x75316420]
        %v296 = vld.sshfl [vmem:[#allocation1 + $0x8] sm:$0xff pattern:$0x75316420]
        %v297 = vld.sshfl [vmem:[#allocation1 + $0x10] sm:$0xff pattern:$0x75316420]
        %v298 = vld.sshfl [vmem:[#allocation1 + $0x18] sm:$0xff pattern:$0x75316420]
        %v299 = vld.sshfl [vmem:[#allocation1 + $0x20] sm:$0xff pattern:$0x75316420]
        %v300 = vld.sshfl [vmem:[#allocation1 + $0x28] sm:$0xff pattern:$0x75316420]
        %v301 = vld.sshfl [vmem:[#allocation1 + $0x30] sm:$0xff pattern:$0x75316420]
        %v302 = vld.sshfl [vmem:[#allocation1 + $0x38] sm:$0xff pattern:$0x75316420]
        %303 = vst [vmem:[#allocation1] ss:$2 sm:$0xff] %v258
        %v304 = vld.sshfl [vmem:[#allocation1] sm:$0xff pattern:$0x75316420]
        %v305 = vld.sshfl [vmem:[#allocation1 + $0x8] sm:$0xff pattern:$0x75316420]
        %vm306 = vcmask 31744
        %v308 = vsel %vm306, %v222, 0
        %v311 = vsel %vm306, %v223, 0
        %v314 = vsel %vm306, %v224, 0
        %v317 = vsel %vm306, %v225, 0
        %v320 = vsel %vm306, %v226, 0
        %v323 = vsel %vm306, %v227, 0
        %v326 = vsel %vm306, %v228, 0
        %v329 = vsel %vm306, %v229, 0
        %v332 = vsel %vm306, %v230, 0
        %v335 = vsel %vm306, %v231, 0
        %v338 = vsel %vm306, %v232, 0
        %v341 = vsel %vm306, %v233, 0
        %v344 = vsel %vm306, %v234, 0
        %v347 = vsel %vm306, %v235, 0
        %v350 = vsel %vm306, %v236, 0
        %v353 = vsel %vm306, %v237, 0
        %v356 = vsel %vm306, %v238, 0
        %v359 = vsel %vm306, %v239, 0
        %v362 = vsel %vm306, %v240, 0
        %v365 = vsel %vm306, %v241, 0
        %v368 = vsel %vm306, %v242, 0
        %v371 = vsel %vm306, %v243, 0
        %v374 = vsel %vm306, %v244, 0
        %v377 = vsel %vm306, %v245, 0
        %v380 = vsel %vm306, %v246, 0
        %v383 = vsel %vm306, %v247, 0
        %v386 = vsel %vm306, %v248, 0
        %v389 = vsel %vm306, %v249, 0
        %v392 = vsel %vm306, %v250, 0
        %v395 = vsel %vm306, %v251, 0
        %v398 = vsel %vm306, %v252, 0
        %v401 = vsel %vm306, %v253, 0
        %vm403 = vcmask 1043456
        %v404 = vsel %vm403, %v295, 0
        %v406 = vsel %vm403, %v296, 0
        %v408 = vsel %vm403, %v297, 0
        %v410 = vsel %vm403, %v298, 0
        %v412 = vsel %vm403, %v299, 0
        %v414 = vsel %vm403, %v300, 0
        %v416 = vsel %vm403, %v301, 0
        %v418 = vsel %vm403, %v302, 0
        %v420 = vsel %vm403, %v304, 0
        %v422 = vsel %vm403, %v305, 0
        %424 = vmatpush.msra.mxu0 0.0
        %425 = vmatpush.msra.mxu0 0.0
        %426 = vmatpush.msra.mxu0 0.0
        %427 = vmatpush.msra.mxu0 0.0
        %428 = vmatpush.msra.mxu0 0.0
        %429 = vmatpush.msra.mxu0 0.0
        %430 = vmatpush.msra.mxu0 0.0
        %431 = vmatpush.msra.mxu0 0.0
        %432 = vmatpush.msra.mxu0 0.0
        %433 = vmatpush.msra.mxu0 0.0
        %434 = vmatpush.msra.mxu0 0.0
        %435 = vmatpush.msra.mxu0 0.0
        %436 = vmatpush.msra.mxu0 0.0
        %437 = vmatpush.msra.mxu0 0.0
        %438 = vmatpush.msra.mxu0 0.0
        %439 = vmatpush.msra.mxu0 %v404
        %440 = vmatmul.f32.gmra.mxu0 %v308
        %v441 = vpop.f32.mrf.mxu0
        %v442 = vadd.f32 %v263, %v441
        %443 = vmatmul.f32.gmra.mxu0 %v311
        %v444 = vpop.f32.mrf.mxu0
        %v445 = vadd.f32 %v263, %v444
        %446 = vmatmul.f32.gmra.mxu0 %v314
        %v447 = vpop.f32.mrf.mxu0
        %v448 = vadd.f32 %v263, %v447
        %449 = vmatmul.f32.gmra.mxu0 %v317
        %v450 = vpop.f32.mrf.mxu0
        %v451 = vadd.f32 %v263, %v450
        %452 = vmatmul.f32.gmra.mxu0 %v320
        %v453 = vpop.f32.mrf.mxu0
        %v454 = vadd.f32 %v263, %v453
        %455 = vmatmul.f32.gmra.mxu0 %v323
        %v456 = vpop.f32.mrf.mxu0
        %v457 = vadd.f32 %v263, %v456
        %458 = vmatmul.f32.gmra.mxu0 %v326
        %v459 = vpop.f32.mrf.mxu0
        %v460 = vadd.f32 %v263, %v459
        %461 = vmatmul.f32.gmra.mxu0 %v329
        %v462 = vpop.f32.mrf.mxu0
        %v463 = vadd.f32 %v263, %v462
        %464 = vmatmul.f32.gmra.mxu0 %v332
        %v465 = vpop.f32.mrf.mxu0
        %v466 = vadd.f32 %v263, %v465
        %467 = vmatmul.f32.gmra.mxu0 %v335
        %v468 = vpop.f32.mrf.mxu0
        %v469 = vadd.f32 %v263, %v468
        %470 = vmatmul.f32.gmra.mxu0 %v338
        %v471 = vpop.f32.mrf.mxu0
        %v472 = vadd.f32 %v263, %v471
        %473 = vmatmul.f32.gmra.mxu0 %v341
        %v474 = vpop.f32.mrf.mxu0
        %v475 = vadd.f32 %v263, %v474
        %476 = vmatmul.f32.gmra.mxu0 %v344
        %v477 = vpop.f32.mrf.mxu0
        %v478 = vadd.f32 %v263, %v477
        %479 = vmatmul.f32.gmra.mxu0 %v347
        %v480 = vpop.f32.mrf.mxu0
        %v481 = vadd.f32 %v263, %v480
        %482 = vmatmul.f32.gmra.mxu0 %v350
        %v483 = vpop.f32.mrf.mxu0
        %v484 = vadd.f32 %v263, %v483
        %485 = vmatmul.f32.gmra.mxu0 %v353
        %v486 = vpop.f32.mrf.mxu0
        %v487 = vadd.f32 %v263, %v486
        %488 = vmatmul.f32.gmra.mxu0 %v356
        %v489 = vpop.f32.mrf.mxu0
        %v490 = vadd.f32 %v263, %v489
        %491 = vmatmul.f32.gmra.mxu0 %v359
        %v492 = vpop.f32.mrf.mxu0
        %v493 = vadd.f32 %v263, %v492
        %494 = vmatmul.f32.gmra.mxu0 %v362
        %v495 = vpop.f32.mrf.mxu0
        %v496 = vadd.f32 %v263, %v495
        %497 = vmatmul.f32.gmra.mxu0 %v365
        %v498 = vpop.f32.mrf.mxu0
        %v499 = vadd.f32 %v263, %v498
        %500 = vmatmul.f32.gmra.mxu0 %v368
        %v501 = vpop.f32.mrf.mxu0
        %v502 = vadd.f32 %v263, %v501
        %503 = vmatmul.f32.gmra.mxu0 %v371
        %v504 = vpop.f32.mrf.mxu0
        %v505 = vadd.f32 %v263, %v504
        %506 = vmatmul.f32.gmra.mxu0 %v374
        %v507 = vpop.f32.mrf.mxu0
        %v508 = vadd.f32 %v263, %v507
        %509 = vmatmul.f32.gmra.mxu0 %v377
        %v510 = vpop.f32.mrf.mxu0
        %v511 = vadd.f32 %v263, %v510
        %512 = vmatmul.f32.gmra.mxu0 %v380
        %v513 = vpop.f32.mrf.mxu0
        %v514 = vadd.f32 %v263, %v513
        %515 = vmatmul.f32.gmra.mxu0 %v383
        %v516 = vpop.f32.mrf.mxu0
        %v517 = vadd.f32 %v263, %v516
        %518 = vmatmul.f32.gmra.mxu0 %v386
        %v519 = vpop.f32.mrf.mxu0
        %v520 = vadd.f32 %v263, %v519
        %521 = vmatmul.f32.gmra.mxu0 %v389
        %v522 = vpop.f32.mrf.mxu0
        %v523 = vadd.f32 %v263, %v522
        %524 = vmatmul.f32.gmra.mxu0 %v392
        %v525 = vpop.f32.mrf.mxu0
        %v526 = vadd.f32 %v263, %v525
        %527 = vmatmul.f32.gmra.mxu0 %v395
        %v528 = vpop.f32.mrf.mxu0
        %v529 = vadd.f32 %v263, %v528
        %530 = vmatmul.f32.gmra.mxu0 %v398
        %v531 = vpop.f32.mrf.mxu0
        %v532 = vadd.f32 %v263, %v531
        %533 = vmatmul.f32.gmra.mxu0 %v401
        %v534 = vpop.f32.mrf.mxu0
        %v535 = vadd.f32 %v263, %v534
        %536 = vdwg.mxu0
        %537 = vmatpush.msra.mxu0 0.0
        %538 = vmatpush.msra.mxu0 0.0
        %539 = vmatpush.msra.mxu0 0.0
        %540 = vmatpush.msra.mxu0 0.0
        %541 = vmatpush.msra.mxu0 0.0
        %542 = vmatpush.msra.mxu0 0.0
        %543 = vmatpush.msra.mxu0 0.0
        %544 = vmatpush.msra.mxu0 0.0
        %545 = vmatpush.msra.mxu0 0.0
        %546 = vmatpush.msra.mxu0 0.0
        %547 = vmatpush.msra.mxu0 0.0
        %548 = vmatpush.msra.mxu0 0.0
        %549 = vmatpush.msra.mxu0 0.0
        %550 = vmatpush.msra.mxu0 0.0
        %551 = vmatpush.msra.mxu0 0.0
        %552 = vmatpush.msra.mxu0 %v406
        %553 = vmatmul.f32.gmra.mxu0 %v308
        %v554 = vpop.f32.mrf.mxu0
        %v555 = vadd.f32 %v264, %v554
        %556 = vmatmul.f32.gmra.mxu0 %v311
        %v557 = vpop.f32.mrf.mxu0
        %v558 = vadd.f32 %v264, %v557
        %559 = vmatmul.f32.gmra.mxu0 %v314
        %v560 = vpop.f32.mrf.mxu0
        %v561 = vadd.f32 %v264, %v560
        %562 = vmatmul.f32.gmra.mxu0 %v317
        %v563 = vpop.f32.mrf.mxu0
        %v564 = vadd.f32 %v264, %v563
        %565 = vmatmul.f32.gmra.mxu0 %v320
        %v566 = vpop.f32.mrf.mxu0
        %v567 = vadd.f32 %v264, %v566
        %568 = vmatmul.f32.gmra.mxu0 %v323
        %v569 = vpop.f32.mrf.mxu0
        %v570 = vadd.f32 %v264, %v569
        %571 = vmatmul.f32.gmra.mxu0 %v326
        %v572 = vpop.f32.mrf.mxu0
        %v573 = vadd.f32 %v264, %v572
        %574 = vmatmul.f32.gmra.mxu0 %v329
        %v575 = vpop.f32.mrf.mxu0
        %v576 = vadd.f32 %v264, %v575
        %577 = vmatmul.f32.gmra.mxu0 %v332
        %v578 = vpop.f32.mrf.mxu0
        %v579 = vadd.f32 %v264, %v578
        %580 = vmatmul.f32.gmra.mxu0 %v335
        %v581 = vpop.f32.mrf.mxu0
        %v582 = vadd.f32 %v264, %v581
        %583 = vmatmul.f32.gmra.mxu0 %v338
        %v584 = vpop.f32.mrf.mxu0
        %v585 = vadd.f32 %v264, %v584
        %586 = vmatmul.f32.gmra.mxu0 %v341
        %v587 = vpop.f32.mrf.mxu0
        %v588 = vadd.f32 %v264, %v587
        %589 = vmatmul.f32.gmra.mxu0 %v344
        %v590 = vpop.f32.mrf.mxu0
        %v591 = vadd.f32 %v264, %v590
        %592 = vmatmul.f32.gmra.mxu0 %v347
        %v593 = vpop.f32.mrf.mxu0
        %v594 = vadd.f32 %v264, %v593
        %595 = vmatmul.f32.gmra.mxu0 %v350
        %v596 = vpop.f32.mrf.mxu0
        %v597 = vadd.f32 %v264, %v596
        %598 = vmatmul.f32.gmra.mxu0 %v353
        %v599 = vpop.f32.mrf.mxu0
        %v600 = vadd.f32 %v264, %v599
        %601 = vmatmul.f32.gmra.mxu0 %v356
        %v602 = vpop.f32.mrf.mxu0
        %v603 = vadd.f32 %v264, %v602
        %604 = vmatmul.f32.gmra.mxu0 %v359
        %v605 = vpop.f32.mrf.mxu0
        %v606 = vadd.f32 %v264, %v605
        %607 = vmatmul.f32.gmra.mxu0 %v362
        %v608 = vpop.f32.mrf.mxu0
        %v609 = vadd.f32 %v264, %v608
        %610 = vmatmul.f32.gmra.mxu0 %v365
        %v611 = vpop.f32.mrf.mxu0
        %v612 = vadd.f32 %v264, %v611
        %613 = vmatmul.f32.gmra.mxu0 %v368
        %v614 = vpop.f32.mrf.mxu0
        %v615 = vadd.f32 %v264, %v614
        %616 = vmatmul.f32.gmra.mxu0 %v371
        %v617 = vpop.f32.mrf.mxu0
        %v618 = vadd.f32 %v264, %v617
        %619 = vmatmul.f32.gmra.mxu0 %v374
        %v620 = vpop.f32.mrf.mxu0
        %v621 = vadd.f32 %v264, %v620
        %622 = vmatmul.f32.gmra.mxu0 %v377
        %v623 = vpop.f32.mrf.mxu0
        %v624 = vadd.f32 %v264, %v623
        %625 = vmatmul.f32.gmra.mxu0 %v380
        %v626 = vpop.f32.mrf.mxu0
        %v627 = vadd.f32 %v264, %v626
        %628 = vmatmul.f32.gmra.mxu0 %v383
        %v629 = vpop.f32.mrf.mxu0
        %v630 = vadd.f32 %v264, %v629
        %631 = vmatmul.f32.gmra.mxu0 %v386
        %v632 = vpop.f32.mrf.mxu0
        %v633 = vadd.f32 %v264, %v632
        %634 = vmatmul.f32.gmra.mxu0 %v389
        %v635 = vpop.f32.mrf.mxu0
        %v636 = vadd.f32 %v264, %v635
        %637 = vmatmul.f32.gmra.mxu0 %v392
        %v638 = vpop.f32.mrf.mxu0
        %v639 = vadd.f32 %v264, %v638
        %640 = vmatmul.f32.gmra.mxu0 %v395
        %v641 = vpop.f32.mrf.mxu0
        %v642 = vadd.f32 %v264, %v641
        %643 = vmatmul.f32.gmra.mxu0 %v398
        %v644 = vpop.f32.mrf.mxu0
        %v645 = vadd.f32 %v264, %v644
        %646 = vmatmul.f32.gmra.mxu0 %v401
        %v647 = vpop.f32.mrf.mxu0
        %v648 = vadd.f32 %v264, %v647
        %649 = vdwg.mxu0
        %650 = vmatpush.msra.mxu0 0.0
        %651 = vmatpush.msra.mxu0 0.0
        %652 = vmatpush.msra.mxu0 0.0
        %653 = vmatpush.msra.mxu0 0.0
        %654 = vmatpush.msra.mxu0 0.0
        %655 = vmatpush.msra.mxu0 0.0
        %656 = vmatpush.msra.mxu0 0.0
        %657 = vmatpush.msra.mxu0 0.0
        %658 = vmatpush.msra.mxu0 0.0
        %659 = vmatpush.msra.mxu0 0.0
        %660 = vmatpush.msra.mxu0 0.0
        %661 = vmatpush.msra.mxu0 0.0
        %662 = vmatpush.msra.mxu0 0.0
        %663 = vmatpush.msra.mxu0 0.0
        %664 = vmatpush.msra.mxu0 0.0
        %665 = vmatpush.msra.mxu0 %v408
        %666 = vmatmul.f32.gmra.mxu0 %v308
        %v667 = vpop.f32.mrf.mxu0
        %v668 = vadd.f32 %v265, %v667
        %669 = vmatmul.f32.gmra.mxu0 %v311
        %v670 = vpop.f32.mrf.mxu0
        %v671 = vadd.f32 %v265, %v670
        %672 = vmatmul.f32.gmra.mxu0 %v314
        %v673 = vpop.f32.mrf.mxu0
        %v674 = vadd.f32 %v265, %v673
        %675 = vmatmul.f32.gmra.mxu0 %v317
        %v676 = vpop.f32.mrf.mxu0
        %v677 = vadd.f32 %v265, %v676
        %678 = vmatmul.f32.gmra.mxu0 %v320
        %v679 = vpop.f32.mrf.mxu0
        %v680 = vadd.f32 %v265, %v679
        %681 = vmatmul.f32.gmra.mxu0 %v323
        %v682 = vpop.f32.mrf.mxu0
        %v683 = vadd.f32 %v265, %v682
        %684 = vmatmul.f32.gmra.mxu0 %v326
        %v685 = vpop.f32.mrf.mxu0
        %v686 = vadd.f32 %v265, %v685
        %687 = vmatmul.f32.gmra.mxu0 %v329
        %v688 = vpop.f32.mrf.mxu0
        %v689 = vadd.f32 %v265, %v688
        %690 = vmatmul.f32.gmra.mxu0 %v332
        %v691 = vpop.f32.mrf.mxu0
        %v692 = vadd.f32 %v265, %v691
        %693 = vmatmul.f32.gmra.mxu0 %v335
        %v694 = vpop.f32.mrf.mxu0
        %v695 = vadd.f32 %v265, %v694
        %696 = vmatmul.f32.gmra.mxu0 %v338
        %v697 = vpop.f32.mrf.mxu0
        %v698 = vadd.f32 %v265, %v697
        %699 = vmatmul.f32.gmra.mxu0 %v341
        %v700 = vpop.f32.mrf.mxu0
        %v701 = vadd.f32 %v265, %v700
        %702 = vmatmul.f32.gmra.mxu0 %v344
        %v703 = vpop.f32.mrf.mxu0
        %v704 = vadd.f32 %v265, %v703
        %705 = vmatmul.f32.gmra.mxu0 %v347
        %v706 = vpop.f32.mrf.mxu0
        %v707 = vadd.f32 %v265, %v706
        %708 = vmatmul.f32.gmra.mxu0 %v350
        %v709 = vpop.f32.mrf.mxu0
        %v710 = vadd.f32 %v265, %v709
        %711 = vmatmul.f32.gmra.mxu0 %v353
        %v712 = vpop.f32.mrf.mxu0
        %v713 = vadd.f32 %v265, %v712
        %714 = vmatmul.f32.gmra.mxu0 %v356
        %v715 = vpop.f32.mrf.mxu0
        %v716 = vadd.f32 %v265, %v715
        %717 = vmatmul.f32.gmra.mxu0 %v359
        %v718 = vpop.f32.mrf.mxu0
        %v719 = vadd.f32 %v265, %v718
        %720 = vmatmul.f32.gmra.mxu0 %v362
        %v721 = vpop.f32.mrf.mxu0
        %v722 = vadd.f32 %v265, %v721
        %723 = vmatmul.f32.gmra.mxu0 %v365
        %v724 = vpop.f32.mrf.mxu0
        %v725 = vadd.f32 %v265, %v724
        %726 = vmatmul.f32.gmra.mxu0 %v368
        %v727 = vpop.f32.mrf.mxu0
        %v728 = vadd.f32 %v265, %v727
        %729 = vmatmul.f32.gmra.mxu0 %v371
        %v730 = vpop.f32.mrf.mxu0
        %v731 = vadd.f32 %v265, %v730
        %732 = vmatmul.f32.gmra.mxu0 %v374
        %v733 = vpop.f32.mrf.mxu0
        %v734 = vadd.f32 %v265, %v733
        %735 = vmatmul.f32.gmra.mxu0 %v377
        %v736 = vpop.f32.mrf.mxu0
        %v737 = vadd.f32 %v265, %v736
        %738 = vmatmul.f32.gmra.mxu0 %v380
        %v739 = vpop.f32.mrf.mxu0
        %v740 = vadd.f32 %v265, %v739
        %741 = vmatmul.f32.gmra.mxu0 %v383
        %v742 = vpop.f32.mrf.mxu0
        %v743 = vadd.f32 %v265, %v742
        %744 = vmatmul.f32.gmra.mxu0 %v386
        %v745 = vpop.f32.mrf.mxu0
        %v746 = vadd.f32 %v265, %v745
        %747 = vmatmul.f32.gmra.mxu0 %v389
        %v748 = vpop.f32.mrf.mxu0
        %v749 = vadd.f32 %v265, %v748
        %750 = vmatmul.f32.gmra.mxu0 %v392
        %v751 = vpop.f32.mrf.mxu0
        %v752 = vadd.f32 %v265, %v751
        %753 = vmatmul.f32.gmra.mxu0 %v395
        %v754 = vpop.f32.mrf.mxu0
        %v755 = vadd.f32 %v265, %v754
        %756 = vmatmul.f32.gmra.mxu0 %v398
        %v757 = vpop.f32.mrf.mxu0
        %v758 = vadd.f32 %v265, %v757
        %759 = vmatmul.f32.gmra.mxu0 %v401
        %v760 = vpop.f32.mrf.mxu0
        %v761 = vadd.f32 %v265, %v760
        %762 = vdwg.mxu0
        %763 = vmatpush.msra.mxu0 0.0
        %764 = vmatpush.msra.mxu0 0.0
        %765 = vmatpush.msra.mxu0 0.0
        %766 = vmatpush.msra.mxu0 0.0
        %767 = vmatpush.msra.mxu0 0.0
        %768 = vmatpush.msra.mxu0 0.0
        %769 = vmatpush.msra.mxu0 0.0
        %770 = vmatpush.msra.mxu0 0.0
        %771 = vmatpush.msra.mxu0 0.0
        %772 = vmatpush.msra.mxu0 0.0
        %773 = vmatpush.msra.mxu0 0.0
        %774 = vmatpush.msra.mxu0 0.0
        %775 = vmatpush.msra.mxu0 0.0
        %776 = vmatpush.msra.mxu0 0.0
        %777 = vmatpush.msra.mxu0 0.0
        %778 = vmatpush.msra.mxu0 %v410
        %779 = vmatmul.f32.gmra.mxu0 %v308
        %v780 = vpop.f32.mrf.mxu0
        %v781 = vadd.f32 %v266, %v780
        %782 = vmatmul.f32.gmra.mxu0 %v311
        %v783 = vpop.f32.mrf.mxu0
        %v784 = vadd.f32 %v266, %v783
        %785 = vmatmul.f32.gmra.mxu0 %v314
        %v786 = vpop.f32.mrf.mxu0
        %v787 = vadd.f32 %v266, %v786
        %788 = vmatmul.f32.gmra.mxu0 %v317
        %v789 = vpop.f32.mrf.mxu0
        %v790 = vadd.f32 %v266, %v789
        %791 = vmatmul.f32.gmra.mxu0 %v320
        %v792 = vpop.f32.mrf.mxu0
        %v793 = vadd.f32 %v266, %v792
        %794 = vmatmul.f32.gmra.mxu0 %v323
        %v795 = vpop.f32.mrf.mxu0
        %v796 = vadd.f32 %v266, %v795
        %797 = vmatmul.f32.gmra.mxu0 %v326
        %v798 = vpop.f32.mrf.mxu0
        %v799 = vadd.f32 %v266, %v798
        %800 = vmatmul.f32.gmra.mxu0 %v329
        %v801 = vpop.f32.mrf.mxu0
        %v802 = vadd.f32 %v266, %v801
        %803 = vmatmul.f32.gmra.mxu0 %v332
        %v804 = vpop.f32.mrf.mxu0
        %v805 = vadd.f32 %v266, %v804
        %806 = vmatmul.f32.gmra.mxu0 %v335
        %v807 = vpop.f32.mrf.mxu0
        %v808 = vadd.f32 %v266, %v807
        %809 = vmatmul.f32.gmra.mxu0 %v338
        %v810 = vpop.f32.mrf.mxu0
        %v811 = vadd.f32 %v266, %v810
        %812 = vmatmul.f32.gmra.mxu0 %v341
        %v813 = vpop.f32.mrf.mxu0
        %v814 = vadd.f32 %v266, %v813
        %815 = vmatmul.f32.gmra.mxu0 %v344
        %v816 = vpop.f32.mrf.mxu0
        %v817 = vadd.f32 %v266, %v816
        %818 = vmatmul.f32.gmra.mxu0 %v347
        %v819 = vpop.f32.mrf.mxu0
        %v820 = vadd.f32 %v266, %v819
        %821 = vmatmul.f32.gmra.mxu0 %v350
        %v822 = vpop.f32.mrf.mxu0
        %v823 = vadd.f32 %v266, %v822
        %824 = vmatmul.f32.gmra.mxu0 %v353
        %v825 = vpop.f32.mrf.mxu0
        %v826 = vadd.f32 %v266, %v825
        %827 = vmatmul.f32.gmra.mxu0 %v356
        %v828 = vpop.f32.mrf.mxu0
        %v829 = vadd.f32 %v266, %v828
        %830 = vmatmul.f32.gmra.mxu0 %v359
        %v831 = vpop.f32.mrf.mxu0
        %v832 = vadd.f32 %v266, %v831
        %833 = vmatmul.f32.gmra.mxu0 %v362
        %v834 = vpop.f32.mrf.mxu0
        %v835 = vadd.f32 %v266, %v834
        %836 = vmatmul.f32.gmra.mxu0 %v365
        %v837 = vpop.f32.mrf.mxu0
        %v838 = vadd.f32 %v266, %v837
        %839 = vmatmul.f32.gmra.mxu0 %v368
        %v840 = vpop.f32.mrf.mxu0
        %v841 = vadd.f32 %v266, %v840
        %842 = vmatmul.f32.gmra.mxu0 %v371
        %v843 = vpop.f32.mrf.mxu0
        %v844 = vadd.f32 %v266, %v843
        %845 = vmatmul.f32.gmra.mxu0 %v374
        %v846 = vpop.f32.mrf.mxu0
        %v847 = vadd.f32 %v266, %v846
        %848 = vmatmul.f32.gmra.mxu0 %v377
        %v849 = vpop.f32.mrf.mxu0
        %v850 = vadd.f32 %v266, %v849
        %851 = vmatmul.f32.gmra.mxu0 %v380
        %v852 = vpop.f32.mrf.mxu0
        %v853 = vadd.f32 %v266, %v852
        %854 = vmatmul.f32.gmra.mxu0 %v383
        %v855 = vpop.f32.mrf.mxu0
        %v856 = vadd.f32 %v266, %v855
        %857 = vmatmul.f32.gmra.mxu0 %v386
        %v858 = vpop.f32.mrf.mxu0
        %v859 = vadd.f32 %v266, %v858
        %860 = vmatmul.f32.gmra.mxu0 %v389
        %v861 = vpop.f32.mrf.mxu0
        %v862 = vadd.f32 %v266, %v861
        %863 = vmatmul.f32.gmra.mxu0 %v392
        %v864 = vpop.f32.mrf.mxu0
        %v865 = vadd.f32 %v266, %v864
        %866 = vmatmul.f32.gmra.mxu0 %v395
        %v867 = vpop.f32.mrf.mxu0
        %v868 = vadd.f32 %v266, %v867
        %869 = vmatmul.f32.gmra.mxu0 %v398
        %v870 = vpop.f32.mrf.mxu0
        %v871 = vadd.f32 %v266, %v870
        %872 = vmatmul.f32.gmra.mxu0 %v401
        %v873 = vpop.f32.mrf.mxu0
        %v874 = vadd.f32 %v266, %v873
        %875 = vdwg.mxu0
        %876 = vmatpush.msra.mxu0 0.0
        %877 = vmatpush.msra.mxu0 0.0
        %878 = vmatpush.msra.mxu0 0.0
        %879 = vmatpush.msra.mxu0 0.0
        %880 = vmatpush.msra.mxu0 0.0
        %881 = vmatpush.msra.mxu0 0.0
        %882 = vmatpush.msra.mxu0 0.0
        %883 = vmatpush.msra.mxu0 0.0
        %884 = vmatpush.msra.mxu0 0.0
        %885 = vmatpush.msra.mxu0 0.0
        %886 = vmatpush.msra.mxu0 0.0
        %887 = vmatpush.msra.mxu0 0.0
        %888 = vmatpush.msra.mxu0 0.0
        %889 = vmatpush.msra.mxu0 0.0
        %890 = vmatpush.msra.mxu0 0.0
        %891 = vmatpush.msra.mxu0 %v412
        %892 = vmatmul.f32.gmra.mxu0 %v308
        %v893 = vpop.f32.mrf.mxu0
        %v894 = vadd.f32 %v267, %v893
        %895 = vmatmul.f32.gmra.mxu0 %v311
        %v896 = vpop.f32.mrf.mxu0
        %v897 = vadd.f32 %v267, %v896
        %898 = vmatmul.f32.gmra.mxu0 %v314
        %v899 = vpop.f32.mrf.mxu0
        %v900 = vadd.f32 %v267, %v899
        %901 = vmatmul.f32.gmra.mxu0 %v317
        %v902 = vpop.f32.mrf.mxu0
        %v903 = vadd.f32 %v267, %v902
        %904 = vmatmul.f32.gmra.mxu0 %v320
        %v905 = vpop.f32.mrf.mxu0
        %v906 = vadd.f32 %v267, %v905
        %907 = vmatmul.f32.gmra.mxu0 %v323
        %v908 = vpop.f32.mrf.mxu0
        %v909 = vadd.f32 %v267, %v908
        %910 = vmatmul.f32.gmra.mxu0 %v326
        %v911 = vpop.f32.mrf.mxu0
        %v912 = vadd.f32 %v267, %v911
        %913 = vmatmul.f32.gmra.mxu0 %v329
        %v914 = vpop.f32.mrf.mxu0
        %v915 = vadd.f32 %v267, %v914
        %916 = vmatmul.f32.gmra.mxu0 %v332
        %v917 = vpop.f32.mrf.mxu0
        %v918 = vadd.f32 %v267, %v917
        %919 = vmatmul.f32.gmra.mxu0 %v335
        %v920 = vpop.f32.mrf.mxu0
        %v921 = vadd.f32 %v267, %v920
        %922 = vmatmul.f32.gmra.mxu0 %v338
        %v923 = vpop.f32.mrf.mxu0
        %v924 = vadd.f32 %v267, %v923
        %925 = vmatmul.f32.gmra.mxu0 %v341
        %v926 = vpop.f32.mrf.mxu0
        %v927 = vadd.f32 %v267, %v926
        %928 = vmatmul.f32.gmra.mxu0 %v344
        %v929 = vpop.f32.mrf.mxu0
        %v930 = vadd.f32 %v267, %v929
        %931 = vmatmul.f32.gmra.mxu0 %v347
        %v932 = vpop.f32.mrf.mxu0
        %v933 = vadd.f32 %v267, %v932
        %934 = vmatmul.f32.gmra.mxu0 %v350
        %v935 = vpop.f32.mrf.mxu0
        %v936 = vadd.f32 %v267, %v935
        %937 = vmatmul.f32.gmra.mxu0 %v353
        %v938 = vpop.f32.mrf.mxu0
        %v939 = vadd.f32 %v267, %v938
        %940 = vmatmul.f32.gmra.mxu0 %v356
        %v941 = vpop.f32.mrf.mxu0
        %v942 = vadd.f32 %v267, %v941
        %943 = vmatmul.f32.gmra.mxu0 %v359
        %v944 = vpop.f32.mrf.mxu0
        %v945 = vadd.f32 %v267, %v944
        %946 = vmatmul.f32.gmra.mxu0 %v362
        %v947 = vpop.f32.mrf.mxu0
        %v948 = vadd.f32 %v267, %v947
        %949 = vmatmul.f32.gmra.mxu0 %v365
        %v950 = vpop.f32.mrf.mxu0
        %v951 = vadd.f32 %v267, %v950
        %952 = vmatmul.f32.gmra.mxu0 %v368
        %v953 = vpop.f32.mrf.mxu0
        %v954 = vadd.f32 %v267, %v953
        %955 = vmatmul.f32.gmra.mxu0 %v371
        %v956 = vpop.f32.mrf.mxu0
        %v957 = vadd.f32 %v267, %v956
        %958 = vmatmul.f32.gmra.mxu0 %v374
        %v959 = vpop.f32.mrf.mxu0
        %v960 = vadd.f32 %v267, %v959
        %961 = vmatmul.f32.gmra.mxu0 %v377
        %v962 = vpop.f32.mrf.mxu0
        %v963 = vadd.f32 %v267, %v962
        %964 = vmatmul.f32.gmra.mxu0 %v380
        %v965 = vpop.f32.mrf.mxu0
        %v966 = vadd.f32 %v267, %v965
        %967 = vmatmul.f32.gmra.mxu0 %v383
        %v968 = vpop.f32.mrf.mxu0
        %v969 = vadd.f32 %v267, %v968
        %970 = vmatmul.f32.gmra.mxu0 %v386
        %v971 = vpop.f32.mrf.mxu0
        %v972 = vadd.f32 %v267, %v971
        %973 = vmatmul.f32.gmra.mxu0 %v389
        %v974 = vpop.f32.mrf.mxu0
        %v975 = vadd.f32 %v267, %v974
        %976 = vmatmul.f32.gmra.mxu0 %v392
        %v977 = vpop.f32.mrf.mxu0
        %v978 = vadd.f32 %v267, %v977
        %979 = vmatmul.f32.gmra.mxu0 %v395
        %v980 = vpop.f32.mrf.mxu0
        %v981 = vadd.f32 %v267, %v980
        %982 = vmatmul.f32.gmra.mxu0 %v398
        %v983 = vpop.f32.mrf.mxu0
        %v984 = vadd.f32 %v267, %v983
        %985 = vmatmul.f32.gmra.mxu0 %v401
        %v986 = vpop.f32.mrf.mxu0
        %v987 = vadd.f32 %v267, %v986
        %988 = vdwg.mxu0
        %989 = vmatpush.msra.mxu0 0.0
        %990 = vmatpush.msra.mxu0 0.0
        %991 = vmatpush.msra.mxu0 0.0
        %992 = vmatpush.msra.mxu0 0.0
        %993 = vmatpush.msra.mxu0 0.0
        %994 = vmatpush.msra.mxu0 0.0
        %995 = vmatpush.msra.mxu0 0.0
        %996 = vmatpush.msra.mxu0 0.0
        %997 = vmatpush.msra.mxu0 0.0
        %998 = vmatpush.msra.mxu0 0.0
        %999 = vmatpush.msra.mxu0 0.0
        %1000 = vmatpush.msra.mxu0 0.0
        %1001 = vmatpush.msra.mxu0 0.0
        %1002 = vmatpush.msra.mxu0 0.0
        %1003 = vmatpush.msra.mxu0 0.0
        %1004 = vmatpush.msra.mxu0 %v414
        %1005 = vmatmul.f32.gmra.mxu0 %v308
        %v1006 = vpop.f32.mrf.mxu0
        %v1007 = vadd.f32 %v268, %v1006
        %1008 = vmatmul.f32.gmra.mxu0 %v311
        %v1009 = vpop.f32.mrf.mxu0
        %v1010 = vadd.f32 %v268, %v1009
        %1011 = vmatmul.f32.gmra.mxu0 %v314
        %v1012 = vpop.f32.mrf.mxu0
        %v1013 = vadd.f32 %v268, %v1012
        %1014 = vmatmul.f32.gmra.mxu0 %v317
        %v1015 = vpop.f32.mrf.mxu0
        %v1016 = vadd.f32 %v268, %v1015
        %1017 = vmatmul.f32.gmra.mxu0 %v320
        %v1018 = vpop.f32.mrf.mxu0
        %v1019 = vadd.f32 %v268, %v1018
        %1020 = vmatmul.f32.gmra.mxu0 %v323
        %v1021 = vpop.f32.mrf.mxu0
        %v1022 = vadd.f32 %v268, %v1021
        %1023 = vmatmul.f32.gmra.mxu0 %v326
        %v1024 = vpop.f32.mrf.mxu0
        %v1025 = vadd.f32 %v268, %v1024
        %1026 = vmatmul.f32.gmra.mxu0 %v329
        %v1027 = vpop.f32.mrf.mxu0
        %v1028 = vadd.f32 %v268, %v1027
        %1029 = vmatmul.f32.gmra.mxu0 %v332
        %v1030 = vpop.f32.mrf.mxu0
        %v1031 = vadd.f32 %v268, %v1030
        %1032 = vmatmul.f32.gmra.mxu0 %v335
        %v1033 = vpop.f32.mrf.mxu0
        %v1034 = vadd.f32 %v268, %v1033
        %1035 = vmatmul.f32.gmra.mxu0 %v338
        %v1036 = vpop.f32.mrf.mxu0
        %v1037 = vadd.f32 %v268, %v1036
        %1038 = vmatmul.f32.gmra.mxu0 %v341
        %v1039 = vpop.f32.mrf.mxu0
        %v1040 = vadd.f32 %v268, %v1039
        %1041 = vmatmul.f32.gmra.mxu0 %v344
        %v1042 = vpop.f32.mrf.mxu0
        %v1043 = vadd.f32 %v268, %v1042
        %1044 = vmatmul.f32.gmra.mxu0 %v347
        %v1045 = vpop.f32.mrf.mxu0
        %v1046 = vadd.f32 %v268, %v1045
        %1047 = vmatmul.f32.gmra.mxu0 %v350
        %v1048 = vpop.f32.mrf.mxu0
        %v1049 = vadd.f32 %v268, %v1048
        %1050 = vmatmul.f32.gmra.mxu0 %v353
        %v1051 = vpop.f32.mrf.mxu0
        %v1052 = vadd.f32 %v268, %v1051
        %1053 = vmatmul.f32.gmra.mxu0 %v356
        %v1054 = vpop.f32.mrf.mxu0
        %v1055 = vadd.f32 %v268, %v1054
        %1056 = vmatmul.f32.gmra.mxu0 %v359
        %v1057 = vpop.f32.mrf.mxu0
        %v1058 = vadd.f32 %v268, %v1057
        %1059 = vmatmul.f32.gmra.mxu0 %v362
        %v1060 = vpop.f32.mrf.mxu0
        %v1061 = vadd.f32 %v268, %v1060
        %1062 = vmatmul.f32.gmra.mxu0 %v365
        %v1063 = vpop.f32.mrf.mxu0
        %v1064 = vadd.f32 %v268, %v1063
        %1065 = vmatmul.f32.gmra.mxu0 %v368
        %v1066 = vpop.f32.mrf.mxu0
        %v1067 = vadd.f32 %v268, %v1066
        %1068 = vmatmul.f32.gmra.mxu0 %v371
        %v1069 = vpop.f32.mrf.mxu0
        %v1070 = vadd.f32 %v268, %v1069
        %1071 = vmatmul.f32.gmra.mxu0 %v374
        %v1072 = vpop.f32.mrf.mxu0
        %v1073 = vadd.f32 %v268, %v1072
        %1074 = vmatmul.f32.gmra.mxu0 %v377
        %v1075 = vpop.f32.mrf.mxu0
        %v1076 = vadd.f32 %v268, %v1075
        %1077 = vmatmul.f32.gmra.mxu0 %v380
        %v1078 = vpop.f32.mrf.mxu0
        %v1079 = vadd.f32 %v268, %v1078
        %1080 = vmatmul.f32.gmra.mxu0 %v383
        %v1081 = vpop.f32.mrf.mxu0
        %v1082 = vadd.f32 %v268, %v1081
        %1083 = vmatmul.f32.gmra.mxu0 %v386
        %v1084 = vpop.f32.mrf.mxu0
        %v1085 = vadd.f32 %v268, %v1084
        %1086 = vmatmul.f32.gmra.mxu0 %v389
        %v1087 = vpop.f32.mrf.mxu0
        %v1088 = vadd.f32 %v268, %v1087
        %1089 = vmatmul.f32.gmra.mxu0 %v392
        %v1090 = vpop.f32.mrf.mxu0
        %v1091 = vadd.f32 %v268, %v1090
        %1092 = vmatmul.f32.gmra.mxu0 %v395
        %v1093 = vpop.f32.mrf.mxu0
        %v1094 = vadd.f32 %v268, %v1093
        %1095 = vmatmul.f32.gmra.mxu0 %v398
        %v1096 = vpop.f32.mrf.mxu0
        %v1097 = vadd.f32 %v268, %v1096
        %1098 = vmatmul.f32.gmra.mxu0 %v401
        %v1099 = vpop.f32.mrf.mxu0
        %v1100 = vadd.f32 %v268, %v1099
        %1101 = vdwg.mxu0
        %1102 = vmatpush.msra.mxu0 0.0
        %1103 = vmatpush.msra.mxu0 0.0
        %1104 = vmatpush.msra.mxu0 0.0
        %1105 = vmatpush.msra.mxu0 0.0
        %1106 = vmatpush.msra.mxu0 0.0
        %1107 = vmatpush.msra.mxu0 0.0
        %1108 = vmatpush.msra.mxu0 0.0
        %1109 = vmatpush.msra.mxu0 0.0
        %1110 = vmatpush.msra.mxu0 0.0
        %1111 = vmatpush.msra.mxu0 0.0
        %1112 = vmatpush.msra.mxu0 0.0
        %1113 = vmatpush.msra.mxu0 0.0
        %1114 = vmatpush.msra.mxu0 0.0
        %1115 = vmatpush.msra.mxu0 0.0
        %1116 = vmatpush.msra.mxu0 0.0
        %1117 = vmatpush.msra.mxu0 %v416
        %1118 = vmatmul.f32.gmra.mxu0 %v308
        %v1119 = vpop.f32.mrf.mxu0
        %v1120 = vadd.f32 %v269, %v1119
        %1121 = vmatmul.f32.gmra.mxu0 %v311
        %v1122 = vpop.f32.mrf.mxu0
        %v1123 = vadd.f32 %v269, %v1122
        %1124 = vmatmul.f32.gmra.mxu0 %v314
        %v1125 = vpop.f32.mrf.mxu0
        %v1126 = vadd.f32 %v269, %v1125
        %1127 = vmatmul.f32.gmra.mxu0 %v317
        %v1128 = vpop.f32.mrf.mxu0
        %v1129 = vadd.f32 %v269, %v1128
        %1130 = vmatmul.f32.gmra.mxu0 %v320
        %v1131 = vpop.f32.mrf.mxu0
        %v1132 = vadd.f32 %v269, %v1131
        %1133 = vmatmul.f32.gmra.mxu0 %v323
        %v1134 = vpop.f32.mrf.mxu0
        %v1135 = vadd.f32 %v269, %v1134
        %1136 = vmatmul.f32.gmra.mxu0 %v326
        %v1137 = vpop.f32.mrf.mxu0
        %v1138 = vadd.f32 %v269, %v1137
        %1139 = vmatmul.f32.gmra.mxu0 %v329
        %v1140 = vpop.f32.mrf.mxu0
        %v1141 = vadd.f32 %v269, %v1140
        %1142 = vmatmul.f32.gmra.mxu0 %v332
        %v1143 = vpop.f32.mrf.mxu0
        %v1144 = vadd.f32 %v269, %v1143
        %1145 = vmatmul.f32.gmra.mxu0 %v335
        %v1146 = vpop.f32.mrf.mxu0
        %v1147 = vadd.f32 %v269, %v1146
        %1148 = vmatmul.f32.gmra.mxu0 %v338
        %v1149 = vpop.f32.mrf.mxu0
        %v1150 = vadd.f32 %v269, %v1149
        %1151 = vmatmul.f32.gmra.mxu0 %v341
        %v1152 = vpop.f32.mrf.mxu0
        %v1153 = vadd.f32 %v269, %v1152
        %1154 = vmatmul.f32.gmra.mxu0 %v344
        %v1155 = vpop.f32.mrf.mxu0
        %v1156 = vadd.f32 %v269, %v1155
        %1157 = vmatmul.f32.gmra.mxu0 %v347
        %v1158 = vpop.f32.mrf.mxu0
        %v1159 = vadd.f32 %v269, %v1158
        %1160 = vmatmul.f32.gmra.mxu0 %v350
        %v1161 = vpop.f32.mrf.mxu0
        %v1162 = vadd.f32 %v269, %v1161
        %1163 = vmatmul.f32.gmra.mxu0 %v353
        %v1164 = vpop.f32.mrf.mxu0
        %v1165 = vadd.f32 %v269, %v1164
        %1166 = vmatmul.f32.gmra.mxu0 %v356
        %v1167 = vpop.f32.mrf.mxu0
        %v1168 = vadd.f32 %v269, %v1167
        %1169 = vmatmul.f32.gmra.mxu0 %v359
        %v1170 = vpop.f32.mrf.mxu0
        %v1171 = vadd.f32 %v269, %v1170
        %1172 = vmatmul.f32.gmra.mxu0 %v362
        %v1173 = vpop.f32.mrf.mxu0
        %v1174 = vadd.f32 %v269, %v1173
        %1175 = vmatmul.f32.gmra.mxu0 %v365
        %v1176 = vpop.f32.mrf.mxu0
        %v1177 = vadd.f32 %v269, %v1176
        %1178 = vmatmul.f32.gmra.mxu0 %v368
        %v1179 = vpop.f32.mrf.mxu0
        %v1180 = vadd.f32 %v269, %v1179
        %1181 = vmatmul.f32.gmra.mxu0 %v371
        %v1182 = vpop.f32.mrf.mxu0
        %v1183 = vadd.f32 %v269, %v1182
        %1184 = vmatmul.f32.gmra.mxu0 %v374
        %v1185 = vpop.f32.mrf.mxu0
        %v1186 = vadd.f32 %v269, %v1185
        %1187 = vmatmul.f32.gmra.mxu0 %v377
        %v1188 = vpop.f32.mrf.mxu0
        %v1189 = vadd.f32 %v269, %v1188
        %1190 = vmatmul.f32.gmra.mxu0 %v380
        %v1191 = vpop.f32.mrf.mxu0
        %v1192 = vadd.f32 %v269, %v1191
        %1193 = vmatmul.f32.gmra.mxu0 %v383
        %v1194 = vpop.f32.mrf.mxu0
        %v1195 = vadd.f32 %v269, %v1194
        %1196 = vmatmul.f32.gmra.mxu0 %v386
        %v1197 = vpop.f32.mrf.mxu0
        %v1198 = vadd.f32 %v269, %v1197
        %1199 = vmatmul.f32.gmra.mxu0 %v389
        %v1200 = vpop.f32.mrf.mxu0
        %v1201 = vadd.f32 %v269, %v1200
        %1202 = vmatmul.f32.gmra.mxu0 %v392
        %v1203 = vpop.f32.mrf.mxu0
        %v1204 = vadd.f32 %v269, %v1203
        %1205 = vmatmul.f32.gmra.mxu0 %v395
        %v1206 = vpop.f32.mrf.mxu0
        %v1207 = vadd.f32 %v269, %v1206
        %1208 = vmatmul.f32.gmra.mxu0 %v398
        %v1209 = vpop.f32.mrf.mxu0
        %v1210 = vadd.f32 %v269, %v1209
        %1211 = vmatmul.f32.gmra.mxu0 %v401
        %v1212 = vpop.f32.mrf.mxu0
        %v1213 = vadd.f32 %v269, %v1212
        %1214 = vdwg.mxu0
        %1215 = vmatpush.msra.mxu0 0.0
        %1216 = vmatpush.msra.mxu0 0.0
        %1217 = vmatpush.msra.mxu0 0.0
        %1218 = vmatpush.msra.mxu0 0.0
        %1219 = vmatpush.msra.mxu0 0.0
        %1220 = vmatpush.msra.mxu0 0.0
        %1221 = vmatpush.msra.mxu0 0.0
        %1222 = vmatpush.msra.mxu0 0.0
        %1223 = vmatpush.msra.mxu0 0.0
        %1224 = vmatpush.msra.mxu0 0.0
        %1225 = vmatpush.msra.mxu0 0.0
        %1226 = vmatpush.msra.mxu0 0.0
        %1227 = vmatpush.msra.mxu0 0.0
        %1228 = vmatpush.msra.mxu0 0.0
        %1229 = vmatpush.msra.mxu0 0.0
        %1230 = vmatpush.msra.mxu0 %v418
        %1231 = vmatmul.f32.gmra.mxu0 %v308
        %v1232 = vpop.f32.mrf.mxu0
        %v1233 = vadd.f32 %v270, %v1232
        %1234 = vmatmul.f32.gmra.mxu0 %v311
        %v1235 = vpop.f32.mrf.mxu0
        %v1236 = vadd.f32 %v270, %v1235
        %1237 = vmatmul.f32.gmra.mxu0 %v314
        %v1238 = vpop.f32.mrf.mxu0
        %v1239 = vadd.f32 %v270, %v1238
        %1240 = vmatmul.f32.gmra.mxu0 %v317
        %v1241 = vpop.f32.mrf.mxu0
        %v1242 = vadd.f32 %v270, %v1241
        %1243 = vmatmul.f32.gmra.mxu0 %v320
        %v1244 = vpop.f32.mrf.mxu0
        %v1245 = vadd.f32 %v270, %v1244
        %1246 = vmatmul.f32.gmra.mxu0 %v323
        %v1247 = vpop.f32.mrf.mxu0
        %v1248 = vadd.f32 %v270, %v1247
        %1249 = vmatmul.f32.gmra.mxu0 %v326
        %v1250 = vpop.f32.mrf.mxu0
        %v1251 = vadd.f32 %v270, %v1250
        %1252 = vmatmul.f32.gmra.mxu0 %v329
        %v1253 = vpop.f32.mrf.mxu0
        %v1254 = vadd.f32 %v270, %v1253
        %1255 = vmatmul.f32.gmra.mxu0 %v332
        %v1256 = vpop.f32.mrf.mxu0
        %v1257 = vadd.f32 %v270, %v1256
        %1258 = vmatmul.f32.gmra.mxu0 %v335
        %v1259 = vpop.f32.mrf.mxu0
        %v1260 = vadd.f32 %v270, %v1259
        %1261 = vmatmul.f32.gmra.mxu0 %v338
        %v1262 = vpop.f32.mrf.mxu0
        %v1263 = vadd.f32 %v270, %v1262
        %1264 = vmatmul.f32.gmra.mxu0 %v341
        %v1265 = vpop.f32.mrf.mxu0
        %v1266 = vadd.f32 %v270, %v1265
        %1267 = vmatmul.f32.gmra.mxu0 %v344
        %v1268 = vpop.f32.mrf.mxu0
        %v1269 = vadd.f32 %v270, %v1268
        %1270 = vmatmul.f32.gmra.mxu0 %v347
        %v1271 = vpop.f32.mrf.mxu0
        %v1272 = vadd.f32 %v270, %v1271
        %1273 = vmatmul.f32.gmra.mxu0 %v350
        %v1274 = vpop.f32.mrf.mxu0
        %v1275 = vadd.f32 %v270, %v1274
        %1276 = vmatmul.f32.gmra.mxu0 %v353
        %v1277 = vpop.f32.mrf.mxu0
        %v1278 = vadd.f32 %v270, %v1277
        %1279 = vmatmul.f32.gmra.mxu0 %v356
        %v1280 = vpop.f32.mrf.mxu0
        %v1281 = vadd.f32 %v270, %v1280
        %1282 = vmatmul.f32.gmra.mxu0 %v359
        %v1283 = vpop.f32.mrf.mxu0
        %v1284 = vadd.f32 %v270, %v1283
        %1285 = vmatmul.f32.gmra.mxu0 %v362
        %v1286 = vpop.f32.mrf.mxu0
        %v1287 = vadd.f32 %v270, %v1286
        %1288 = vmatmul.f32.gmra.mxu0 %v365
        %v1289 = vpop.f32.mrf.mxu0
        %v1290 = vadd.f32 %v270, %v1289
        %1291 = vmatmul.f32.gmra.mxu0 %v368
        %v1292 = vpop.f32.mrf.mxu0
        %v1293 = vadd.f32 %v270, %v1292
        %1294 = vmatmul.f32.gmra.mxu0 %v371
        %v1295 = vpop.f32.mrf.mxu0
        %v1296 = vadd.f32 %v270, %v1295
        %1297 = vmatmul.f32.gmra.mxu0 %v374
        %v1298 = vpop.f32.mrf.mxu0
        %v1299 = vadd.f32 %v270, %v1298
        %1300 = vmatmul.f32.gmra.mxu0 %v377
        %v1301 = vpop.f32.mrf.mxu0
        %v1302 = vadd.f32 %v270, %v1301
        %1303 = vmatmul.f32.gmra.mxu0 %v380
        %v1304 = vpop.f32.mrf.mxu0
        %v1305 = vadd.f32 %v270, %v1304
        %1306 = vmatmul.f32.gmra.mxu0 %v383
        %v1307 = vpop.f32.mrf.mxu0
        %v1308 = vadd.f32 %v270, %v1307
        %1309 = vmatmul.f32.gmra.mxu0 %v386
        %v1310 = vpop.f32.mrf.mxu0
        %v1311 = vadd.f32 %v270, %v1310
        %1312 = vmatmul.f32.gmra.mxu0 %v389
        %v1313 = vpop.f32.mrf.mxu0
        %v1314 = vadd.f32 %v270, %v1313
        %1315 = vmatmul.f32.gmra.mxu0 %v392
        %v1316 = vpop.f32.mrf.mxu0
        %v1317 = vadd.f32 %v270, %v1316
        %1318 = vmatmul.f32.gmra.mxu0 %v395
        %v1319 = vpop.f32.mrf.mxu0
        %v1320 = vadd.f32 %v270, %v1319
        %1321 = vmatmul.f32.gmra.mxu0 %v398
        %v1322 = vpop.f32.mrf.mxu0
        %v1323 = vadd.f32 %v270, %v1322
        %1324 = vmatmul.f32.gmra.mxu0 %v401
        %v1325 = vpop.f32.mrf.mxu0
        %v1326 = vadd.f32 %v270, %v1325
        %1327 = vdwg.mxu0
        %1328 = vmatpush.msra.mxu0 0.0
        %1329 = vmatpush.msra.mxu0 0.0
        %1330 = vmatpush.msra.mxu0 0.0
        %1331 = vmatpush.msra.mxu0 0.0
        %1332 = vmatpush.msra.mxu0 0.0
        %1333 = vmatpush.msra.mxu0 0.0
        %1334 = vmatpush.msra.mxu0 0.0
        %1335 = vmatpush.msra.mxu0 0.0
        %1336 = vmatpush.msra.mxu0 0.0
        %1337 = vmatpush.msra.mxu0 0.0
        %1338 = vmatpush.msra.mxu0 0.0
        %1339 = vmatpush.msra.mxu0 0.0
        %1340 = vmatpush.msra.mxu0 0.0
        %1341 = vmatpush.msra.mxu0 0.0
        %1342 = vmatpush.msra.mxu0 0.0
        %1343 = vmatpush.msra.mxu0 %v420
        %1344 = vmatmul.f32.gmra.mxu0 %v308
        %v1345 = vpop.f32.mrf.mxu0
        %v1346 = vadd.f32 %v271, %v1345
        %1347 = vmatmul.f32.gmra.mxu0 %v311
        %v1348 = vpop.f32.mrf.mxu0
        %v1349 = vadd.f32 %v271, %v1348
        %1350 = vmatmul.f32.gmra.mxu0 %v314
        %v1351 = vpop.f32.mrf.mxu0
        %v1352 = vadd.f32 %v271, %v1351
        %1353 = vmatmul.f32.gmra.mxu0 %v317
        %v1354 = vpop.f32.mrf.mxu0
        %v1355 = vadd.f32 %v271, %v1354
        %1356 = vmatmul.f32.gmra.mxu0 %v320
        %v1357 = vpop.f32.mrf.mxu0
        %v1358 = vadd.f32 %v271, %v1357
        %1359 = vmatmul.f32.gmra.mxu0 %v323
        %v1360 = vpop.f32.mrf.mxu0
        %v1361 = vadd.f32 %v271, %v1360
        %1362 = vmatmul.f32.gmra.mxu0 %v326
        %v1363 = vpop.f32.mrf.mxu0
        %v1364 = vadd.f32 %v271, %v1363
        %1365 = vmatmul.f32.gmra.mxu0 %v329
        %v1366 = vpop.f32.mrf.mxu0
        %v1367 = vadd.f32 %v271, %v1366
        %1368 = vmatmul.f32.gmra.mxu0 %v332
        %v1369 = vpop.f32.mrf.mxu0
        %v1370 = vadd.f32 %v271, %v1369
        %1371 = vmatmul.f32.gmra.mxu0 %v335
        %v1372 = vpop.f32.mrf.mxu0
        %v1373 = vadd.f32 %v271, %v1372
        %1374 = vmatmul.f32.gmra.mxu0 %v338
        %v1375 = vpop.f32.mrf.mxu0
        %v1376 = vadd.f32 %v271, %v1375
        %1377 = vmatmul.f32.gmra.mxu0 %v341
        %v1378 = vpop.f32.mrf.mxu0
        %v1379 = vadd.f32 %v271, %v1378
        %1380 = vmatmul.f32.gmra.mxu0 %v344
        %v1381 = vpop.f32.mrf.mxu0
        %v1382 = vadd.f32 %v271, %v1381
        %1383 = vmatmul.f32.gmra.mxu0 %v347
        %v1384 = vpop.f32.mrf.mxu0
        %v1385 = vadd.f32 %v271, %v1384
        %1386 = vmatmul.f32.gmra.mxu0 %v350
        %v1387 = vpop.f32.mrf.mxu0
        %v1388 = vadd.f32 %v271, %v1387
        %1389 = vmatmul.f32.gmra.mxu0 %v353
        %v1390 = vpop.f32.mrf.mxu0
        %v1391 = vadd.f32 %v271, %v1390
        %1392 = vmatmul.f32.gmra.mxu0 %v356
        %v1393 = vpop.f32.mrf.mxu0
        %v1394 = vadd.f32 %v271, %v1393
        %1395 = vmatmul.f32.gmra.mxu0 %v359
        %v1396 = vpop.f32.mrf.mxu0
        %v1397 = vadd.f32 %v271, %v1396
        %1398 = vmatmul.f32.gmra.mxu0 %v362
        %v1399 = vpop.f32.mrf.mxu0
        %v1400 = vadd.f32 %v271, %v1399
        %1401 = vmatmul.f32.gmra.mxu0 %v365
        %v1402 = vpop.f32.mrf.mxu0
        %v1403 = vadd.f32 %v271, %v1402
        %1404 = vmatmul.f32.gmra.mxu0 %v368
        %v1405 = vpop.f32.mrf.mxu0
        %v1406 = vadd.f32 %v271, %v1405
        %1407 = vmatmul.f32.gmra.mxu0 %v371
        %v1408 = vpop.f32.mrf.mxu0
        %v1409 = vadd.f32 %v271, %v1408
        %1410 = vmatmul.f32.gmra.mxu0 %v374
        %v1411 = vpop.f32.mrf.mxu0
        %v1412 = vadd.f32 %v271, %v1411
        %1413 = vmatmul.f32.gmra.mxu0 %v377
        %v1414 = vpop.f32.mrf.mxu0
        %v1415 = vadd.f32 %v271, %v1414
        %1416 = vmatmul.f32.gmra.mxu0 %v380
        %v1417 = vpop.f32.mrf.mxu0
        %v1418 = vadd.f32 %v271, %v1417
        %1419 = vmatmul.f32.gmra.mxu0 %v383
        %v1420 = vpop.f32.mrf.mxu0
        %v1421 = vadd.f32 %v271, %v1420
        %1422 = vmatmul.f32.gmra.mxu0 %v386
        %v1423 = vpop.f32.mrf.mxu0
        %v1424 = vadd.f32 %v271, %v1423
        %1425 = vmatmul.f32.gmra.mxu0 %v389
        %v1426 = vpop.f32.mrf.mxu0
        %v1427 = vadd.f32 %v271, %v1426
        %1428 = vmatmul.f32.gmra.mxu0 %v392
        %v1429 = vpop.f32.mrf.mxu0
        %v1430 = vadd.f32 %v271, %v1429
        %1431 = vmatmul.f32.gmra.mxu0 %v395
        %v1432 = vpop.f32.mrf.mxu0
        %v1433 = vadd.f32 %v271, %v1432
        %1434 = vmatmul.f32.gmra.mxu0 %v398
        %v1435 = vpop.f32.mrf.mxu0
        %v1436 = vadd.f32 %v271, %v1435
        %1437 = vmatmul.f32.gmra.mxu0 %v401
        %v1438 = vpop.f32.mrf.mxu0
        %v1439 = vadd.f32 %v271, %v1438
        %1440 = vdwg.mxu0
        %1441 = vmatpush.msra.mxu0 0.0
        %1442 = vmatpush.msra.mxu0 0.0
        %1443 = vmatpush.msra.mxu0 0.0
        %1444 = vmatpush.msra.mxu0 0.0
        %1445 = vmatpush.msra.mxu0 0.0
        %1446 = vmatpush.msra.mxu0 0.0
        %1447 = vmatpush.msra.mxu0 0.0
        %1448 = vmatpush.msra.mxu0 0.0
        %1449 = vmatpush.msra.mxu0 0.0
        %1450 = vmatpush.msra.mxu0 0.0
        %1451 = vmatpush.msra.mxu0 0.0
        %1452 = vmatpush.msra.mxu0 0.0
        %1453 = vmatpush.msra.mxu0 0.0
        %1454 = vmatpush.msra.mxu0 0.0
        %1455 = vmatpush.msra.mxu0 0.0
        %1456 = vmatpush.msra.mxu0 %v422
        %1457 = vmatmul.f32.gmra.mxu0 %v308
        %v1458 = vpop.f32.mrf.mxu0
        %v1459 = vadd.f32 %v272, %v1458
        %1460 = vmatmul.f32.gmra.mxu0 %v311
        %v1461 = vpop.f32.mrf.mxu0
        %v1462 = vadd.f32 %v272, %v1461
        %1463 = vmatmul.f32.gmra.mxu0 %v314
        %v1464 = vpop.f32.mrf.mxu0
        %v1465 = vadd.f32 %v272, %v1464
        %1466 = vmatmul.f32.gmra.mxu0 %v317
        %v1467 = vpop.f32.mrf.mxu0
        %v1468 = vadd.f32 %v272, %v1467
        %1469 = vmatmul.f32.gmra.mxu0 %v320
        %v1470 = vpop.f32.mrf.mxu0
        %v1471 = vadd.f32 %v272, %v1470
        %1472 = vmatmul.f32.gmra.mxu0 %v323
        %v1473 = vpop.f32.mrf.mxu0
        %v1474 = vadd.f32 %v272, %v1473
        %1475 = vmatmul.f32.gmra.mxu0 %v326
        %v1476 = vpop.f32.mrf.mxu0
        %v1477 = vadd.f32 %v272, %v1476
        %1478 = vmatmul.f32.gmra.mxu0 %v329
        %v1479 = vpop.f32.mrf.mxu0
        %v1480 = vadd.f32 %v272, %v1479
        %1481 = vmatmul.f32.gmra.mxu0 %v332
        %v1482 = vpop.f32.mrf.mxu0
        %v1483 = vadd.f32 %v272, %v1482
        %1484 = vmatmul.f32.gmra.mxu0 %v335
        %v1485 = vpop.f32.mrf.mxu0
        %v1486 = vadd.f32 %v272, %v1485
        %1487 = vmatmul.f32.gmra.mxu0 %v338
        %v1488 = vpop.f32.mrf.mxu0
        %v1489 = vadd.f32 %v272, %v1488
        %1490 = vmatmul.f32.gmra.mxu0 %v341
        %v1491 = vpop.f32.mrf.mxu0
        %v1492 = vadd.f32 %v272, %v1491
        %1493 = vmatmul.f32.gmra.mxu0 %v344
        %v1494 = vpop.f32.mrf.mxu0
        %v1495 = vadd.f32 %v272, %v1494
        %1496 = vmatmul.f32.gmra.mxu0 %v347
        %v1497 = vpop.f32.mrf.mxu0
        %v1498 = vadd.f32 %v272, %v1497
        %1499 = vmatmul.f32.gmra.mxu0 %v350
        %v1500 = vpop.f32.mrf.mxu0
        %v1501 = vadd.f32 %v272, %v1500
        %1502 = vmatmul.f32.gmra.mxu0 %v353
        %v1503 = vpop.f32.mrf.mxu0
        %v1504 = vadd.f32 %v272, %v1503
        %1505 = vmatmul.f32.gmra.mxu0 %v356
        %v1506 = vpop.f32.mrf.mxu0
        %v1507 = vadd.f32 %v272, %v1506
        %1508 = vmatmul.f32.gmra.mxu0 %v359
        %v1509 = vpop.f32.mrf.mxu0
        %v1510 = vadd.f32 %v272, %v1509
        %1511 = vmatmul.f32.gmra.mxu0 %v362
        %v1512 = vpop.f32.mrf.mxu0
        %v1513 = vadd.f32 %v272, %v1512
        %1514 = vmatmul.f32.gmra.mxu0 %v365
        %v1515 = vpop.f32.mrf.mxu0
        %v1516 = vadd.f32 %v272, %v1515
        %1517 = vmatmul.f32.gmra.mxu0 %v368
        %v1518 = vpop.f32.mrf.mxu0
        %v1519 = vadd.f32 %v272, %v1518
        %1520 = vmatmul.f32.gmra.mxu0 %v371
        %v1521 = vpop.f32.mrf.mxu0
        %v1522 = vadd.f32 %v272, %v1521
        %1523 = vmatmul.f32.gmra.mxu0 %v374
        %v1524 = vpop.f32.mrf.mxu0
        %v1525 = vadd.f32 %v272, %v1524
        %1526 = vmatmul.f32.gmra.mxu0 %v377
        %v1527 = vpop.f32.mrf.mxu0
        %v1528 = vadd.f32 %v272, %v1527
        %1529 = vmatmul.f32.gmra.mxu0 %v380
        %v1530 = vpop.f32.mrf.mxu0
        %v1531 = vadd.f32 %v272, %v1530
        %1532 = vmatmul.f32.gmra.mxu0 %v383
        %v1533 = vpop.f32.mrf.mxu0
        %v1534 = vadd.f32 %v272, %v1533
        %1535 = vmatmul.f32.gmra.mxu0 %v386
        %v1536 = vpop.f32.mrf.mxu0
        %v1537 = vadd.f32 %v272, %v1536
        %1538 = vmatmul.f32.gmra.mxu0 %v389
        %v1539 = vpop.f32.mrf.mxu0
        %v1540 = vadd.f32 %v272, %v1539
        %1541 = vmatmul.f32.gmra.mxu0 %v392
        %v1542 = vpop.f32.mrf.mxu0
        %v1543 = vadd.f32 %v272, %v1542
        %1544 = vmatmul.f32.gmra.mxu0 %v395
        %v1545 = vpop.f32.mrf.mxu0
        %v1546 = vadd.f32 %v272, %v1545
        %1547 = vmatmul.f32.gmra.mxu0 %v398
        %v1548 = vpop.f32.mrf.mxu0
        %v1549 = vadd.f32 %v272, %v1548
        %1550 = vmatmul.f32.gmra.mxu0 %v401
        %v1551 = vpop.f32.mrf.mxu0
        %v1552 = vadd.f32 %v272, %v1551
        %1553 = vdwg.mxu0
        %v1554 = vsub.f32 0.0, %v442
        %v1555 = vsub.f32 0.0, %v555
        %v1556 = vsub.f32 0.0, %v668
        %v1557 = vsub.f32 0.0, %v781
        %v1558 = vsub.f32 0.0, %v894
        %v1559 = vsub.f32 0.0, %v1007
        %v1560 = vsub.f32 0.0, %v1120
        %v1561 = vsub.f32 0.0, %v1233
        %v1562 = vsub.f32 0.0, %v1346
        %v1563 = vsub.f32 0.0, %v1459
        %v1564 = vsub.f32 0.0, %v445
        %v1565 = vsub.f32 0.0, %v558
        %v1566 = vsub.f32 0.0, %v671
        %v1567 = vsub.f32 0.0, %v784
        %v1568 = vsub.f32 0.0, %v897
        %v1569 = vsub.f32 0.0, %v1010
        %v1570 = vsub.f32 0.0, %v1123
        %v1571 = vsub.f32 0.0, %v1236
        %v1572 = vsub.f32 0.0, %v1349
        %v1573 = vsub.f32 0.0, %v1462
        %v1574 = vsub.f32 0.0, %v448
        %v1575 = vsub.f32 0.0, %v561
        %v1576 = vsub.f32 0.0, %v674
        %v1577 = vsub.f32 0.0, %v787
        %v1578 = vsub.f32 0.0, %v900
        %v1579 = vsub.f32 0.0, %v1013
        %v1580 = vsub.f32 0.0, %v1126
        %v1581 = vsub.f32 0.0, %v1239
        %v1582 = vsub.f32 0.0, %v1352
        %v1583 = vsub.f32 0.0, %v1465
        %v1584 = vsub.f32 0.0, %v451
        %v1585 = vsub.f32 0.0, %v564
        %v1586 = vsub.f32 0.0, %v677
        %v1587 = vsub.f32 0.0, %v790
        %v1588 = vsub.f32 0.0, %v903
        %v1589 = vsub.f32 0.0, %v1016
        %v1590 = vsub.f32 0.0, %v1129
        %v1591 = vsub.f32 0.0, %v1242
        %v1592 = vsub.f32 0.0, %v1355
        %v1593 = vsub.f32 0.0, %v1468
        %v1594 = vsub.f32 0.0, %v454
        %v1595 = vsub.f32 0.0, %v567
        %v1596 = vsub.f32 0.0, %v680
        %v1597 = vsub.f32 0.0, %v793
        %v1598 = vsub.f32 0.0, %v906
        %v1599 = vsub.f32 0.0, %v1019
        %v1600 = vsub.f32 0.0, %v1132
        %v1601 = vsub.f32 0.0, %v1245
        %v1602 = vsub.f32 0.0, %v1358
        %v1603 = vsub.f32 0.0, %v1471
        %v1604 = vsub.f32 0.0, %v457
        %v1605 = vsub.f32 0.0, %v570
        %v1606 = vsub.f32 0.0, %v683
        %v1607 = vsub.f32 0.0, %v796
        %v1608 = vsub.f32 0.0, %v909
        %v1609 = vsub.f32 0.0, %v1022
        %v1610 = vsub.f32 0.0, %v1135
        %v1611 = vsub.f32 0.0, %v1248
        %v1612 = vsub.f32 0.0, %v1361
        %v1613 = vsub.f32 0.0, %v1474
        %v1614 = vsub.f32 0.0, %v460
        %v1615 = vsub.f32 0.0, %v573
        %v1616 = vsub.f32 0.0, %v686
        %v1617 = vsub.f32 0.0, %v799
        %v1618 = vsub.f32 0.0, %v912
        %v1619 = vsub.f32 0.0, %v1025
        %v1620 = vsub.f32 0.0, %v1138
        %v1621 = vsub.f32 0.0, %v1251
        %v1622 = vsub.f32 0.0, %v1364
        %v1623 = vsub.f32 0.0, %v1477
        %v1624 = vsub.f32 0.0, %v463
        %v1625 = vsub.f32 0.0, %v576
        %v1626 = vsub.f32 0.0, %v689
        %v1627 = vsub.f32 0.0, %v802
        %v1628 = vsub.f32 0.0, %v915
        %v1629 = vsub.f32 0.0, %v1028
        %v1630 = vsub.f32 0.0, %v1141
        %v1631 = vsub.f32 0.0, %v1254
        %v1632 = vsub.f32 0.0, %v1367
        %v1633 = vsub.f32 0.0, %v1480
        %v1634 = vsub.f32 0.0, %v466
        %v1635 = vsub.f32 0.0, %v579
        %v1636 = vsub.f32 0.0, %v692
        %v1637 = vsub.f32 0.0, %v805
        %v1638 = vsub.f32 0.0, %v918
        %v1639 = vsub.f32 0.0, %v1031
        %v1640 = vsub.f32 0.0, %v1144
        %v1641 = vsub.f32 0.0, %v1257
        %v1642 = vsub.f32 0.0, %v1370
        %v1643 = vsub.f32 0.0, %v1483
        %v1644 = vsub.f32 0.0, %v469
        %v1645 = vsub.f32 0.0, %v582
        %v1646 = vsub.f32 0.0, %v695
        %v1647 = vsub.f32 0.0, %v808
        %v1648 = vsub.f32 0.0, %v921
        %v1649 = vsub.f32 0.0, %v1034
        %v1650 = vsub.f32 0.0, %v1147
        %v1651 = vsub.f32 0.0, %v1260
        %v1652 = vsub.f32 0.0, %v1373
        %v1653 = vsub.f32 0.0, %v1486
        %v1654 = vsub.f32 0.0, %v472
        %v1655 = vsub.f32 0.0, %v585
        %v1656 = vsub.f32 0.0, %v698
        %v1657 = vsub.f32 0.0, %v811
        %v1658 = vsub.f32 0.0, %v924
        %v1659 = vsub.f32 0.0, %v1037
        %v1660 = vsub.f32 0.0, %v1150
        %v1661 = vsub.f32 0.0, %v1263
        %v1662 = vsub.f32 0.0, %v1376
        %v1663 = vsub.f32 0.0, %v1489
        %v1664 = vsub.f32 0.0, %v475
        %v1665 = vsub.f32 0.0, %v588
        %v1666 = vsub.f32 0.0, %v701
        %v1667 = vsub.f32 0.0, %v814
        %v1668 = vsub.f32 0.0, %v927
        %v1669 = vsub.f32 0.0, %v1040
        %v1670 = vsub.f32 0.0, %v1153
        %v1671 = vsub.f32 0.0, %v1266
        %v1672 = vsub.f32 0.0, %v1379
        %v1673 = vsub.f32 0.0, %v1492
        %v1674 = vsub.f32 0.0, %v478
        %v1675 = vsub.f32 0.0, %v591
        %v1676 = vsub.f32 0.0, %v704
        %v1677 = vsub.f32 0.0, %v817
        %v1678 = vsub.f32 0.0, %v930
        %v1679 = vsub.f32 0.0, %v1043
        %v1680 = vsub.f32 0.0, %v1156
        %v1681 = vsub.f32 0.0, %v1269
        %v1682 = vsub.f32 0.0, %v1382
        %v1683 = vsub.f32 0.0, %v1495
        %v1684 = vsub.f32 0.0, %v481
        %v1685 = vsub.f32 0.0, %v594
        %v1686 = vsub.f32 0.0, %v707
        %v1687 = vsub.f32 0.0, %v820
        %v1688 = vsub.f32 0.0, %v933
        %v1689 = vsub.f32 0.0, %v1046
        %v1690 = vsub.f32 0.0, %v1159
        %v1691 = vsub.f32 0.0, %v1272
        %v1692 = vsub.f32 0.0, %v1385
        %v1693 = vsub.f32 0.0, %v1498
        %v1694 = vsub.f32 0.0, %v484
        %v1695 = vsub.f32 0.0, %v597
        %v1696 = vsub.f32 0.0, %v710
        %v1697 = vsub.f32 0.0, %v823
        %v1698 = vsub.f32 0.0, %v936
        %v1699 = vsub.f32 0.0, %v1049
        %v1700 = vsub.f32 0.0, %v1162
        %v1701 = vsub.f32 0.0, %v1275
        %v1702 = vsub.f32 0.0, %v1388
        %v1703 = vsub.f32 0.0, %v1501
        %v1704 = vsub.f32 0.0, %v487
        %v1705 = vsub.f32 0.0, %v600
        %v1706 = vsub.f32 0.0, %v713
        %v1707 = vsub.f32 0.0, %v826
        %v1708 = vsub.f32 0.0, %v939
        %v1709 = vsub.f32 0.0, %v1052
        %v1710 = vsub.f32 0.0, %v1165
        %v1711 = vsub.f32 0.0, %v1278
        %v1712 = vsub.f32 0.0, %v1391
        %v1713 = vsub.f32 0.0, %v1504
        %v1714 = vsub.f32 0.0, %v490
        %v1715 = vsub.f32 0.0, %v603
        %v1716 = vsub.f32 0.0, %v716
        %v1717 = vsub.f32 0.0, %v829
        %v1718 = vsub.f32 0.0, %v942
        %v1719 = vsub.f32 0.0, %v1055
        %v1720 = vsub.f32 0.0, %v1168
        %v1721 = vsub.f32 0.0, %v1281
        %v1722 = vsub.f32 0.0, %v1394
        %v1723 = vsub.f32 0.0, %v1507
        %v1724 = vsub.f32 0.0, %v493
        %v1725 = vsub.f32 0.0, %v606
        %v1726 = vsub.f32 0.0, %v719
        %v1727 = vsub.f32 0.0, %v832
        %v1728 = vsub.f32 0.0, %v945
        %v1729 = vsub.f32 0.0, %v1058
        %v1730 = vsub.f32 0.0, %v1171
        %v1731 = vsub.f32 0.0, %v1284
        %v1732 = vsub.f32 0.0, %v1397
        %v1733 = vsub.f32 0.0, %v1510
        %v1734 = vsub.f32 0.0, %v496
        %v1735 = vsub.f32 0.0, %v609
        %v1736 = vsub.f32 0.0, %v722
        %v1737 = vsub.f32 0.0, %v835
        %v1738 = vsub.f32 0.0, %v948
        %v1739 = vsub.f32 0.0, %v1061
        %v1740 = vsub.f32 0.0, %v1174
        %v1741 = vsub.f32 0.0, %v1287
        %v1742 = vsub.f32 0.0, %v1400
        %v1743 = vsub.f32 0.0, %v1513
        %v1744 = vsub.f32 0.0, %v499
        %v1745 = vsub.f32 0.0, %v612
        %v1746 = vsub.f32 0.0, %v725
        %v1747 = vsub.f32 0.0, %v838
        %v1748 = vsub.f32 0.0, %v951
        %v1749 = vsub.f32 0.0, %v1064
        %v1750 = vsub.f32 0.0, %v1177
        %v1751 = vsub.f32 0.0, %v1290
        %v1752 = vsub.f32 0.0, %v1403
        %v1753 = vsub.f32 0.0, %v1516
        %v1754 = vsub.f32 0.0, %v502
        %v1755 = vsub.f32 0.0, %v615
        %v1756 = vsub.f32 0.0, %v728
        %v1757 = vsub.f32 0.0, %v841
        %v1758 = vsub.f32 0.0, %v954
        %v1759 = vsub.f32 0.0, %v1067
        %v1760 = vsub.f32 0.0, %v1180
        %v1761 = vsub.f32 0.0, %v1293
        %v1762 = vsub.f32 0.0, %v1406
        %v1763 = vsub.f32 0.0, %v1519
        %v1764 = vsub.f32 0.0, %v505
        %v1765 = vsub.f32 0.0, %v618
        %v1766 = vsub.f32 0.0, %v731
        %v1767 = vsub.f32 0.0, %v844
        %v1768 = vsub.f32 0.0, %v957
        %v1769 = vsub.f32 0.0, %v1070
        %v1770 = vsub.f32 0.0, %v1183
        %v1771 = vsub.f32 0.0, %v1296
        %v1772 = vsub.f32 0.0, %v1409
        %v1773 = vsub.f32 0.0, %v1522
        %v1774 = vsub.f32 0.0, %v508
        %v1775 = vsub.f32 0.0, %v621
        %v1776 = vsub.f32 0.0, %v734
        %v1777 = vsub.f32 0.0, %v847
        %v1778 = vsub.f32 0.0, %v960
        %v1779 = vsub.f32 0.0, %v1073
        %v1780 = vsub.f32 0.0, %v1186
        %v1781 = vsub.f32 0.0, %v1299
        %v1782 = vsub.f32 0.0, %v1412
        %v1783 = vsub.f32 0.0, %v1525
        %v1784 = vsub.f32 0.0, %v511
        %v1785 = vsub.f32 0.0, %v624
        %v1786 = vsub.f32 0.0, %v737
        %v1787 = vsub.f32 0.0, %v850
        %v1788 = vsub.f32 0.0, %v963
        %v1789 = vsub.f32 0.0, %v1076
        %v1790 = vsub.f32 0.0, %v1189
        %v1791 = vsub.f32 0.0, %v1302
        %v1792 = vsub.f32 0.0, %v1415
        %v1793 = vsub.f32 0.0, %v1528
        %v1794 = vsub.f32 0.0, %v514
        %v1795 = vsub.f32 0.0, %v627
        %v1796 = vsub.f32 0.0, %v740
        %v1797 = vsub.f32 0.0, %v853
        %v1798 = vsub.f32 0.0, %v966
        %v1799 = vsub.f32 0.0, %v1079
        %v1800 = vsub.f32 0.0, %v1192
        %v1801 = vsub.f32 0.0, %v1305
        %v1802 = vsub.f32 0.0, %v1418
        %v1803 = vsub.f32 0.0, %v1531
        %v1804 = vsub.f32 0.0, %v517
        %v1805 = vsub.f32 0.0, %v630
        %v1806 = vsub.f32 0.0, %v743
        %v1807 = vsub.f32 0.0, %v856
        %v1808 = vsub.f32 0.0, %v969
        %v1809 = vsub.f32 0.0, %v1082
        %v1810 = vsub.f32 0.0, %v1195
        %v1811 = vsub.f32 0.0, %v1308
        %v1812 = vsub.f32 0.0, %v1421
        %v1813 = vsub.f32 0.0, %v1534
        %v1814 = vsub.f32 0.0, %v520
        %v1815 = vsub.f32 0.0, %v633
        %v1816 = vsub.f32 0.0, %v746
        %v1817 = vsub.f32 0.0, %v859
        %v1818 = vsub.f32 0.0, %v972
        %v1819 = vsub.f32 0.0, %v1085
        %v1820 = vsub.f32 0.0, %v1198
        %v1821 = vsub.f32 0.0, %v1311
        %v1822 = vsub.f32 0.0, %v1424
        %v1823 = vsub.f32 0.0, %v1537
        %v1824 = vsub.f32 0.0, %v523
        %v1825 = vsub.f32 0.0, %v636
        %v1826 = vsub.f32 0.0, %v749
        %v1827 = vsub.f32 0.0, %v862
        %v1828 = vsub.f32 0.0, %v975
        %v1829 = vsub.f32 0.0, %v1088
        %v1830 = vsub.f32 0.0, %v1201
        %v1831 = vsub.f32 0.0, %v1314
        %v1832 = vsub.f32 0.0, %v1427
        %v1833 = vsub.f32 0.0, %v1540
        %v1834 = vsub.f32 0.0, %v526
        %v1835 = vsub.f32 0.0, %v639
        %v1836 = vsub.f32 0.0, %v752
        %v1837 = vsub.f32 0.0, %v865
        %v1838 = vsub.f32 0.0, %v978
        %v1839 = vsub.f32 0.0, %v1091
        %v1840 = vsub.f32 0.0, %v1204
        %v1841 = vsub.f32 0.0, %v1317
        %v1842 = vsub.f32 0.0, %v1430
        %v1843 = vsub.f32 0.0, %v1543
        %v1844 = vsub.f32 0.0, %v529
        %v1845 = vsub.f32 0.0, %v642
        %v1846 = vsub.f32 0.0, %v755
        %v1847 = vsub.f32 0.0, %v868
        %v1848 = vsub.f32 0.0, %v981
        %v1849 = vsub.f32 0.0, %v1094
        %v1850 = vsub.f32 0.0, %v1207
        %v1851 = vsub.f32 0.0, %v1320
        %v1852 = vsub.f32 0.0, %v1433
        %v1853 = vsub.f32 0.0, %v1546
        %v1854 = vsub.f32 0.0, %v532
        %v1855 = vsub.f32 0.0, %v645
        %v1856 = vsub.f32 0.0, %v758
        %v1857 = vsub.f32 0.0, %v871
        %v1858 = vsub.f32 0.0, %v984
        %v1859 = vsub.f32 0.0, %v1097
        %v1860 = vsub.f32 0.0, %v1210
        %v1861 = vsub.f32 0.0, %v1323
        %v1862 = vsub.f32 0.0, %v1436
        %v1863 = vsub.f32 0.0, %v1549
        %v1864 = vsub.f32 0.0, %v535
        %v1865 = vsub.f32 0.0, %v648
        %v1866 = vsub.f32 0.0, %v761
        %v1867 = vsub.f32 0.0, %v874
        %v1868 = vsub.f32 0.0, %v987
        %v1869 = vsub.f32 0.0, %v1100
        %v1870 = vsub.f32 0.0, %v1213
        %v1871 = vsub.f32 0.0, %v1326
        %v1872 = vsub.f32 0.0, %v1439
        %v1873 = vsub.f32 0.0, %v1552
        %v1874 = vmul.f32 %v1554, 1.442695
        %v1875 = vpow.pop %v1874
        %v1876 = vmul.f32 %v1555, 1.442695
        %v1877 = vpow.pop %v1876
        %v1878 = vmul.f32 %v1556, 1.442695
        %v1879 = vpow.pop %v1878
        %v1880 = vmul.f32 %v1557, 1.442695
        %v1881 = vpow.pop %v1880
        %v1882 = vmul.f32 %v1558, 1.442695
        %v1883 = vpow.pop %v1882
        %v1884 = vmul.f32 %v1559, 1.442695
        %v1885 = vpow.pop %v1884
        %v1886 = vmul.f32 %v1560, 1.442695
        %v1887 = vpow.pop %v1886
        %v1888 = vmul.f32 %v1561, 1.442695
        %v1889 = vpow.pop %v1888
        %v1890 = vmul.f32 %v1562, 1.442695
        %v1891 = vpow.pop %v1890
        %v1892 = vmul.f32 %v1563, 1.442695
        %v1893 = vpow.pop %v1892
        %v1894 = vmul.f32 %v1564, 1.442695
        %v1895 = vpow.pop %v1894
        %v1896 = vmul.f32 %v1565, 1.442695
        %v1897 = vpow.pop %v1896
        %v1898 = vmul.f32 %v1566, 1.442695
        %v1899 = vpow.pop %v1898
        %v1900 = vmul.f32 %v1567, 1.442695
        %v1901 = vpow.pop %v1900
        %v1902 = vmul.f32 %v1568, 1.442695
        %v1903 = vpow.pop %v1902
        %v1904 = vmul.f32 %v1569, 1.442695
        %v1905 = vpow.pop %v1904
        %v1906 = vmul.f32 %v1570, 1.442695
        %v1907 = vpow.pop %v1906
        %v1908 = vmul.f32 %v1571, 1.442695
        %v1909 = vpow.pop %v1908
        %v1910 = vmul.f32 %v1572, 1.442695
        %v1911 = vpow.pop %v1910
        %v1912 = vmul.f32 %v1573, 1.442695
        %v1913 = vpow.pop %v1912
        %v1914 = vmul.f32 %v1574, 1.442695
        %v1915 = vpow.pop %v1914
        %v1916 = vmul.f32 %v1575, 1.442695
        %v1917 = vpow.pop %v1916
        %v1918 = vmul.f32 %v1576, 1.442695
        %v1919 = vpow.pop %v1918
        %v1920 = vmul.f32 %v1577, 1.442695
        %v1921 = vpow.pop %v1920
        %v1922 = vmul.f32 %v1578, 1.442695
        %v1923 = vpow.pop %v1922
        %v1924 = vmul.f32 %v1579, 1.442695
        %v1925 = vpow.pop %v1924
        %v1926 = vmul.f32 %v1580, 1.442695
        %v1927 = vpow.pop %v1926
        %v1928 = vmul.f32 %v1581, 1.442695
        %v1929 = vpow.pop %v1928
        %v1930 = vmul.f32 %v1582, 1.442695
        %v1931 = vpow.pop %v1930
        %v1932 = vmul.f32 %v1583, 1.442695
        %v1933 = vpow.pop %v1932
        %v1934 = vmul.f32 %v1584, 1.442695
        %v1935 = vpow.pop %v1934
        %v1936 = vmul.f32 %v1585, 1.442695
        %v1937 = vpow.pop %v1936
        %v1938 = vmul.f32 %v1586, 1.442695
        %v1939 = vpow.pop %v1938
        %v1940 = vmul.f32 %v1587, 1.442695
        %v1941 = vpow.pop %v1940
        %v1942 = vmul.f32 %v1588, 1.442695
        %v1943 = vpow.pop %v1942
        %v1944 = vmul.f32 %v1589, 1.442695
        %v1945 = vpow.pop %v1944
        %v1946 = vmul.f32 %v1590, 1.442695
        %v1947 = vpow.pop %v1946
        %v1948 = vmul.f32 %v1591, 1.442695
        %v1949 = vpow.pop %v1948
        %v1950 = vmul.f32 %v1592, 1.442695
        %v1951 = vpow.pop %v1950
        %v1952 = vmul.f32 %v1593, 1.442695
        %v1953 = vpow.pop %v1952
        %v1954 = vmul.f32 %v1594, 1.442695
        %v1955 = vpow.pop %v1954
        %v1956 = vmul.f32 %v1595, 1.442695
        %v1957 = vpow.pop %v1956
        %v1958 = vmul.f32 %v1596, 1.442695
        %v1959 = vpow.pop %v1958
        %v1960 = vmul.f32 %v1597, 1.442695
        %v1961 = vpow.pop %v1960
        %v1962 = vmul.f32 %v1598, 1.442695
        %v1963 = vpow.pop %v1962
        %v1964 = vmul.f32 %v1599, 1.442695
        %v1965 = vpow.pop %v1964
        %v1966 = vmul.f32 %v1600, 1.442695
        %v1967 = vpow.pop %v1966
        %v1968 = vmul.f32 %v1601, 1.442695
        %v1969 = vpow.pop %v1968
        %v1970 = vmul.f32 %v1602, 1.442695
        %v1971 = vpow.pop %v1970
        %v1972 = vmul.f32 %v1603, 1.442695
        %v1973 = vpow.pop %v1972
        %v1974 = vmul.f32 %v1604, 1.442695
        %v1975 = vpow.pop %v1974
        %v1976 = vmul.f32 %v1605, 1.442695
        %v1977 = vpow.pop %v1976
        %v1978 = vmul.f32 %v1606, 1.442695
        %v1979 = vpow.pop %v1978
        %v1980 = vmul.f32 %v1607, 1.442695
        %v1981 = vpow.pop %v1980
        %v1982 = vmul.f32 %v1608, 1.442695
        %v1983 = vpow.pop %v1982
        %v1984 = vmul.f32 %v1609, 1.442695
        %v1985 = vpow.pop %v1984
        %v1986 = vmul.f32 %v1610, 1.442695
        %v1987 = vpow.pop %v1986
        %v1988 = vmul.f32 %v1611, 1.442695
        %v1989 = vpow.pop %v1988
        %v1990 = vmul.f32 %v1612, 1.442695
        %v1991 = vpow.pop %v1990
        %v1992 = vmul.f32 %v1613, 1.442695
        %v1993 = vpow.pop %v1992
        %v1994 = vmul.f32 %v1614, 1.442695
        %v1995 = vpow.pop %v1994
        %v1996 = vmul.f32 %v1615, 1.442695
        %v1997 = vpow.pop %v1996
        %v1998 = vmul.f32 %v1616, 1.442695
        %v1999 = vpow.pop %v1998
        %v2000 = vmul.f32 %v1617, 1.442695
        %v2001 = vpow.pop %v2000
        %v2002 = vmul.f32 %v1618, 1.442695
        %v2003 = vpow.pop %v2002
        %v2004 = vmul.f32 %v1619, 1.442695
        %v2005 = vpow.pop %v2004
        %v2006 = vmul.f32 %v1620, 1.442695
        %v2007 = vpow.pop %v2006
        %v2008 = vmul.f32 %v1621, 1.442695
        %v2009 = vpow.pop %v2008
        %v2010 = vmul.f32 %v1622, 1.442695
        %v2011 = vpow.pop %v2010
        %v2012 = vmul.f32 %v1623, 1.442695
        %v2013 = vpow.pop %v2012
        %v2014 = vmul.f32 %v1624, 1.442695
        %v2015 = vpow.pop %v2014
        %v2016 = vmul.f32 %v1625, 1.442695
        %v2017 = vpow.pop %v2016
        %v2018 = vmul.f32 %v1626, 1.442695
        %v2019 = vpow.pop %v2018
        %v2020 = vmul.f32 %v1627, 1.442695
        %v2021 = vpow.pop %v2020
        %v2022 = vmul.f32 %v1628, 1.442695
        %v2023 = vpow.pop %v2022
        %v2024 = vmul.f32 %v1629, 1.442695
        %v2025 = vpow.pop %v2024
        %v2026 = vmul.f32 %v1630, 1.442695
        %v2027 = vpow.pop %v2026
        %v2028 = vmul.f32 %v1631, 1.442695
        %v2029 = vpow.pop %v2028
        %v2030 = vmul.f32 %v1632, 1.442695
        %v2031 = vpow.pop %v2030
        %v2032 = vmul.f32 %v1633, 1.442695
        %v2033 = vpow.pop %v2032
        %v2034 = vmul.f32 %v1634, 1.442695
        %v2035 = vpow.pop %v2034
        %v2036 = vmul.f32 %v1635, 1.442695
        %v2037 = vpow.pop %v2036
        %v2038 = vmul.f32 %v1636, 1.442695
        %v2039 = vpow.pop %v2038
        %v2040 = vmul.f32 %v1637, 1.442695
        %v2041 = vpow.pop %v2040
        %v2042 = vmul.f32 %v1638, 1.442695
        %v2043 = vpow.pop %v2042
        %v2044 = vmul.f32 %v1639, 1.442695
        %v2045 = vpow.pop %v2044
        %v2046 = vmul.f32 %v1640, 1.442695
        %v2047 = vpow.pop %v2046
        %v2048 = vmul.f32 %v1641, 1.442695
        %v2049 = vpow.pop %v2048
        %v2050 = vmul.f32 %v1642, 1.442695
        %v2051 = vpow.pop %v2050
        %v2052 = vmul.f32 %v1643, 1.442695
        %v2053 = vpow.pop %v2052
        %v2054 = vmul.f32 %v1644, 1.442695
        %v2055 = vpow.pop %v2054
        %v2056 = vmul.f32 %v1645, 1.442695
        %v2057 = vpow.pop %v2056
        %v2058 = vmul.f32 %v1646, 1.442695
        %v2059 = vpow.pop %v2058
        %v2060 = vmul.f32 %v1647, 1.442695
        %v2061 = vpow.pop %v2060
        %v2062 = vmul.f32 %v1648, 1.442695
        %v2063 = vpow.pop %v2062
        %v2064 = vmul.f32 %v1649, 1.442695
        %v2065 = vpow.pop %v2064
        %v2066 = vmul.f32 %v1650, 1.442695
        %v2067 = vpow.pop %v2066
        %v2068 = vmul.f32 %v1651, 1.442695
        %v2069 = vpow.pop %v2068
        %v2070 = vmul.f32 %v1652, 1.442695
        %v2071 = vpow.pop %v2070
        %v2072 = vmul.f32 %v1653, 1.442695
        %v2073 = vpow.pop %v2072
        %v2074 = vmul.f32 %v1654, 1.442695
        %v2075 = vpow.pop %v2074
        %v2076 = vmul.f32 %v1655, 1.442695
        %v2077 = vpow.pop %v2076
        %v2078 = vmul.f32 %v1656, 1.442695
        %v2079 = vpow.pop %v2078
        %v2080 = vmul.f32 %v1657, 1.442695
        %v2081 = vpow.pop %v2080
        %v2082 = vmul.f32 %v1658, 1.442695
        %v2083 = vpow.pop %v2082
        %v2084 = vmul.f32 %v1659, 1.442695
        %v2085 = vpow.pop %v2084
        %v2086 = vmul.f32 %v1660, 1.442695
        %v2087 = vpow.pop %v2086
        %v2088 = vmul.f32 %v1661, 1.442695
        %v2089 = vpow.pop %v2088
        %v2090 = vmul.f32 %v1662, 1.442695
        %v2091 = vpow.pop %v2090
        %v2092 = vmul.f32 %v1663, 1.442695
        %v2093 = vpow.pop %v2092
        %v2094 = vmul.f32 %v1664, 1.442695
        %v2095 = vpow.pop %v2094
        %v2096 = vmul.f32 %v1665, 1.442695
        %v2097 = vpow.pop %v2096
        %v2098 = vmul.f32 %v1666, 1.442695
        %v2099 = vpow.pop %v2098
        %v2100 = vmul.f32 %v1667, 1.442695
        %v2101 = vpow.pop %v2100
        %v2102 = vmul.f32 %v1668, 1.442695
        %v2103 = vpow.pop %v2102
        %v2104 = vmul.f32 %v1669, 1.442695
        %v2105 = vpow.pop %v2104
        %v2106 = vmul.f32 %v1670, 1.442695
        %v2107 = vpow.pop %v2106
        %v2108 = vmul.f32 %v1671, 1.442695
        %v2109 = vpow.pop %v2108
        %v2110 = vmul.f32 %v1672, 1.442695
        %v2111 = vpow.pop %v2110
        %v2112 = vmul.f32 %v1673, 1.442695
        %v2113 = vpow.pop %v2112
        %v2114 = vmul.f32 %v1674, 1.442695
        %v2115 = vpow.pop %v2114
        %v2116 = vmul.f32 %v1675, 1.442695
        %v2117 = vpow.pop %v2116
        %v2118 = vmul.f32 %v1676, 1.442695
        %v2119 = vpow.pop %v2118
        %v2120 = vmul.f32 %v1677, 1.442695
        %v2121 = vpow.pop %v2120
        %v2122 = vmul.f32 %v1678, 1.442695
        %v2123 = vpow.pop %v2122
        %v2124 = vmul.f32 %v1679, 1.442695
        %v2125 = vpow.pop %v2124
        %v2126 = vmul.f32 %v1680, 1.442695
        %v2127 = vpow.pop %v2126
        %v2128 = vmul.f32 %v1681, 1.442695
        %v2129 = vpow.pop %v2128
        %v2130 = vmul.f32 %v1682, 1.442695
        %v2131 = vpow.pop %v2130
        %v2132 = vmul.f32 %v1683, 1.442695
        %v2133 = vpow.pop %v2132
        %v2134 = vmul.f32 %v1684, 1.442695
        %v2135 = vpow.pop %v2134
        %v2136 = vmul.f32 %v1685, 1.442695
        %v2137 = vpow.pop %v2136
        %v2138 = vmul.f32 %v1686, 1.442695
        %v2139 = vpow.pop %v2138
        %v2140 = vmul.f32 %v1687, 1.442695
        %v2141 = vpow.pop %v2140
        %v2142 = vmul.f32 %v1688, 1.442695
        %v2143 = vpow.pop %v2142
        %v2144 = vmul.f32 %v1689, 1.442695
        %v2145 = vpow.pop %v2144
        %v2146 = vmul.f32 %v1690, 1.442695
        %v2147 = vpow.pop %v2146
        %v2148 = vmul.f32 %v1691, 1.442695
        %v2149 = vpow.pop %v2148
        %v2150 = vmul.f32 %v1692, 1.442695
        %v2151 = vpow.pop %v2150
        %v2152 = vmul.f32 %v1693, 1.442695
        %v2153 = vpow.pop %v2152
        %v2154 = vmul.f32 %v1694, 1.442695
        %v2155 = vpow.pop %v2154
        %v2156 = vmul.f32 %v1695, 1.442695
        %v2157 = vpow.pop %v2156
        %v2158 = vmul.f32 %v1696, 1.442695
        %v2159 = vpow.pop %v2158
        %v2160 = vmul.f32 %v1697, 1.442695
        %v2161 = vpow.pop %v2160
        %v2162 = vmul.f32 %v1698, 1.442695
        %v2163 = vpow.pop %v2162
        %v2164 = vmul.f32 %v1699, 1.442695
        %v2165 = vpow.pop %v2164
        %v2166 = vmul.f32 %v1700, 1.442695
        %v2167 = vpow.pop %v2166
        %v2168 = vmul.f32 %v1701, 1.442695
        %v2169 = vpow.pop %v2168
        %v2170 = vmul.f32 %v1702, 1.442695
        %v2171 = vpow.pop %v2170
        %v2172 = vmul.f32 %v1703, 1.442695
        %v2173 = vpow.pop %v2172
        %v2174 = vmul.f32 %v1704, 1.442695
        %v2175 = vpow.pop %v2174
        %v2176 = vmul.f32 %v1705, 1.442695
        %v2177 = vpow.pop %v2176
        %v2178 = vmul.f32 %v1706, 1.442695
        %v2179 = vpow.pop %v2178
        %v2180 = vmul.f32 %v1707, 1.442695
        %v2181 = vpow.pop %v2180
        %v2182 = vmul.f32 %v1708, 1.442695
        %v2183 = vpow.pop %v2182
        %v2184 = vmul.f32 %v1709, 1.442695
        %v2185 = vpow.pop %v2184
        %v2186 = vmul.f32 %v1710, 1.442695
        %v2187 = vpow.pop %v2186
        %v2188 = vmul.f32 %v1711, 1.442695
        %v2189 = vpow.pop %v2188
        %v2190 = vmul.f32 %v1712, 1.442695
        %v2191 = vpow.pop %v2190
        %v2192 = vmul.f32 %v1713, 1.442695
        %v2193 = vpow.pop %v2192
        %v2194 = vmul.f32 %v1714, 1.442695
        %v2195 = vpow.pop %v2194
        %v2196 = vmul.f32 %v1715, 1.442695
        %v2197 = vpow.pop %v2196
        %v2198 = vmul.f32 %v1716, 1.442695
        %v2199 = vpow.pop %v2198
        %v2200 = vmul.f32 %v1717, 1.442695
        %v2201 = vpow.pop %v2200
        %v2202 = vmul.f32 %v1718, 1.442695
        %v2203 = vpow.pop %v2202
        %v2204 = vmul.f32 %v1719, 1.442695
        %v2205 = vpow.pop %v2204
        %v2206 = vmul.f32 %v1720, 1.442695
        %v2207 = vpow.pop %v2206
        %v2208 = vmul.f32 %v1721, 1.442695
        %v2209 = vpow.pop %v2208
        %v2210 = vmul.f32 %v1722, 1.442695
        %v2211 = vpow.pop %v2210
        %v2212 = vmul.f32 %v1723, 1.442695
        %v2213 = vpow.pop %v2212
        %v2214 = vmul.f32 %v1724, 1.442695
        %v2215 = vpow.pop %v2214
        %v2216 = vmul.f32 %v1725, 1.442695
        %v2217 = vpow.pop %v2216
        %v2218 = vmul.f32 %v1726, 1.442695
        %v2219 = vpow.pop %v2218
        %v2220 = vmul.f32 %v1727, 1.442695
        %v2221 = vpow.pop %v2220
        %v2222 = vmul.f32 %v1728, 1.442695
        %v2223 = vpow.pop %v2222
        %v2224 = vmul.f32 %v1729, 1.442695
        %v2225 = vpow.pop %v2224
        %v2226 = vmul.f32 %v1730, 1.442695
        %v2227 = vpow.pop %v2226
        %v2228 = vmul.f32 %v1731, 1.442695
        %v2229 = vpow.pop %v2228
        %v2230 = vmul.f32 %v1732, 1.442695
        %v2231 = vpow.pop %v2230
        %v2232 = vmul.f32 %v1733, 1.442695
        %v2233 = vpow.pop %v2232
        %v2234 = vmul.f32 %v1734, 1.442695
        %v2235 = vpow.pop %v2234
        %v2236 = vmul.f32 %v1735, 1.442695
        %v2237 = vpow.pop %v2236
        %v2238 = vmul.f32 %v1736, 1.442695
        %v2239 = vpow.pop %v2238
        %v2240 = vmul.f32 %v1737, 1.442695
        %v2241 = vpow.pop %v2240
        %v2242 = vmul.f32 %v1738, 1.442695
        %v2243 = vpow.pop %v2242
        %v2244 = vmul.f32 %v1739, 1.442695
        %v2245 = vpow.pop %v2244
        %v2246 = vmul.f32 %v1740, 1.442695
        %v2247 = vpow.pop %v2246
        %v2248 = vmul.f32 %v1741, 1.442695
        %v2249 = vpow.pop %v2248
        %v2250 = vmul.f32 %v1742, 1.442695
        %v2251 = vpow.pop %v2250
        %v2252 = vmul.f32 %v1743, 1.442695
        %v2253 = vpow.pop %v2252
        %v2254 = vmul.f32 %v1744, 1.442695
        %v2255 = vpow.pop %v2254
        %v2256 = vmul.f32 %v1745, 1.442695
        %v2257 = vpow.pop %v2256
        %v2258 = vmul.f32 %v1746, 1.442695
        %v2259 = vpow.pop %v2258
        %v2260 = vmul.f32 %v1747, 1.442695
        %v2261 = vpow.pop %v2260
        %v2262 = vmul.f32 %v1748, 1.442695
        %v2263 = vpow.pop %v2262
        %v2264 = vmul.f32 %v1749, 1.442695
        %v2265 = vpow.pop %v2264
        %v2266 = vmul.f32 %v1750, 1.442695
        %v2267 = vpow.pop %v2266
        %v2268 = vmul.f32 %v1751, 1.442695
        %v2269 = vpow.pop %v2268
        %v2270 = vmul.f32 %v1752, 1.442695
        %v2271 = vpow.pop %v2270
        %v2272 = vmul.f32 %v1753, 1.442695
        %v2273 = vpow.pop %v2272
        %v2274 = vmul.f32 %v1754, 1.442695
        %v2275 = vpow.pop %v2274
        %v2276 = vmul.f32 %v1755, 1.442695
        %v2277 = vpow.pop %v2276
        %v2278 = vmul.f32 %v1756, 1.442695
        %v2279 = vpow.pop %v2278
        %v2280 = vmul.f32 %v1757, 1.442695
        %v2281 = vpow.pop %v2280
        %v2282 = vmul.f32 %v1758, 1.442695
        %v2283 = vpow.pop %v2282
        %v2284 = vmul.f32 %v1759, 1.442695
        %v2285 = vpow.pop %v2284
        %v2286 = vmul.f32 %v1760, 1.442695
        %v2287 = vpow.pop %v2286
        %v2288 = vmul.f32 %v1761, 1.442695
        %v2289 = vpow.pop %v2288
        %v2290 = vmul.f32 %v1762, 1.442695
        %v2291 = vpow.pop %v2290
        %v2292 = vmul.f32 %v1763, 1.442695
        %v2293 = vpow.pop %v2292
        %v2294 = vmul.f32 %v1764, 1.442695
        %v2295 = vpow.pop %v2294
        %v2296 = vmul.f32 %v1765, 1.442695
        %v2297 = vpow.pop %v2296
        %v2298 = vmul.f32 %v1766, 1.442695
        %v2299 = vpow.pop %v2298
        %v2300 = vmul.f32 %v1767, 1.442695
        %v2301 = vpow.pop %v2300
        %v2302 = vmul.f32 %v1768, 1.442695
        %v2303 = vpow.pop %v2302
        %v2304 = vmul.f32 %v1769, 1.442695
        %v2305 = vpow.pop %v2304
        %v2306 = vmul.f32 %v1770, 1.442695
        %v2307 = vpow.pop %v2306
        %v2308 = vmul.f32 %v1771, 1.442695
        %v2309 = vpow.pop %v2308
        %v2310 = vmul.f32 %v1772, 1.442695
        %v2311 = vpow.pop %v2310
        %v2312 = vmul.f32 %v1773, 1.442695
        %v2313 = vpow.pop %v2312
        %v2314 = vmul.f32 %v1774, 1.442695
        %v2315 = vpow.pop %v2314
        %v2316 = vmul.f32 %v1775, 1.442695
        %v2317 = vpow.pop %v2316
        %v2318 = vmul.f32 %v1776, 1.442695
        %v2319 = vpow.pop %v2318
        %v2320 = vmul.f32 %v1777, 1.442695
        %v2321 = vpow.pop %v2320
        %v2322 = vmul.f32 %v1778, 1.442695
        %v2323 = vpow.pop %v2322
        %v2324 = vmul.f32 %v1779, 1.442695
        %v2325 = vpow.pop %v2324
        %v2326 = vmul.f32 %v1780, 1.442695
        %v2327 = vpow.pop %v2326
        %v2328 = vmul.f32 %v1781, 1.442695
        %v2329 = vpow.pop %v2328
        %v2330 = vmul.f32 %v1782, 1.442695
        %v2331 = vpow.pop %v2330
        %v2332 = vmul.f32 %v1783, 1.442695
        %v2333 = vpow.pop %v2332
        %v2334 = vmul.f32 %v1784, 1.442695
        %v2335 = vpow.pop %v2334
        %v2336 = vmul.f32 %v1785, 1.442695
        %v2337 = vpow.pop %v2336
        %v2338 = vmul.f32 %v1786, 1.442695
        %v2339 = vpow.pop %v2338
        %v2340 = vmul.f32 %v1787, 1.442695
        %v2341 = vpow.pop %v2340
        %v2342 = vmul.f32 %v1788, 1.442695
        %v2343 = vpow.pop %v2342
        %v2344 = vmul.f32 %v1789, 1.442695
        %v2345 = vpow.pop %v2344
        %v2346 = vmul.f32 %v1790, 1.442695
        %v2347 = vpow.pop %v2346
        %v2348 = vmul.f32 %v1791, 1.442695
        %v2349 = vpow.pop %v2348
        %v2350 = vmul.f32 %v1792, 1.442695
        %v2351 = vpow.pop %v2350
        %v2352 = vmul.f32 %v1793, 1.442695
        %v2353 = vpow.pop %v2352
        %v2354 = vmul.f32 %v1794, 1.442695
        %v2355 = vpow.pop %v2354
        %v2356 = vmul.f32 %v1795, 1.442695
        %v2357 = vpow.pop %v2356
        %v2358 = vmul.f32 %v1796, 1.442695
        %v2359 = vpow.pop %v2358
        %v2360 = vmul.f32 %v1797, 1.442695
        %v2361 = vpow.pop %v2360
        %v2362 = vmul.f32 %v1798, 1.442695
        %v2363 = vpow.pop %v2362
        %v2364 = vmul.f32 %v1799, 1.442695
        %v2365 = vpow.pop %v2364
        %v2366 = vmul.f32 %v1800, 1.442695
        %v2367 = vpow.pop %v2366
        %v2368 = vmul.f32 %v1801, 1.442695
        %v2369 = vpow.pop %v2368
        %v2370 = vmul.f32 %v1802, 1.442695
        %v2371 = vpow.pop %v2370
        %v2372 = vmul.f32 %v1803, 1.442695
        %v2373 = vpow.pop %v2372
        %v2374 = vmul.f32 %v1804, 1.442695
        %v2375 = vpow.pop %v2374
        %v2376 = vmul.f32 %v1805, 1.442695
        %v2377 = vpow.pop %v2376
        %v2378 = vmul.f32 %v1806, 1.442695
        %v2379 = vpow.pop %v2378
        %v2380 = vmul.f32 %v1807, 1.442695
        %v2381 = vpow.pop %v2380
        %v2382 = vmul.f32 %v1808, 1.442695
        %v2383 = vpow.pop %v2382
        %v2384 = vmul.f32 %v1809, 1.442695
        %v2385 = vpow.pop %v2384
        %v2386 = vmul.f32 %v1810, 1.442695
        %v2387 = vpow.pop %v2386
        %v2388 = vmul.f32 %v1811, 1.442695
        %v2389 = vpow.pop %v2388
        %v2390 = vmul.f32 %v1812, 1.442695
        %v2391 = vpow.pop %v2390
        %v2392 = vmul.f32 %v1813, 1.442695
        %v2393 = vpow.pop %v2392
        %v2394 = vmul.f32 %v1814, 1.442695
        %v2395 = vpow.pop %v2394
        %v2396 = vmul.f32 %v1815, 1.442695
        %v2397 = vpow.pop %v2396
        %v2398 = vmul.f32 %v1816, 1.442695
        %v2399 = vpow.pop %v2398
        %v2400 = vmul.f32 %v1817, 1.442695
        %v2401 = vpow.pop %v2400
        %v2402 = vmul.f32 %v1818, 1.442695
        %v2403 = vpow.pop %v2402
        %v2404 = vmul.f32 %v1819, 1.442695
        %v2405 = vpow.pop %v2404
        %v2406 = vmul.f32 %v1820, 1.442695
        %v2407 = vpow.pop %v2406
        %v2408 = vmul.f32 %v1821, 1.442695
        %v2409 = vpow.pop %v2408
        %v2410 = vmul.f32 %v1822, 1.442695
        %v2411 = vpow.pop %v2410
        %v2412 = vmul.f32 %v1823, 1.442695
        %v2413 = vpow.pop %v2412
        %v2414 = vmul.f32 %v1824, 1.442695
        %v2415 = vpow.pop %v2414
        %v2416 = vmul.f32 %v1825, 1.442695
        %v2417 = vpow.pop %v2416
        %v2418 = vmul.f32 %v1826, 1.442695
        %v2419 = vpow.pop %v2418
        %v2420 = vmul.f32 %v1827, 1.442695
        %v2421 = vpow.pop %v2420
        %v2422 = vmul.f32 %v1828, 1.442695
        %v2423 = vpow.pop %v2422
        %v2424 = vmul.f32 %v1829, 1.442695
        %v2425 = vpow.pop %v2424
        %v2426 = vmul.f32 %v1830, 1.442695
        %v2427 = vpow.pop %v2426
        %v2428 = vmul.f32 %v1831, 1.442695
        %v2429 = vpow.pop %v2428
        %v2430 = vmul.f32 %v1832, 1.442695
        %v2431 = vpow.pop %v2430
        %v2432 = vmul.f32 %v1833, 1.442695
        %v2433 = vpow.pop %v2432
        %v2434 = vmul.f32 %v1834, 1.442695
        %v2435 = vpow.pop %v2434
        %v2436 = vmul.f32 %v1835, 1.442695
        %v2437 = vpow.pop %v2436
        %v2438 = vmul.f32 %v1836, 1.442695
        %v2439 = vpow.pop %v2438
        %v2440 = vmul.f32 %v1837, 1.442695
        %v2441 = vpow.pop %v2440
        %v2442 = vmul.f32 %v1838, 1.442695
        %v2443 = vpow.pop %v2442
        %v2444 = vmul.f32 %v1839, 1.442695
        %v2445 = vpow.pop %v2444
        %v2446 = vmul.f32 %v1840, 1.442695
        %v2447 = vpow.pop %v2446
        %v2448 = vmul.f32 %v1841, 1.442695
        %v2449 = vpow.pop %v2448
        %v2450 = vmul.f32 %v1842, 1.442695
        %v2451 = vpow.pop %v2450
        %v2452 = vmul.f32 %v1843, 1.442695
        %v2453 = vpow.pop %v2452
        %v2454 = vmul.f32 %v1844, 1.442695
        %v2455 = vpow.pop %v2454
        %v2456 = vmul.f32 %v1845, 1.442695
        %v2457 = vpow.pop %v2456
        %v2458 = vmul.f32 %v1846, 1.442695
        %v2459 = vpow.pop %v2458
        %v2460 = vmul.f32 %v1847, 1.442695
        %v2461 = vpow.pop %v2460
        %v2462 = vmul.f32 %v1848, 1.442695
        %v2463 = vpow.pop %v2462
        %v2464 = vmul.f32 %v1849, 1.442695
        %v2465 = vpow.pop %v2464
        %v2466 = vmul.f32 %v1850, 1.442695
        %v2467 = vpow.pop %v2466
        %v2468 = vmul.f32 %v1851, 1.442695
        %v2469 = vpow.pop %v2468
        %v2470 = vmul.f32 %v1852, 1.442695
        %v2471 = vpow.pop %v2470
        %v2472 = vmul.f32 %v1853, 1.442695
        %v2473 = vpow.pop %v2472
        %v2474 = vmul.f32 %v1854, 1.442695
        %v2475 = vpow.pop %v2474
        %v2476 = vmul.f32 %v1855, 1.442695
        %v2477 = vpow.pop %v2476
        %v2478 = vmul.f32 %v1856, 1.442695
        %v2479 = vpow.pop %v2478
        %v2480 = vmul.f32 %v1857, 1.442695
        %v2481 = vpow.pop %v2480
        %v2482 = vmul.f32 %v1858, 1.442695
        %v2483 = vpow.pop %v2482
        %v2484 = vmul.f32 %v1859, 1.442695
        %v2485 = vpow.pop %v2484
        %v2486 = vmul.f32 %v1860, 1.442695
        %v2487 = vpow.pop %v2486
        %v2488 = vmul.f32 %v1861, 1.442695
        %v2489 = vpow.pop %v2488
        %v2490 = vmul.f32 %v1862, 1.442695
        %v2491 = vpow.pop %v2490
        %v2492 = vmul.f32 %v1863, 1.442695
        %v2493 = vpow.pop %v2492
        %v2494 = vmul.f32 %v1864, 1.442695
        %v2495 = vpow.pop %v2494
        %v2496 = vmul.f32 %v1865, 1.442695
        %v2497 = vpow.pop %v2496
        %v2498 = vmul.f32 %v1866, 1.442695
        %v2499 = vpow.pop %v2498
        %v2500 = vmul.f32 %v1867, 1.442695
        %v2501 = vpow.pop %v2500
        %v2502 = vmul.f32 %v1868, 1.442695
        %v2503 = vpow.pop %v2502
        %v2504 = vmul.f32 %v1869, 1.442695
        %v2505 = vpow.pop %v2504
        %v2506 = vmul.f32 %v1870, 1.442695
        %v2507 = vpow.pop %v2506
        %v2508 = vmul.f32 %v1871, 1.442695
        %v2509 = vpow.pop %v2508
        %v2510 = vmul.f32 %v1872, 1.442695
        %v2511 = vpow.pop %v2510
        %v2512 = vmul.f32 %v1873, 1.442695
        %v2513 = vpow.pop %v2512
        %v2514 = vadd.f32 %v1875, 1.0
        %v2515 = vadd.f32 %v1877, 1.0
        %v2516 = vadd.f32 %v1879, 1.0
        %v2517 = vadd.f32 %v1881, 1.0
        %v2518 = vadd.f32 %v1883, 1.0
        %v2519 = vadd.f32 %v1885, 1.0
        %v2520 = vadd.f32 %v1887, 1.0
        %v2521 = vadd.f32 %v1889, 1.0
        %v2522 = vadd.f32 %v1891, 1.0
        %v2523 = vadd.f32 %v1893, 1.0
        %v2524 = vadd.f32 %v1895, 1.0
        %v2525 = vadd.f32 %v1897, 1.0
        %v2526 = vadd.f32 %v1899, 1.0
        %v2527 = vadd.f32 %v1901, 1.0
        %v2528 = vadd.f32 %v1903, 1.0
        %v2529 = vadd.f32 %v1905, 1.0
        %v2530 = vadd.f32 %v1907, 1.0
        %v2531 = vadd.f32 %v1909, 1.0
        %v2532 = vadd.f32 %v1911, 1.0
        %v2533 = vadd.f32 %v1913, 1.0
        %v2534 = vadd.f32 %v1915, 1.0
        %v2535 = vadd.f32 %v1917, 1.0
        %v2536 = vadd.f32 %v1919, 1.0
        %v2537 = vadd.f32 %v1921, 1.0
        %v2538 = vadd.f32 %v1923, 1.0
        %v2539 = vadd.f32 %v1925, 1.0
        %v2540 = vadd.f32 %v1927, 1.0
        %v2541 = vadd.f32 %v1929, 1.0
        %v2542 = vadd.f32 %v1931, 1.0
        %v2543 = vadd.f32 %v1933, 1.0
        %v2544 = vadd.f32 %v1935, 1.0
        %v2545 = vadd.f32 %v1937, 1.0
        %v2546 = vadd.f32 %v1939, 1.0
        %v2547 = vadd.f32 %v1941, 1.0
        %v2548 = vadd.f32 %v1943, 1.0
        %v2549 = vadd.f32 %v1945, 1.0
        %v2550 = vadd.f32 %v1947, 1.0
        %v2551 = vadd.f32 %v1949, 1.0
        %v2552 = vadd.f32 %v1951, 1.0
        %v2553 = vadd.f32 %v1953, 1.0
        %v2554 = vadd.f32 %v1955, 1.0
        %v2555 = vadd.f32 %v1957, 1.0
        %v2556 = vadd.f32 %v1959, 1.0
        %v2557 = vadd.f32 %v1961, 1.0
        %v2558 = vadd.f32 %v1963, 1.0
        %v2559 = vadd.f32 %v1965, 1.0
        %v2560 = vadd.f32 %v1967, 1.0
        %v2561 = vadd.f32 %v1969, 1.0
        %v2562 = vadd.f32 %v1971, 1.0
        %v2563 = vadd.f32 %v1973, 1.0
        %v2564 = vadd.f32 %v1975, 1.0
        %v2565 = vadd.f32 %v1977, 1.0
        %v2566 = vadd.f32 %v1979, 1.0
        %v2567 = vadd.f32 %v1981, 1.0
        %v2568 = vadd.f32 %v1983, 1.0
        %v2569 = vadd.f32 %v1985, 1.0
        %v2570 = vadd.f32 %v1987, 1.0
        %v2571 = vadd.f32 %v1989, 1.0
        %v2572 = vadd.f32 %v1991, 1.0
        %v2573 = vadd.f32 %v1993, 1.0
        %v2574 = vadd.f32 %v1995, 1.0
        %v2575 = vadd.f32 %v1997, 1.0
        %v2576 = vadd.f32 %v1999, 1.0
        %v2577 = vadd.f32 %v2001, 1.0
        %v2578 = vadd.f32 %v2003, 1.0
        %v2579 = vadd.f32 %v2005, 1.0
        %v2580 = vadd.f32 %v2007, 1.0
        %v2581 = vadd.f32 %v2009, 1.0
        %v2582 = vadd.f32 %v2011, 1.0
        %v2583 = vadd.f32 %v2013, 1.0
        %v2584 = vadd.f32 %v2015, 1.0
        %v2585 = vadd.f32 %v2017, 1.0
        %v2586 = vadd.f32 %v2019, 1.0
        %v2587 = vadd.f32 %v2021, 1.0
        %v2588 = vadd.f32 %v2023, 1.0
        %v2589 = vadd.f32 %v2025, 1.0
        %v2590 = vadd.f32 %v2027, 1.0
        %v2591 = vadd.f32 %v2029, 1.0
        %v2592 = vadd.f32 %v2031, 1.0
        %v2593 = vadd.f32 %v2033, 1.0
        %v2594 = vadd.f32 %v2035, 1.0
        %v2595 = vadd.f32 %v2037, 1.0
        %v2596 = vadd.f32 %v2039, 1.0
        %v2597 = vadd.f32 %v2041, 1.0
        %v2598 = vadd.f32 %v2043, 1.0
        %v2599 = vadd.f32 %v2045, 1.0
        %v2600 = vadd.f32 %v2047, 1.0
        %v2601 = vadd.f32 %v2049, 1.0
        %v2602 = vadd.f32 %v2051, 1.0
        %v2603 = vadd.f32 %v2053, 1.0
        %v2604 = vadd.f32 %v2055, 1.0
        %v2605 = vadd.f32 %v2057, 1.0
        %v2606 = vadd.f32 %v2059, 1.0
        %v2607 = vadd.f32 %v2061, 1.0
        %v2608 = vadd.f32 %v2063, 1.0
        %v2609 = vadd.f32 %v2065, 1.0
        %v2610 = vadd.f32 %v2067, 1.0
        %v2611 = vadd.f32 %v2069, 1.0
        %v2612 = vadd.f32 %v2071, 1.0
        %v2613 = vadd.f32 %v2073, 1.0
        %v2614 = vadd.f32 %v2075, 1.0
        %v2615 = vadd.f32 %v2077, 1.0
        %v2616 = vadd.f32 %v2079, 1.0
        %v2617 = vadd.f32 %v2081, 1.0
        %v2618 = vadd.f32 %v2083, 1.0
        %v2619 = vadd.f32 %v2085, 1.0
        %v2620 = vadd.f32 %v2087, 1.0
        %v2621 = vadd.f32 %v2089, 1.0
        %v2622 = vadd.f32 %v2091, 1.0
        %v2623 = vadd.f32 %v2093, 1.0
        %v2624 = vadd.f32 %v2095, 1.0
        %v2625 = vadd.f32 %v2097, 1.0
        %v2626 = vadd.f32 %v2099, 1.0
        %v2627 = vadd.f32 %v2101, 1.0
        %v2628 = vadd.f32 %v2103, 1.0
        %v2629 = vadd.f32 %v2105, 1.0
        %v2630 = vadd.f32 %v2107, 1.0
        %v2631 = vadd.f32 %v2109, 1.0
        %v2632 = vadd.f32 %v2111, 1.0
        %v2633 = vadd.f32 %v2113, 1.0
        %v2634 = vadd.f32 %v2115, 1.0
        %v2635 = vadd.f32 %v2117, 1.0
        %v2636 = vadd.f32 %v2119, 1.0
        %v2637 = vadd.f32 %v2121, 1.0
        %v2638 = vadd.f32 %v2123, 1.0
        %v2639 = vadd.f32 %v2125, 1.0
        %v2640 = vadd.f32 %v2127, 1.0
        %v2641 = vadd.f32 %v2129, 1.0
        %v2642 = vadd.f32 %v2131, 1.0
        %v2643 = vadd.f32 %v2133, 1.0
        %v2644 = vadd.f32 %v2135, 1.0
        %v2645 = vadd.f32 %v2137, 1.0
        %v2646 = vadd.f32 %v2139, 1.0
        %v2647 = vadd.f32 %v2141, 1.0
        %v2648 = vadd.f32 %v2143, 1.0
        %v2649 = vadd.f32 %v2145, 1.0
        %v2650 = vadd.f32 %v2147, 1.0
        %v2651 = vadd.f32 %v2149, 1.0
        %v2652 = vadd.f32 %v2151, 1.0
        %v2653 = vadd.f32 %v2153, 1.0
        %v2654 = vadd.f32 %v2155, 1.0
        %v2655 = vadd.f32 %v2157, 1.0
        %v2656 = vadd.f32 %v2159, 1.0
        %v2657 = vadd.f32 %v2161, 1.0
        %v2658 = vadd.f32 %v2163, 1.0
        %v2659 = vadd.f32 %v2165, 1.0
        %v2660 = vadd.f32 %v2167, 1.0
        %v2661 = vadd.f32 %v2169, 1.0
        %v2662 = vadd.f32 %v2171, 1.0
        %v2663 = vadd.f32 %v2173, 1.0
        %v2664 = vadd.f32 %v2175, 1.0
        %v2665 = vadd.f32 %v2177, 1.0
        %v2666 = vadd.f32 %v2179, 1.0
        %v2667 = vadd.f32 %v2181, 1.0
        %v2668 = vadd.f32 %v2183, 1.0
        %v2669 = vadd.f32 %v2185, 1.0
        %v2670 = vadd.f32 %v2187, 1.0
        %v2671 = vadd.f32 %v2189, 1.0
        %v2672 = vadd.f32 %v2191, 1.0
        %v2673 = vadd.f32 %v2193, 1.0
        %v2674 = vadd.f32 %v2195, 1.0
        %v2675 = vadd.f32 %v2197, 1.0
        %v2676 = vadd.f32 %v2199, 1.0
        %v2677 = vadd.f32 %v2201, 1.0
        %v2678 = vadd.f32 %v2203, 1.0
        %v2679 = vadd.f32 %v2205, 1.0
        %v2680 = vadd.f32 %v2207, 1.0
        %v2681 = vadd.f32 %v2209, 1.0
        %v2682 = vadd.f32 %v2211, 1.0
        %v2683 = vadd.f32 %v2213, 1.0
        %v2684 = vadd.f32 %v2215, 1.0
        %v2685 = vadd.f32 %v2217, 1.0
        %v2686 = vadd.f32 %v2219, 1.0
        %v2687 = vadd.f32 %v2221, 1.0
        %v2688 = vadd.f32 %v2223, 1.0
        %v2689 = vadd.f32 %v2225, 1.0
        %v2690 = vadd.f32 %v2227, 1.0
        %v2691 = vadd.f32 %v2229, 1.0
        %v2692 = vadd.f32 %v2231, 1.0
        %v2693 = vadd.f32 %v2233, 1.0
        %v2694 = vadd.f32 %v2235, 1.0
        %v2695 = vadd.f32 %v2237, 1.0
        %v2696 = vadd.f32 %v2239, 1.0
        %v2697 = vadd.f32 %v2241, 1.0
        %v2698 = vadd.f32 %v2243, 1.0
        %v2699 = vadd.f32 %v2245, 1.0
        %v2700 = vadd.f32 %v2247, 1.0
        %v2701 = vadd.f32 %v2249, 1.0
        %v2702 = vadd.f32 %v2251, 1.0
        %v2703 = vadd.f32 %v2253, 1.0
        %v2704 = vadd.f32 %v2255, 1.0
        %v2705 = vadd.f32 %v2257, 1.0
        %v2706 = vadd.f32 %v2259, 1.0
        %v2707 = vadd.f32 %v2261, 1.0
        %v2708 = vadd.f32 %v2263, 1.0
        %v2709 = vadd.f32 %v2265, 1.0
        %v2710 = vadd.f32 %v2267, 1.0
        %v2711 = vadd.f32 %v2269, 1.0
        %v2712 = vadd.f32 %v2271, 1.0
        %v2713 = vadd.f32 %v2273, 1.0
        %v2714 = vadd.f32 %v2275, 1.0
        %v2715 = vadd.f32 %v2277, 1.0
        %v2716 = vadd.f32 %v2279, 1.0
        %v2717 = vadd.f32 %v2281, 1.0
        %v2718 = vadd.f32 %v2283, 1.0
        %v2719 = vadd.f32 %v2285, 1.0
        %v2720 = vadd.f32 %v2287, 1.0
        %v2721 = vadd.f32 %v2289, 1.0
        %v2722 = vadd.f32 %v2291, 1.0
        %v2723 = vadd.f32 %v2293, 1.0
        %v2724 = vadd.f32 %v2295, 1.0
        %v2725 = vadd.f32 %v2297, 1.0
        %v2726 = vadd.f32 %v2299, 1.0
        %v2727 = vadd.f32 %v2301, 1.0
        %v2728 = vadd.f32 %v2303, 1.0
        %v2729 = vadd.f32 %v2305, 1.0
        %v2730 = vadd.f32 %v2307, 1.0
        %v2731 = vadd.f32 %v2309, 1.0
        %v2732 = vadd.f32 %v2311, 1.0
        %v2733 = vadd.f32 %v2313, 1.0
        %v2734 = vadd.f32 %v2315, 1.0
        %v2735 = vadd.f32 %v2317, 1.0
        %v2736 = vadd.f32 %v2319, 1.0
        %v2737 = vadd.f32 %v2321, 1.0
        %v2738 = vadd.f32 %v2323, 1.0
        %v2739 = vadd.f32 %v2325, 1.0
        %v2740 = vadd.f32 %v2327, 1.0
        %v2741 = vadd.f32 %v2329, 1.0
        %v2742 = vadd.f32 %v2331, 1.0
        %v2743 = vadd.f32 %v2333, 1.0
        %v2744 = vadd.f32 %v2335, 1.0
        %v2745 = vadd.f32 %v2337, 1.0
        %v2746 = vadd.f32 %v2339, 1.0
        %v2747 = vadd.f32 %v2341, 1.0
        %v2748 = vadd.f32 %v2343, 1.0
        %v2749 = vadd.f32 %v2345, 1.0
        %v2750 = vadd.f32 %v2347, 1.0
        %v2751 = vadd.f32 %v2349, 1.0
        %v2752 = vadd.f32 %v2351, 1.0
        %v2753 = vadd.f32 %v2353, 1.0
        %v2754 = vadd.f32 %v2355, 1.0
        %v2755 = vadd.f32 %v2357, 1.0
        %v2756 = vadd.f32 %v2359, 1.0
        %v2757 = vadd.f32 %v2361, 1.0
        %v2758 = vadd.f32 %v2363, 1.0
        %v2759 = vadd.f32 %v2365, 1.0
        %v2760 = vadd.f32 %v2367, 1.0
        %v2761 = vadd.f32 %v2369, 1.0
        %v2762 = vadd.f32 %v2371, 1.0
        %v2763 = vadd.f32 %v2373, 1.0
        %v2764 = vadd.f32 %v2375, 1.0
        %v2765 = vadd.f32 %v2377, 1.0
        %v2766 = vadd.f32 %v2379, 1.0
        %v2767 = vadd.f32 %v2381, 1.0
        %v2768 = vadd.f32 %v2383, 1.0
        %v2769 = vadd.f32 %v2385, 1.0
        %v2770 = vadd.f32 %v2387, 1.0
        %v2771 = vadd.f32 %v2389, 1.0
        %v2772 = vadd.f32 %v2391, 1.0
        %v2773 = vadd.f32 %v2393, 1.0
        %v2774 = vadd.f32 %v2395, 1.0
        %v2775 = vadd.f32 %v2397, 1.0
        %v2776 = vadd.f32 %v2399, 1.0
        %v2777 = vadd.f32 %v2401, 1.0
        %v2778 = vadd.f32 %v2403, 1.0
        %v2779 = vadd.f32 %v2405, 1.0
        %v2780 = vadd.f32 %v2407, 1.0
        %v2781 = vadd.f32 %v2409, 1.0
        %v2782 = vadd.f32 %v2411, 1.0
        %v2783 = vadd.f32 %v2413, 1.0
        %v2784 = vadd.f32 %v2415, 1.0
        %v2785 = vadd.f32 %v2417, 1.0
        %v2786 = vadd.f32 %v2419, 1.0
        %v2787 = vadd.f32 %v2421, 1.0
        %v2788 = vadd.f32 %v2423, 1.0
        %v2789 = vadd.f32 %v2425, 1.0
        %v2790 = vadd.f32 %v2427, 1.0
        %v2791 = vadd.f32 %v2429, 1.0
        %v2792 = vadd.f32 %v2431, 1.0
        %v2793 = vadd.f32 %v2433, 1.0
        %v2794 = vadd.f32 %v2435, 1.0
        %v2795 = vadd.f32 %v2437, 1.0
        %v2796 = vadd.f32 %v2439, 1.0
        %v2797 = vadd.f32 %v2441, 1.0
        %v2798 = vadd.f32 %v2443, 1.0
        %v2799 = vadd.f32 %v2445, 1.0
        %v2800 = vadd.f32 %v2447, 1.0
        %v2801 = vadd.f32 %v2449, 1.0
        %v2802 = vadd.f32 %v2451, 1.0
        %v2803 = vadd.f32 %v2453, 1.0
        %v2804 = vadd.f32 %v2455, 1.0
        %v2805 = vadd.f32 %v2457, 1.0
        %v2806 = vadd.f32 %v2459, 1.0
        %v2807 = vadd.f32 %v2461, 1.0
        %v2808 = vadd.f32 %v2463, 1.0
        %v2809 = vadd.f32 %v2465, 1.0
        %v2810 = vadd.f32 %v2467, 1.0
        %v2811 = vadd.f32 %v2469, 1.0
        %v2812 = vadd.f32 %v2471, 1.0
        %v2813 = vadd.f32 %v2473, 1.0
        %v2814 = vadd.f32 %v2475, 1.0
        %v2815 = vadd.f32 %v2477, 1.0
        %v2816 = vadd.f32 %v2479, 1.0
        %v2817 = vadd.f32 %v2481, 1.0
        %v2818 = vadd.f32 %v2483, 1.0
        %v2819 = vadd.f32 %v2485, 1.0
        %v2820 = vadd.f32 %v2487, 1.0
        %v2821 = vadd.f32 %v2489, 1.0
        %v2822 = vadd.f32 %v2491, 1.0
        %v2823 = vadd.f32 %v2493, 1.0
        %v2824 = vadd.f32 %v2495, 1.0
        %v2825 = vadd.f32 %v2497, 1.0
        %v2826 = vadd.f32 %v2499, 1.0
        %v2827 = vadd.f32 %v2501, 1.0
        %v2828 = vadd.f32 %v2503, 1.0
        %v2829 = vadd.f32 %v2505, 1.0
        %v2830 = vadd.f32 %v2507, 1.0
        %v2831 = vadd.f32 %v2509, 1.0
        %v2832 = vadd.f32 %v2511, 1.0
        %v2833 = vadd.f32 %v2513, 1.0
        %v2834 = vrcp.pop %v2514
        %v2835 = vmul.f32 %v2514, %v2834
        %v2836 = vsub.f32 1.0, %v2835
        %v2837 = vmul.f32 %v2834, %v2836
        %v2838 = vadd.f32 %v2834, %v2837
        %vm2839 = vweird.f32 %v2514
        %vm2840 = vweird.f32 %v2834
        %vm2841 = vmor %vm2839, %vm2840
        %v2842 = vsel %vm2841, %v2834, %v2838
        %v2843 = vand.u32 2147483647, %v2514
        %vm2844 = vcmp.eq.f32.partialorder %v2843, 8.507059e+37
        %v2845 = vand.u32 %v2514, 2147483648
        %v2846 = vor.u32 1.1754944e-38, %v2845
        %v2847 = vsel %vm2844, %v2846, %v2842
        %v2848 = vmul.f32 1.0, %v2847
        %v2849 = vrcp.pop %v2515
        %v2850 = vmul.f32 %v2515, %v2849
        %v2851 = vsub.f32 1.0, %v2850
        %v2852 = vmul.f32 %v2849, %v2851
        %v2853 = vadd.f32 %v2849, %v2852
        %vm2854 = vweird.f32 %v2515
        %vm2855 = vweird.f32 %v2849
        %vm2856 = vmor %vm2854, %vm2855
        %v2857 = vsel %vm2856, %v2849, %v2853
        %v2858 = vand.u32 2147483647, %v2515
        %vm2859 = vcmp.eq.f32.partialorder %v2858, 8.507059e+37
        %v2860 = vand.u32 %v2515, 2147483648
        %v2861 = vor.u32 1.1754944e-38, %v2860
        %v2862 = vsel %vm2859, %v2861, %v2857
        %v2863 = vmul.f32 1.0, %v2862
        %v2864 = vrcp.pop %v2516
        %v2865 = vmul.f32 %v2516, %v2864
        %v2866 = vsub.f32 1.0, %v2865
        %v2867 = vmul.f32 %v2864, %v2866
        %v2868 = vadd.f32 %v2864, %v2867
        %vm2869 = vweird.f32 %v2516
        %vm2870 = vweird.f32 %v2864
        %vm2871 = vmor %vm2869, %vm2870
        %v2872 = vsel %vm2871, %v2864, %v2868
        %v2873 = vand.u32 2147483647, %v2516
        %vm2874 = vcmp.eq.f32.partialorder %v2873, 8.507059e+37
        %v2875 = vand.u32 %v2516, 2147483648
        %v2876 = vor.u32 1.1754944e-38, %v2875
        %v2877 = vsel %vm2874, %v2876, %v2872
        %v2878 = vmul.f32 1.0, %v2877
        %v2879 = vrcp.pop %v2517
        %v2880 = vmul.f32 %v2517, %v2879
        %v2881 = vsub.f32 1.0, %v2880
        %v2882 = vmul.f32 %v2879, %v2881
        %v2883 = vadd.f32 %v2879, %v2882
        %vm2884 = vweird.f32 %v2517
        %vm2885 = vweird.f32 %v2879
        %vm2886 = vmor %vm2884, %vm2885
        %v2887 = vsel %vm2886, %v2879, %v2883
        %v2888 = vand.u32 2147483647, %v2517
        %vm2889 = vcmp.eq.f32.partialorder %v2888, 8.507059e+37
        %v2890 = vand.u32 %v2517, 2147483648
        %v2891 = vor.u32 1.1754944e-38, %v2890
        %v2892 = vsel %vm2889, %v2891, %v2887
        %v2893 = vmul.f32 1.0, %v2892
        %v2894 = vrcp.pop %v2518
        %v2895 = vmul.f32 %v2518, %v2894
        %v2896 = vsub.f32 1.0, %v2895
        %v2897 = vmul.f32 %v2894, %v2896
        %v2898 = vadd.f32 %v2894, %v2897
        %vm2899 = vweird.f32 %v2518
        %vm2900 = vweird.f32 %v2894
        %vm2901 = vmor %vm2899, %vm2900
        %v2902 = vsel %vm2901, %v2894, %v2898
        %v2903 = vand.u32 2147483647, %v2518
        %vm2904 = vcmp.eq.f32.partialorder %v2903, 8.507059e+37
        %v2905 = vand.u32 %v2518, 2147483648
        %v2906 = vor.u32 1.1754944e-38, %v2905
        %v2907 = vsel %vm2904, %v2906, %v2902
        %v2908 = vmul.f32 1.0, %v2907
        %v2909 = vrcp.pop %v2519
        %v2910 = vmul.f32 %v2519, %v2909
        %v2911 = vsub.f32 1.0, %v2910
        %v2912 = vmul.f32 %v2909, %v2911
        %v2913 = vadd.f32 %v2909, %v2912
        %vm2914 = vweird.f32 %v2519
        %vm2915 = vweird.f32 %v2909
        %vm2916 = vmor %vm2914, %vm2915
        %v2917 = vsel %vm2916, %v2909, %v2913
        %v2918 = vand.u32 2147483647, %v2519
        %vm2919 = vcmp.eq.f32.partialorder %v2918, 8.507059e+37
        %v2920 = vand.u32 %v2519, 2147483648
        %v2921 = vor.u32 1.1754944e-38, %v2920
        %v2922 = vsel %vm2919, %v2921, %v2917
        %v2923 = vmul.f32 1.0, %v2922
        %v2924 = vrcp.pop %v2520
        %v2925 = vmul.f32 %v2520, %v2924
        %v2926 = vsub.f32 1.0, %v2925
        %v2927 = vmul.f32 %v2924, %v2926
        %v2928 = vadd.f32 %v2924, %v2927
        %vm2929 = vweird.f32 %v2520
        %vm2930 = vweird.f32 %v2924
        %vm2931 = vmor %vm2929, %vm2930
        %v2932 = vsel %vm2931, %v2924, %v2928
        %v2933 = vand.u32 2147483647, %v2520
        %vm2934 = vcmp.eq.f32.partialorder %v2933, 8.507059e+37
        %v2935 = vand.u32 %v2520, 2147483648
        %v2936 = vor.u32 1.1754944e-38, %v2935
        %v2937 = vsel %vm2934, %v2936, %v2932
        %v2938 = vmul.f32 1.0, %v2937
        %v2939 = vrcp.pop %v2521
        %v2940 = vmul.f32 %v2521, %v2939
        %v2941 = vsub.f32 1.0, %v2940
        %v2942 = vmul.f32 %v2939, %v2941
        %v2943 = vadd.f32 %v2939, %v2942
        %vm2944 = vweird.f32 %v2521
        %vm2945 = vweird.f32 %v2939
        %vm2946 = vmor %vm2944, %vm2945
        %v2947 = vsel %vm2946, %v2939, %v2943
        %v2948 = vand.u32 2147483647, %v2521
        %vm2949 = vcmp.eq.f32.partialorder %v2948, 8.507059e+37
        %v2950 = vand.u32 %v2521, 2147483648
        %v2951 = vor.u32 1.1754944e-38, %v2950
        %v2952 = vsel %vm2949, %v2951, %v2947
        %v2953 = vmul.f32 1.0, %v2952
        %v2954 = vrcp.pop %v2522
        %v2955 = vmul.f32 %v2522, %v2954
        %v2956 = vsub.f32 1.0, %v2955
        %v2957 = vmul.f32 %v2954, %v2956
        %v2958 = vadd.f32 %v2954, %v2957
        %vm2959 = vweird.f32 %v2522
        %vm2960 = vweird.f32 %v2954
        %vm2961 = vmor %vm2959, %vm2960
        %v2962 = vsel %vm2961, %v2954, %v2958
        %v2963 = vand.u32 2147483647, %v2522
        %vm2964 = vcmp.eq.f32.partialorder %v2963, 8.507059e+37
        %v2965 = vand.u32 %v2522, 2147483648
        %v2966 = vor.u32 1.1754944e-38, %v2965
        %v2967 = vsel %vm2964, %v2966, %v2962
        %v2968 = vmul.f32 1.0, %v2967
        %v2969 = vrcp.pop %v2523
        %v2970 = vmul.f32 %v2523, %v2969
        %v2971 = vsub.f32 1.0, %v2970
        %v2972 = vmul.f32 %v2969, %v2971
        %v2973 = vadd.f32 %v2969, %v2972
        %vm2974 = vweird.f32 %v2523
        %vm2975 = vweird.f32 %v2969
        %vm2976 = vmor %vm2974, %vm2975
        %v2977 = vsel %vm2976, %v2969, %v2973
        %v2978 = vand.u32 2147483647, %v2523
        %vm2979 = vcmp.eq.f32.partialorder %v2978, 8.507059e+37
        %v2980 = vand.u32 %v2523, 2147483648
        %v2981 = vor.u32 1.1754944e-38, %v2980
        %v2982 = vsel %vm2979, %v2981, %v2977
        %v2983 = vmul.f32 1.0, %v2982
        %v2984 = vrcp.pop %v2524
        %v2985 = vmul.f32 %v2524, %v2984
        %v2986 = vsub.f32 1.0, %v2985
        %v2987 = vmul.f32 %v2984, %v2986
        %v2988 = vadd.f32 %v2984, %v2987
        %vm2989 = vweird.f32 %v2524
        %vm2990 = vweird.f32 %v2984
        %vm2991 = vmor %vm2989, %vm2990
        %v2992 = vsel %vm2991, %v2984, %v2988
        %v2993 = vand.u32 2147483647, %v2524
        %vm2994 = vcmp.eq.f32.partialorder %v2993, 8.507059e+37
        %v2995 = vand.u32 %v2524, 2147483648
        %v2996 = vor.u32 1.1754944e-38, %v2995
        %v2997 = vsel %vm2994, %v2996, %v2992
        %v2998 = vmul.f32 1.0, %v2997
        %v2999 = vrcp.pop %v2525
        %v3000 = vmul.f32 %v2525, %v2999
        %v3001 = vsub.f32 1.0, %v3000
        %v3002 = vmul.f32 %v2999, %v3001
        %v3003 = vadd.f32 %v2999, %v3002
        %vm3004 = vweird.f32 %v2525
        %vm3005 = vweird.f32 %v2999
        %vm3006 = vmor %vm3004, %vm3005
        %v3007 = vsel %vm3006, %v2999, %v3003
        %v3008 = vand.u32 2147483647, %v2525
        %vm3009 = vcmp.eq.f32.partialorder %v3008, 8.507059e+37
        %v3010 = vand.u32 %v2525, 2147483648
        %v3011 = vor.u32 1.1754944e-38, %v3010
        %v3012 = vsel %vm3009, %v3011, %v3007
        %v3013 = vmul.f32 1.0, %v3012
        %v3014 = vrcp.pop %v2526
        %v3015 = vmul.f32 %v2526, %v3014
        %v3016 = vsub.f32 1.0, %v3015
        %v3017 = vmul.f32 %v3014, %v3016
        %v3018 = vadd.f32 %v3014, %v3017
        %vm3019 = vweird.f32 %v2526
        %vm3020 = vweird.f32 %v3014
        %vm3021 = vmor %vm3019, %vm3020
        %v3022 = vsel %vm3021, %v3014, %v3018
        %v3023 = vand.u32 2147483647, %v2526
        %vm3024 = vcmp.eq.f32.partialorder %v3023, 8.507059e+37
        %v3025 = vand.u32 %v2526, 2147483648
        %v3026 = vor.u32 1.1754944e-38, %v3025
        %v3027 = vsel %vm3024, %v3026, %v3022
        %v3028 = vmul.f32 1.0, %v3027
        %v3029 = vrcp.pop %v2527
        %v3030 = vmul.f32 %v2527, %v3029
        %v3031 = vsub.f32 1.0, %v3030
        %v3032 = vmul.f32 %v3029, %v3031
        %v3033 = vadd.f32 %v3029, %v3032
        %vm3034 = vweird.f32 %v2527
        %vm3035 = vweird.f32 %v3029
        %vm3036 = vmor %vm3034, %vm3035
        %v3037 = vsel %vm3036, %v3029, %v3033
        %v3038 = vand.u32 2147483647, %v2527
        %vm3039 = vcmp.eq.f32.partialorder %v3038, 8.507059e+37
        %v3040 = vand.u32 %v2527, 2147483648
        %v3041 = vor.u32 1.1754944e-38, %v3040
        %v3042 = vsel %vm3039, %v3041, %v3037
        %v3043 = vmul.f32 1.0, %v3042
        %v3044 = vrcp.pop %v2528
        %v3045 = vmul.f32 %v2528, %v3044
        %v3046 = vsub.f32 1.0, %v3045
        %v3047 = vmul.f32 %v3044, %v3046
        %v3048 = vadd.f32 %v3044, %v3047
        %vm3049 = vweird.f32 %v2528
        %vm3050 = vweird.f32 %v3044
        %vm3051 = vmor %vm3049, %vm3050
        %v3052 = vsel %vm3051, %v3044, %v3048
        %v3053 = vand.u32 2147483647, %v2528
        %vm3054 = vcmp.eq.f32.partialorder %v3053, 8.507059e+37
        %v3055 = vand.u32 %v2528, 2147483648
        %v3056 = vor.u32 1.1754944e-38, %v3055
        %v3057 = vsel %vm3054, %v3056, %v3052
        %v3058 = vmul.f32 1.0, %v3057
        %v3059 = vrcp.pop %v2529
        %v3060 = vmul.f32 %v2529, %v3059
        %v3061 = vsub.f32 1.0, %v3060
        %v3062 = vmul.f32 %v3059, %v3061
        %v3063 = vadd.f32 %v3059, %v3062
        %vm3064 = vweird.f32 %v2529
        %vm3065 = vweird.f32 %v3059
        %vm3066 = vmor %vm3064, %vm3065
        %v3067 = vsel %vm3066, %v3059, %v3063
        %v3068 = vand.u32 2147483647, %v2529
        %vm3069 = vcmp.eq.f32.partialorder %v3068, 8.507059e+37
        %v3070 = vand.u32 %v2529, 2147483648
        %v3071 = vor.u32 1.1754944e-38, %v3070
        %v3072 = vsel %vm3069, %v3071, %v3067
        %v3073 = vmul.f32 1.0, %v3072
        %v3074 = vrcp.pop %v2530
        %v3075 = vmul.f32 %v2530, %v3074
        %v3076 = vsub.f32 1.0, %v3075
        %v3077 = vmul.f32 %v3074, %v3076
        %v3078 = vadd.f32 %v3074, %v3077
        %vm3079 = vweird.f32 %v2530
        %vm3080 = vweird.f32 %v3074
        %vm3081 = vmor %vm3079, %vm3080
        %v3082 = vsel %vm3081, %v3074, %v3078
        %v3083 = vand.u32 2147483647, %v2530
        %vm3084 = vcmp.eq.f32.partialorder %v3083, 8.507059e+37
        %v3085 = vand.u32 %v2530, 2147483648
        %v3086 = vor.u32 1.1754944e-38, %v3085
        %v3087 = vsel %vm3084, %v3086, %v3082
        %v3088 = vmul.f32 1.0, %v3087
        %v3089 = vrcp.pop %v2531
        %v3090 = vmul.f32 %v2531, %v3089
        %v3091 = vsub.f32 1.0, %v3090
        %v3092 = vmul.f32 %v3089, %v3091
        %v3093 = vadd.f32 %v3089, %v3092
        %vm3094 = vweird.f32 %v2531
        %vm3095 = vweird.f32 %v3089
        %vm3096 = vmor %vm3094, %vm3095
        %v3097 = vsel %vm3096, %v3089, %v3093
        %v3098 = vand.u32 2147483647, %v2531
        %vm3099 = vcmp.eq.f32.partialorder %v3098, 8.507059e+37
        %v3100 = vand.u32 %v2531, 2147483648
        %v3101 = vor.u32 1.1754944e-38, %v3100
        %v3102 = vsel %vm3099, %v3101, %v3097
        %v3103 = vmul.f32 1.0, %v3102
        %v3104 = vrcp.pop %v2532
        %v3105 = vmul.f32 %v2532, %v3104
        %v3106 = vsub.f32 1.0, %v3105
        %v3107 = vmul.f32 %v3104, %v3106
        %v3108 = vadd.f32 %v3104, %v3107
        %vm3109 = vweird.f32 %v2532
        %vm3110 = vweird.f32 %v3104
        %vm3111 = vmor %vm3109, %vm3110
        %v3112 = vsel %vm3111, %v3104, %v3108
        %v3113 = vand.u32 2147483647, %v2532
        %vm3114 = vcmp.eq.f32.partialorder %v3113, 8.507059e+37
        %v3115 = vand.u32 %v2532, 2147483648
        %v3116 = vor.u32 1.1754944e-38, %v3115
        %v3117 = vsel %vm3114, %v3116, %v3112
        %v3118 = vmul.f32 1.0, %v3117
        %v3119 = vrcp.pop %v2533
        %v3120 = vmul.f32 %v2533, %v3119
        %v3121 = vsub.f32 1.0, %v3120
        %v3122 = vmul.f32 %v3119, %v3121
        %v3123 = vadd.f32 %v3119, %v3122
        %vm3124 = vweird.f32 %v2533
        %vm3125 = vweird.f32 %v3119
        %vm3126 = vmor %vm3124, %vm3125
        %v3127 = vsel %vm3126, %v3119, %v3123
        %v3128 = vand.u32 2147483647, %v2533
        %vm3129 = vcmp.eq.f32.partialorder %v3128, 8.507059e+37
        %v3130 = vand.u32 %v2533, 2147483648
        %v3131 = vor.u32 1.1754944e-38, %v3130
        %v3132 = vsel %vm3129, %v3131, %v3127
        %v3133 = vmul.f32 1.0, %v3132
        %v3134 = vrcp.pop %v2534
        %v3135 = vmul.f32 %v2534, %v3134
        %v3136 = vsub.f32 1.0, %v3135
        %v3137 = vmul.f32 %v3134, %v3136
        %v3138 = vadd.f32 %v3134, %v3137
        %vm3139 = vweird.f32 %v2534
        %vm3140 = vweird.f32 %v3134
        %vm3141 = vmor %vm3139, %vm3140
        %v3142 = vsel %vm3141, %v3134, %v3138
        %v3143 = vand.u32 2147483647, %v2534
        %vm3144 = vcmp.eq.f32.partialorder %v3143, 8.507059e+37
        %v3145 = vand.u32 %v2534, 2147483648
        %v3146 = vor.u32 1.1754944e-38, %v3145
        %v3147 = vsel %vm3144, %v3146, %v3142
        %v3148 = vmul.f32 1.0, %v3147
        %v3149 = vrcp.pop %v2535
        %v3150 = vmul.f32 %v2535, %v3149
        %v3151 = vsub.f32 1.0, %v3150
        %v3152 = vmul.f32 %v3149, %v3151
        %v3153 = vadd.f32 %v3149, %v3152
        %vm3154 = vweird.f32 %v2535
        %vm3155 = vweird.f32 %v3149
        %vm3156 = vmor %vm3154, %vm3155
        %v3157 = vsel %vm3156, %v3149, %v3153
        %v3158 = vand.u32 2147483647, %v2535
        %vm3159 = vcmp.eq.f32.partialorder %v3158, 8.507059e+37
        %v3160 = vand.u32 %v2535, 2147483648
        %v3161 = vor.u32 1.1754944e-38, %v3160
        %v3162 = vsel %vm3159, %v3161, %v3157
        %v3163 = vmul.f32 1.0, %v3162
        %v3164 = vrcp.pop %v2536
        %v3165 = vmul.f32 %v2536, %v3164
        %v3166 = vsub.f32 1.0, %v3165
        %v3167 = vmul.f32 %v3164, %v3166
        %v3168 = vadd.f32 %v3164, %v3167
        %vm3169 = vweird.f32 %v2536
        %vm3170 = vweird.f32 %v3164
        %vm3171 = vmor %vm3169, %vm3170
        %v3172 = vsel %vm3171, %v3164, %v3168
        %v3173 = vand.u32 2147483647, %v2536
        %vm3174 = vcmp.eq.f32.partialorder %v3173, 8.507059e+37
        %v3175 = vand.u32 %v2536, 2147483648
        %v3176 = vor.u32 1.1754944e-38, %v3175
        %v3177 = vsel %vm3174, %v3176, %v3172
        %v3178 = vmul.f32 1.0, %v3177
        %v3179 = vrcp.pop %v2537
        %v3180 = vmul.f32 %v2537, %v3179
        %v3181 = vsub.f32 1.0, %v3180
        %v3182 = vmul.f32 %v3179, %v3181
        %v3183 = vadd.f32 %v3179, %v3182
        %vm3184 = vweird.f32 %v2537
        %vm3185 = vweird.f32 %v3179
        %vm3186 = vmor %vm3184, %vm3185
        %v3187 = vsel %vm3186, %v3179, %v3183
        %v3188 = vand.u32 2147483647, %v2537
        %vm3189 = vcmp.eq.f32.partialorder %v3188, 8.507059e+37
        %v3190 = vand.u32 %v2537, 2147483648
        %v3191 = vor.u32 1.1754944e-38, %v3190
        %v3192 = vsel %vm3189, %v3191, %v3187
        %v3193 = vmul.f32 1.0, %v3192
        %v3194 = vrcp.pop %v2538
        %v3195 = vmul.f32 %v2538, %v3194
        %v3196 = vsub.f32 1.0, %v3195
        %v3197 = vmul.f32 %v3194, %v3196
        %v3198 = vadd.f32 %v3194, %v3197
        %vm3199 = vweird.f32 %v2538
        %vm3200 = vweird.f32 %v3194
        %vm3201 = vmor %vm3199, %vm3200
        %v3202 = vsel %vm3201, %v3194, %v3198
        %v3203 = vand.u32 2147483647, %v2538
        %vm3204 = vcmp.eq.f32.partialorder %v3203, 8.507059e+37
        %v3205 = vand.u32 %v2538, 2147483648
        %v3206 = vor.u32 1.1754944e-38, %v3205
        %v3207 = vsel %vm3204, %v3206, %v3202
        %v3208 = vmul.f32 1.0, %v3207
        %v3209 = vrcp.pop %v2539
        %v3210 = vmul.f32 %v2539, %v3209
        %v3211 = vsub.f32 1.0, %v3210
        %v3212 = vmul.f32 %v3209, %v3211
        %v3213 = vadd.f32 %v3209, %v3212
        %vm3214 = vweird.f32 %v2539
        %vm3215 = vweird.f32 %v3209
        %vm3216 = vmor %vm3214, %vm3215
        %v3217 = vsel %vm3216, %v3209, %v3213
        %v3218 = vand.u32 2147483647, %v2539
        %vm3219 = vcmp.eq.f32.partialorder %v3218, 8.507059e+37
        %v3220 = vand.u32 %v2539, 2147483648
        %v3221 = vor.u32 1.1754944e-38, %v3220
        %v3222 = vsel %vm3219, %v3221, %v3217
        %v3223 = vmul.f32 1.0, %v3222
        %v3224 = vrcp.pop %v2540
        %v3225 = vmul.f32 %v2540, %v3224
        %v3226 = vsub.f32 1.0, %v3225
        %v3227 = vmul.f32 %v3224, %v3226
        %v3228 = vadd.f32 %v3224, %v3227
        %vm3229 = vweird.f32 %v2540
        %vm3230 = vweird.f32 %v3224
        %vm3231 = vmor %vm3229, %vm3230
        %v3232 = vsel %vm3231, %v3224, %v3228
        %v3233 = vand.u32 2147483647, %v2540
        %vm3234 = vcmp.eq.f32.partialorder %v3233, 8.507059e+37
        %v3235 = vand.u32 %v2540, 2147483648
        %v3236 = vor.u32 1.1754944e-38, %v3235
        %v3237 = vsel %vm3234, %v3236, %v3232
        %v3238 = vmul.f32 1.0, %v3237
        %v3239 = vrcp.pop %v2541
        %v3240 = vmul.f32 %v2541, %v3239
        %v3241 = vsub.f32 1.0, %v3240
        %v3242 = vmul.f32 %v3239, %v3241
        %v3243 = vadd.f32 %v3239, %v3242
        %vm3244 = vweird.f32 %v2541
        %vm3245 = vweird.f32 %v3239
        %vm3246 = vmor %vm3244, %vm3245
        %v3247 = vsel %vm3246, %v3239, %v3243
        %v3248 = vand.u32 2147483647, %v2541
        %vm3249 = vcmp.eq.f32.partialorder %v3248, 8.507059e+37
        %v3250 = vand.u32 %v2541, 2147483648
        %v3251 = vor.u32 1.1754944e-38, %v3250
        %v3252 = vsel %vm3249, %v3251, %v3247
        %v3253 = vmul.f32 1.0, %v3252
        %v3254 = vrcp.pop %v2542
        %v3255 = vmul.f32 %v2542, %v3254
        %v3256 = vsub.f32 1.0, %v3255
        %v3257 = vmul.f32 %v3254, %v3256
        %v3258 = vadd.f32 %v3254, %v3257
        %vm3259 = vweird.f32 %v2542
        %vm3260 = vweird.f32 %v3254
        %vm3261 = vmor %vm3259, %vm3260
        %v3262 = vsel %vm3261, %v3254, %v3258
        %v3263 = vand.u32 2147483647, %v2542
        %vm3264 = vcmp.eq.f32.partialorder %v3263, 8.507059e+37
        %v3265 = vand.u32 %v2542, 2147483648
        %v3266 = vor.u32 1.1754944e-38, %v3265
        %v3267 = vsel %vm3264, %v3266, %v3262
        %v3268 = vmul.f32 1.0, %v3267
        %v3269 = vrcp.pop %v2543
        %v3270 = vmul.f32 %v2543, %v3269
        %v3271 = vsub.f32 1.0, %v3270
        %v3272 = vmul.f32 %v3269, %v3271
        %v3273 = vadd.f32 %v3269, %v3272
        %vm3274 = vweird.f32 %v2543
        %vm3275 = vweird.f32 %v3269
        %vm3276 = vmor %vm3274, %vm3275
        %v3277 = vsel %vm3276, %v3269, %v3273
        %v3278 = vand.u32 2147483647, %v2543
        %vm3279 = vcmp.eq.f32.partialorder %v3278, 8.507059e+37
        %v3280 = vand.u32 %v2543, 2147483648
        %v3281 = vor.u32 1.1754944e-38, %v3280
        %v3282 = vsel %vm3279, %v3281, %v3277
        %v3283 = vmul.f32 1.0, %v3282
        %v3284 = vrcp.pop %v2544
        %v3285 = vmul.f32 %v2544, %v3284
        %v3286 = vsub.f32 1.0, %v3285
        %v3287 = vmul.f32 %v3284, %v3286
        %v3288 = vadd.f32 %v3284, %v3287
        %vm3289 = vweird.f32 %v2544
        %vm3290 = vweird.f32 %v3284
        %vm3291 = vmor %vm3289, %vm3290
        %v3292 = vsel %vm3291, %v3284, %v3288
        %v3293 = vand.u32 2147483647, %v2544
        %vm3294 = vcmp.eq.f32.partialorder %v3293, 8.507059e+37
        %v3295 = vand.u32 %v2544, 2147483648
        %v3296 = vor.u32 1.1754944e-38, %v3295
        %v3297 = vsel %vm3294, %v3296, %v3292
        %v3298 = vmul.f32 1.0, %v3297
        %v3299 = vrcp.pop %v2545
        %v3300 = vmul.f32 %v2545, %v3299
        %v3301 = vsub.f32 1.0, %v3300
        %v3302 = vmul.f32 %v3299, %v3301
        %v3303 = vadd.f32 %v3299, %v3302
        %vm3304 = vweird.f32 %v2545
        %vm3305 = vweird.f32 %v3299
        %vm3306 = vmor %vm3304, %vm3305
        %v3307 = vsel %vm3306, %v3299, %v3303
        %v3308 = vand.u32 2147483647, %v2545
        %vm3309 = vcmp.eq.f32.partialorder %v3308, 8.507059e+37
        %v3310 = vand.u32 %v2545, 2147483648
        %v3311 = vor.u32 1.1754944e-38, %v3310
        %v3312 = vsel %vm3309, %v3311, %v3307
        %v3313 = vmul.f32 1.0, %v3312
        %v3314 = vrcp.pop %v2546
        %v3315 = vmul.f32 %v2546, %v3314
        %v3316 = vsub.f32 1.0, %v3315
        %v3317 = vmul.f32 %v3314, %v3316
        %v3318 = vadd.f32 %v3314, %v3317
        %vm3319 = vweird.f32 %v2546
        %vm3320 = vweird.f32 %v3314
        %vm3321 = vmor %vm3319, %vm3320
        %v3322 = vsel %vm3321, %v3314, %v3318
        %v3323 = vand.u32 2147483647, %v2546
        %vm3324 = vcmp.eq.f32.partialorder %v3323, 8.507059e+37
        %v3325 = vand.u32 %v2546, 2147483648
        %v3326 = vor.u32 1.1754944e-38, %v3325
        %v3327 = vsel %vm3324, %v3326, %v3322
        %v3328 = vmul.f32 1.0, %v3327
        %v3329 = vrcp.pop %v2547
        %v3330 = vmul.f32 %v2547, %v3329
        %v3331 = vsub.f32 1.0, %v3330
        %v3332 = vmul.f32 %v3329, %v3331
        %v3333 = vadd.f32 %v3329, %v3332
        %vm3334 = vweird.f32 %v2547
        %vm3335 = vweird.f32 %v3329
        %vm3336 = vmor %vm3334, %vm3335
        %v3337 = vsel %vm3336, %v3329, %v3333
        %v3338 = vand.u32 2147483647, %v2547
        %vm3339 = vcmp.eq.f32.partialorder %v3338, 8.507059e+37
        %v3340 = vand.u32 %v2547, 2147483648
        %v3341 = vor.u32 1.1754944e-38, %v3340
        %v3342 = vsel %vm3339, %v3341, %v3337
        %v3343 = vmul.f32 1.0, %v3342
        %v3344 = vrcp.pop %v2548
        %v3345 = vmul.f32 %v2548, %v3344
        %v3346 = vsub.f32 1.0, %v3345
        %v3347 = vmul.f32 %v3344, %v3346
        %v3348 = vadd.f32 %v3344, %v3347
        %vm3349 = vweird.f32 %v2548
        %vm3350 = vweird.f32 %v3344
        %vm3351 = vmor %vm3349, %vm3350
        %v3352 = vsel %vm3351, %v3344, %v3348
        %v3353 = vand.u32 2147483647, %v2548
        %vm3354 = vcmp.eq.f32.partialorder %v3353, 8.507059e+37
        %v3355 = vand.u32 %v2548, 2147483648
        %v3356 = vor.u32 1.1754944e-38, %v3355
        %v3357 = vsel %vm3354, %v3356, %v3352
        %v3358 = vmul.f32 1.0, %v3357
        %v3359 = vrcp.pop %v2549
        %v3360 = vmul.f32 %v2549, %v3359
        %v3361 = vsub.f32 1.0, %v3360
        %v3362 = vmul.f32 %v3359, %v3361
        %v3363 = vadd.f32 %v3359, %v3362
        %vm3364 = vweird.f32 %v2549
        %vm3365 = vweird.f32 %v3359
        %vm3366 = vmor %vm3364, %vm3365
        %v3367 = vsel %vm3366, %v3359, %v3363
        %v3368 = vand.u32 2147483647, %v2549
        %vm3369 = vcmp.eq.f32.partialorder %v3368, 8.507059e+37
        %v3370 = vand.u32 %v2549, 2147483648
        %v3371 = vor.u32 1.1754944e-38, %v3370
        %v3372 = vsel %vm3369, %v3371, %v3367
        %v3373 = vmul.f32 1.0, %v3372
        %v3374 = vrcp.pop %v2550
        %v3375 = vmul.f32 %v2550, %v3374
        %v3376 = vsub.f32 1.0, %v3375
        %v3377 = vmul.f32 %v3374, %v3376
        %v3378 = vadd.f32 %v3374, %v3377
        %vm3379 = vweird.f32 %v2550
        %vm3380 = vweird.f32 %v3374
        %vm3381 = vmor %vm3379, %vm3380
        %v3382 = vsel %vm3381, %v3374, %v3378
        %v3383 = vand.u32 2147483647, %v2550
        %vm3384 = vcmp.eq.f32.partialorder %v3383, 8.507059e+37
        %v3385 = vand.u32 %v2550, 2147483648
        %v3386 = vor.u32 1.1754944e-38, %v3385
        %v3387 = vsel %vm3384, %v3386, %v3382
        %v3388 = vmul.f32 1.0, %v3387
        %v3389 = vrcp.pop %v2551
        %v3390 = vmul.f32 %v2551, %v3389
        %v3391 = vsub.f32 1.0, %v3390
        %v3392 = vmul.f32 %v3389, %v3391
        %v3393 = vadd.f32 %v3389, %v3392
        %vm3394 = vweird.f32 %v2551
        %vm3395 = vweird.f32 %v3389
        %vm3396 = vmor %vm3394, %vm3395
        %v3397 = vsel %vm3396, %v3389, %v3393
        %v3398 = vand.u32 2147483647, %v2551
        %vm3399 = vcmp.eq.f32.partialorder %v3398, 8.507059e+37
        %v3400 = vand.u32 %v2551, 2147483648
        %v3401 = vor.u32 1.1754944e-38, %v3400
        %v3402 = vsel %vm3399, %v3401, %v3397
        %v3403 = vmul.f32 1.0, %v3402
        %v3404 = vrcp.pop %v2552
        %v3405 = vmul.f32 %v2552, %v3404
        %v3406 = vsub.f32 1.0, %v3405
        %v3407 = vmul.f32 %v3404, %v3406
        %v3408 = vadd.f32 %v3404, %v3407
        %vm3409 = vweird.f32 %v2552
        %vm3410 = vweird.f32 %v3404
        %vm3411 = vmor %vm3409, %vm3410
        %v3412 = vsel %vm3411, %v3404, %v3408
        %v3413 = vand.u32 2147483647, %v2552
        %vm3414 = vcmp.eq.f32.partialorder %v3413, 8.507059e+37
        %v3415 = vand.u32 %v2552, 2147483648
        %v3416 = vor.u32 1.1754944e-38, %v3415
        %v3417 = vsel %vm3414, %v3416, %v3412
        %v3418 = vmul.f32 1.0, %v3417
        %v3419 = vrcp.pop %v2553
        %v3420 = vmul.f32 %v2553, %v3419
        %v3421 = vsub.f32 1.0, %v3420
        %v3422 = vmul.f32 %v3419, %v3421
        %v3423 = vadd.f32 %v3419, %v3422
        %vm3424 = vweird.f32 %v2553
        %vm3425 = vweird.f32 %v3419
        %vm3426 = vmor %vm3424, %vm3425
        %v3427 = vsel %vm3426, %v3419, %v3423
        %v3428 = vand.u32 2147483647, %v2553
        %vm3429 = vcmp.eq.f32.partialorder %v3428, 8.507059e+37
        %v3430 = vand.u32 %v2553, 2147483648
        %v3431 = vor.u32 1.1754944e-38, %v3430
        %v3432 = vsel %vm3429, %v3431, %v3427
        %v3433 = vmul.f32 1.0, %v3432
        %v3434 = vrcp.pop %v2554
        %v3435 = vmul.f32 %v2554, %v3434
        %v3436 = vsub.f32 1.0, %v3435
        %v3437 = vmul.f32 %v3434, %v3436
        %v3438 = vadd.f32 %v3434, %v3437
        %vm3439 = vweird.f32 %v2554
        %vm3440 = vweird.f32 %v3434
        %vm3441 = vmor %vm3439, %vm3440
        %v3442 = vsel %vm3441, %v3434, %v3438
        %v3443 = vand.u32 2147483647, %v2554
        %vm3444 = vcmp.eq.f32.partialorder %v3443, 8.507059e+37
        %v3445 = vand.u32 %v2554, 2147483648
        %v3446 = vor.u32 1.1754944e-38, %v3445
        %v3447 = vsel %vm3444, %v3446, %v3442
        %v3448 = vmul.f32 1.0, %v3447
        %v3449 = vrcp.pop %v2555
        %v3450 = vmul.f32 %v2555, %v3449
        %v3451 = vsub.f32 1.0, %v3450
        %v3452 = vmul.f32 %v3449, %v3451
        %v3453 = vadd.f32 %v3449, %v3452
        %vm3454 = vweird.f32 %v2555
        %vm3455 = vweird.f32 %v3449
        %vm3456 = vmor %vm3454, %vm3455
        %v3457 = vsel %vm3456, %v3449, %v3453
        %v3458 = vand.u32 2147483647, %v2555
        %vm3459 = vcmp.eq.f32.partialorder %v3458, 8.507059e+37
        %v3460 = vand.u32 %v2555, 2147483648
        %v3461 = vor.u32 1.1754944e-38, %v3460
        %v3462 = vsel %vm3459, %v3461, %v3457
        %v3463 = vmul.f32 1.0, %v3462
        %v3464 = vrcp.pop %v2556
        %v3465 = vmul.f32 %v2556, %v3464
        %v3466 = vsub.f32 1.0, %v3465
        %v3467 = vmul.f32 %v3464, %v3466
        %v3468 = vadd.f32 %v3464, %v3467
        %vm3469 = vweird.f32 %v2556
        %vm3470 = vweird.f32 %v3464
        %vm3471 = vmor %vm3469, %vm3470
        %v3472 = vsel %vm3471, %v3464, %v3468
        %v3473 = vand.u32 2147483647, %v2556
        %vm3474 = vcmp.eq.f32.partialorder %v3473, 8.507059e+37
        %v3475 = vand.u32 %v2556, 2147483648
        %v3476 = vor.u32 1.1754944e-38, %v3475
        %v3477 = vsel %vm3474, %v3476, %v3472
        %v3478 = vmul.f32 1.0, %v3477
        %v3479 = vrcp.pop %v2557
        %v3480 = vmul.f32 %v2557, %v3479
        %v3481 = vsub.f32 1.0, %v3480
        %v3482 = vmul.f32 %v3479, %v3481
        %v3483 = vadd.f32 %v3479, %v3482
        %vm3484 = vweird.f32 %v2557
        %vm3485 = vweird.f32 %v3479
        %vm3486 = vmor %vm3484, %vm3485
        %v3487 = vsel %vm3486, %v3479, %v3483
        %v3488 = vand.u32 2147483647, %v2557
        %vm3489 = vcmp.eq.f32.partialorder %v3488, 8.507059e+37
        %v3490 = vand.u32 %v2557, 2147483648
        %v3491 = vor.u32 1.1754944e-38, %v3490
        %v3492 = vsel %vm3489, %v3491, %v3487
        %v3493 = vmul.f32 1.0, %v3492
        %v3494 = vrcp.pop %v2558
        %v3495 = vmul.f32 %v2558, %v3494
        %v3496 = vsub.f32 1.0, %v3495
        %v3497 = vmul.f32 %v3494, %v3496
        %v3498 = vadd.f32 %v3494, %v3497
        %vm3499 = vweird.f32 %v2558
        %vm3500 = vweird.f32 %v3494
        %vm3501 = vmor %vm3499, %vm3500
        %v3502 = vsel %vm3501, %v3494, %v3498
        %v3503 = vand.u32 2147483647, %v2558
        %vm3504 = vcmp.eq.f32.partialorder %v3503, 8.507059e+37
        %v3505 = vand.u32 %v2558, 2147483648
        %v3506 = vor.u32 1.1754944e-38, %v3505
        %v3507 = vsel %vm3504, %v3506, %v3502
        %v3508 = vmul.f32 1.0, %v3507
        %v3509 = vrcp.pop %v2559
        %v3510 = vmul.f32 %v2559, %v3509
        %v3511 = vsub.f32 1.0, %v3510
        %v3512 = vmul.f32 %v3509, %v3511
        %v3513 = vadd.f32 %v3509, %v3512
        %vm3514 = vweird.f32 %v2559
        %vm3515 = vweird.f32 %v3509
        %vm3516 = vmor %vm3514, %vm3515
        %v3517 = vsel %vm3516, %v3509, %v3513
        %v3518 = vand.u32 2147483647, %v2559
        %vm3519 = vcmp.eq.f32.partialorder %v3518, 8.507059e+37
        %v3520 = vand.u32 %v2559, 2147483648
        %v3521 = vor.u32 1.1754944e-38, %v3520
        %v3522 = vsel %vm3519, %v3521, %v3517
        %v3523 = vmul.f32 1.0, %v3522
        %v3524 = vrcp.pop %v2560
        %v3525 = vmul.f32 %v2560, %v3524
        %v3526 = vsub.f32 1.0, %v3525
        %v3527 = vmul.f32 %v3524, %v3526
        %v3528 = vadd.f32 %v3524, %v3527
        %vm3529 = vweird.f32 %v2560
        %vm3530 = vweird.f32 %v3524
        %vm3531 = vmor %vm3529, %vm3530
        %v3532 = vsel %vm3531, %v3524, %v3528
        %v3533 = vand.u32 2147483647, %v2560
        %vm3534 = vcmp.eq.f32.partialorder %v3533, 8.507059e+37
        %v3535 = vand.u32 %v2560, 2147483648
        %v3536 = vor.u32 1.1754944e-38, %v3535
        %v3537 = vsel %vm3534, %v3536, %v3532
        %v3538 = vmul.f32 1.0, %v3537
        %v3539 = vrcp.pop %v2561
        %v3540 = vmul.f32 %v2561, %v3539
        %v3541 = vsub.f32 1.0, %v3540
        %v3542 = vmul.f32 %v3539, %v3541
        %v3543 = vadd.f32 %v3539, %v3542
        %vm3544 = vweird.f32 %v2561
        %vm3545 = vweird.f32 %v3539
        %vm3546 = vmor %vm3544, %vm3545
        %v3547 = vsel %vm3546, %v3539, %v3543
        %v3548 = vand.u32 2147483647, %v2561
        %vm3549 = vcmp.eq.f32.partialorder %v3548, 8.507059e+37
        %v3550 = vand.u32 %v2561, 2147483648
        %v3551 = vor.u32 1.1754944e-38, %v3550
        %v3552 = vsel %vm3549, %v3551, %v3547
        %v3553 = vmul.f32 1.0, %v3552
        %v3554 = vrcp.pop %v2562
        %v3555 = vmul.f32 %v2562, %v3554
        %v3556 = vsub.f32 1.0, %v3555
        %v3557 = vmul.f32 %v3554, %v3556
        %v3558 = vadd.f32 %v3554, %v3557
        %vm3559 = vweird.f32 %v2562
        %vm3560 = vweird.f32 %v3554
        %vm3561 = vmor %vm3559, %vm3560
        %v3562 = vsel %vm3561, %v3554, %v3558
        %v3563 = vand.u32 2147483647, %v2562
        %vm3564 = vcmp.eq.f32.partialorder %v3563, 8.507059e+37
        %v3565 = vand.u32 %v2562, 2147483648
        %v3566 = vor.u32 1.1754944e-38, %v3565
        %v3567 = vsel %vm3564, %v3566, %v3562
        %v3568 = vmul.f32 1.0, %v3567
        %v3569 = vrcp.pop %v2563
        %v3570 = vmul.f32 %v2563, %v3569
        %v3571 = vsub.f32 1.0, %v3570
        %v3572 = vmul.f32 %v3569, %v3571
        %v3573 = vadd.f32 %v3569, %v3572
        %vm3574 = vweird.f32 %v2563
        %vm3575 = vweird.f32 %v3569
        %vm3576 = vmor %vm3574, %vm3575
        %v3577 = vsel %vm3576, %v3569, %v3573
        %v3578 = vand.u32 2147483647, %v2563
        %vm3579 = vcmp.eq.f32.partialorder %v3578, 8.507059e+37
        %v3580 = vand.u32 %v2563, 2147483648
        %v3581 = vor.u32 1.1754944e-38, %v3580
        %v3582 = vsel %vm3579, %v3581, %v3577
        %v3583 = vmul.f32 1.0, %v3582
        %v3584 = vrcp.pop %v2564
        %v3585 = vmul.f32 %v2564, %v3584
        %v3586 = vsub.f32 1.0, %v3585
        %v3587 = vmul.f32 %v3584, %v3586
        %v3588 = vadd.f32 %v3584, %v3587
        %vm3589 = vweird.f32 %v2564
        %vm3590 = vweird.f32 %v3584
        %vm3591 = vmor %vm3589, %vm3590
        %v3592 = vsel %vm3591, %v3584, %v3588
        %v3593 = vand.u32 2147483647, %v2564
        %vm3594 = vcmp.eq.f32.partialorder %v3593, 8.507059e+37
        %v3595 = vand.u32 %v2564, 2147483648
        %v3596 = vor.u32 1.1754944e-38, %v3595
        %v3597 = vsel %vm3594, %v3596, %v3592
        %v3598 = vmul.f32 1.0, %v3597
        %v3599 = vrcp.pop %v2565
        %v3600 = vmul.f32 %v2565, %v3599
        %v3601 = vsub.f32 1.0, %v3600
        %v3602 = vmul.f32 %v3599, %v3601
        %v3603 = vadd.f32 %v3599, %v3602
        %vm3604 = vweird.f32 %v2565
        %vm3605 = vweird.f32 %v3599
        %vm3606 = vmor %vm3604, %vm3605
        %v3607 = vsel %vm3606, %v3599, %v3603
        %v3608 = vand.u32 2147483647, %v2565
        %vm3609 = vcmp.eq.f32.partialorder %v3608, 8.507059e+37
        %v3610 = vand.u32 %v2565, 2147483648
        %v3611 = vor.u32 1.1754944e-38, %v3610
        %v3612 = vsel %vm3609, %v3611, %v3607
        %v3613 = vmul.f32 1.0, %v3612
        %v3614 = vrcp.pop %v2566
        %v3615 = vmul.f32 %v2566, %v3614
        %v3616 = vsub.f32 1.0, %v3615
        %v3617 = vmul.f32 %v3614, %v3616
        %v3618 = vadd.f32 %v3614, %v3617
        %vm3619 = vweird.f32 %v2566
        %vm3620 = vweird.f32 %v3614
        %vm3621 = vmor %vm3619, %vm3620
        %v3622 = vsel %vm3621, %v3614, %v3618
        %v3623 = vand.u32 2147483647, %v2566
        %vm3624 = vcmp.eq.f32.partialorder %v3623, 8.507059e+37
        %v3625 = vand.u32 %v2566, 2147483648
        %v3626 = vor.u32 1.1754944e-38, %v3625
        %v3627 = vsel %vm3624, %v3626, %v3622
        %v3628 = vmul.f32 1.0, %v3627
        %v3629 = vrcp.pop %v2567
        %v3630 = vmul.f32 %v2567, %v3629
        %v3631 = vsub.f32 1.0, %v3630
        %v3632 = vmul.f32 %v3629, %v3631
        %v3633 = vadd.f32 %v3629, %v3632
        %vm3634 = vweird.f32 %v2567
        %vm3635 = vweird.f32 %v3629
        %vm3636 = vmor %vm3634, %vm3635
        %v3637 = vsel %vm3636, %v3629, %v3633
        %v3638 = vand.u32 2147483647, %v2567
        %vm3639 = vcmp.eq.f32.partialorder %v3638, 8.507059e+37
        %v3640 = vand.u32 %v2567, 2147483648
        %v3641 = vor.u32 1.1754944e-38, %v3640
        %v3642 = vsel %vm3639, %v3641, %v3637
        %v3643 = vmul.f32 1.0, %v3642
        %v3644 = vrcp.pop %v2568
        %v3645 = vmul.f32 %v2568, %v3644
        %v3646 = vsub.f32 1.0, %v3645
        %v3647 = vmul.f32 %v3644, %v3646
        %v3648 = vadd.f32 %v3644, %v3647
        %vm3649 = vweird.f32 %v2568
        %vm3650 = vweird.f32 %v3644
        %vm3651 = vmor %vm3649, %vm3650
        %v3652 = vsel %vm3651, %v3644, %v3648
        %v3653 = vand.u32 2147483647, %v2568
        %vm3654 = vcmp.eq.f32.partialorder %v3653, 8.507059e+37
        %v3655 = vand.u32 %v2568, 2147483648
        %v3656 = vor.u32 1.1754944e-38, %v3655
        %v3657 = vsel %vm3654, %v3656, %v3652
        %v3658 = vmul.f32 1.0, %v3657
        %v3659 = vrcp.pop %v2569
        %v3660 = vmul.f32 %v2569, %v3659
        %v3661 = vsub.f32 1.0, %v3660
        %v3662 = vmul.f32 %v3659, %v3661
        %v3663 = vadd.f32 %v3659, %v3662
        %vm3664 = vweird.f32 %v2569
        %vm3665 = vweird.f32 %v3659
        %vm3666 = vmor %vm3664, %vm3665
        %v3667 = vsel %vm3666, %v3659, %v3663
        %v3668 = vand.u32 2147483647, %v2569
        %vm3669 = vcmp.eq.f32.partialorder %v3668, 8.507059e+37
        %v3670 = vand.u32 %v2569, 2147483648
        %v3671 = vor.u32 1.1754944e-38, %v3670
        %v3672 = vsel %vm3669, %v3671, %v3667
        %v3673 = vmul.f32 1.0, %v3672
        %v3674 = vrcp.pop %v2570
        %v3675 = vmul.f32 %v2570, %v3674
        %v3676 = vsub.f32 1.0, %v3675
        %v3677 = vmul.f32 %v3674, %v3676
        %v3678 = vadd.f32 %v3674, %v3677
        %vm3679 = vweird.f32 %v2570
        %vm3680 = vweird.f32 %v3674
        %vm3681 = vmor %vm3679, %vm3680
        %v3682 = vsel %vm3681, %v3674, %v3678
        %v3683 = vand.u32 2147483647, %v2570
        %vm3684 = vcmp.eq.f32.partialorder %v3683, 8.507059e+37
        %v3685 = vand.u32 %v2570, 2147483648
        %v3686 = vor.u32 1.1754944e-38, %v3685
        %v3687 = vsel %vm3684, %v3686, %v3682
        %v3688 = vmul.f32 1.0, %v3687
        %v3689 = vrcp.pop %v2571
        %v3690 = vmul.f32 %v2571, %v3689
        %v3691 = vsub.f32 1.0, %v3690
        %v3692 = vmul.f32 %v3689, %v3691
        %v3693 = vadd.f32 %v3689, %v3692
        %vm3694 = vweird.f32 %v2571
        %vm3695 = vweird.f32 %v3689
        %vm3696 = vmor %vm3694, %vm3695
        %v3697 = vsel %vm3696, %v3689, %v3693
        %v3698 = vand.u32 2147483647, %v2571
        %vm3699 = vcmp.eq.f32.partialorder %v3698, 8.507059e+37
        %v3700 = vand.u32 %v2571, 2147483648
        %v3701 = vor.u32 1.1754944e-38, %v3700
        %v3702 = vsel %vm3699, %v3701, %v3697
        %v3703 = vmul.f32 1.0, %v3702
        %v3704 = vrcp.pop %v2572
        %v3705 = vmul.f32 %v2572, %v3704
        %v3706 = vsub.f32 1.0, %v3705
        %v3707 = vmul.f32 %v3704, %v3706
        %v3708 = vadd.f32 %v3704, %v3707
        %vm3709 = vweird.f32 %v2572
        %vm3710 = vweird.f32 %v3704
        %vm3711 = vmor %vm3709, %vm3710
        %v3712 = vsel %vm3711, %v3704, %v3708
        %v3713 = vand.u32 2147483647, %v2572
        %vm3714 = vcmp.eq.f32.partialorder %v3713, 8.507059e+37
        %v3715 = vand.u32 %v2572, 2147483648
        %v3716 = vor.u32 1.1754944e-38, %v3715
        %v3717 = vsel %vm3714, %v3716, %v3712
        %v3718 = vmul.f32 1.0, %v3717
        %v3719 = vrcp.pop %v2573
        %v3720 = vmul.f32 %v2573, %v3719
        %v3721 = vsub.f32 1.0, %v3720
        %v3722 = vmul.f32 %v3719, %v3721
        %v3723 = vadd.f32 %v3719, %v3722
        %vm3724 = vweird.f32 %v2573
        %vm3725 = vweird.f32 %v3719
        %vm3726 = vmor %vm3724, %vm3725
        %v3727 = vsel %vm3726, %v3719, %v3723
        %v3728 = vand.u32 2147483647, %v2573
        %vm3729 = vcmp.eq.f32.partialorder %v3728, 8.507059e+37
        %v3730 = vand.u32 %v2573, 2147483648
        %v3731 = vor.u32 1.1754944e-38, %v3730
        %v3732 = vsel %vm3729, %v3731, %v3727
        %v3733 = vmul.f32 1.0, %v3732
        %v3734 = vrcp.pop %v2574
        %v3735 = vmul.f32 %v2574, %v3734
        %v3736 = vsub.f32 1.0, %v3735
        %v3737 = vmul.f32 %v3734, %v3736
        %v3738 = vadd.f32 %v3734, %v3737
        %vm3739 = vweird.f32 %v2574
        %vm3740 = vweird.f32 %v3734
        %vm3741 = vmor %vm3739, %vm3740
        %v3742 = vsel %vm3741, %v3734, %v3738
        %v3743 = vand.u32 2147483647, %v2574
        %vm3744 = vcmp.eq.f32.partialorder %v3743, 8.507059e+37
        %v3745 = vand.u32 %v2574, 2147483648
        %v3746 = vor.u32 1.1754944e-38, %v3745
        %v3747 = vsel %vm3744, %v3746, %v3742
        %v3748 = vmul.f32 1.0, %v3747
        %v3749 = vrcp.pop %v2575
        %v3750 = vmul.f32 %v2575, %v3749
        %v3751 = vsub.f32 1.0, %v3750
        %v3752 = vmul.f32 %v3749, %v3751
        %v3753 = vadd.f32 %v3749, %v3752
        %vm3754 = vweird.f32 %v2575
        %vm3755 = vweird.f32 %v3749
        %vm3756 = vmor %vm3754, %vm3755
        %v3757 = vsel %vm3756, %v3749, %v3753
        %v3758 = vand.u32 2147483647, %v2575
        %vm3759 = vcmp.eq.f32.partialorder %v3758, 8.507059e+37
        %v3760 = vand.u32 %v2575, 2147483648
        %v3761 = vor.u32 1.1754944e-38, %v3760
        %v3762 = vsel %vm3759, %v3761, %v3757
        %v3763 = vmul.f32 1.0, %v3762
        %v3764 = vrcp.pop %v2576
        %v3765 = vmul.f32 %v2576, %v3764
        %v3766 = vsub.f32 1.0, %v3765
        %v3767 = vmul.f32 %v3764, %v3766
        %v3768 = vadd.f32 %v3764, %v3767
        %vm3769 = vweird.f32 %v2576
        %vm3770 = vweird.f32 %v3764
        %vm3771 = vmor %vm3769, %vm3770
        %v3772 = vsel %vm3771, %v3764, %v3768
        %v3773 = vand.u32 2147483647, %v2576
        %vm3774 = vcmp.eq.f32.partialorder %v3773, 8.507059e+37
        %v3775 = vand.u32 %v2576, 2147483648
        %v3776 = vor.u32 1.1754944e-38, %v3775
        %v3777 = vsel %vm3774, %v3776, %v3772
        %v3778 = vmul.f32 1.0, %v3777
        %v3779 = vrcp.pop %v2577
        %v3780 = vmul.f32 %v2577, %v3779
        %v3781 = vsub.f32 1.0, %v3780
        %v3782 = vmul.f32 %v3779, %v3781
        %v3783 = vadd.f32 %v3779, %v3782
        %vm3784 = vweird.f32 %v2577
        %vm3785 = vweird.f32 %v3779
        %vm3786 = vmor %vm3784, %vm3785
        %v3787 = vsel %vm3786, %v3779, %v3783
        %v3788 = vand.u32 2147483647, %v2577
        %vm3789 = vcmp.eq.f32.partialorder %v3788, 8.507059e+37
        %v3790 = vand.u32 %v2577, 2147483648
        %v3791 = vor.u32 1.1754944e-38, %v3790
        %v3792 = vsel %vm3789, %v3791, %v3787
        %v3793 = vmul.f32 1.0, %v3792
        %v3794 = vrcp.pop %v2578
        %v3795 = vmul.f32 %v2578, %v3794
        %v3796 = vsub.f32 1.0, %v3795
        %v3797 = vmul.f32 %v3794, %v3796
        %v3798 = vadd.f32 %v3794, %v3797
        %vm3799 = vweird.f32 %v2578
        %vm3800 = vweird.f32 %v3794
        %vm3801 = vmor %vm3799, %vm3800
        %v3802 = vsel %vm3801, %v3794, %v3798
        %v3803 = vand.u32 2147483647, %v2578
        %vm3804 = vcmp.eq.f32.partialorder %v3803, 8.507059e+37
        %v3805 = vand.u32 %v2578, 2147483648
        %v3806 = vor.u32 1.1754944e-38, %v3805
        %v3807 = vsel %vm3804, %v3806, %v3802
        %v3808 = vmul.f32 1.0, %v3807
        %v3809 = vrcp.pop %v2579
        %v3810 = vmul.f32 %v2579, %v3809
        %v3811 = vsub.f32 1.0, %v3810
        %v3812 = vmul.f32 %v3809, %v3811
        %v3813 = vadd.f32 %v3809, %v3812
        %vm3814 = vweird.f32 %v2579
        %vm3815 = vweird.f32 %v3809
        %vm3816 = vmor %vm3814, %vm3815
        %v3817 = vsel %vm3816, %v3809, %v3813
        %v3818 = vand.u32 2147483647, %v2579
        %vm3819 = vcmp.eq.f32.partialorder %v3818, 8.507059e+37
        %v3820 = vand.u32 %v2579, 2147483648
        %v3821 = vor.u32 1.1754944e-38, %v3820
        %v3822 = vsel %vm3819, %v3821, %v3817
        %v3823 = vmul.f32 1.0, %v3822
        %v3824 = vrcp.pop %v2580
        %v3825 = vmul.f32 %v2580, %v3824
        %v3826 = vsub.f32 1.0, %v3825
        %v3827 = vmul.f32 %v3824, %v3826
        %v3828 = vadd.f32 %v3824, %v3827
        %vm3829 = vweird.f32 %v2580
        %vm3830 = vweird.f32 %v3824
        %vm3831 = vmor %vm3829, %vm3830
        %v3832 = vsel %vm3831, %v3824, %v3828
        %v3833 = vand.u32 2147483647, %v2580
        %vm3834 = vcmp.eq.f32.partialorder %v3833, 8.507059e+37
        %v3835 = vand.u32 %v2580, 2147483648
        %v3836 = vor.u32 1.1754944e-38, %v3835
        %v3837 = vsel %vm3834, %v3836, %v3832
        %v3838 = vmul.f32 1.0, %v3837
        %v3839 = vrcp.pop %v2581
        %v3840 = vmul.f32 %v2581, %v3839
        %v3841 = vsub.f32 1.0, %v3840
        %v3842 = vmul.f32 %v3839, %v3841
        %v3843 = vadd.f32 %v3839, %v3842
        %vm3844 = vweird.f32 %v2581
        %vm3845 = vweird.f32 %v3839
        %vm3846 = vmor %vm3844, %vm3845
        %v3847 = vsel %vm3846, %v3839, %v3843
        %v3848 = vand.u32 2147483647, %v2581
        %vm3849 = vcmp.eq.f32.partialorder %v3848, 8.507059e+37
        %v3850 = vand.u32 %v2581, 2147483648
        %v3851 = vor.u32 1.1754944e-38, %v3850
        %v3852 = vsel %vm3849, %v3851, %v3847
        %v3853 = vmul.f32 1.0, %v3852
        %v3854 = vrcp.pop %v2582
        %v3855 = vmul.f32 %v2582, %v3854
        %v3856 = vsub.f32 1.0, %v3855
        %v3857 = vmul.f32 %v3854, %v3856
        %v3858 = vadd.f32 %v3854, %v3857
        %vm3859 = vweird.f32 %v2582
        %vm3860 = vweird.f32 %v3854
        %vm3861 = vmor %vm3859, %vm3860
        %v3862 = vsel %vm3861, %v3854, %v3858
        %v3863 = vand.u32 2147483647, %v2582
        %vm3864 = vcmp.eq.f32.partialorder %v3863, 8.507059e+37
        %v3865 = vand.u32 %v2582, 2147483648
        %v3866 = vor.u32 1.1754944e-38, %v3865
        %v3867 = vsel %vm3864, %v3866, %v3862
        %v3868 = vmul.f32 1.0, %v3867
        %v3869 = vrcp.pop %v2583
        %v3870 = vmul.f32 %v2583, %v3869
        %v3871 = vsub.f32 1.0, %v3870
        %v3872 = vmul.f32 %v3869, %v3871
        %v3873 = vadd.f32 %v3869, %v3872
        %vm3874 = vweird.f32 %v2583
        %vm3875 = vweird.f32 %v3869
        %vm3876 = vmor %vm3874, %vm3875
        %v3877 = vsel %vm3876, %v3869, %v3873
        %v3878 = vand.u32 2147483647, %v2583
        %vm3879 = vcmp.eq.f32.partialorder %v3878, 8.507059e+37
        %v3880 = vand.u32 %v2583, 2147483648
        %v3881 = vor.u32 1.1754944e-38, %v3880
        %v3882 = vsel %vm3879, %v3881, %v3877
        %v3883 = vmul.f32 1.0, %v3882
        %v3884 = vrcp.pop %v2584
        %v3885 = vmul.f32 %v2584, %v3884
        %v3886 = vsub.f32 1.0, %v3885
        %v3887 = vmul.f32 %v3884, %v3886
        %v3888 = vadd.f32 %v3884, %v3887
        %vm3889 = vweird.f32 %v2584
        %vm3890 = vweird.f32 %v3884
        %vm3891 = vmor %vm3889, %vm3890
        %v3892 = vsel %vm3891, %v3884, %v3888
        %v3893 = vand.u32 2147483647, %v2584
        %vm3894 = vcmp.eq.f32.partialorder %v3893, 8.507059e+37
        %v3895 = vand.u32 %v2584, 2147483648
        %v3896 = vor.u32 1.1754944e-38, %v3895
        %v3897 = vsel %vm3894, %v3896, %v3892
        %v3898 = vmul.f32 1.0, %v3897
        %v3899 = vrcp.pop %v2585
        %v3900 = vmul.f32 %v2585, %v3899
        %v3901 = vsub.f32 1.0, %v3900
        %v3902 = vmul.f32 %v3899, %v3901
        %v3903 = vadd.f32 %v3899, %v3902
        %vm3904 = vweird.f32 %v2585
        %vm3905 = vweird.f32 %v3899
        %vm3906 = vmor %vm3904, %vm3905
        %v3907 = vsel %vm3906, %v3899, %v3903
        %v3908 = vand.u32 2147483647, %v2585
        %vm3909 = vcmp.eq.f32.partialorder %v3908, 8.507059e+37
        %v3910 = vand.u32 %v2585, 2147483648
        %v3911 = vor.u32 1.1754944e-38, %v3910
        %v3912 = vsel %vm3909, %v3911, %v3907
        %v3913 = vmul.f32 1.0, %v3912
        %v3914 = vrcp.pop %v2586
        %v3915 = vmul.f32 %v2586, %v3914
        %v3916 = vsub.f32 1.0, %v3915
        %v3917 = vmul.f32 %v3914, %v3916
        %v3918 = vadd.f32 %v3914, %v3917
        %vm3919 = vweird.f32 %v2586
        %vm3920 = vweird.f32 %v3914
        %vm3921 = vmor %vm3919, %vm3920
        %v3922 = vsel %vm3921, %v3914, %v3918
        %v3923 = vand.u32 2147483647, %v2586
        %vm3924 = vcmp.eq.f32.partialorder %v3923, 8.507059e+37
        %v3925 = vand.u32 %v2586, 2147483648
        %v3926 = vor.u32 1.1754944e-38, %v3925
        %v3927 = vsel %vm3924, %v3926, %v3922
        %v3928 = vmul.f32 1.0, %v3927
        %v3929 = vrcp.pop %v2587
        %v3930 = vmul.f32 %v2587, %v3929
        %v3931 = vsub.f32 1.0, %v3930
        %v3932 = vmul.f32 %v3929, %v3931
        %v3933 = vadd.f32 %v3929, %v3932
        %vm3934 = vweird.f32 %v2587
        %vm3935 = vweird.f32 %v3929
        %vm3936 = vmor %vm3934, %vm3935
        %v3937 = vsel %vm3936, %v3929, %v3933
        %v3938 = vand.u32 2147483647, %v2587
        %vm3939 = vcmp.eq.f32.partialorder %v3938, 8.507059e+37
        %v3940 = vand.u32 %v2587, 2147483648
        %v3941 = vor.u32 1.1754944e-38, %v3940
        %v3942 = vsel %vm3939, %v3941, %v3937
        %v3943 = vmul.f32 1.0, %v3942
        %v3944 = vrcp.pop %v2588
        %v3945 = vmul.f32 %v2588, %v3944
        %v3946 = vsub.f32 1.0, %v3945
        %v3947 = vmul.f32 %v3944, %v3946
        %v3948 = vadd.f32 %v3944, %v3947
        %vm3949 = vweird.f32 %v2588
        %vm3950 = vweird.f32 %v3944
        %vm3951 = vmor %vm3949, %vm3950
        %v3952 = vsel %vm3951, %v3944, %v3948
        %v3953 = vand.u32 2147483647, %v2588
        %vm3954 = vcmp.eq.f32.partialorder %v3953, 8.507059e+37
        %v3955 = vand.u32 %v2588, 2147483648
        %v3956 = vor.u32 1.1754944e-38, %v3955
        %v3957 = vsel %vm3954, %v3956, %v3952
        %v3958 = vmul.f32 1.0, %v3957
        %v3959 = vrcp.pop %v2589
        %v3960 = vmul.f32 %v2589, %v3959
        %v3961 = vsub.f32 1.0, %v3960
        %v3962 = vmul.f32 %v3959, %v3961
        %v3963 = vadd.f32 %v3959, %v3962
        %vm3964 = vweird.f32 %v2589
        %vm3965 = vweird.f32 %v3959
        %vm3966 = vmor %vm3964, %vm3965
        %v3967 = vsel %vm3966, %v3959, %v3963
        %v3968 = vand.u32 2147483647, %v2589
        %vm3969 = vcmp.eq.f32.partialorder %v3968, 8.507059e+37
        %v3970 = vand.u32 %v2589, 2147483648
        %v3971 = vor.u32 1.1754944e-38, %v3970
        %v3972 = vsel %vm3969, %v3971, %v3967
        %v3973 = vmul.f32 1.0, %v3972
        %v3974 = vrcp.pop %v2590
        %v3975 = vmul.f32 %v2590, %v3974
        %v3976 = vsub.f32 1.0, %v3975
        %v3977 = vmul.f32 %v3974, %v3976
        %v3978 = vadd.f32 %v3974, %v3977
        %vm3979 = vweird.f32 %v2590
        %vm3980 = vweird.f32 %v3974
        %vm3981 = vmor %vm3979, %vm3980
        %v3982 = vsel %vm3981, %v3974, %v3978
        %v3983 = vand.u32 2147483647, %v2590
        %vm3984 = vcmp.eq.f32.partialorder %v3983, 8.507059e+37
        %v3985 = vand.u32 %v2590, 2147483648
        %v3986 = vor.u32 1.1754944e-38, %v3985
        %v3987 = vsel %vm3984, %v3986, %v3982
        %v3988 = vmul.f32 1.0, %v3987
        %v3989 = vrcp.pop %v2591
        %v3990 = vmul.f32 %v2591, %v3989
        %v3991 = vsub.f32 1.0, %v3990
        %v3992 = vmul.f32 %v3989, %v3991
        %v3993 = vadd.f32 %v3989, %v3992
        %vm3994 = vweird.f32 %v2591
        %vm3995 = vweird.f32 %v3989
        %vm3996 = vmor %vm3994, %vm3995
        %v3997 = vsel %vm3996, %v3989, %v3993
        %v3998 = vand.u32 2147483647, %v2591
        %vm3999 = vcmp.eq.f32.partialorder %v3998, 8.507059e+37
        %v4000 = vand.u32 %v2591, 2147483648
        %v4001 = vor.u32 1.1754944e-38, %v4000
        %v4002 = vsel %vm3999, %v4001, %v3997
        %v4003 = vmul.f32 1.0, %v4002
        %v4004 = vrcp.pop %v2592
        %v4005 = vmul.f32 %v2592, %v4004
        %v4006 = vsub.f32 1.0, %v4005
        %v4007 = vmul.f32 %v4004, %v4006
        %v4008 = vadd.f32 %v4004, %v4007
        %vm4009 = vweird.f32 %v2592
        %vm4010 = vweird.f32 %v4004
        %vm4011 = vmor %vm4009, %vm4010
        %v4012 = vsel %vm4011, %v4004, %v4008
        %v4013 = vand.u32 2147483647, %v2592
        %vm4014 = vcmp.eq.f32.partialorder %v4013, 8.507059e+37
        %v4015 = vand.u32 %v2592, 2147483648
        %v4016 = vor.u32 1.1754944e-38, %v4015
        %v4017 = vsel %vm4014, %v4016, %v4012
        %v4018 = vmul.f32 1.0, %v4017
        %v4019 = vrcp.pop %v2593
        %v4020 = vmul.f32 %v2593, %v4019
        %v4021 = vsub.f32 1.0, %v4020
        %v4022 = vmul.f32 %v4019, %v4021
        %v4023 = vadd.f32 %v4019, %v4022
        %vm4024 = vweird.f32 %v2593
        %vm4025 = vweird.f32 %v4019
        %vm4026 = vmor %vm4024, %vm4025
        %v4027 = vsel %vm4026, %v4019, %v4023
        %v4028 = vand.u32 2147483647, %v2593
        %vm4029 = vcmp.eq.f32.partialorder %v4028, 8.507059e+37
        %v4030 = vand.u32 %v2593, 2147483648
        %v4031 = vor.u32 1.1754944e-38, %v4030
        %v4032 = vsel %vm4029, %v4031, %v4027
        %v4033 = vmul.f32 1.0, %v4032
        %v4034 = vrcp.pop %v2594
        %v4035 = vmul.f32 %v2594, %v4034
        %v4036 = vsub.f32 1.0, %v4035
        %v4037 = vmul.f32 %v4034, %v4036
        %v4038 = vadd.f32 %v4034, %v4037
        %vm4039 = vweird.f32 %v2594
        %vm4040 = vweird.f32 %v4034
        %vm4041 = vmor %vm4039, %vm4040
        %v4042 = vsel %vm4041, %v4034, %v4038
        %v4043 = vand.u32 2147483647, %v2594
        %vm4044 = vcmp.eq.f32.partialorder %v4043, 8.507059e+37
        %v4045 = vand.u32 %v2594, 2147483648
        %v4046 = vor.u32 1.1754944e-38, %v4045
        %v4047 = vsel %vm4044, %v4046, %v4042
        %v4048 = vmul.f32 1.0, %v4047
        %v4049 = vrcp.pop %v2595
        %v4050 = vmul.f32 %v2595, %v4049
        %v4051 = vsub.f32 1.0, %v4050
        %v4052 = vmul.f32 %v4049, %v4051
        %v4053 = vadd.f32 %v4049, %v4052
        %vm4054 = vweird.f32 %v2595
        %vm4055 = vweird.f32 %v4049
        %vm4056 = vmor %vm4054, %vm4055
        %v4057 = vsel %vm4056, %v4049, %v4053
        %v4058 = vand.u32 2147483647, %v2595
        %vm4059 = vcmp.eq.f32.partialorder %v4058, 8.507059e+37
        %v4060 = vand.u32 %v2595, 2147483648
        %v4061 = vor.u32 1.1754944e-38, %v4060
        %v4062 = vsel %vm4059, %v4061, %v4057
        %v4063 = vmul.f32 1.0, %v4062
        %v4064 = vrcp.pop %v2596
        %v4065 = vmul.f32 %v2596, %v4064
        %v4066 = vsub.f32 1.0, %v4065
        %v4067 = vmul.f32 %v4064, %v4066
        %v4068 = vadd.f32 %v4064, %v4067
        %vm4069 = vweird.f32 %v2596
        %vm4070 = vweird.f32 %v4064
        %vm4071 = vmor %vm4069, %vm4070
        %v4072 = vsel %vm4071, %v4064, %v4068
        %v4073 = vand.u32 2147483647, %v2596
        %vm4074 = vcmp.eq.f32.partialorder %v4073, 8.507059e+37
        %v4075 = vand.u32 %v2596, 2147483648
        %v4076 = vor.u32 1.1754944e-38, %v4075
        %v4077 = vsel %vm4074, %v4076, %v4072
        %v4078 = vmul.f32 1.0, %v4077
        %v4079 = vrcp.pop %v2597
        %v4080 = vmul.f32 %v2597, %v4079
        %v4081 = vsub.f32 1.0, %v4080
        %v4082 = vmul.f32 %v4079, %v4081
        %v4083 = vadd.f32 %v4079, %v4082
        %vm4084 = vweird.f32 %v2597
        %vm4085 = vweird.f32 %v4079
        %vm4086 = vmor %vm4084, %vm4085
        %v4087 = vsel %vm4086, %v4079, %v4083
        %v4088 = vand.u32 2147483647, %v2597
        %vm4089 = vcmp.eq.f32.partialorder %v4088, 8.507059e+37
        %v4090 = vand.u32 %v2597, 2147483648
        %v4091 = vor.u32 1.1754944e-38, %v4090
        %v4092 = vsel %vm4089, %v4091, %v4087
        %v4093 = vmul.f32 1.0, %v4092
        %v4094 = vrcp.pop %v2598
        %v4095 = vmul.f32 %v2598, %v4094
        %v4096 = vsub.f32 1.0, %v4095
        %v4097 = vmul.f32 %v4094, %v4096
        %v4098 = vadd.f32 %v4094, %v4097
        %vm4099 = vweird.f32 %v2598
        %vm4100 = vweird.f32 %v4094
        %vm4101 = vmor %vm4099, %vm4100
        %v4102 = vsel %vm4101, %v4094, %v4098
        %v4103 = vand.u32 2147483647, %v2598
        %vm4104 = vcmp.eq.f32.partialorder %v4103, 8.507059e+37
        %v4105 = vand.u32 %v2598, 2147483648
        %v4106 = vor.u32 1.1754944e-38, %v4105
        %v4107 = vsel %vm4104, %v4106, %v4102
        %v4108 = vmul.f32 1.0, %v4107
        %v4109 = vrcp.pop %v2599
        %v4110 = vmul.f32 %v2599, %v4109
        %v4111 = vsub.f32 1.0, %v4110
        %v4112 = vmul.f32 %v4109, %v4111
        %v4113 = vadd.f32 %v4109, %v4112
        %vm4114 = vweird.f32 %v2599
        %vm4115 = vweird.f32 %v4109
        %vm4116 = vmor %vm4114, %vm4115
        %v4117 = vsel %vm4116, %v4109, %v4113
        %v4118 = vand.u32 2147483647, %v2599
        %vm4119 = vcmp.eq.f32.partialorder %v4118, 8.507059e+37
        %v4120 = vand.u32 %v2599, 2147483648
        %v4121 = vor.u32 1.1754944e-38, %v4120
        %v4122 = vsel %vm4119, %v4121, %v4117
        %v4123 = vmul.f32 1.0, %v4122
        %v4124 = vrcp.pop %v2600
        %v4125 = vmul.f32 %v2600, %v4124
        %v4126 = vsub.f32 1.0, %v4125
        %v4127 = vmul.f32 %v4124, %v4126
        %v4128 = vadd.f32 %v4124, %v4127
        %vm4129 = vweird.f32 %v2600
        %vm4130 = vweird.f32 %v4124
        %vm4131 = vmor %vm4129, %vm4130
        %v4132 = vsel %vm4131, %v4124, %v4128
        %v4133 = vand.u32 2147483647, %v2600
        %vm4134 = vcmp.eq.f32.partialorder %v4133, 8.507059e+37
        %v4135 = vand.u32 %v2600, 2147483648
        %v4136 = vor.u32 1.1754944e-38, %v4135
        %v4137 = vsel %vm4134, %v4136, %v4132
        %v4138 = vmul.f32 1.0, %v4137
        %v4139 = vrcp.pop %v2601
        %v4140 = vmul.f32 %v2601, %v4139
        %v4141 = vsub.f32 1.0, %v4140
        %v4142 = vmul.f32 %v4139, %v4141
        %v4143 = vadd.f32 %v4139, %v4142
        %vm4144 = vweird.f32 %v2601
        %vm4145 = vweird.f32 %v4139
        %vm4146 = vmor %vm4144, %vm4145
        %v4147 = vsel %vm4146, %v4139, %v4143
        %v4148 = vand.u32 2147483647, %v2601
        %vm4149 = vcmp.eq.f32.partialorder %v4148, 8.507059e+37
        %v4150 = vand.u32 %v2601, 2147483648
        %v4151 = vor.u32 1.1754944e-38, %v4150
        %v4152 = vsel %vm4149, %v4151, %v4147
        %v4153 = vmul.f32 1.0, %v4152
        %v4154 = vrcp.pop %v2602
        %v4155 = vmul.f32 %v2602, %v4154
        %v4156 = vsub.f32 1.0, %v4155
        %v4157 = vmul.f32 %v4154, %v4156
        %v4158 = vadd.f32 %v4154, %v4157
        %vm4159 = vweird.f32 %v2602
        %vm4160 = vweird.f32 %v4154
        %vm4161 = vmor %vm4159, %vm4160
        %v4162 = vsel %vm4161, %v4154, %v4158
        %v4163 = vand.u32 2147483647, %v2602
        %vm4164 = vcmp.eq.f32.partialorder %v4163, 8.507059e+37
        %v4165 = vand.u32 %v2602, 2147483648
        %v4166 = vor.u32 1.1754944e-38, %v4165
        %v4167 = vsel %vm4164, %v4166, %v4162
        %v4168 = vmul.f32 1.0, %v4167
        %v4169 = vrcp.pop %v2603
        %v4170 = vmul.f32 %v2603, %v4169
        %v4171 = vsub.f32 1.0, %v4170
        %v4172 = vmul.f32 %v4169, %v4171
        %v4173 = vadd.f32 %v4169, %v4172
        %vm4174 = vweird.f32 %v2603
        %vm4175 = vweird.f32 %v4169
        %vm4176 = vmor %vm4174, %vm4175
        %v4177 = vsel %vm4176, %v4169, %v4173
        %v4178 = vand.u32 2147483647, %v2603
        %vm4179 = vcmp.eq.f32.partialorder %v4178, 8.507059e+37
        %v4180 = vand.u32 %v2603, 2147483648
        %v4181 = vor.u32 1.1754944e-38, %v4180
        %v4182 = vsel %vm4179, %v4181, %v4177
        %v4183 = vmul.f32 1.0, %v4182
        %v4184 = vrcp.pop %v2604
        %v4185 = vmul.f32 %v2604, %v4184
        %v4186 = vsub.f32 1.0, %v4185
        %v4187 = vmul.f32 %v4184, %v4186
        %v4188 = vadd.f32 %v4184, %v4187
        %vm4189 = vweird.f32 %v2604
        %vm4190 = vweird.f32 %v4184
        %vm4191 = vmor %vm4189, %vm4190
        %v4192 = vsel %vm4191, %v4184, %v4188
        %v4193 = vand.u32 2147483647, %v2604
        %vm4194 = vcmp.eq.f32.partialorder %v4193, 8.507059e+37
        %v4195 = vand.u32 %v2604, 2147483648
        %v4196 = vor.u32 1.1754944e-38, %v4195
        %v4197 = vsel %vm4194, %v4196, %v4192
        %v4198 = vmul.f32 1.0, %v4197
        %v4199 = vrcp.pop %v2605
        %v4200 = vmul.f32 %v2605, %v4199
        %v4201 = vsub.f32 1.0, %v4200
        %v4202 = vmul.f32 %v4199, %v4201
        %v4203 = vadd.f32 %v4199, %v4202
        %vm4204 = vweird.f32 %v2605
        %vm4205 = vweird.f32 %v4199
        %vm4206 = vmor %vm4204, %vm4205
        %v4207 = vsel %vm4206, %v4199, %v4203
        %v4208 = vand.u32 2147483647, %v2605
        %vm4209 = vcmp.eq.f32.partialorder %v4208, 8.507059e+37
        %v4210 = vand.u32 %v2605, 2147483648
        %v4211 = vor.u32 1.1754944e-38, %v4210
        %v4212 = vsel %vm4209, %v4211, %v4207
        %v4213 = vmul.f32 1.0, %v4212
        %v4214 = vrcp.pop %v2606
        %v4215 = vmul.f32 %v2606, %v4214
        %v4216 = vsub.f32 1.0, %v4215
        %v4217 = vmul.f32 %v4214, %v4216
        %v4218 = vadd.f32 %v4214, %v4217
        %vm4219 = vweird.f32 %v2606
        %vm4220 = vweird.f32 %v4214
        %vm4221 = vmor %vm4219, %vm4220
        %v4222 = vsel %vm4221, %v4214, %v4218
        %v4223 = vand.u32 2147483647, %v2606
        %vm4224 = vcmp.eq.f32.partialorder %v4223, 8.507059e+37
        %v4225 = vand.u32 %v2606, 2147483648
        %v4226 = vor.u32 1.1754944e-38, %v4225
        %v4227 = vsel %vm4224, %v4226, %v4222
        %v4228 = vmul.f32 1.0, %v4227
        %v4229 = vrcp.pop %v2607
        %v4230 = vmul.f32 %v2607, %v4229
        %v4231 = vsub.f32 1.0, %v4230
        %v4232 = vmul.f32 %v4229, %v4231
        %v4233 = vadd.f32 %v4229, %v4232
        %vm4234 = vweird.f32 %v2607
        %vm4235 = vweird.f32 %v4229
        %vm4236 = vmor %vm4234, %vm4235
        %v4237 = vsel %vm4236, %v4229, %v4233
        %v4238 = vand.u32 2147483647, %v2607
        %vm4239 = vcmp.eq.f32.partialorder %v4238, 8.507059e+37
        %v4240 = vand.u32 %v2607, 2147483648
        %v4241 = vor.u32 1.1754944e-38, %v4240
        %v4242 = vsel %vm4239, %v4241, %v4237
        %v4243 = vmul.f32 1.0, %v4242
        %v4244 = vrcp.pop %v2608
        %v4245 = vmul.f32 %v2608, %v4244
        %v4246 = vsub.f32 1.0, %v4245
        %v4247 = vmul.f32 %v4244, %v4246
        %v4248 = vadd.f32 %v4244, %v4247
        %vm4249 = vweird.f32 %v2608
        %vm4250 = vweird.f32 %v4244
        %vm4251 = vmor %vm4249, %vm4250
        %v4252 = vsel %vm4251, %v4244, %v4248
        %v4253 = vand.u32 2147483647, %v2608
        %vm4254 = vcmp.eq.f32.partialorder %v4253, 8.507059e+37
        %v4255 = vand.u32 %v2608, 2147483648
        %v4256 = vor.u32 1.1754944e-38, %v4255
        %v4257 = vsel %vm4254, %v4256, %v4252
        %v4258 = vmul.f32 1.0, %v4257
        %v4259 = vrcp.pop %v2609
        %v4260 = vmul.f32 %v2609, %v4259
        %v4261 = vsub.f32 1.0, %v4260
        %v4262 = vmul.f32 %v4259, %v4261
        %v4263 = vadd.f32 %v4259, %v4262
        %vm4264 = vweird.f32 %v2609
        %vm4265 = vweird.f32 %v4259
        %vm4266 = vmor %vm4264, %vm4265
        %v4267 = vsel %vm4266, %v4259, %v4263
        %v4268 = vand.u32 2147483647, %v2609
        %vm4269 = vcmp.eq.f32.partialorder %v4268, 8.507059e+37
        %v4270 = vand.u32 %v2609, 2147483648
        %v4271 = vor.u32 1.1754944e-38, %v4270
        %v4272 = vsel %vm4269, %v4271, %v4267
        %v4273 = vmul.f32 1.0, %v4272
        %v4274 = vrcp.pop %v2610
        %v4275 = vmul.f32 %v2610, %v4274
        %v4276 = vsub.f32 1.0, %v4275
        %v4277 = vmul.f32 %v4274, %v4276
        %v4278 = vadd.f32 %v4274, %v4277
        %vm4279 = vweird.f32 %v2610
        %vm4280 = vweird.f32 %v4274
        %vm4281 = vmor %vm4279, %vm4280
        %v4282 = vsel %vm4281, %v4274, %v4278
        %v4283 = vand.u32 2147483647, %v2610
        %vm4284 = vcmp.eq.f32.partialorder %v4283, 8.507059e+37
        %v4285 = vand.u32 %v2610, 2147483648
        %v4286 = vor.u32 1.1754944e-38, %v4285
        %v4287 = vsel %vm4284, %v4286, %v4282
        %v4288 = vmul.f32 1.0, %v4287
        %v4289 = vrcp.pop %v2611
        %v4290 = vmul.f32 %v2611, %v4289
        %v4291 = vsub.f32 1.0, %v4290
        %v4292 = vmul.f32 %v4289, %v4291
        %v4293 = vadd.f32 %v4289, %v4292
        %vm4294 = vweird.f32 %v2611
        %vm4295 = vweird.f32 %v4289
        %vm4296 = vmor %vm4294, %vm4295
        %v4297 = vsel %vm4296, %v4289, %v4293
        %v4298 = vand.u32 2147483647, %v2611
        %vm4299 = vcmp.eq.f32.partialorder %v4298, 8.507059e+37
        %v4300 = vand.u32 %v2611, 2147483648
        %v4301 = vor.u32 1.1754944e-38, %v4300
        %v4302 = vsel %vm4299, %v4301, %v4297
        %v4303 = vmul.f32 1.0, %v4302
        %v4304 = vrcp.pop %v2612
        %v4305 = vmul.f32 %v2612, %v4304
        %v4306 = vsub.f32 1.0, %v4305
        %v4307 = vmul.f32 %v4304, %v4306
        %v4308 = vadd.f32 %v4304, %v4307
        %vm4309 = vweird.f32 %v2612
        %vm4310 = vweird.f32 %v4304
        %vm4311 = vmor %vm4309, %vm4310
        %v4312 = vsel %vm4311, %v4304, %v4308
        %v4313 = vand.u32 2147483647, %v2612
        %vm4314 = vcmp.eq.f32.partialorder %v4313, 8.507059e+37
        %v4315 = vand.u32 %v2612, 2147483648
        %v4316 = vor.u32 1.1754944e-38, %v4315
        %v4317 = vsel %vm4314, %v4316, %v4312
        %v4318 = vmul.f32 1.0, %v4317
        %v4319 = vrcp.pop %v2613
        %v4320 = vmul.f32 %v2613, %v4319
        %v4321 = vsub.f32 1.0, %v4320
        %v4322 = vmul.f32 %v4319, %v4321
        %v4323 = vadd.f32 %v4319, %v4322
        %vm4324 = vweird.f32 %v2613
        %vm4325 = vweird.f32 %v4319
        %vm4326 = vmor %vm4324, %vm4325
        %v4327 = vsel %vm4326, %v4319, %v4323
        %v4328 = vand.u32 2147483647, %v2613
        %vm4329 = vcmp.eq.f32.partialorder %v4328, 8.507059e+37
        %v4330 = vand.u32 %v2613, 2147483648
        %v4331 = vor.u32 1.1754944e-38, %v4330
        %v4332 = vsel %vm4329, %v4331, %v4327
        %v4333 = vmul.f32 1.0, %v4332
        %v4334 = vrcp.pop %v2614
        %v4335 = vmul.f32 %v2614, %v4334
        %v4336 = vsub.f32 1.0, %v4335
        %v4337 = vmul.f32 %v4334, %v4336
        %v4338 = vadd.f32 %v4334, %v4337
        %vm4339 = vweird.f32 %v2614
        %vm4340 = vweird.f32 %v4334
        %vm4341 = vmor %vm4339, %vm4340
        %v4342 = vsel %vm4341, %v4334, %v4338
        %v4343 = vand.u32 2147483647, %v2614
        %vm4344 = vcmp.eq.f32.partialorder %v4343, 8.507059e+37
        %v4345 = vand.u32 %v2614, 2147483648
        %v4346 = vor.u32 1.1754944e-38, %v4345
        %v4347 = vsel %vm4344, %v4346, %v4342
        %v4348 = vmul.f32 1.0, %v4347
        %v4349 = vrcp.pop %v2615
        %v4350 = vmul.f32 %v2615, %v4349
        %v4351 = vsub.f32 1.0, %v4350
        %v4352 = vmul.f32 %v4349, %v4351
        %v4353 = vadd.f32 %v4349, %v4352
        %vm4354 = vweird.f32 %v2615
        %vm4355 = vweird.f32 %v4349
        %vm4356 = vmor %vm4354, %vm4355
        %v4357 = vsel %vm4356, %v4349, %v4353
        %v4358 = vand.u32 2147483647, %v2615
        %vm4359 = vcmp.eq.f32.partialorder %v4358, 8.507059e+37
        %v4360 = vand.u32 %v2615, 2147483648
        %v4361 = vor.u32 1.1754944e-38, %v4360
        %v4362 = vsel %vm4359, %v4361, %v4357
        %v4363 = vmul.f32 1.0, %v4362
        %v4364 = vrcp.pop %v2616
        %v4365 = vmul.f32 %v2616, %v4364
        %v4366 = vsub.f32 1.0, %v4365
        %v4367 = vmul.f32 %v4364, %v4366
        %v4368 = vadd.f32 %v4364, %v4367
        %vm4369 = vweird.f32 %v2616
        %vm4370 = vweird.f32 %v4364
        %vm4371 = vmor %vm4369, %vm4370
        %v4372 = vsel %vm4371, %v4364, %v4368
        %v4373 = vand.u32 2147483647, %v2616
        %vm4374 = vcmp.eq.f32.partialorder %v4373, 8.507059e+37
        %v4375 = vand.u32 %v2616, 2147483648
        %v4376 = vor.u32 1.1754944e-38, %v4375
        %v4377 = vsel %vm4374, %v4376, %v4372
        %v4378 = vmul.f32 1.0, %v4377
        %v4379 = vrcp.pop %v2617
        %v4380 = vmul.f32 %v2617, %v4379
        %v4381 = vsub.f32 1.0, %v4380
        %v4382 = vmul.f32 %v4379, %v4381
        %v4383 = vadd.f32 %v4379, %v4382
        %vm4384 = vweird.f32 %v2617
        %vm4385 = vweird.f32 %v4379
        %vm4386 = vmor %vm4384, %vm4385
        %v4387 = vsel %vm4386, %v4379, %v4383
        %v4388 = vand.u32 2147483647, %v2617
        %vm4389 = vcmp.eq.f32.partialorder %v4388, 8.507059e+37
        %v4390 = vand.u32 %v2617, 2147483648
        %v4391 = vor.u32 1.1754944e-38, %v4390
        %v4392 = vsel %vm4389, %v4391, %v4387
        %v4393 = vmul.f32 1.0, %v4392
        %v4394 = vrcp.pop %v2618
        %v4395 = vmul.f32 %v2618, %v4394
        %v4396 = vsub.f32 1.0, %v4395
        %v4397 = vmul.f32 %v4394, %v4396
        %v4398 = vadd.f32 %v4394, %v4397
        %vm4399 = vweird.f32 %v2618
        %vm4400 = vweird.f32 %v4394
        %vm4401 = vmor %vm4399, %vm4400
        %v4402 = vsel %vm4401, %v4394, %v4398
        %v4403 = vand.u32 2147483647, %v2618
        %vm4404 = vcmp.eq.f32.partialorder %v4403, 8.507059e+37
        %v4405 = vand.u32 %v2618, 2147483648
        %v4406 = vor.u32 1.1754944e-38, %v4405
        %v4407 = vsel %vm4404, %v4406, %v4402
        %v4408 = vmul.f32 1.0, %v4407
        %v4409 = vrcp.pop %v2619
        %v4410 = vmul.f32 %v2619, %v4409
        %v4411 = vsub.f32 1.0, %v4410
        %v4412 = vmul.f32 %v4409, %v4411
        %v4413 = vadd.f32 %v4409, %v4412
        %vm4414 = vweird.f32 %v2619
        %vm4415 = vweird.f32 %v4409
        %vm4416 = vmor %vm4414, %vm4415
        %v4417 = vsel %vm4416, %v4409, %v4413
        %v4418 = vand.u32 2147483647, %v2619
        %vm4419 = vcmp.eq.f32.partialorder %v4418, 8.507059e+37
        %v4420 = vand.u32 %v2619, 2147483648
        %v4421 = vor.u32 1.1754944e-38, %v4420
        %v4422 = vsel %vm4419, %v4421, %v4417
        %v4423 = vmul.f32 1.0, %v4422
        %v4424 = vrcp.pop %v2620
        %v4425 = vmul.f32 %v2620, %v4424
        %v4426 = vsub.f32 1.0, %v4425
        %v4427 = vmul.f32 %v4424, %v4426
        %v4428 = vadd.f32 %v4424, %v4427
        %vm4429 = vweird.f32 %v2620
        %vm4430 = vweird.f32 %v4424
        %vm4431 = vmor %vm4429, %vm4430
        %v4432 = vsel %vm4431, %v4424, %v4428
        %v4433 = vand.u32 2147483647, %v2620
        %vm4434 = vcmp.eq.f32.partialorder %v4433, 8.507059e+37
        %v4435 = vand.u32 %v2620, 2147483648
        %v4436 = vor.u32 1.1754944e-38, %v4435
        %v4437 = vsel %vm4434, %v4436, %v4432
        %v4438 = vmul.f32 1.0, %v4437
        %v4439 = vrcp.pop %v2621
        %v4440 = vmul.f32 %v2621, %v4439
        %v4441 = vsub.f32 1.0, %v4440
        %v4442 = vmul.f32 %v4439, %v4441
        %v4443 = vadd.f32 %v4439, %v4442
        %vm4444 = vweird.f32 %v2621
        %vm4445 = vweird.f32 %v4439
        %vm4446 = vmor %vm4444, %vm4445
        %v4447 = vsel %vm4446, %v4439, %v4443
        %v4448 = vand.u32 2147483647, %v2621
        %vm4449 = vcmp.eq.f32.partialorder %v4448, 8.507059e+37
        %v4450 = vand.u32 %v2621, 2147483648
        %v4451 = vor.u32 1.1754944e-38, %v4450
        %v4452 = vsel %vm4449, %v4451, %v4447
        %v4453 = vmul.f32 1.0, %v4452
        %v4454 = vrcp.pop %v2622
        %v4455 = vmul.f32 %v2622, %v4454
        %v4456 = vsub.f32 1.0, %v4455
        %v4457 = vmul.f32 %v4454, %v4456
        %v4458 = vadd.f32 %v4454, %v4457
        %vm4459 = vweird.f32 %v2622
        %vm4460 = vweird.f32 %v4454
        %vm4461 = vmor %vm4459, %vm4460
        %v4462 = vsel %vm4461, %v4454, %v4458
        %v4463 = vand.u32 2147483647, %v2622
        %vm4464 = vcmp.eq.f32.partialorder %v4463, 8.507059e+37
        %v4465 = vand.u32 %v2622, 2147483648
        %v4466 = vor.u32 1.1754944e-38, %v4465
        %v4467 = vsel %vm4464, %v4466, %v4462
        %v4468 = vmul.f32 1.0, %v4467
        %v4469 = vrcp.pop %v2623
        %v4470 = vmul.f32 %v2623, %v4469
        %v4471 = vsub.f32 1.0, %v4470
        %v4472 = vmul.f32 %v4469, %v4471
        %v4473 = vadd.f32 %v4469, %v4472
        %vm4474 = vweird.f32 %v2623
        %vm4475 = vweird.f32 %v4469
        %vm4476 = vmor %vm4474, %vm4475
        %v4477 = vsel %vm4476, %v4469, %v4473
        %v4478 = vand.u32 2147483647, %v2623
        %vm4479 = vcmp.eq.f32.partialorder %v4478, 8.507059e+37
        %v4480 = vand.u32 %v2623, 2147483648
        %v4481 = vor.u32 1.1754944e-38, %v4480
        %v4482 = vsel %vm4479, %v4481, %v4477
        %v4483 = vmul.f32 1.0, %v4482
        %v4484 = vrcp.pop %v2624
        %v4485 = vmul.f32 %v2624, %v4484
        %v4486 = vsub.f32 1.0, %v4485
        %v4487 = vmul.f32 %v4484, %v4486
        %v4488 = vadd.f32 %v4484, %v4487
        %vm4489 = vweird.f32 %v2624
        %vm4490 = vweird.f32 %v4484
        %vm4491 = vmor %vm4489, %vm4490
        %v4492 = vsel %vm4491, %v4484, %v4488
        %v4493 = vand.u32 2147483647, %v2624
        %vm4494 = vcmp.eq.f32.partialorder %v4493, 8.507059e+37
        %v4495 = vand.u32 %v2624, 2147483648
        %v4496 = vor.u32 1.1754944e-38, %v4495
        %v4497 = vsel %vm4494, %v4496, %v4492
        %v4498 = vmul.f32 1.0, %v4497
        %v4499 = vrcp.pop %v2625
        %v4500 = vmul.f32 %v2625, %v4499
        %v4501 = vsub.f32 1.0, %v4500
        %v4502 = vmul.f32 %v4499, %v4501
        %v4503 = vadd.f32 %v4499, %v4502
        %vm4504 = vweird.f32 %v2625
        %vm4505 = vweird.f32 %v4499
        %vm4506 = vmor %vm4504, %vm4505
        %v4507 = vsel %vm4506, %v4499, %v4503
        %v4508 = vand.u32 2147483647, %v2625
        %vm4509 = vcmp.eq.f32.partialorder %v4508, 8.507059e+37
        %v4510 = vand.u32 %v2625, 2147483648
        %v4511 = vor.u32 1.1754944e-38, %v4510
        %v4512 = vsel %vm4509, %v4511, %v4507
        %v4513 = vmul.f32 1.0, %v4512
        %v4514 = vrcp.pop %v2626
        %v4515 = vmul.f32 %v2626, %v4514
        %v4516 = vsub.f32 1.0, %v4515
        %v4517 = vmul.f32 %v4514, %v4516
        %v4518 = vadd.f32 %v4514, %v4517
        %vm4519 = vweird.f32 %v2626
        %vm4520 = vweird.f32 %v4514
        %vm4521 = vmor %vm4519, %vm4520
        %v4522 = vsel %vm4521, %v4514, %v4518
        %v4523 = vand.u32 2147483647, %v2626
        %vm4524 = vcmp.eq.f32.partialorder %v4523, 8.507059e+37
        %v4525 = vand.u32 %v2626, 2147483648
        %v4526 = vor.u32 1.1754944e-38, %v4525
        %v4527 = vsel %vm4524, %v4526, %v4522
        %v4528 = vmul.f32 1.0, %v4527
        %v4529 = vrcp.pop %v2627
        %v4530 = vmul.f32 %v2627, %v4529
        %v4531 = vsub.f32 1.0, %v4530
        %v4532 = vmul.f32 %v4529, %v4531
        %v4533 = vadd.f32 %v4529, %v4532
        %vm4534 = vweird.f32 %v2627
        %vm4535 = vweird.f32 %v4529
        %vm4536 = vmor %vm4534, %vm4535
        %v4537 = vsel %vm4536, %v4529, %v4533
        %v4538 = vand.u32 2147483647, %v2627
        %vm4539 = vcmp.eq.f32.partialorder %v4538, 8.507059e+37
        %v4540 = vand.u32 %v2627, 2147483648
        %v4541 = vor.u32 1.1754944e-38, %v4540
        %v4542 = vsel %vm4539, %v4541, %v4537
        %v4543 = vmul.f32 1.0, %v4542
        %v4544 = vrcp.pop %v2628
        %v4545 = vmul.f32 %v2628, %v4544
        %v4546 = vsub.f32 1.0, %v4545
        %v4547 = vmul.f32 %v4544, %v4546
        %v4548 = vadd.f32 %v4544, %v4547
        %vm4549 = vweird.f32 %v2628
        %vm4550 = vweird.f32 %v4544
        %vm4551 = vmor %vm4549, %vm4550
        %v4552 = vsel %vm4551, %v4544, %v4548
        %v4553 = vand.u32 2147483647, %v2628
        %vm4554 = vcmp.eq.f32.partialorder %v4553, 8.507059e+37
        %v4555 = vand.u32 %v2628, 2147483648
        %v4556 = vor.u32 1.1754944e-38, %v4555
        %v4557 = vsel %vm4554, %v4556, %v4552
        %v4558 = vmul.f32 1.0, %v4557
        %v4559 = vrcp.pop %v2629
        %v4560 = vmul.f32 %v2629, %v4559
        %v4561 = vsub.f32 1.0, %v4560
        %v4562 = vmul.f32 %v4559, %v4561
        %v4563 = vadd.f32 %v4559, %v4562
        %vm4564 = vweird.f32 %v2629
        %vm4565 = vweird.f32 %v4559
        %vm4566 = vmor %vm4564, %vm4565
        %v4567 = vsel %vm4566, %v4559, %v4563
        %v4568 = vand.u32 2147483647, %v2629
        %vm4569 = vcmp.eq.f32.partialorder %v4568, 8.507059e+37
        %v4570 = vand.u32 %v2629, 2147483648
        %v4571 = vor.u32 1.1754944e-38, %v4570
        %v4572 = vsel %vm4569, %v4571, %v4567
        %v4573 = vmul.f32 1.0, %v4572
        %v4574 = vrcp.pop %v2630
        %v4575 = vmul.f32 %v2630, %v4574
        %v4576 = vsub.f32 1.0, %v4575
        %v4577 = vmul.f32 %v4574, %v4576
        %v4578 = vadd.f32 %v4574, %v4577
        %vm4579 = vweird.f32 %v2630
        %vm4580 = vweird.f32 %v4574
        %vm4581 = vmor %vm4579, %vm4580
        %v4582 = vsel %vm4581, %v4574, %v4578
        %v4583 = vand.u32 2147483647, %v2630
        %vm4584 = vcmp.eq.f32.partialorder %v4583, 8.507059e+37
        %v4585 = vand.u32 %v2630, 2147483648
        %v4586 = vor.u32 1.1754944e-38, %v4585
        %v4587 = vsel %vm4584, %v4586, %v4582
        %v4588 = vmul.f32 1.0, %v4587
        %v4589 = vrcp.pop %v2631
        %v4590 = vmul.f32 %v2631, %v4589
        %v4591 = vsub.f32 1.0, %v4590
        %v4592 = vmul.f32 %v4589, %v4591
        %v4593 = vadd.f32 %v4589, %v4592
        %vm4594 = vweird.f32 %v2631
        %vm4595 = vweird.f32 %v4589
        %vm4596 = vmor %vm4594, %vm4595
        %v4597 = vsel %vm4596, %v4589, %v4593
        %v4598 = vand.u32 2147483647, %v2631
        %vm4599 = vcmp.eq.f32.partialorder %v4598, 8.507059e+37
        %v4600 = vand.u32 %v2631, 2147483648
        %v4601 = vor.u32 1.1754944e-38, %v4600
        %v4602 = vsel %vm4599, %v4601, %v4597
        %v4603 = vmul.f32 1.0, %v4602
        %v4604 = vrcp.pop %v2632
        %v4605 = vmul.f32 %v2632, %v4604
        %v4606 = vsub.f32 1.0, %v4605
        %v4607 = vmul.f32 %v4604, %v4606
        %v4608 = vadd.f32 %v4604, %v4607
        %vm4609 = vweird.f32 %v2632
        %vm4610 = vweird.f32 %v4604
        %vm4611 = vmor %vm4609, %vm4610
        %v4612 = vsel %vm4611, %v4604, %v4608
        %v4613 = vand.u32 2147483647, %v2632
        %vm4614 = vcmp.eq.f32.partialorder %v4613, 8.507059e+37
        %v4615 = vand.u32 %v2632, 2147483648
        %v4616 = vor.u32 1.1754944e-38, %v4615
        %v4617 = vsel %vm4614, %v4616, %v4612
        %v4618 = vmul.f32 1.0, %v4617
        %v4619 = vrcp.pop %v2633
        %v4620 = vmul.f32 %v2633, %v4619
        %v4621 = vsub.f32 1.0, %v4620
        %v4622 = vmul.f32 %v4619, %v4621
        %v4623 = vadd.f32 %v4619, %v4622
        %vm4624 = vweird.f32 %v2633
        %vm4625 = vweird.f32 %v4619
        %vm4626 = vmor %vm4624, %vm4625
        %v4627 = vsel %vm4626, %v4619, %v4623
        %v4628 = vand.u32 2147483647, %v2633
        %vm4629 = vcmp.eq.f32.partialorder %v4628, 8.507059e+37
        %v4630 = vand.u32 %v2633, 2147483648
        %v4631 = vor.u32 1.1754944e-38, %v4630
        %v4632 = vsel %vm4629, %v4631, %v4627
        %v4633 = vmul.f32 1.0, %v4632
        %v4634 = vrcp.pop %v2634
        %v4635 = vmul.f32 %v2634, %v4634
        %v4636 = vsub.f32 1.0, %v4635
        %v4637 = vmul.f32 %v4634, %v4636
        %v4638 = vadd.f32 %v4634, %v4637
        %vm4639 = vweird.f32 %v2634
        %vm4640 = vweird.f32 %v4634
        %vm4641 = vmor %vm4639, %vm4640
        %v4642 = vsel %vm4641, %v4634, %v4638
        %v4643 = vand.u32 2147483647, %v2634
        %vm4644 = vcmp.eq.f32.partialorder %v4643, 8.507059e+37
        %v4645 = vand.u32 %v2634, 2147483648
        %v4646 = vor.u32 1.1754944e-38, %v4645
        %v4647 = vsel %vm4644, %v4646, %v4642
        %v4648 = vmul.f32 1.0, %v4647
        %v4649 = vrcp.pop %v2635
        %v4650 = vmul.f32 %v2635, %v4649
        %v4651 = vsub.f32 1.0, %v4650
        %v4652 = vmul.f32 %v4649, %v4651
        %v4653 = vadd.f32 %v4649, %v4652
        %vm4654 = vweird.f32 %v2635
        %vm4655 = vweird.f32 %v4649
        %vm4656 = vmor %vm4654, %vm4655
        %v4657 = vsel %vm4656, %v4649, %v4653
        %v4658 = vand.u32 2147483647, %v2635
        %vm4659 = vcmp.eq.f32.partialorder %v4658, 8.507059e+37
        %v4660 = vand.u32 %v2635, 2147483648
        %v4661 = vor.u32 1.1754944e-38, %v4660
        %v4662 = vsel %vm4659, %v4661, %v4657
        %v4663 = vmul.f32 1.0, %v4662
        %v4664 = vrcp.pop %v2636
        %v4665 = vmul.f32 %v2636, %v4664
        %v4666 = vsub.f32 1.0, %v4665
        %v4667 = vmul.f32 %v4664, %v4666
        %v4668 = vadd.f32 %v4664, %v4667
        %vm4669 = vweird.f32 %v2636
        %vm4670 = vweird.f32 %v4664
        %vm4671 = vmor %vm4669, %vm4670
        %v4672 = vsel %vm4671, %v4664, %v4668
        %v4673 = vand.u32 2147483647, %v2636
        %vm4674 = vcmp.eq.f32.partialorder %v4673, 8.507059e+37
        %v4675 = vand.u32 %v2636, 2147483648
        %v4676 = vor.u32 1.1754944e-38, %v4675
        %v4677 = vsel %vm4674, %v4676, %v4672
        %v4678 = vmul.f32 1.0, %v4677
        %v4679 = vrcp.pop %v2637
        %v4680 = vmul.f32 %v2637, %v4679
        %v4681 = vsub.f32 1.0, %v4680
        %v4682 = vmul.f32 %v4679, %v4681
        %v4683 = vadd.f32 %v4679, %v4682
        %vm4684 = vweird.f32 %v2637
        %vm4685 = vweird.f32 %v4679
        %vm4686 = vmor %vm4684, %vm4685
        %v4687 = vsel %vm4686, %v4679, %v4683
        %v4688 = vand.u32 2147483647, %v2637
        %vm4689 = vcmp.eq.f32.partialorder %v4688, 8.507059e+37
        %v4690 = vand.u32 %v2637, 2147483648
        %v4691 = vor.u32 1.1754944e-38, %v4690
        %v4692 = vsel %vm4689, %v4691, %v4687
        %v4693 = vmul.f32 1.0, %v4692
        %v4694 = vrcp.pop %v2638
        %v4695 = vmul.f32 %v2638, %v4694
        %v4696 = vsub.f32 1.0, %v4695
        %v4697 = vmul.f32 %v4694, %v4696
        %v4698 = vadd.f32 %v4694, %v4697
        %vm4699 = vweird.f32 %v2638
        %vm4700 = vweird.f32 %v4694
        %vm4701 = vmor %vm4699, %vm4700
        %v4702 = vsel %vm4701, %v4694, %v4698
        %v4703 = vand.u32 2147483647, %v2638
        %vm4704 = vcmp.eq.f32.partialorder %v4703, 8.507059e+37
        %v4705 = vand.u32 %v2638, 2147483648
        %v4706 = vor.u32 1.1754944e-38, %v4705
        %v4707 = vsel %vm4704, %v4706, %v4702
        %v4708 = vmul.f32 1.0, %v4707
        %v4709 = vrcp.pop %v2639
        %v4710 = vmul.f32 %v2639, %v4709
        %v4711 = vsub.f32 1.0, %v4710
        %v4712 = vmul.f32 %v4709, %v4711
        %v4713 = vadd.f32 %v4709, %v4712
        %vm4714 = vweird.f32 %v2639
        %vm4715 = vweird.f32 %v4709
        %vm4716 = vmor %vm4714, %vm4715
        %v4717 = vsel %vm4716, %v4709, %v4713
        %v4718 = vand.u32 2147483647, %v2639
        %vm4719 = vcmp.eq.f32.partialorder %v4718, 8.507059e+37
        %v4720 = vand.u32 %v2639, 2147483648
        %v4721 = vor.u32 1.1754944e-38, %v4720
        %v4722 = vsel %vm4719, %v4721, %v4717
        %v4723 = vmul.f32 1.0, %v4722
        %v4724 = vrcp.pop %v2640
        %v4725 = vmul.f32 %v2640, %v4724
        %v4726 = vsub.f32 1.0, %v4725
        %v4727 = vmul.f32 %v4724, %v4726
        %v4728 = vadd.f32 %v4724, %v4727
        %vm4729 = vweird.f32 %v2640
        %vm4730 = vweird.f32 %v4724
        %vm4731 = vmor %vm4729, %vm4730
        %v4732 = vsel %vm4731, %v4724, %v4728
        %v4733 = vand.u32 2147483647, %v2640
        %vm4734 = vcmp.eq.f32.partialorder %v4733, 8.507059e+37
        %v4735 = vand.u32 %v2640, 2147483648
        %v4736 = vor.u32 1.1754944e-38, %v4735
        %v4737 = vsel %vm4734, %v4736, %v4732
        %v4738 = vmul.f32 1.0, %v4737
        %v4739 = vrcp.pop %v2641
        %v4740 = vmul.f32 %v2641, %v4739
        %v4741 = vsub.f32 1.0, %v4740
        %v4742 = vmul.f32 %v4739, %v4741
        %v4743 = vadd.f32 %v4739, %v4742
        %vm4744 = vweird.f32 %v2641
        %vm4745 = vweird.f32 %v4739
        %vm4746 = vmor %vm4744, %vm4745
        %v4747 = vsel %vm4746, %v4739, %v4743
        %v4748 = vand.u32 2147483647, %v2641
        %vm4749 = vcmp.eq.f32.partialorder %v4748, 8.507059e+37
        %v4750 = vand.u32 %v2641, 2147483648
        %v4751 = vor.u32 1.1754944e-38, %v4750
        %v4752 = vsel %vm4749, %v4751, %v4747
        %v4753 = vmul.f32 1.0, %v4752
        %v4754 = vrcp.pop %v2642
        %v4755 = vmul.f32 %v2642, %v4754
        %v4756 = vsub.f32 1.0, %v4755
        %v4757 = vmul.f32 %v4754, %v4756
        %v4758 = vadd.f32 %v4754, %v4757
        %vm4759 = vweird.f32 %v2642
        %vm4760 = vweird.f32 %v4754
        %vm4761 = vmor %vm4759, %vm4760
        %v4762 = vsel %vm4761, %v4754, %v4758
        %v4763 = vand.u32 2147483647, %v2642
        %vm4764 = vcmp.eq.f32.partialorder %v4763, 8.507059e+37
        %v4765 = vand.u32 %v2642, 2147483648
        %v4766 = vor.u32 1.1754944e-38, %v4765
        %v4767 = vsel %vm4764, %v4766, %v4762
        %v4768 = vmul.f32 1.0, %v4767
        %v4769 = vrcp.pop %v2643
        %v4770 = vmul.f32 %v2643, %v4769
        %v4771 = vsub.f32 1.0, %v4770
        %v4772 = vmul.f32 %v4769, %v4771
        %v4773 = vadd.f32 %v4769, %v4772
        %vm4774 = vweird.f32 %v2643
        %vm4775 = vweird.f32 %v4769
        %vm4776 = vmor %vm4774, %vm4775
        %v4777 = vsel %vm4776, %v4769, %v4773
        %v4778 = vand.u32 2147483647, %v2643
        %vm4779 = vcmp.eq.f32.partialorder %v4778, 8.507059e+37
        %v4780 = vand.u32 %v2643, 2147483648
        %v4781 = vor.u32 1.1754944e-38, %v4780
        %v4782 = vsel %vm4779, %v4781, %v4777
        %v4783 = vmul.f32 1.0, %v4782
        %v4784 = vrcp.pop %v2644
        %v4785 = vmul.f32 %v2644, %v4784
        %v4786 = vsub.f32 1.0, %v4785
        %v4787 = vmul.f32 %v4784, %v4786
        %v4788 = vadd.f32 %v4784, %v4787
        %vm4789 = vweird.f32 %v2644
        %vm4790 = vweird.f32 %v4784
        %vm4791 = vmor %vm4789, %vm4790
        %v4792 = vsel %vm4791, %v4784, %v4788
        %v4793 = vand.u32 2147483647, %v2644
        %vm4794 = vcmp.eq.f32.partialorder %v4793, 8.507059e+37
        %v4795 = vand.u32 %v2644, 2147483648
        %v4796 = vor.u32 1.1754944e-38, %v4795
        %v4797 = vsel %vm4794, %v4796, %v4792
        %v4798 = vmul.f32 1.0, %v4797
        %v4799 = vrcp.pop %v2645
        %v4800 = vmul.f32 %v2645, %v4799
        %v4801 = vsub.f32 1.0, %v4800
        %v4802 = vmul.f32 %v4799, %v4801
        %v4803 = vadd.f32 %v4799, %v4802
        %vm4804 = vweird.f32 %v2645
        %vm4805 = vweird.f32 %v4799
        %vm4806 = vmor %vm4804, %vm4805
        %v4807 = vsel %vm4806, %v4799, %v4803
        %v4808 = vand.u32 2147483647, %v2645
        %vm4809 = vcmp.eq.f32.partialorder %v4808, 8.507059e+37
        %v4810 = vand.u32 %v2645, 2147483648
        %v4811 = vor.u32 1.1754944e-38, %v4810
        %v4812 = vsel %vm4809, %v4811, %v4807
        %v4813 = vmul.f32 1.0, %v4812
        %v4814 = vrcp.pop %v2646
        %v4815 = vmul.f32 %v2646, %v4814
        %v4816 = vsub.f32 1.0, %v4815
        %v4817 = vmul.f32 %v4814, %v4816
        %v4818 = vadd.f32 %v4814, %v4817
        %vm4819 = vweird.f32 %v2646
        %vm4820 = vweird.f32 %v4814
        %vm4821 = vmor %vm4819, %vm4820
        %v4822 = vsel %vm4821, %v4814, %v4818
        %v4823 = vand.u32 2147483647, %v2646
        %vm4824 = vcmp.eq.f32.partialorder %v4823, 8.507059e+37
        %v4825 = vand.u32 %v2646, 2147483648
        %v4826 = vor.u32 1.1754944e-38, %v4825
        %v4827 = vsel %vm4824, %v4826, %v4822
        %v4828 = vmul.f32 1.0, %v4827
        %v4829 = vrcp.pop %v2647
        %v4830 = vmul.f32 %v2647, %v4829
        %v4831 = vsub.f32 1.0, %v4830
        %v4832 = vmul.f32 %v4829, %v4831
        %v4833 = vadd.f32 %v4829, %v4832
        %vm4834 = vweird.f32 %v2647
        %vm4835 = vweird.f32 %v4829
        %vm4836 = vmor %vm4834, %vm4835
        %v4837 = vsel %vm4836, %v4829, %v4833
        %v4838 = vand.u32 2147483647, %v2647
        %vm4839 = vcmp.eq.f32.partialorder %v4838, 8.507059e+37
        %v4840 = vand.u32 %v2647, 2147483648
        %v4841 = vor.u32 1.1754944e-38, %v4840
        %v4842 = vsel %vm4839, %v4841, %v4837
        %v4843 = vmul.f32 1.0, %v4842
        %v4844 = vrcp.pop %v2648
        %v4845 = vmul.f32 %v2648, %v4844
        %v4846 = vsub.f32 1.0, %v4845
        %v4847 = vmul.f32 %v4844, %v4846
        %v4848 = vadd.f32 %v4844, %v4847
        %vm4849 = vweird.f32 %v2648
        %vm4850 = vweird.f32 %v4844
        %vm4851 = vmor %vm4849, %vm4850
        %v4852 = vsel %vm4851, %v4844, %v4848
        %v4853 = vand.u32 2147483647, %v2648
        %vm4854 = vcmp.eq.f32.partialorder %v4853, 8.507059e+37
        %v4855 = vand.u32 %v2648, 2147483648
        %v4856 = vor.u32 1.1754944e-38, %v4855
        %v4857 = vsel %vm4854, %v4856, %v4852
        %v4858 = vmul.f32 1.0, %v4857
        %v4859 = vrcp.pop %v2649
        %v4860 = vmul.f32 %v2649, %v4859
        %v4861 = vsub.f32 1.0, %v4860
        %v4862 = vmul.f32 %v4859, %v4861
        %v4863 = vadd.f32 %v4859, %v4862
        %vm4864 = vweird.f32 %v2649
        %vm4865 = vweird.f32 %v4859
        %vm4866 = vmor %vm4864, %vm4865
        %v4867 = vsel %vm4866, %v4859, %v4863
        %v4868 = vand.u32 2147483647, %v2649
        %vm4869 = vcmp.eq.f32.partialorder %v4868, 8.507059e+37
        %v4870 = vand.u32 %v2649, 2147483648
        %v4871 = vor.u32 1.1754944e-38, %v4870
        %v4872 = vsel %vm4869, %v4871, %v4867
        %v4873 = vmul.f32 1.0, %v4872
        %v4874 = vrcp.pop %v2650
        %v4875 = vmul.f32 %v2650, %v4874
        %v4876 = vsub.f32 1.0, %v4875
        %v4877 = vmul.f32 %v4874, %v4876
        %v4878 = vadd.f32 %v4874, %v4877
        %vm4879 = vweird.f32 %v2650
        %vm4880 = vweird.f32 %v4874
        %vm4881 = vmor %vm4879, %vm4880
        %v4882 = vsel %vm4881, %v4874, %v4878
        %v4883 = vand.u32 2147483647, %v2650
        %vm4884 = vcmp.eq.f32.partialorder %v4883, 8.507059e+37
        %v4885 = vand.u32 %v2650, 2147483648
        %v4886 = vor.u32 1.1754944e-38, %v4885
        %v4887 = vsel %vm4884, %v4886, %v4882
        %v4888 = vmul.f32 1.0, %v4887
        %v4889 = vrcp.pop %v2651
        %v4890 = vmul.f32 %v2651, %v4889
        %v4891 = vsub.f32 1.0, %v4890
        %v4892 = vmul.f32 %v4889, %v4891
        %v4893 = vadd.f32 %v4889, %v4892
        %vm4894 = vweird.f32 %v2651
        %vm4895 = vweird.f32 %v4889
        %vm4896 = vmor %vm4894, %vm4895
        %v4897 = vsel %vm4896, %v4889, %v4893
        %v4898 = vand.u32 2147483647, %v2651
        %vm4899 = vcmp.eq.f32.partialorder %v4898, 8.507059e+37
        %v4900 = vand.u32 %v2651, 2147483648
        %v4901 = vor.u32 1.1754944e-38, %v4900
        %v4902 = vsel %vm4899, %v4901, %v4897
        %v4903 = vmul.f32 1.0, %v4902
        %v4904 = vrcp.pop %v2652
        %v4905 = vmul.f32 %v2652, %v4904
        %v4906 = vsub.f32 1.0, %v4905
        %v4907 = vmul.f32 %v4904, %v4906
        %v4908 = vadd.f32 %v4904, %v4907
        %vm4909 = vweird.f32 %v2652
        %vm4910 = vweird.f32 %v4904
        %vm4911 = vmor %vm4909, %vm4910
        %v4912 = vsel %vm4911, %v4904, %v4908
        %v4913 = vand.u32 2147483647, %v2652
        %vm4914 = vcmp.eq.f32.partialorder %v4913, 8.507059e+37
        %v4915 = vand.u32 %v2652, 2147483648
        %v4916 = vor.u32 1.1754944e-38, %v4915
        %v4917 = vsel %vm4914, %v4916, %v4912
        %v4918 = vmul.f32 1.0, %v4917
        %v4919 = vrcp.pop %v2653
        %v4920 = vmul.f32 %v2653, %v4919
        %v4921 = vsub.f32 1.0, %v4920
        %v4922 = vmul.f32 %v4919, %v4921
        %v4923 = vadd.f32 %v4919, %v4922
        %vm4924 = vweird.f32 %v2653
        %vm4925 = vweird.f32 %v4919
        %vm4926 = vmor %vm4924, %vm4925
        %v4927 = vsel %vm4926, %v4919, %v4923
        %v4928 = vand.u32 2147483647, %v2653
        %vm4929 = vcmp.eq.f32.partialorder %v4928, 8.507059e+37
        %v4930 = vand.u32 %v2653, 2147483648
        %v4931 = vor.u32 1.1754944e-38, %v4930
        %v4932 = vsel %vm4929, %v4931, %v4927
        %v4933 = vmul.f32 1.0, %v4932
        %v4934 = vrcp.pop %v2654
        %v4935 = vmul.f32 %v2654, %v4934
        %v4936 = vsub.f32 1.0, %v4935
        %v4937 = vmul.f32 %v4934, %v4936
        %v4938 = vadd.f32 %v4934, %v4937
        %vm4939 = vweird.f32 %v2654
        %vm4940 = vweird.f32 %v4934
        %vm4941 = vmor %vm4939, %vm4940
        %v4942 = vsel %vm4941, %v4934, %v4938
        %v4943 = vand.u32 2147483647, %v2654
        %vm4944 = vcmp.eq.f32.partialorder %v4943, 8.507059e+37
        %v4945 = vand.u32 %v2654, 2147483648
        %v4946 = vor.u32 1.1754944e-38, %v4945
        %v4947 = vsel %vm4944, %v4946, %v4942
        %v4948 = vmul.f32 1.0, %v4947
        %v4949 = vrcp.pop %v2655
        %v4950 = vmul.f32 %v2655, %v4949
        %v4951 = vsub.f32 1.0, %v4950
        %v4952 = vmul.f32 %v4949, %v4951
        %v4953 = vadd.f32 %v4949, %v4952
        %vm4954 = vweird.f32 %v2655
        %vm4955 = vweird.f32 %v4949
        %vm4956 = vmor %vm4954, %vm4955
        %v4957 = vsel %vm4956, %v4949, %v4953
        %v4958 = vand.u32 2147483647, %v2655
        %vm4959 = vcmp.eq.f32.partialorder %v4958, 8.507059e+37
        %v4960 = vand.u32 %v2655, 2147483648
        %v4961 = vor.u32 1.1754944e-38, %v4960
        %v4962 = vsel %vm4959, %v4961, %v4957
        %v4963 = vmul.f32 1.0, %v4962
        %v4964 = vrcp.pop %v2656
        %v4965 = vmul.f32 %v2656, %v4964
        %v4966 = vsub.f32 1.0, %v4965
        %v4967 = vmul.f32 %v4964, %v4966
        %v4968 = vadd.f32 %v4964, %v4967
        %vm4969 = vweird.f32 %v2656
        %vm4970 = vweird.f32 %v4964
        %vm4971 = vmor %vm4969, %vm4970
        %v4972 = vsel %vm4971, %v4964, %v4968
        %v4973 = vand.u32 2147483647, %v2656
        %vm4974 = vcmp.eq.f32.partialorder %v4973, 8.507059e+37
        %v4975 = vand.u32 %v2656, 2147483648
        %v4976 = vor.u32 1.1754944e-38, %v4975
        %v4977 = vsel %vm4974, %v4976, %v4972
        %v4978 = vmul.f32 1.0, %v4977
        %v4979 = vrcp.pop %v2657
        %v4980 = vmul.f32 %v2657, %v4979
        %v4981 = vsub.f32 1.0, %v4980
        %v4982 = vmul.f32 %v4979, %v4981
        %v4983 = vadd.f32 %v4979, %v4982
        %vm4984 = vweird.f32 %v2657
        %vm4985 = vweird.f32 %v4979
        %vm4986 = vmor %vm4984, %vm4985
        %v4987 = vsel %vm4986, %v4979, %v4983
        %v4988 = vand.u32 2147483647, %v2657
        %vm4989 = vcmp.eq.f32.partialorder %v4988, 8.507059e+37
        %v4990 = vand.u32 %v2657, 2147483648
        %v4991 = vor.u32 1.1754944e-38, %v4990
        %v4992 = vsel %vm4989, %v4991, %v4987
        %v4993 = vmul.f32 1.0, %v4992
        %v4994 = vrcp.pop %v2658
        %v4995 = vmul.f32 %v2658, %v4994
        %v4996 = vsub.f32 1.0, %v4995
        %v4997 = vmul.f32 %v4994, %v4996
        %v4998 = vadd.f32 %v4994, %v4997
        %vm4999 = vweird.f32 %v2658
        %vm5000 = vweird.f32 %v4994
        %vm5001 = vmor %vm4999, %vm5000
        %v5002 = vsel %vm5001, %v4994, %v4998
        %v5003 = vand.u32 2147483647, %v2658
        %vm5004 = vcmp.eq.f32.partialorder %v5003, 8.507059e+37
        %v5005 = vand.u32 %v2658, 2147483648
        %v5006 = vor.u32 1.1754944e-38, %v5005
        %v5007 = vsel %vm5004, %v5006, %v5002
        %v5008 = vmul.f32 1.0, %v5007
        %v5009 = vrcp.pop %v2659
        %v5010 = vmul.f32 %v2659, %v5009
        %v5011 = vsub.f32 1.0, %v5010
        %v5012 = vmul.f32 %v5009, %v5011
        %v5013 = vadd.f32 %v5009, %v5012
        %vm5014 = vweird.f32 %v2659
        %vm5015 = vweird.f32 %v5009
        %vm5016 = vmor %vm5014, %vm5015
        %v5017 = vsel %vm5016, %v5009, %v5013
        %v5018 = vand.u32 2147483647, %v2659
        %vm5019 = vcmp.eq.f32.partialorder %v5018, 8.507059e+37
        %v5020 = vand.u32 %v2659, 2147483648
        %v5021 = vor.u32 1.1754944e-38, %v5020
        %v5022 = vsel %vm5019, %v5021, %v5017
        %v5023 = vmul.f32 1.0, %v5022
        %v5024 = vrcp.pop %v2660
        %v5025 = vmul.f32 %v2660, %v5024
        %v5026 = vsub.f32 1.0, %v5025
        %v5027 = vmul.f32 %v5024, %v5026
        %v5028 = vadd.f32 %v5024, %v5027
        %vm5029 = vweird.f32 %v2660
        %vm5030 = vweird.f32 %v5024
        %vm5031 = vmor %vm5029, %vm5030
        %v5032 = vsel %vm5031, %v5024, %v5028
        %v5033 = vand.u32 2147483647, %v2660
        %vm5034 = vcmp.eq.f32.partialorder %v5033, 8.507059e+37
        %v5035 = vand.u32 %v2660, 2147483648
        %v5036 = vor.u32 1.1754944e-38, %v5035
        %v5037 = vsel %vm5034, %v5036, %v5032
        %v5038 = vmul.f32 1.0, %v5037
        %v5039 = vrcp.pop %v2661
        %v5040 = vmul.f32 %v2661, %v5039
        %v5041 = vsub.f32 1.0, %v5040
        %v5042 = vmul.f32 %v5039, %v5041
        %v5043 = vadd.f32 %v5039, %v5042
        %vm5044 = vweird.f32 %v2661
        %vm5045 = vweird.f32 %v5039
        %vm5046 = vmor %vm5044, %vm5045
        %v5047 = vsel %vm5046, %v5039, %v5043
        %v5048 = vand.u32 2147483647, %v2661
        %vm5049 = vcmp.eq.f32.partialorder %v5048, 8.507059e+37
        %v5050 = vand.u32 %v2661, 2147483648
        %v5051 = vor.u32 1.1754944e-38, %v5050
        %v5052 = vsel %vm5049, %v5051, %v5047
        %v5053 = vmul.f32 1.0, %v5052
        %v5054 = vrcp.pop %v2662
        %v5055 = vmul.f32 %v2662, %v5054
        %v5056 = vsub.f32 1.0, %v5055
        %v5057 = vmul.f32 %v5054, %v5056
        %v5058 = vadd.f32 %v5054, %v5057
        %vm5059 = vweird.f32 %v2662
        %vm5060 = vweird.f32 %v5054
        %vm5061 = vmor %vm5059, %vm5060
        %v5062 = vsel %vm5061, %v5054, %v5058
        %v5063 = vand.u32 2147483647, %v2662
        %vm5064 = vcmp.eq.f32.partialorder %v5063, 8.507059e+37
        %v5065 = vand.u32 %v2662, 2147483648
        %v5066 = vor.u32 1.1754944e-38, %v5065
        %v5067 = vsel %vm5064, %v5066, %v5062
        %v5068 = vmul.f32 1.0, %v5067
        %v5069 = vrcp.pop %v2663
        %v5070 = vmul.f32 %v2663, %v5069
        %v5071 = vsub.f32 1.0, %v5070
        %v5072 = vmul.f32 %v5069, %v5071
        %v5073 = vadd.f32 %v5069, %v5072
        %vm5074 = vweird.f32 %v2663
        %vm5075 = vweird.f32 %v5069
        %vm5076 = vmor %vm5074, %vm5075
        %v5077 = vsel %vm5076, %v5069, %v5073
        %v5078 = vand.u32 2147483647, %v2663
        %vm5079 = vcmp.eq.f32.partialorder %v5078, 8.507059e+37
        %v5080 = vand.u32 %v2663, 2147483648
        %v5081 = vor.u32 1.1754944e-38, %v5080
        %v5082 = vsel %vm5079, %v5081, %v5077
        %v5083 = vmul.f32 1.0, %v5082
        %v5084 = vrcp.pop %v2664
        %v5085 = vmul.f32 %v2664, %v5084
        %v5086 = vsub.f32 1.0, %v5085
        %v5087 = vmul.f32 %v5084, %v5086
        %v5088 = vadd.f32 %v5084, %v5087
        %vm5089 = vweird.f32 %v2664
        %vm5090 = vweird.f32 %v5084
        %vm5091 = vmor %vm5089, %vm5090
        %v5092 = vsel %vm5091, %v5084, %v5088
        %v5093 = vand.u32 2147483647, %v2664
        %vm5094 = vcmp.eq.f32.partialorder %v5093, 8.507059e+37
        %v5095 = vand.u32 %v2664, 2147483648
        %v5096 = vor.u32 1.1754944e-38, %v5095
        %v5097 = vsel %vm5094, %v5096, %v5092
        %v5098 = vmul.f32 1.0, %v5097
        %v5099 = vrcp.pop %v2665
        %v5100 = vmul.f32 %v2665, %v5099
        %v5101 = vsub.f32 1.0, %v5100
        %v5102 = vmul.f32 %v5099, %v5101
        %v5103 = vadd.f32 %v5099, %v5102
        %vm5104 = vweird.f32 %v2665
        %vm5105 = vweird.f32 %v5099
        %vm5106 = vmor %vm5104, %vm5105
        %v5107 = vsel %vm5106, %v5099, %v5103
        %v5108 = vand.u32 2147483647, %v2665
        %vm5109 = vcmp.eq.f32.partialorder %v5108, 8.507059e+37
        %v5110 = vand.u32 %v2665, 2147483648
        %v5111 = vor.u32 1.1754944e-38, %v5110
        %v5112 = vsel %vm5109, %v5111, %v5107
        %v5113 = vmul.f32 1.0, %v5112
        %v5114 = vrcp.pop %v2666
        %v5115 = vmul.f32 %v2666, %v5114
        %v5116 = vsub.f32 1.0, %v5115
        %v5117 = vmul.f32 %v5114, %v5116
        %v5118 = vadd.f32 %v5114, %v5117
        %vm5119 = vweird.f32 %v2666
        %vm5120 = vweird.f32 %v5114
        %vm5121 = vmor %vm5119, %vm5120
        %v5122 = vsel %vm5121, %v5114, %v5118
        %v5123 = vand.u32 2147483647, %v2666
        %vm5124 = vcmp.eq.f32.partialorder %v5123, 8.507059e+37
        %v5125 = vand.u32 %v2666, 2147483648
        %v5126 = vor.u32 1.1754944e-38, %v5125
        %v5127 = vsel %vm5124, %v5126, %v5122
        %v5128 = vmul.f32 1.0, %v5127
        %v5129 = vrcp.pop %v2667
        %v5130 = vmul.f32 %v2667, %v5129
        %v5131 = vsub.f32 1.0, %v5130
        %v5132 = vmul.f32 %v5129, %v5131
        %v5133 = vadd.f32 %v5129, %v5132
        %vm5134 = vweird.f32 %v2667
        %vm5135 = vweird.f32 %v5129
        %vm5136 = vmor %vm5134, %vm5135
        %v5137 = vsel %vm5136, %v5129, %v5133
        %v5138 = vand.u32 2147483647, %v2667
        %vm5139 = vcmp.eq.f32.partialorder %v5138, 8.507059e+37
        %v5140 = vand.u32 %v2667, 2147483648
        %v5141 = vor.u32 1.1754944e-38, %v5140
        %v5142 = vsel %vm5139, %v5141, %v5137
        %v5143 = vmul.f32 1.0, %v5142
        %v5144 = vrcp.pop %v2668
        %v5145 = vmul.f32 %v2668, %v5144
        %v5146 = vsub.f32 1.0, %v5145
        %v5147 = vmul.f32 %v5144, %v5146
        %v5148 = vadd.f32 %v5144, %v5147
        %vm5149 = vweird.f32 %v2668
        %vm5150 = vweird.f32 %v5144
        %vm5151 = vmor %vm5149, %vm5150
        %v5152 = vsel %vm5151, %v5144, %v5148
        %v5153 = vand.u32 2147483647, %v2668
        %vm5154 = vcmp.eq.f32.partialorder %v5153, 8.507059e+37
        %v5155 = vand.u32 %v2668, 2147483648
        %v5156 = vor.u32 1.1754944e-38, %v5155
        %v5157 = vsel %vm5154, %v5156, %v5152
        %v5158 = vmul.f32 1.0, %v5157
        %v5159 = vrcp.pop %v2669
        %v5160 = vmul.f32 %v2669, %v5159
        %v5161 = vsub.f32 1.0, %v5160
        %v5162 = vmul.f32 %v5159, %v5161
        %v5163 = vadd.f32 %v5159, %v5162
        %vm5164 = vweird.f32 %v2669
        %vm5165 = vweird.f32 %v5159
        %vm5166 = vmor %vm5164, %vm5165
        %v5167 = vsel %vm5166, %v5159, %v5163
        %v5168 = vand.u32 2147483647, %v2669
        %vm5169 = vcmp.eq.f32.partialorder %v5168, 8.507059e+37
        %v5170 = vand.u32 %v2669, 2147483648
        %v5171 = vor.u32 1.1754944e-38, %v5170
        %v5172 = vsel %vm5169, %v5171, %v5167
        %v5173 = vmul.f32 1.0, %v5172
        %v5174 = vrcp.pop %v2670
        %v5175 = vmul.f32 %v2670, %v5174
        %v5176 = vsub.f32 1.0, %v5175
        %v5177 = vmul.f32 %v5174, %v5176
        %v5178 = vadd.f32 %v5174, %v5177
        %vm5179 = vweird.f32 %v2670
        %vm5180 = vweird.f32 %v5174
        %vm5181 = vmor %vm5179, %vm5180
        %v5182 = vsel %vm5181, %v5174, %v5178
        %v5183 = vand.u32 2147483647, %v2670
        %vm5184 = vcmp.eq.f32.partialorder %v5183, 8.507059e+37
        %v5185 = vand.u32 %v2670, 2147483648
        %v5186 = vor.u32 1.1754944e-38, %v5185
        %v5187 = vsel %vm5184, %v5186, %v5182
        %v5188 = vmul.f32 1.0, %v5187
        %v5189 = vrcp.pop %v2671
        %v5190 = vmul.f32 %v2671, %v5189
        %v5191 = vsub.f32 1.0, %v5190
        %v5192 = vmul.f32 %v5189, %v5191
        %v5193 = vadd.f32 %v5189, %v5192
        %vm5194 = vweird.f32 %v2671
        %vm5195 = vweird.f32 %v5189
        %vm5196 = vmor %vm5194, %vm5195
        %v5197 = vsel %vm5196, %v5189, %v5193
        %v5198 = vand.u32 2147483647, %v2671
        %vm5199 = vcmp.eq.f32.partialorder %v5198, 8.507059e+37
        %v5200 = vand.u32 %v2671, 2147483648
        %v5201 = vor.u32 1.1754944e-38, %v5200
        %v5202 = vsel %vm5199, %v5201, %v5197
        %v5203 = vmul.f32 1.0, %v5202
        %v5204 = vrcp.pop %v2672
        %v5205 = vmul.f32 %v2672, %v5204
        %v5206 = vsub.f32 1.0, %v5205
        %v5207 = vmul.f32 %v5204, %v5206
        %v5208 = vadd.f32 %v5204, %v5207
        %vm5209 = vweird.f32 %v2672
        %vm5210 = vweird.f32 %v5204
        %vm5211 = vmor %vm5209, %vm5210
        %v5212 = vsel %vm5211, %v5204, %v5208
        %v5213 = vand.u32 2147483647, %v2672
        %vm5214 = vcmp.eq.f32.partialorder %v5213, 8.507059e+37
        %v5215 = vand.u32 %v2672, 2147483648
        %v5216 = vor.u32 1.1754944e-38, %v5215
        %v5217 = vsel %vm5214, %v5216, %v5212
        %v5218 = vmul.f32 1.0, %v5217
        %v5219 = vrcp.pop %v2673
        %v5220 = vmul.f32 %v2673, %v5219
        %v5221 = vsub.f32 1.0, %v5220
        %v5222 = vmul.f32 %v5219, %v5221
        %v5223 = vadd.f32 %v5219, %v5222
        %vm5224 = vweird.f32 %v2673
        %vm5225 = vweird.f32 %v5219
        %vm5226 = vmor %vm5224, %vm5225
        %v5227 = vsel %vm5226, %v5219, %v5223
        %v5228 = vand.u32 2147483647, %v2673
        %vm5229 = vcmp.eq.f32.partialorder %v5228, 8.507059e+37
        %v5230 = vand.u32 %v2673, 2147483648
        %v5231 = vor.u32 1.1754944e-38, %v5230
        %v5232 = vsel %vm5229, %v5231, %v5227
        %v5233 = vmul.f32 1.0, %v5232
        %v5234 = vrcp.pop %v2674
        %v5235 = vmul.f32 %v2674, %v5234
        %v5236 = vsub.f32 1.0, %v5235
        %v5237 = vmul.f32 %v5234, %v5236
        %v5238 = vadd.f32 %v5234, %v5237
        %vm5239 = vweird.f32 %v2674
        %vm5240 = vweird.f32 %v5234
        %vm5241 = vmor %vm5239, %vm5240
        %v5242 = vsel %vm5241, %v5234, %v5238
        %v5243 = vand.u32 2147483647, %v2674
        %vm5244 = vcmp.eq.f32.partialorder %v5243, 8.507059e+37
        %v5245 = vand.u32 %v2674, 2147483648
        %v5246 = vor.u32 1.1754944e-38, %v5245
        %v5247 = vsel %vm5244, %v5246, %v5242
        %v5248 = vmul.f32 1.0, %v5247
        %v5249 = vrcp.pop %v2675
        %v5250 = vmul.f32 %v2675, %v5249
        %v5251 = vsub.f32 1.0, %v5250
        %v5252 = vmul.f32 %v5249, %v5251
        %v5253 = vadd.f32 %v5249, %v5252
        %vm5254 = vweird.f32 %v2675
        %vm5255 = vweird.f32 %v5249
        %vm5256 = vmor %vm5254, %vm5255
        %v5257 = vsel %vm5256, %v5249, %v5253
        %v5258 = vand.u32 2147483647, %v2675
        %vm5259 = vcmp.eq.f32.partialorder %v5258, 8.507059e+37
        %v5260 = vand.u32 %v2675, 2147483648
        %v5261 = vor.u32 1.1754944e-38, %v5260
        %v5262 = vsel %vm5259, %v5261, %v5257
        %v5263 = vmul.f32 1.0, %v5262
        %v5264 = vrcp.pop %v2676
        %v5265 = vmul.f32 %v2676, %v5264
        %v5266 = vsub.f32 1.0, %v5265
        %v5267 = vmul.f32 %v5264, %v5266
        %v5268 = vadd.f32 %v5264, %v5267
        %vm5269 = vweird.f32 %v2676
        %vm5270 = vweird.f32 %v5264
        %vm5271 = vmor %vm5269, %vm5270
        %v5272 = vsel %vm5271, %v5264, %v5268
        %v5273 = vand.u32 2147483647, %v2676
        %vm5274 = vcmp.eq.f32.partialorder %v5273, 8.507059e+37
        %v5275 = vand.u32 %v2676, 2147483648
        %v5276 = vor.u32 1.1754944e-38, %v5275
        %v5277 = vsel %vm5274, %v5276, %v5272
        %v5278 = vmul.f32 1.0, %v5277
        %v5279 = vrcp.pop %v2677
        %v5280 = vmul.f32 %v2677, %v5279
        %v5281 = vsub.f32 1.0, %v5280
        %v5282 = vmul.f32 %v5279, %v5281
        %v5283 = vadd.f32 %v5279, %v5282
        %vm5284 = vweird.f32 %v2677
        %vm5285 = vweird.f32 %v5279
        %vm5286 = vmor %vm5284, %vm5285
        %v5287 = vsel %vm5286, %v5279, %v5283
        %v5288 = vand.u32 2147483647, %v2677
        %vm5289 = vcmp.eq.f32.partialorder %v5288, 8.507059e+37
        %v5290 = vand.u32 %v2677, 2147483648
        %v5291 = vor.u32 1.1754944e-38, %v5290
        %v5292 = vsel %vm5289, %v5291, %v5287
        %v5293 = vmul.f32 1.0, %v5292
        %v5294 = vrcp.pop %v2678
        %v5295 = vmul.f32 %v2678, %v5294
        %v5296 = vsub.f32 1.0, %v5295
        %v5297 = vmul.f32 %v5294, %v5296
        %v5298 = vadd.f32 %v5294, %v5297
        %vm5299 = vweird.f32 %v2678
        %vm5300 = vweird.f32 %v5294
        %vm5301 = vmor %vm5299, %vm5300
        %v5302 = vsel %vm5301, %v5294, %v5298
        %v5303 = vand.u32 2147483647, %v2678
        %vm5304 = vcmp.eq.f32.partialorder %v5303, 8.507059e+37
        %v5305 = vand.u32 %v2678, 2147483648
        %v5306 = vor.u32 1.1754944e-38, %v5305
        %v5307 = vsel %vm5304, %v5306, %v5302
        %v5308 = vmul.f32 1.0, %v5307
        %v5309 = vrcp.pop %v2679
        %v5310 = vmul.f32 %v2679, %v5309
        %v5311 = vsub.f32 1.0, %v5310
        %v5312 = vmul.f32 %v5309, %v5311
        %v5313 = vadd.f32 %v5309, %v5312
        %vm5314 = vweird.f32 %v2679
        %vm5315 = vweird.f32 %v5309
        %vm5316 = vmor %vm5314, %vm5315
        %v5317 = vsel %vm5316, %v5309, %v5313
        %v5318 = vand.u32 2147483647, %v2679
        %vm5319 = vcmp.eq.f32.partialorder %v5318, 8.507059e+37
        %v5320 = vand.u32 %v2679, 2147483648
        %v5321 = vor.u32 1.1754944e-38, %v5320
        %v5322 = vsel %vm5319, %v5321, %v5317
        %v5323 = vmul.f32 1.0, %v5322
        %v5324 = vrcp.pop %v2680
        %v5325 = vmul.f32 %v2680, %v5324
        %v5326 = vsub.f32 1.0, %v5325
        %v5327 = vmul.f32 %v5324, %v5326
        %v5328 = vadd.f32 %v5324, %v5327
        %vm5329 = vweird.f32 %v2680
        %vm5330 = vweird.f32 %v5324
        %vm5331 = vmor %vm5329, %vm5330
        %v5332 = vsel %vm5331, %v5324, %v5328
        %v5333 = vand.u32 2147483647, %v2680
        %vm5334 = vcmp.eq.f32.partialorder %v5333, 8.507059e+37
        %v5335 = vand.u32 %v2680, 2147483648
        %v5336 = vor.u32 1.1754944e-38, %v5335
        %v5337 = vsel %vm5334, %v5336, %v5332
        %v5338 = vmul.f32 1.0, %v5337
        %v5339 = vrcp.pop %v2681
        %v5340 = vmul.f32 %v2681, %v5339
        %v5341 = vsub.f32 1.0, %v5340
        %v5342 = vmul.f32 %v5339, %v5341
        %v5343 = vadd.f32 %v5339, %v5342
        %vm5344 = vweird.f32 %v2681
        %vm5345 = vweird.f32 %v5339
        %vm5346 = vmor %vm5344, %vm5345
        %v5347 = vsel %vm5346, %v5339, %v5343
        %v5348 = vand.u32 2147483647, %v2681
        %vm5349 = vcmp.eq.f32.partialorder %v5348, 8.507059e+37
        %v5350 = vand.u32 %v2681, 2147483648
        %v5351 = vor.u32 1.1754944e-38, %v5350
        %v5352 = vsel %vm5349, %v5351, %v5347
        %v5353 = vmul.f32 1.0, %v5352
        %v5354 = vrcp.pop %v2682
        %v5355 = vmul.f32 %v2682, %v5354
        %v5356 = vsub.f32 1.0, %v5355
        %v5357 = vmul.f32 %v5354, %v5356
        %v5358 = vadd.f32 %v5354, %v5357
        %vm5359 = vweird.f32 %v2682
        %vm5360 = vweird.f32 %v5354
        %vm5361 = vmor %vm5359, %vm5360
        %v5362 = vsel %vm5361, %v5354, %v5358
        %v5363 = vand.u32 2147483647, %v2682
        %vm5364 = vcmp.eq.f32.partialorder %v5363, 8.507059e+37
        %v5365 = vand.u32 %v2682, 2147483648
        %v5366 = vor.u32 1.1754944e-38, %v5365
        %v5367 = vsel %vm5364, %v5366, %v5362
        %v5368 = vmul.f32 1.0, %v5367
        %v5369 = vrcp.pop %v2683
        %v5370 = vmul.f32 %v2683, %v5369
        %v5371 = vsub.f32 1.0, %v5370
        %v5372 = vmul.f32 %v5369, %v5371
        %v5373 = vadd.f32 %v5369, %v5372
        %vm5374 = vweird.f32 %v2683
        %vm5375 = vweird.f32 %v5369
        %vm5376 = vmor %vm5374, %vm5375
        %v5377 = vsel %vm5376, %v5369, %v5373
        %v5378 = vand.u32 2147483647, %v2683
        %vm5379 = vcmp.eq.f32.partialorder %v5378, 8.507059e+37
        %v5380 = vand.u32 %v2683, 2147483648
        %v5381 = vor.u32 1.1754944e-38, %v5380
        %v5382 = vsel %vm5379, %v5381, %v5377
        %v5383 = vmul.f32 1.0, %v5382
        %v5384 = vrcp.pop %v2684
        %v5385 = vmul.f32 %v2684, %v5384
        %v5386 = vsub.f32 1.0, %v5385
        %v5387 = vmul.f32 %v5384, %v5386
        %v5388 = vadd.f32 %v5384, %v5387
        %vm5389 = vweird.f32 %v2684
        %vm5390 = vweird.f32 %v5384
        %vm5391 = vmor %vm5389, %vm5390
        %v5392 = vsel %vm5391, %v5384, %v5388
        %v5393 = vand.u32 2147483647, %v2684
        %vm5394 = vcmp.eq.f32.partialorder %v5393, 8.507059e+37
        %v5395 = vand.u32 %v2684, 2147483648
        %v5396 = vor.u32 1.1754944e-38, %v5395
        %v5397 = vsel %vm5394, %v5396, %v5392
        %v5398 = vmul.f32 1.0, %v5397
        %v5399 = vrcp.pop %v2685
        %v5400 = vmul.f32 %v2685, %v5399
        %v5401 = vsub.f32 1.0, %v5400
        %v5402 = vmul.f32 %v5399, %v5401
        %v5403 = vadd.f32 %v5399, %v5402
        %vm5404 = vweird.f32 %v2685
        %vm5405 = vweird.f32 %v5399
        %vm5406 = vmor %vm5404, %vm5405
        %v5407 = vsel %vm5406, %v5399, %v5403
        %v5408 = vand.u32 2147483647, %v2685
        %vm5409 = vcmp.eq.f32.partialorder %v5408, 8.507059e+37
        %v5410 = vand.u32 %v2685, 2147483648
        %v5411 = vor.u32 1.1754944e-38, %v5410
        %v5412 = vsel %vm5409, %v5411, %v5407
        %v5413 = vmul.f32 1.0, %v5412
        %v5414 = vrcp.pop %v2686
        %v5415 = vmul.f32 %v2686, %v5414
        %v5416 = vsub.f32 1.0, %v5415
        %v5417 = vmul.f32 %v5414, %v5416
        %v5418 = vadd.f32 %v5414, %v5417
        %vm5419 = vweird.f32 %v2686
        %vm5420 = vweird.f32 %v5414
        %vm5421 = vmor %vm5419, %vm5420
        %v5422 = vsel %vm5421, %v5414, %v5418
        %v5423 = vand.u32 2147483647, %v2686
        %vm5424 = vcmp.eq.f32.partialorder %v5423, 8.507059e+37
        %v5425 = vand.u32 %v2686, 2147483648
        %v5426 = vor.u32 1.1754944e-38, %v5425
        %v5427 = vsel %vm5424, %v5426, %v5422
        %v5428 = vmul.f32 1.0, %v5427
        %v5429 = vrcp.pop %v2687
        %v5430 = vmul.f32 %v2687, %v5429
        %v5431 = vsub.f32 1.0, %v5430
        %v5432 = vmul.f32 %v5429, %v5431
        %v5433 = vadd.f32 %v5429, %v5432
        %vm5434 = vweird.f32 %v2687
        %vm5435 = vweird.f32 %v5429
        %vm5436 = vmor %vm5434, %vm5435
        %v5437 = vsel %vm5436, %v5429, %v5433
        %v5438 = vand.u32 2147483647, %v2687
        %vm5439 = vcmp.eq.f32.partialorder %v5438, 8.507059e+37
        %v5440 = vand.u32 %v2687, 2147483648
        %v5441 = vor.u32 1.1754944e-38, %v5440
        %v5442 = vsel %vm5439, %v5441, %v5437
        %v5443 = vmul.f32 1.0, %v5442
        %v5444 = vrcp.pop %v2688
        %v5445 = vmul.f32 %v2688, %v5444
        %v5446 = vsub.f32 1.0, %v5445
        %v5447 = vmul.f32 %v5444, %v5446
        %v5448 = vadd.f32 %v5444, %v5447
        %vm5449 = vweird.f32 %v2688
        %vm5450 = vweird.f32 %v5444
        %vm5451 = vmor %vm5449, %vm5450
        %v5452 = vsel %vm5451, %v5444, %v5448
        %v5453 = vand.u32 2147483647, %v2688
        %vm5454 = vcmp.eq.f32.partialorder %v5453, 8.507059e+37
        %v5455 = vand.u32 %v2688, 2147483648
        %v5456 = vor.u32 1.1754944e-38, %v5455
        %v5457 = vsel %vm5454, %v5456, %v5452
        %v5458 = vmul.f32 1.0, %v5457
        %v5459 = vrcp.pop %v2689
        %v5460 = vmul.f32 %v2689, %v5459
        %v5461 = vsub.f32 1.0, %v5460
        %v5462 = vmul.f32 %v5459, %v5461
        %v5463 = vadd.f32 %v5459, %v5462
        %vm5464 = vweird.f32 %v2689
        %vm5465 = vweird.f32 %v5459
        %vm5466 = vmor %vm5464, %vm5465
        %v5467 = vsel %vm5466, %v5459, %v5463
        %v5468 = vand.u32 2147483647, %v2689
        %vm5469 = vcmp.eq.f32.partialorder %v5468, 8.507059e+37
        %v5470 = vand.u32 %v2689, 2147483648
        %v5471 = vor.u32 1.1754944e-38, %v5470
        %v5472 = vsel %vm5469, %v5471, %v5467
        %v5473 = vmul.f32 1.0, %v5472
        %v5474 = vrcp.pop %v2690
        %v5475 = vmul.f32 %v2690, %v5474
        %v5476 = vsub.f32 1.0, %v5475
        %v5477 = vmul.f32 %v5474, %v5476
        %v5478 = vadd.f32 %v5474, %v5477
        %vm5479 = vweird.f32 %v2690
        %vm5480 = vweird.f32 %v5474
        %vm5481 = vmor %vm5479, %vm5480
        %v5482 = vsel %vm5481, %v5474, %v5478
        %v5483 = vand.u32 2147483647, %v2690
        %vm5484 = vcmp.eq.f32.partialorder %v5483, 8.507059e+37
        %v5485 = vand.u32 %v2690, 2147483648
        %v5486 = vor.u32 1.1754944e-38, %v5485
        %v5487 = vsel %vm5484, %v5486, %v5482
        %v5488 = vmul.f32 1.0, %v5487
        %v5489 = vrcp.pop %v2691
        %v5490 = vmul.f32 %v2691, %v5489
        %v5491 = vsub.f32 1.0, %v5490
        %v5492 = vmul.f32 %v5489, %v5491
        %v5493 = vadd.f32 %v5489, %v5492
        %vm5494 = vweird.f32 %v2691
        %vm5495 = vweird.f32 %v5489
        %vm5496 = vmor %vm5494, %vm5495
        %v5497 = vsel %vm5496, %v5489, %v5493
        %v5498 = vand.u32 2147483647, %v2691
        %vm5499 = vcmp.eq.f32.partialorder %v5498, 8.507059e+37
        %v5500 = vand.u32 %v2691, 2147483648
        %v5501 = vor.u32 1.1754944e-38, %v5500
        %v5502 = vsel %vm5499, %v5501, %v5497
        %v5503 = vmul.f32 1.0, %v5502
        %v5504 = vrcp.pop %v2692
        %v5505 = vmul.f32 %v2692, %v5504
        %v5506 = vsub.f32 1.0, %v5505
        %v5507 = vmul.f32 %v5504, %v5506
        %v5508 = vadd.f32 %v5504, %v5507
        %vm5509 = vweird.f32 %v2692
        %vm5510 = vweird.f32 %v5504
        %vm5511 = vmor %vm5509, %vm5510
        %v5512 = vsel %vm5511, %v5504, %v5508
        %v5513 = vand.u32 2147483647, %v2692
        %vm5514 = vcmp.eq.f32.partialorder %v5513, 8.507059e+37
        %v5515 = vand.u32 %v2692, 2147483648
        %v5516 = vor.u32 1.1754944e-38, %v5515
        %v5517 = vsel %vm5514, %v5516, %v5512
        %v5518 = vmul.f32 1.0, %v5517
        %v5519 = vrcp.pop %v2693
        %v5520 = vmul.f32 %v2693, %v5519
        %v5521 = vsub.f32 1.0, %v5520
        %v5522 = vmul.f32 %v5519, %v5521
        %v5523 = vadd.f32 %v5519, %v5522
        %vm5524 = vweird.f32 %v2693
        %vm5525 = vweird.f32 %v5519
        %vm5526 = vmor %vm5524, %vm5525
        %v5527 = vsel %vm5526, %v5519, %v5523
        %v5528 = vand.u32 2147483647, %v2693
        %vm5529 = vcmp.eq.f32.partialorder %v5528, 8.507059e+37
        %v5530 = vand.u32 %v2693, 2147483648
        %v5531 = vor.u32 1.1754944e-38, %v5530
        %v5532 = vsel %vm5529, %v5531, %v5527
        %v5533 = vmul.f32 1.0, %v5532
        %v5534 = vrcp.pop %v2694
        %v5535 = vmul.f32 %v2694, %v5534
        %v5536 = vsub.f32 1.0, %v5535
        %v5537 = vmul.f32 %v5534, %v5536
        %v5538 = vadd.f32 %v5534, %v5537
        %vm5539 = vweird.f32 %v2694
        %vm5540 = vweird.f32 %v5534
        %vm5541 = vmor %vm5539, %vm5540
        %v5542 = vsel %vm5541, %v5534, %v5538
        %v5543 = vand.u32 2147483647, %v2694
        %vm5544 = vcmp.eq.f32.partialorder %v5543, 8.507059e+37
        %v5545 = vand.u32 %v2694, 2147483648
        %v5546 = vor.u32 1.1754944e-38, %v5545
        %v5547 = vsel %vm5544, %v5546, %v5542
        %v5548 = vmul.f32 1.0, %v5547
        %v5549 = vrcp.pop %v2695
        %v5550 = vmul.f32 %v2695, %v5549
        %v5551 = vsub.f32 1.0, %v5550
        %v5552 = vmul.f32 %v5549, %v5551
        %v5553 = vadd.f32 %v5549, %v5552
        %vm5554 = vweird.f32 %v2695
        %vm5555 = vweird.f32 %v5549
        %vm5556 = vmor %vm5554, %vm5555
        %v5557 = vsel %vm5556, %v5549, %v5553
        %v5558 = vand.u32 2147483647, %v2695
        %vm5559 = vcmp.eq.f32.partialorder %v5558, 8.507059e+37
        %v5560 = vand.u32 %v2695, 2147483648
        %v5561 = vor.u32 1.1754944e-38, %v5560
        %v5562 = vsel %vm5559, %v5561, %v5557
        %v5563 = vmul.f32 1.0, %v5562
        %v5564 = vrcp.pop %v2696
        %v5565 = vmul.f32 %v2696, %v5564
        %v5566 = vsub.f32 1.0, %v5565
        %v5567 = vmul.f32 %v5564, %v5566
        %v5568 = vadd.f32 %v5564, %v5567
        %vm5569 = vweird.f32 %v2696
        %vm5570 = vweird.f32 %v5564
        %vm5571 = vmor %vm5569, %vm5570
        %v5572 = vsel %vm5571, %v5564, %v5568
        %v5573 = vand.u32 2147483647, %v2696
        %vm5574 = vcmp.eq.f32.partialorder %v5573, 8.507059e+37
        %v5575 = vand.u32 %v2696, 2147483648
        %v5576 = vor.u32 1.1754944e-38, %v5575
        %v5577 = vsel %vm5574, %v5576, %v5572
        %v5578 = vmul.f32 1.0, %v5577
        %v5579 = vrcp.pop %v2697
        %v5580 = vmul.f32 %v2697, %v5579
        %v5581 = vsub.f32 1.0, %v5580
        %v5582 = vmul.f32 %v5579, %v5581
        %v5583 = vadd.f32 %v5579, %v5582
        %vm5584 = vweird.f32 %v2697
        %vm5585 = vweird.f32 %v5579
        %vm5586 = vmor %vm5584, %vm5585
        %v5587 = vsel %vm5586, %v5579, %v5583
        %v5588 = vand.u32 2147483647, %v2697
        %vm5589 = vcmp.eq.f32.partialorder %v5588, 8.507059e+37
        %v5590 = vand.u32 %v2697, 2147483648
        %v5591 = vor.u32 1.1754944e-38, %v5590
        %v5592 = vsel %vm5589, %v5591, %v5587
        %v5593 = vmul.f32 1.0, %v5592
        %v5594 = vrcp.pop %v2698
        %v5595 = vmul.f32 %v2698, %v5594
        %v5596 = vsub.f32 1.0, %v5595
        %v5597 = vmul.f32 %v5594, %v5596
        %v5598 = vadd.f32 %v5594, %v5597
        %vm5599 = vweird.f32 %v2698
        %vm5600 = vweird.f32 %v5594
        %vm5601 = vmor %vm5599, %vm5600
        %v5602 = vsel %vm5601, %v5594, %v5598
        %v5603 = vand.u32 2147483647, %v2698
        %vm5604 = vcmp.eq.f32.partialorder %v5603, 8.507059e+37
        %v5605 = vand.u32 %v2698, 2147483648
        %v5606 = vor.u32 1.1754944e-38, %v5605
        %v5607 = vsel %vm5604, %v5606, %v5602
        %v5608 = vmul.f32 1.0, %v5607
        %v5609 = vrcp.pop %v2699
        %v5610 = vmul.f32 %v2699, %v5609
        %v5611 = vsub.f32 1.0, %v5610
        %v5612 = vmul.f32 %v5609, %v5611
        %v5613 = vadd.f32 %v5609, %v5612
        %vm5614 = vweird.f32 %v2699
        %vm5615 = vweird.f32 %v5609
        %vm5616 = vmor %vm5614, %vm5615
        %v5617 = vsel %vm5616, %v5609, %v5613
        %v5618 = vand.u32 2147483647, %v2699
        %vm5619 = vcmp.eq.f32.partialorder %v5618, 8.507059e+37
        %v5620 = vand.u32 %v2699, 2147483648
        %v5621 = vor.u32 1.1754944e-38, %v5620
        %v5622 = vsel %vm5619, %v5621, %v5617
        %v5623 = vmul.f32 1.0, %v5622
        %v5624 = vrcp.pop %v2700
        %v5625 = vmul.f32 %v2700, %v5624
        %v5626 = vsub.f32 1.0, %v5625
        %v5627 = vmul.f32 %v5624, %v5626
        %v5628 = vadd.f32 %v5624, %v5627
        %vm5629 = vweird.f32 %v2700
        %vm5630 = vweird.f32 %v5624
        %vm5631 = vmor %vm5629, %vm5630
        %v5632 = vsel %vm5631, %v5624, %v5628
        %v5633 = vand.u32 2147483647, %v2700
        %vm5634 = vcmp.eq.f32.partialorder %v5633, 8.507059e+37
        %v5635 = vand.u32 %v2700, 2147483648
        %v5636 = vor.u32 1.1754944e-38, %v5635
        %v5637 = vsel %vm5634, %v5636, %v5632
        %v5638 = vmul.f32 1.0, %v5637
        %v5639 = vrcp.pop %v2701
        %v5640 = vmul.f32 %v2701, %v5639
        %v5641 = vsub.f32 1.0, %v5640
        %v5642 = vmul.f32 %v5639, %v5641
        %v5643 = vadd.f32 %v5639, %v5642
        %vm5644 = vweird.f32 %v2701
        %vm5645 = vweird.f32 %v5639
        %vm5646 = vmor %vm5644, %vm5645
        %v5647 = vsel %vm5646, %v5639, %v5643
        %v5648 = vand.u32 2147483647, %v2701
        %vm5649 = vcmp.eq.f32.partialorder %v5648, 8.507059e+37
        %v5650 = vand.u32 %v2701, 2147483648
        %v5651 = vor.u32 1.1754944e-38, %v5650
        %v5652 = vsel %vm5649, %v5651, %v5647
        %v5653 = vmul.f32 1.0, %v5652
        %v5654 = vrcp.pop %v2702
        %v5655 = vmul.f32 %v2702, %v5654
        %v5656 = vsub.f32 1.0, %v5655
        %v5657 = vmul.f32 %v5654, %v5656
        %v5658 = vadd.f32 %v5654, %v5657
        %vm5659 = vweird.f32 %v2702
        %vm5660 = vweird.f32 %v5654
        %vm5661 = vmor %vm5659, %vm5660
        %v5662 = vsel %vm5661, %v5654, %v5658
        %v5663 = vand.u32 2147483647, %v2702
        %vm5664 = vcmp.eq.f32.partialorder %v5663, 8.507059e+37
        %v5665 = vand.u32 %v2702, 2147483648
        %v5666 = vor.u32 1.1754944e-38, %v5665
        %v5667 = vsel %vm5664, %v5666, %v5662
        %v5668 = vmul.f32 1.0, %v5667
        %v5669 = vrcp.pop %v2703
        %v5670 = vmul.f32 %v2703, %v5669
        %v5671 = vsub.f32 1.0, %v5670
        %v5672 = vmul.f32 %v5669, %v5671
        %v5673 = vadd.f32 %v5669, %v5672
        %vm5674 = vweird.f32 %v2703
        %vm5675 = vweird.f32 %v5669
        %vm5676 = vmor %vm5674, %vm5675
        %v5677 = vsel %vm5676, %v5669, %v5673
        %v5678 = vand.u32 2147483647, %v2703
        %vm5679 = vcmp.eq.f32.partialorder %v5678, 8.507059e+37
        %v5680 = vand.u32 %v2703, 2147483648
        %v5681 = vor.u32 1.1754944e-38, %v5680
        %v5682 = vsel %vm5679, %v5681, %v5677
        %v5683 = vmul.f32 1.0, %v5682
        %v5684 = vrcp.pop %v2704
        %v5685 = vmul.f32 %v2704, %v5684
        %v5686 = vsub.f32 1.0, %v5685
        %v5687 = vmul.f32 %v5684, %v5686
        %v5688 = vadd.f32 %v5684, %v5687
        %vm5689 = vweird.f32 %v2704
        %vm5690 = vweird.f32 %v5684
        %vm5691 = vmor %vm5689, %vm5690
        %v5692 = vsel %vm5691, %v5684, %v5688
        %v5693 = vand.u32 2147483647, %v2704
        %vm5694 = vcmp.eq.f32.partialorder %v5693, 8.507059e+37
        %v5695 = vand.u32 %v2704, 2147483648
        %v5696 = vor.u32 1.1754944e-38, %v5695
        %v5697 = vsel %vm5694, %v5696, %v5692
        %v5698 = vmul.f32 1.0, %v5697
        %v5699 = vrcp.pop %v2705
        %v5700 = vmul.f32 %v2705, %v5699
        %v5701 = vsub.f32 1.0, %v5700
        %v5702 = vmul.f32 %v5699, %v5701
        %v5703 = vadd.f32 %v5699, %v5702
        %vm5704 = vweird.f32 %v2705
        %vm5705 = vweird.f32 %v5699
        %vm5706 = vmor %vm5704, %vm5705
        %v5707 = vsel %vm5706, %v5699, %v5703
        %v5708 = vand.u32 2147483647, %v2705
        %vm5709 = vcmp.eq.f32.partialorder %v5708, 8.507059e+37
        %v5710 = vand.u32 %v2705, 2147483648
        %v5711 = vor.u32 1.1754944e-38, %v5710
        %v5712 = vsel %vm5709, %v5711, %v5707
        %v5713 = vmul.f32 1.0, %v5712
        %v5714 = vrcp.pop %v2706
        %v5715 = vmul.f32 %v2706, %v5714
        %v5716 = vsub.f32 1.0, %v5715
        %v5717 = vmul.f32 %v5714, %v5716
        %v5718 = vadd.f32 %v5714, %v5717
        %vm5719 = vweird.f32 %v2706
        %vm5720 = vweird.f32 %v5714
        %vm5721 = vmor %vm5719, %vm5720
        %v5722 = vsel %vm5721, %v5714, %v5718
        %v5723 = vand.u32 2147483647, %v2706
        %vm5724 = vcmp.eq.f32.partialorder %v5723, 8.507059e+37
        %v5725 = vand.u32 %v2706, 2147483648
        %v5726 = vor.u32 1.1754944e-38, %v5725
        %v5727 = vsel %vm5724, %v5726, %v5722
        %v5728 = vmul.f32 1.0, %v5727
        %v5729 = vrcp.pop %v2707
        %v5730 = vmul.f32 %v2707, %v5729
        %v5731 = vsub.f32 1.0, %v5730
        %v5732 = vmul.f32 %v5729, %v5731
        %v5733 = vadd.f32 %v5729, %v5732
        %vm5734 = vweird.f32 %v2707
        %vm5735 = vweird.f32 %v5729
        %vm5736 = vmor %vm5734, %vm5735
        %v5737 = vsel %vm5736, %v5729, %v5733
        %v5738 = vand.u32 2147483647, %v2707
        %vm5739 = vcmp.eq.f32.partialorder %v5738, 8.507059e+37
        %v5740 = vand.u32 %v2707, 2147483648
        %v5741 = vor.u32 1.1754944e-38, %v5740
        %v5742 = vsel %vm5739, %v5741, %v5737
        %v5743 = vmul.f32 1.0, %v5742
        %v5744 = vrcp.pop %v2708
        %v5745 = vmul.f32 %v2708, %v5744
        %v5746 = vsub.f32 1.0, %v5745
        %v5747 = vmul.f32 %v5744, %v5746
        %v5748 = vadd.f32 %v5744, %v5747
        %vm5749 = vweird.f32 %v2708
        %vm5750 = vweird.f32 %v5744
        %vm5751 = vmor %vm5749, %vm5750
        %v5752 = vsel %vm5751, %v5744, %v5748
        %v5753 = vand.u32 2147483647, %v2708
        %vm5754 = vcmp.eq.f32.partialorder %v5753, 8.507059e+37
        %v5755 = vand.u32 %v2708, 2147483648
        %v5756 = vor.u32 1.1754944e-38, %v5755
        %v5757 = vsel %vm5754, %v5756, %v5752
        %v5758 = vmul.f32 1.0, %v5757
        %v5759 = vrcp.pop %v2709
        %v5760 = vmul.f32 %v2709, %v5759
        %v5761 = vsub.f32 1.0, %v5760
        %v5762 = vmul.f32 %v5759, %v5761
        %v5763 = vadd.f32 %v5759, %v5762
        %vm5764 = vweird.f32 %v2709
        %vm5765 = vweird.f32 %v5759
        %vm5766 = vmor %vm5764, %vm5765
        %v5767 = vsel %vm5766, %v5759, %v5763
        %v5768 = vand.u32 2147483647, %v2709
        %vm5769 = vcmp.eq.f32.partialorder %v5768, 8.507059e+37
        %v5770 = vand.u32 %v2709, 2147483648
        %v5771 = vor.u32 1.1754944e-38, %v5770
        %v5772 = vsel %vm5769, %v5771, %v5767
        %v5773 = vmul.f32 1.0, %v5772
        %v5774 = vrcp.pop %v2710
        %v5775 = vmul.f32 %v2710, %v5774
        %v5776 = vsub.f32 1.0, %v5775
        %v5777 = vmul.f32 %v5774, %v5776
        %v5778 = vadd.f32 %v5774, %v5777
        %vm5779 = vweird.f32 %v2710
        %vm5780 = vweird.f32 %v5774
        %vm5781 = vmor %vm5779, %vm5780
        %v5782 = vsel %vm5781, %v5774, %v5778
        %v5783 = vand.u32 2147483647, %v2710
        %vm5784 = vcmp.eq.f32.partialorder %v5783, 8.507059e+37
        %v5785 = vand.u32 %v2710, 2147483648
        %v5786 = vor.u32 1.1754944e-38, %v5785
        %v5787 = vsel %vm5784, %v5786, %v5782
        %v5788 = vmul.f32 1.0, %v5787
        %v5789 = vrcp.pop %v2711
        %v5790 = vmul.f32 %v2711, %v5789
        %v5791 = vsub.f32 1.0, %v5790
        %v5792 = vmul.f32 %v5789, %v5791
        %v5793 = vadd.f32 %v5789, %v5792
        %vm5794 = vweird.f32 %v2711
        %vm5795 = vweird.f32 %v5789
        %vm5796 = vmor %vm5794, %vm5795
        %v5797 = vsel %vm5796, %v5789, %v5793
        %v5798 = vand.u32 2147483647, %v2711
        %vm5799 = vcmp.eq.f32.partialorder %v5798, 8.507059e+37
        %v5800 = vand.u32 %v2711, 2147483648
        %v5801 = vor.u32 1.1754944e-38, %v5800
        %v5802 = vsel %vm5799, %v5801, %v5797
        %v5803 = vmul.f32 1.0, %v5802
        %v5804 = vrcp.pop %v2712
        %v5805 = vmul.f32 %v2712, %v5804
        %v5806 = vsub.f32 1.0, %v5805
        %v5807 = vmul.f32 %v5804, %v5806
        %v5808 = vadd.f32 %v5804, %v5807
        %vm5809 = vweird.f32 %v2712
        %vm5810 = vweird.f32 %v5804
        %vm5811 = vmor %vm5809, %vm5810
        %v5812 = vsel %vm5811, %v5804, %v5808
        %v5813 = vand.u32 2147483647, %v2712
        %vm5814 = vcmp.eq.f32.partialorder %v5813, 8.507059e+37
        %v5815 = vand.u32 %v2712, 2147483648
        %v5816 = vor.u32 1.1754944e-38, %v5815
        %v5817 = vsel %vm5814, %v5816, %v5812
        %v5818 = vmul.f32 1.0, %v5817
        %v5819 = vrcp.pop %v2713
        %v5820 = vmul.f32 %v2713, %v5819
        %v5821 = vsub.f32 1.0, %v5820
        %v5822 = vmul.f32 %v5819, %v5821
        %v5823 = vadd.f32 %v5819, %v5822
        %vm5824 = vweird.f32 %v2713
        %vm5825 = vweird.f32 %v5819
        %vm5826 = vmor %vm5824, %vm5825
        %v5827 = vsel %vm5826, %v5819, %v5823
        %v5828 = vand.u32 2147483647, %v2713
        %vm5829 = vcmp.eq.f32.partialorder %v5828, 8.507059e+37
        %v5830 = vand.u32 %v2713, 2147483648
        %v5831 = vor.u32 1.1754944e-38, %v5830
        %v5832 = vsel %vm5829, %v5831, %v5827
        %v5833 = vmul.f32 1.0, %v5832
        %v5834 = vrcp.pop %v2714
        %v5835 = vmul.f32 %v2714, %v5834
        %v5836 = vsub.f32 1.0, %v5835
        %v5837 = vmul.f32 %v5834, %v5836
        %v5838 = vadd.f32 %v5834, %v5837
        %vm5839 = vweird.f32 %v2714
        %vm5840 = vweird.f32 %v5834
        %vm5841 = vmor %vm5839, %vm5840
        %v5842 = vsel %vm5841, %v5834, %v5838
        %v5843 = vand.u32 2147483647, %v2714
        %vm5844 = vcmp.eq.f32.partialorder %v5843, 8.507059e+37
        %v5845 = vand.u32 %v2714, 2147483648
        %v5846 = vor.u32 1.1754944e-38, %v5845
        %v5847 = vsel %vm5844, %v5846, %v5842
        %v5848 = vmul.f32 1.0, %v5847
        %v5849 = vrcp.pop %v2715
        %v5850 = vmul.f32 %v2715, %v5849
        %v5851 = vsub.f32 1.0, %v5850
        %v5852 = vmul.f32 %v5849, %v5851
        %v5853 = vadd.f32 %v5849, %v5852
        %vm5854 = vweird.f32 %v2715
        %vm5855 = vweird.f32 %v5849
        %vm5856 = vmor %vm5854, %vm5855
        %v5857 = vsel %vm5856, %v5849, %v5853
        %v5858 = vand.u32 2147483647, %v2715
        %vm5859 = vcmp.eq.f32.partialorder %v5858, 8.507059e+37
        %v5860 = vand.u32 %v2715, 2147483648
        %v5861 = vor.u32 1.1754944e-38, %v5860
        %v5862 = vsel %vm5859, %v5861, %v5857
        %v5863 = vmul.f32 1.0, %v5862
        %v5864 = vrcp.pop %v2716
        %v5865 = vmul.f32 %v2716, %v5864
        %v5866 = vsub.f32 1.0, %v5865
        %v5867 = vmul.f32 %v5864, %v5866
        %v5868 = vadd.f32 %v5864, %v5867
        %vm5869 = vweird.f32 %v2716
        %vm5870 = vweird.f32 %v5864
        %vm5871 = vmor %vm5869, %vm5870
        %v5872 = vsel %vm5871, %v5864, %v5868
        %v5873 = vand.u32 2147483647, %v2716
        %vm5874 = vcmp.eq.f32.partialorder %v5873, 8.507059e+37
        %v5875 = vand.u32 %v2716, 2147483648
        %v5876 = vor.u32 1.1754944e-38, %v5875
        %v5877 = vsel %vm5874, %v5876, %v5872
        %v5878 = vmul.f32 1.0, %v5877
        %v5879 = vrcp.pop %v2717
        %v5880 = vmul.f32 %v2717, %v5879
        %v5881 = vsub.f32 1.0, %v5880
        %v5882 = vmul.f32 %v5879, %v5881
        %v5883 = vadd.f32 %v5879, %v5882
        %vm5884 = vweird.f32 %v2717
        %vm5885 = vweird.f32 %v5879
        %vm5886 = vmor %vm5884, %vm5885
        %v5887 = vsel %vm5886, %v5879, %v5883
        %v5888 = vand.u32 2147483647, %v2717
        %vm5889 = vcmp.eq.f32.partialorder %v5888, 8.507059e+37
        %v5890 = vand.u32 %v2717, 2147483648
        %v5891 = vor.u32 1.1754944e-38, %v5890
        %v5892 = vsel %vm5889, %v5891, %v5887
        %v5893 = vmul.f32 1.0, %v5892
        %v5894 = vrcp.pop %v2718
        %v5895 = vmul.f32 %v2718, %v5894
        %v5896 = vsub.f32 1.0, %v5895
        %v5897 = vmul.f32 %v5894, %v5896
        %v5898 = vadd.f32 %v5894, %v5897
        %vm5899 = vweird.f32 %v2718
        %vm5900 = vweird.f32 %v5894
        %vm5901 = vmor %vm5899, %vm5900
        %v5902 = vsel %vm5901, %v5894, %v5898
        %v5903 = vand.u32 2147483647, %v2718
        %vm5904 = vcmp.eq.f32.partialorder %v5903, 8.507059e+37
        %v5905 = vand.u32 %v2718, 2147483648
        %v5906 = vor.u32 1.1754944e-38, %v5905
        %v5907 = vsel %vm5904, %v5906, %v5902
        %v5908 = vmul.f32 1.0, %v5907
        %v5909 = vrcp.pop %v2719
        %v5910 = vmul.f32 %v2719, %v5909
        %v5911 = vsub.f32 1.0, %v5910
        %v5912 = vmul.f32 %v5909, %v5911
        %v5913 = vadd.f32 %v5909, %v5912
        %vm5914 = vweird.f32 %v2719
        %vm5915 = vweird.f32 %v5909
        %vm5916 = vmor %vm5914, %vm5915
        %v5917 = vsel %vm5916, %v5909, %v5913
        %v5918 = vand.u32 2147483647, %v2719
        %vm5919 = vcmp.eq.f32.partialorder %v5918, 8.507059e+37
        %v5920 = vand.u32 %v2719, 2147483648
        %v5921 = vor.u32 1.1754944e-38, %v5920
        %v5922 = vsel %vm5919, %v5921, %v5917
        %v5923 = vmul.f32 1.0, %v5922
        %v5924 = vrcp.pop %v2720
        %v5925 = vmul.f32 %v2720, %v5924
        %v5926 = vsub.f32 1.0, %v5925
        %v5927 = vmul.f32 %v5924, %v5926
        %v5928 = vadd.f32 %v5924, %v5927
        %vm5929 = vweird.f32 %v2720
        %vm5930 = vweird.f32 %v5924
        %vm5931 = vmor %vm5929, %vm5930
        %v5932 = vsel %vm5931, %v5924, %v5928
        %v5933 = vand.u32 2147483647, %v2720
        %vm5934 = vcmp.eq.f32.partialorder %v5933, 8.507059e+37
        %v5935 = vand.u32 %v2720, 2147483648
        %v5936 = vor.u32 1.1754944e-38, %v5935
        %v5937 = vsel %vm5934, %v5936, %v5932
        %v5938 = vmul.f32 1.0, %v5937
        %v5939 = vrcp.pop %v2721
        %v5940 = vmul.f32 %v2721, %v5939
        %v5941 = vsub.f32 1.0, %v5940
        %v5942 = vmul.f32 %v5939, %v5941
        %v5943 = vadd.f32 %v5939, %v5942
        %vm5944 = vweird.f32 %v2721
        %vm5945 = vweird.f32 %v5939
        %vm5946 = vmor %vm5944, %vm5945
        %v5947 = vsel %vm5946, %v5939, %v5943
        %v5948 = vand.u32 2147483647, %v2721
        %vm5949 = vcmp.eq.f32.partialorder %v5948, 8.507059e+37
        %v5950 = vand.u32 %v2721, 2147483648
        %v5951 = vor.u32 1.1754944e-38, %v5950
        %v5952 = vsel %vm5949, %v5951, %v5947
        %v5953 = vmul.f32 1.0, %v5952
        %v5954 = vrcp.pop %v2722
        %v5955 = vmul.f32 %v2722, %v5954
        %v5956 = vsub.f32 1.0, %v5955
        %v5957 = vmul.f32 %v5954, %v5956
        %v5958 = vadd.f32 %v5954, %v5957
        %vm5959 = vweird.f32 %v2722
        %vm5960 = vweird.f32 %v5954
        %vm5961 = vmor %vm5959, %vm5960
        %v5962 = vsel %vm5961, %v5954, %v5958
        %v5963 = vand.u32 2147483647, %v2722
        %vm5964 = vcmp.eq.f32.partialorder %v5963, 8.507059e+37
        %v5965 = vand.u32 %v2722, 2147483648
        %v5966 = vor.u32 1.1754944e-38, %v5965
        %v5967 = vsel %vm5964, %v5966, %v5962
        %v5968 = vmul.f32 1.0, %v5967
        %v5969 = vrcp.pop %v2723
        %v5970 = vmul.f32 %v2723, %v5969
        %v5971 = vsub.f32 1.0, %v5970
        %v5972 = vmul.f32 %v5969, %v5971
        %v5973 = vadd.f32 %v5969, %v5972
        %vm5974 = vweird.f32 %v2723
        %vm5975 = vweird.f32 %v5969
        %vm5976 = vmor %vm5974, %vm5975
        %v5977 = vsel %vm5976, %v5969, %v5973
        %v5978 = vand.u32 2147483647, %v2723
        %vm5979 = vcmp.eq.f32.partialorder %v5978, 8.507059e+37
        %v5980 = vand.u32 %v2723, 2147483648
        %v5981 = vor.u32 1.1754944e-38, %v5980
        %v5982 = vsel %vm5979, %v5981, %v5977
        %v5983 = vmul.f32 1.0, %v5982
        %v5984 = vrcp.pop %v2724
        %v5985 = vmul.f32 %v2724, %v5984
        %v5986 = vsub.f32 1.0, %v5985
        %v5987 = vmul.f32 %v5984, %v5986
        %v5988 = vadd.f32 %v5984, %v5987
        %vm5989 = vweird.f32 %v2724
        %vm5990 = vweird.f32 %v5984
        %vm5991 = vmor %vm5989, %vm5990
        %v5992 = vsel %vm5991, %v5984, %v5988
        %v5993 = vand.u32 2147483647, %v2724
        %vm5994 = vcmp.eq.f32.partialorder %v5993, 8.507059e+37
        %v5995 = vand.u32 %v2724, 2147483648
        %v5996 = vor.u32 1.1754944e-38, %v5995
        %v5997 = vsel %vm5994, %v5996, %v5992
        %v5998 = vmul.f32 1.0, %v5997
        %v5999 = vrcp.pop %v2725
        %v6000 = vmul.f32 %v2725, %v5999
        %v6001 = vsub.f32 1.0, %v6000
        %v6002 = vmul.f32 %v5999, %v6001
        %v6003 = vadd.f32 %v5999, %v6002
        %vm6004 = vweird.f32 %v2725
        %vm6005 = vweird.f32 %v5999
        %vm6006 = vmor %vm6004, %vm6005
        %v6007 = vsel %vm6006, %v5999, %v6003
        %v6008 = vand.u32 2147483647, %v2725
        %vm6009 = vcmp.eq.f32.partialorder %v6008, 8.507059e+37
        %v6010 = vand.u32 %v2725, 2147483648
        %v6011 = vor.u32 1.1754944e-38, %v6010
        %v6012 = vsel %vm6009, %v6011, %v6007
        %v6013 = vmul.f32 1.0, %v6012
        %v6014 = vrcp.pop %v2726
        %v6015 = vmul.f32 %v2726, %v6014
        %v6016 = vsub.f32 1.0, %v6015
        %v6017 = vmul.f32 %v6014, %v6016
        %v6018 = vadd.f32 %v6014, %v6017
        %vm6019 = vweird.f32 %v2726
        %vm6020 = vweird.f32 %v6014
        %vm6021 = vmor %vm6019, %vm6020
        %v6022 = vsel %vm6021, %v6014, %v6018
        %v6023 = vand.u32 2147483647, %v2726
        %vm6024 = vcmp.eq.f32.partialorder %v6023, 8.507059e+37
        %v6025 = vand.u32 %v2726, 2147483648
        %v6026 = vor.u32 1.1754944e-38, %v6025
        %v6027 = vsel %vm6024, %v6026, %v6022
        %v6028 = vmul.f32 1.0, %v6027
        %v6029 = vrcp.pop %v2727
        %v6030 = vmul.f32 %v2727, %v6029
        %v6031 = vsub.f32 1.0, %v6030
        %v6032 = vmul.f32 %v6029, %v6031
        %v6033 = vadd.f32 %v6029, %v6032
        %vm6034 = vweird.f32 %v2727
        %vm6035 = vweird.f32 %v6029
        %vm6036 = vmor %vm6034, %vm6035
        %v6037 = vsel %vm6036, %v6029, %v6033
        %v6038 = vand.u32 2147483647, %v2727
        %vm6039 = vcmp.eq.f32.partialorder %v6038, 8.507059e+37
        %v6040 = vand.u32 %v2727, 2147483648
        %v6041 = vor.u32 1.1754944e-38, %v6040
        %v6042 = vsel %vm6039, %v6041, %v6037
        %v6043 = vmul.f32 1.0, %v6042
        %v6044 = vrcp.pop %v2728
        %v6045 = vmul.f32 %v2728, %v6044
        %v6046 = vsub.f32 1.0, %v6045
        %v6047 = vmul.f32 %v6044, %v6046
        %v6048 = vadd.f32 %v6044, %v6047
        %vm6049 = vweird.f32 %v2728
        %vm6050 = vweird.f32 %v6044
        %vm6051 = vmor %vm6049, %vm6050
        %v6052 = vsel %vm6051, %v6044, %v6048
        %v6053 = vand.u32 2147483647, %v2728
        %vm6054 = vcmp.eq.f32.partialorder %v6053, 8.507059e+37
        %v6055 = vand.u32 %v2728, 2147483648
        %v6056 = vor.u32 1.1754944e-38, %v6055
        %v6057 = vsel %vm6054, %v6056, %v6052
        %v6058 = vmul.f32 1.0, %v6057
        %v6059 = vrcp.pop %v2729
        %v6060 = vmul.f32 %v2729, %v6059
        %v6061 = vsub.f32 1.0, %v6060
        %v6062 = vmul.f32 %v6059, %v6061
        %v6063 = vadd.f32 %v6059, %v6062
        %vm6064 = vweird.f32 %v2729
        %vm6065 = vweird.f32 %v6059
        %vm6066 = vmor %vm6064, %vm6065
        %v6067 = vsel %vm6066, %v6059, %v6063
        %v6068 = vand.u32 2147483647, %v2729
        %vm6069 = vcmp.eq.f32.partialorder %v6068, 8.507059e+37
        %v6070 = vand.u32 %v2729, 2147483648
        %v6071 = vor.u32 1.1754944e-38, %v6070
        %v6072 = vsel %vm6069, %v6071, %v6067
        %v6073 = vmul.f32 1.0, %v6072
        %v6074 = vrcp.pop %v2730
        %v6075 = vmul.f32 %v2730, %v6074
        %v6076 = vsub.f32 1.0, %v6075
        %v6077 = vmul.f32 %v6074, %v6076
        %v6078 = vadd.f32 %v6074, %v6077
        %vm6079 = vweird.f32 %v2730
        %vm6080 = vweird.f32 %v6074
        %vm6081 = vmor %vm6079, %vm6080
        %v6082 = vsel %vm6081, %v6074, %v6078
        %v6083 = vand.u32 2147483647, %v2730
        %vm6084 = vcmp.eq.f32.partialorder %v6083, 8.507059e+37
        %v6085 = vand.u32 %v2730, 2147483648
        %v6086 = vor.u32 1.1754944e-38, %v6085
        %v6087 = vsel %vm6084, %v6086, %v6082
        %v6088 = vmul.f32 1.0, %v6087
        %v6089 = vrcp.pop %v2731
        %v6090 = vmul.f32 %v2731, %v6089
        %v6091 = vsub.f32 1.0, %v6090
        %v6092 = vmul.f32 %v6089, %v6091
        %v6093 = vadd.f32 %v6089, %v6092
        %vm6094 = vweird.f32 %v2731
        %vm6095 = vweird.f32 %v6089
        %vm6096 = vmor %vm6094, %vm6095
        %v6097 = vsel %vm6096, %v6089, %v6093
        %v6098 = vand.u32 2147483647, %v2731
        %vm6099 = vcmp.eq.f32.partialorder %v6098, 8.507059e+37
        %v6100 = vand.u32 %v2731, 2147483648
        %v6101 = vor.u32 1.1754944e-38, %v6100
        %v6102 = vsel %vm6099, %v6101, %v6097
        %v6103 = vmul.f32 1.0, %v6102
        %v6104 = vrcp.pop %v2732
        %v6105 = vmul.f32 %v2732, %v6104
        %v6106 = vsub.f32 1.0, %v6105
        %v6107 = vmul.f32 %v6104, %v6106
        %v6108 = vadd.f32 %v6104, %v6107
        %vm6109 = vweird.f32 %v2732
        %vm6110 = vweird.f32 %v6104
        %vm6111 = vmor %vm6109, %vm6110
        %v6112 = vsel %vm6111, %v6104, %v6108
        %v6113 = vand.u32 2147483647, %v2732
        %vm6114 = vcmp.eq.f32.partialorder %v6113, 8.507059e+37
        %v6115 = vand.u32 %v2732, 2147483648
        %v6116 = vor.u32 1.1754944e-38, %v6115
        %v6117 = vsel %vm6114, %v6116, %v6112
        %v6118 = vmul.f32 1.0, %v6117
        %v6119 = vrcp.pop %v2733
        %v6120 = vmul.f32 %v2733, %v6119
        %v6121 = vsub.f32 1.0, %v6120
        %v6122 = vmul.f32 %v6119, %v6121
        %v6123 = vadd.f32 %v6119, %v6122
        %vm6124 = vweird.f32 %v2733
        %vm6125 = vweird.f32 %v6119
        %vm6126 = vmor %vm6124, %vm6125
        %v6127 = vsel %vm6126, %v6119, %v6123
        %v6128 = vand.u32 2147483647, %v2733
        %vm6129 = vcmp.eq.f32.partialorder %v6128, 8.507059e+37
        %v6130 = vand.u32 %v2733, 2147483648
        %v6131 = vor.u32 1.1754944e-38, %v6130
        %v6132 = vsel %vm6129, %v6131, %v6127
        %v6133 = vmul.f32 1.0, %v6132
        %v6134 = vrcp.pop %v2734
        %v6135 = vmul.f32 %v2734, %v6134
        %v6136 = vsub.f32 1.0, %v6135
        %v6137 = vmul.f32 %v6134, %v6136
        %v6138 = vadd.f32 %v6134, %v6137
        %vm6139 = vweird.f32 %v2734
        %vm6140 = vweird.f32 %v6134
        %vm6141 = vmor %vm6139, %vm6140
        %v6142 = vsel %vm6141, %v6134, %v6138
        %v6143 = vand.u32 2147483647, %v2734
        %vm6144 = vcmp.eq.f32.partialorder %v6143, 8.507059e+37
        %v6145 = vand.u32 %v2734, 2147483648
        %v6146 = vor.u32 1.1754944e-38, %v6145
        %v6147 = vsel %vm6144, %v6146, %v6142
        %v6148 = vmul.f32 1.0, %v6147
        %v6149 = vrcp.pop %v2735
        %v6150 = vmul.f32 %v2735, %v6149
        %v6151 = vsub.f32 1.0, %v6150
        %v6152 = vmul.f32 %v6149, %v6151
        %v6153 = vadd.f32 %v6149, %v6152
        %vm6154 = vweird.f32 %v2735
        %vm6155 = vweird.f32 %v6149
        %vm6156 = vmor %vm6154, %vm6155
        %v6157 = vsel %vm6156, %v6149, %v6153
        %v6158 = vand.u32 2147483647, %v2735
        %vm6159 = vcmp.eq.f32.partialorder %v6158, 8.507059e+37
        %v6160 = vand.u32 %v2735, 2147483648
        %v6161 = vor.u32 1.1754944e-38, %v6160
        %v6162 = vsel %vm6159, %v6161, %v6157
        %v6163 = vmul.f32 1.0, %v6162
        %v6164 = vrcp.pop %v2736
        %v6165 = vmul.f32 %v2736, %v6164
        %v6166 = vsub.f32 1.0, %v6165
        %v6167 = vmul.f32 %v6164, %v6166
        %v6168 = vadd.f32 %v6164, %v6167
        %vm6169 = vweird.f32 %v2736
        %vm6170 = vweird.f32 %v6164
        %vm6171 = vmor %vm6169, %vm6170
        %v6172 = vsel %vm6171, %v6164, %v6168
        %v6173 = vand.u32 2147483647, %v2736
        %vm6174 = vcmp.eq.f32.partialorder %v6173, 8.507059e+37
        %v6175 = vand.u32 %v2736, 2147483648
        %v6176 = vor.u32 1.1754944e-38, %v6175
        %v6177 = vsel %vm6174, %v6176, %v6172
        %v6178 = vmul.f32 1.0, %v6177
        %v6179 = vrcp.pop %v2737
        %v6180 = vmul.f32 %v2737, %v6179
        %v6181 = vsub.f32 1.0, %v6180
        %v6182 = vmul.f32 %v6179, %v6181
        %v6183 = vadd.f32 %v6179, %v6182
        %vm6184 = vweird.f32 %v2737
        %vm6185 = vweird.f32 %v6179
        %vm6186 = vmor %vm6184, %vm6185
        %v6187 = vsel %vm6186, %v6179, %v6183
        %v6188 = vand.u32 2147483647, %v2737
        %vm6189 = vcmp.eq.f32.partialorder %v6188, 8.507059e+37
        %v6190 = vand.u32 %v2737, 2147483648
        %v6191 = vor.u32 1.1754944e-38, %v6190
        %v6192 = vsel %vm6189, %v6191, %v6187
        %v6193 = vmul.f32 1.0, %v6192
        %v6194 = vrcp.pop %v2738
        %v6195 = vmul.f32 %v2738, %v6194
        %v6196 = vsub.f32 1.0, %v6195
        %v6197 = vmul.f32 %v6194, %v6196
        %v6198 = vadd.f32 %v6194, %v6197
        %vm6199 = vweird.f32 %v2738
        %vm6200 = vweird.f32 %v6194
        %vm6201 = vmor %vm6199, %vm6200
        %v6202 = vsel %vm6201, %v6194, %v6198
        %v6203 = vand.u32 2147483647, %v2738
        %vm6204 = vcmp.eq.f32.partialorder %v6203, 8.507059e+37
        %v6205 = vand.u32 %v2738, 2147483648
        %v6206 = vor.u32 1.1754944e-38, %v6205
        %v6207 = vsel %vm6204, %v6206, %v6202
        %v6208 = vmul.f32 1.0, %v6207
        %v6209 = vrcp.pop %v2739
        %v6210 = vmul.f32 %v2739, %v6209
        %v6211 = vsub.f32 1.0, %v6210
        %v6212 = vmul.f32 %v6209, %v6211
        %v6213 = vadd.f32 %v6209, %v6212
        %vm6214 = vweird.f32 %v2739
        %vm6215 = vweird.f32 %v6209
        %vm6216 = vmor %vm6214, %vm6215
        %v6217 = vsel %vm6216, %v6209, %v6213
        %v6218 = vand.u32 2147483647, %v2739
        %vm6219 = vcmp.eq.f32.partialorder %v6218, 8.507059e+37
        %v6220 = vand.u32 %v2739, 2147483648
        %v6221 = vor.u32 1.1754944e-38, %v6220
        %v6222 = vsel %vm6219, %v6221, %v6217
        %v6223 = vmul.f32 1.0, %v6222
        %v6224 = vrcp.pop %v2740
        %v6225 = vmul.f32 %v2740, %v6224
        %v6226 = vsub.f32 1.0, %v6225
        %v6227 = vmul.f32 %v6224, %v6226
        %v6228 = vadd.f32 %v6224, %v6227
        %vm6229 = vweird.f32 %v2740
        %vm6230 = vweird.f32 %v6224
        %vm6231 = vmor %vm6229, %vm6230
        %v6232 = vsel %vm6231, %v6224, %v6228
        %v6233 = vand.u32 2147483647, %v2740
        %vm6234 = vcmp.eq.f32.partialorder %v6233, 8.507059e+37
        %v6235 = vand.u32 %v2740, 2147483648
        %v6236 = vor.u32 1.1754944e-38, %v6235
        %v6237 = vsel %vm6234, %v6236, %v6232
        %v6238 = vmul.f32 1.0, %v6237
        %v6239 = vrcp.pop %v2741
        %v6240 = vmul.f32 %v2741, %v6239
        %v6241 = vsub.f32 1.0, %v6240
        %v6242 = vmul.f32 %v6239, %v6241
        %v6243 = vadd.f32 %v6239, %v6242
        %vm6244 = vweird.f32 %v2741
        %vm6245 = vweird.f32 %v6239
        %vm6246 = vmor %vm6244, %vm6245
        %v6247 = vsel %vm6246, %v6239, %v6243
        %v6248 = vand.u32 2147483647, %v2741
        %vm6249 = vcmp.eq.f32.partialorder %v6248, 8.507059e+37
        %v6250 = vand.u32 %v2741, 2147483648
        %v6251 = vor.u32 1.1754944e-38, %v6250
        %v6252 = vsel %vm6249, %v6251, %v6247
        %v6253 = vmul.f32 1.0, %v6252
        %v6254 = vrcp.pop %v2742
        %v6255 = vmul.f32 %v2742, %v6254
        %v6256 = vsub.f32 1.0, %v6255
        %v6257 = vmul.f32 %v6254, %v6256
        %v6258 = vadd.f32 %v6254, %v6257
        %vm6259 = vweird.f32 %v2742
        %vm6260 = vweird.f32 %v6254
        %vm6261 = vmor %vm6259, %vm6260
        %v6262 = vsel %vm6261, %v6254, %v6258
        %v6263 = vand.u32 2147483647, %v2742
        %vm6264 = vcmp.eq.f32.partialorder %v6263, 8.507059e+37
        %v6265 = vand.u32 %v2742, 2147483648
        %v6266 = vor.u32 1.1754944e-38, %v6265
        %v6267 = vsel %vm6264, %v6266, %v6262
        %v6268 = vmul.f32 1.0, %v6267
        %v6269 = vrcp.pop %v2743
        %v6270 = vmul.f32 %v2743, %v6269
        %v6271 = vsub.f32 1.0, %v6270
        %v6272 = vmul.f32 %v6269, %v6271
        %v6273 = vadd.f32 %v6269, %v6272
        %vm6274 = vweird.f32 %v2743
        %vm6275 = vweird.f32 %v6269
        %vm6276 = vmor %vm6274, %vm6275
        %v6277 = vsel %vm6276, %v6269, %v6273
        %v6278 = vand.u32 2147483647, %v2743
        %vm6279 = vcmp.eq.f32.partialorder %v6278, 8.507059e+37
        %v6280 = vand.u32 %v2743, 2147483648
        %v6281 = vor.u32 1.1754944e-38, %v6280
        %v6282 = vsel %vm6279, %v6281, %v6277
        %v6283 = vmul.f32 1.0, %v6282
        %v6284 = vrcp.pop %v2744
        %v6285 = vmul.f32 %v2744, %v6284
        %v6286 = vsub.f32 1.0, %v6285
        %v6287 = vmul.f32 %v6284, %v6286
        %v6288 = vadd.f32 %v6284, %v6287
        %vm6289 = vweird.f32 %v2744
        %vm6290 = vweird.f32 %v6284
        %vm6291 = vmor %vm6289, %vm6290
        %v6292 = vsel %vm6291, %v6284, %v6288
        %v6293 = vand.u32 2147483647, %v2744
        %vm6294 = vcmp.eq.f32.partialorder %v6293, 8.507059e+37
        %v6295 = vand.u32 %v2744, 2147483648
        %v6296 = vor.u32 1.1754944e-38, %v6295
        %v6297 = vsel %vm6294, %v6296, %v6292
        %v6298 = vmul.f32 1.0, %v6297
        %v6299 = vrcp.pop %v2745
        %v6300 = vmul.f32 %v2745, %v6299
        %v6301 = vsub.f32 1.0, %v6300
        %v6302 = vmul.f32 %v6299, %v6301
        %v6303 = vadd.f32 %v6299, %v6302
        %vm6304 = vweird.f32 %v2745
        %vm6305 = vweird.f32 %v6299
        %vm6306 = vmor %vm6304, %vm6305
        %v6307 = vsel %vm6306, %v6299, %v6303
        %v6308 = vand.u32 2147483647, %v2745
        %vm6309 = vcmp.eq.f32.partialorder %v6308, 8.507059e+37
        %v6310 = vand.u32 %v2745, 2147483648
        %v6311 = vor.u32 1.1754944e-38, %v6310
        %v6312 = vsel %vm6309, %v6311, %v6307
        %v6313 = vmul.f32 1.0, %v6312
        %v6314 = vrcp.pop %v2746
        %v6315 = vmul.f32 %v2746, %v6314
        %v6316 = vsub.f32 1.0, %v6315
        %v6317 = vmul.f32 %v6314, %v6316
        %v6318 = vadd.f32 %v6314, %v6317
        %vm6319 = vweird.f32 %v2746
        %vm6320 = vweird.f32 %v6314
        %vm6321 = vmor %vm6319, %vm6320
        %v6322 = vsel %vm6321, %v6314, %v6318
        %v6323 = vand.u32 2147483647, %v2746
        %vm6324 = vcmp.eq.f32.partialorder %v6323, 8.507059e+37
        %v6325 = vand.u32 %v2746, 2147483648
        %v6326 = vor.u32 1.1754944e-38, %v6325
        %v6327 = vsel %vm6324, %v6326, %v6322
        %v6328 = vmul.f32 1.0, %v6327
        %v6329 = vrcp.pop %v2747
        %v6330 = vmul.f32 %v2747, %v6329
        %v6331 = vsub.f32 1.0, %v6330
        %v6332 = vmul.f32 %v6329, %v6331
        %v6333 = vadd.f32 %v6329, %v6332
        %vm6334 = vweird.f32 %v2747
        %vm6335 = vweird.f32 %v6329
        %vm6336 = vmor %vm6334, %vm6335
        %v6337 = vsel %vm6336, %v6329, %v6333
        %v6338 = vand.u32 2147483647, %v2747
        %vm6339 = vcmp.eq.f32.partialorder %v6338, 8.507059e+37
        %v6340 = vand.u32 %v2747, 2147483648
        %v6341 = vor.u32 1.1754944e-38, %v6340
        %v6342 = vsel %vm6339, %v6341, %v6337
        %v6343 = vmul.f32 1.0, %v6342
        %v6344 = vrcp.pop %v2748
        %v6345 = vmul.f32 %v2748, %v6344
        %v6346 = vsub.f32 1.0, %v6345
        %v6347 = vmul.f32 %v6344, %v6346
        %v6348 = vadd.f32 %v6344, %v6347
        %vm6349 = vweird.f32 %v2748
        %vm6350 = vweird.f32 %v6344
        %vm6351 = vmor %vm6349, %vm6350
        %v6352 = vsel %vm6351, %v6344, %v6348
        %v6353 = vand.u32 2147483647, %v2748
        %vm6354 = vcmp.eq.f32.partialorder %v6353, 8.507059e+37
        %v6355 = vand.u32 %v2748, 2147483648
        %v6356 = vor.u32 1.1754944e-38, %v6355
        %v6357 = vsel %vm6354, %v6356, %v6352
        %v6358 = vmul.f32 1.0, %v6357
        %v6359 = vrcp.pop %v2749
        %v6360 = vmul.f32 %v2749, %v6359
        %v6361 = vsub.f32 1.0, %v6360
        %v6362 = vmul.f32 %v6359, %v6361
        %v6363 = vadd.f32 %v6359, %v6362
        %vm6364 = vweird.f32 %v2749
        %vm6365 = vweird.f32 %v6359
        %vm6366 = vmor %vm6364, %vm6365
        %v6367 = vsel %vm6366, %v6359, %v6363
        %v6368 = vand.u32 2147483647, %v2749
        %vm6369 = vcmp.eq.f32.partialorder %v6368, 8.507059e+37
        %v6370 = vand.u32 %v2749, 2147483648
        %v6371 = vor.u32 1.1754944e-38, %v6370
        %v6372 = vsel %vm6369, %v6371, %v6367
        %v6373 = vmul.f32 1.0, %v6372
        %v6374 = vrcp.pop %v2750
        %v6375 = vmul.f32 %v2750, %v6374
        %v6376 = vsub.f32 1.0, %v6375
        %v6377 = vmul.f32 %v6374, %v6376
        %v6378 = vadd.f32 %v6374, %v6377
        %vm6379 = vweird.f32 %v2750
        %vm6380 = vweird.f32 %v6374
        %vm6381 = vmor %vm6379, %vm6380
        %v6382 = vsel %vm6381, %v6374, %v6378
        %v6383 = vand.u32 2147483647, %v2750
        %vm6384 = vcmp.eq.f32.partialorder %v6383, 8.507059e+37
        %v6385 = vand.u32 %v2750, 2147483648
        %v6386 = vor.u32 1.1754944e-38, %v6385
        %v6387 = vsel %vm6384, %v6386, %v6382
        %v6388 = vmul.f32 1.0, %v6387
        %v6389 = vrcp.pop %v2751
        %v6390 = vmul.f32 %v2751, %v6389
        %v6391 = vsub.f32 1.0, %v6390
        %v6392 = vmul.f32 %v6389, %v6391
        %v6393 = vadd.f32 %v6389, %v6392
        %vm6394 = vweird.f32 %v2751
        %vm6395 = vweird.f32 %v6389
        %vm6396 = vmor %vm6394, %vm6395
        %v6397 = vsel %vm6396, %v6389, %v6393
        %v6398 = vand.u32 2147483647, %v2751
        %vm6399 = vcmp.eq.f32.partialorder %v6398, 8.507059e+37
        %v6400 = vand.u32 %v2751, 2147483648
        %v6401 = vor.u32 1.1754944e-38, %v6400
        %v6402 = vsel %vm6399, %v6401, %v6397
        %v6403 = vmul.f32 1.0, %v6402
        %v6404 = vrcp.pop %v2752
        %v6405 = vmul.f32 %v2752, %v6404
        %v6406 = vsub.f32 1.0, %v6405
        %v6407 = vmul.f32 %v6404, %v6406
        %v6408 = vadd.f32 %v6404, %v6407
        %vm6409 = vweird.f32 %v2752
        %vm6410 = vweird.f32 %v6404
        %vm6411 = vmor %vm6409, %vm6410
        %v6412 = vsel %vm6411, %v6404, %v6408
        %v6413 = vand.u32 2147483647, %v2752
        %vm6414 = vcmp.eq.f32.partialorder %v6413, 8.507059e+37
        %v6415 = vand.u32 %v2752, 2147483648
        %v6416 = vor.u32 1.1754944e-38, %v6415
        %v6417 = vsel %vm6414, %v6416, %v6412
        %v6418 = vmul.f32 1.0, %v6417
        %v6419 = vrcp.pop %v2753
        %v6420 = vmul.f32 %v2753, %v6419
        %v6421 = vsub.f32 1.0, %v6420
        %v6422 = vmul.f32 %v6419, %v6421
        %v6423 = vadd.f32 %v6419, %v6422
        %vm6424 = vweird.f32 %v2753
        %vm6425 = vweird.f32 %v6419
        %vm6426 = vmor %vm6424, %vm6425
        %v6427 = vsel %vm6426, %v6419, %v6423
        %v6428 = vand.u32 2147483647, %v2753
        %vm6429 = vcmp.eq.f32.partialorder %v6428, 8.507059e+37
        %v6430 = vand.u32 %v2753, 2147483648
        %v6431 = vor.u32 1.1754944e-38, %v6430
        %v6432 = vsel %vm6429, %v6431, %v6427
        %v6433 = vmul.f32 1.0, %v6432
        %v6434 = vrcp.pop %v2754
        %v6435 = vmul.f32 %v2754, %v6434
        %v6436 = vsub.f32 1.0, %v6435
        %v6437 = vmul.f32 %v6434, %v6436
        %v6438 = vadd.f32 %v6434, %v6437
        %vm6439 = vweird.f32 %v2754
        %vm6440 = vweird.f32 %v6434
        %vm6441 = vmor %vm6439, %vm6440
        %v6442 = vsel %vm6441, %v6434, %v6438
        %v6443 = vand.u32 2147483647, %v2754
        %vm6444 = vcmp.eq.f32.partialorder %v6443, 8.507059e+37
        %v6445 = vand.u32 %v2754, 2147483648
        %v6446 = vor.u32 1.1754944e-38, %v6445
        %v6447 = vsel %vm6444, %v6446, %v6442
        %v6448 = vmul.f32 1.0, %v6447
        %v6449 = vrcp.pop %v2755
        %v6450 = vmul.f32 %v2755, %v6449
        %v6451 = vsub.f32 1.0, %v6450
        %v6452 = vmul.f32 %v6449, %v6451
        %v6453 = vadd.f32 %v6449, %v6452
        %vm6454 = vweird.f32 %v2755
        %vm6455 = vweird.f32 %v6449
        %vm6456 = vmor %vm6454, %vm6455
        %v6457 = vsel %vm6456, %v6449, %v6453
        %v6458 = vand.u32 2147483647, %v2755
        %vm6459 = vcmp.eq.f32.partialorder %v6458, 8.507059e+37
        %v6460 = vand.u32 %v2755, 2147483648
        %v6461 = vor.u32 1.1754944e-38, %v6460
        %v6462 = vsel %vm6459, %v6461, %v6457
        %v6463 = vmul.f32 1.0, %v6462
        %v6464 = vrcp.pop %v2756
        %v6465 = vmul.f32 %v2756, %v6464
        %v6466 = vsub.f32 1.0, %v6465
        %v6467 = vmul.f32 %v6464, %v6466
        %v6468 = vadd.f32 %v6464, %v6467
        %vm6469 = vweird.f32 %v2756
        %vm6470 = vweird.f32 %v6464
        %vm6471 = vmor %vm6469, %vm6470
        %v6472 = vsel %vm6471, %v6464, %v6468
        %v6473 = vand.u32 2147483647, %v2756
        %vm6474 = vcmp.eq.f32.partialorder %v6473, 8.507059e+37
        %v6475 = vand.u32 %v2756, 2147483648
        %v6476 = vor.u32 1.1754944e-38, %v6475
        %v6477 = vsel %vm6474, %v6476, %v6472
        %v6478 = vmul.f32 1.0, %v6477
        %v6479 = vrcp.pop %v2757
        %v6480 = vmul.f32 %v2757, %v6479
        %v6481 = vsub.f32 1.0, %v6480
        %v6482 = vmul.f32 %v6479, %v6481
        %v6483 = vadd.f32 %v6479, %v6482
        %vm6484 = vweird.f32 %v2757
        %vm6485 = vweird.f32 %v6479
        %vm6486 = vmor %vm6484, %vm6485
        %v6487 = vsel %vm6486, %v6479, %v6483
        %v6488 = vand.u32 2147483647, %v2757
        %vm6489 = vcmp.eq.f32.partialorder %v6488, 8.507059e+37
        %v6490 = vand.u32 %v2757, 2147483648
        %v6491 = vor.u32 1.1754944e-38, %v6490
        %v6492 = vsel %vm6489, %v6491, %v6487
        %v6493 = vmul.f32 1.0, %v6492
        %v6494 = vrcp.pop %v2758
        %v6495 = vmul.f32 %v2758, %v6494
        %v6496 = vsub.f32 1.0, %v6495
        %v6497 = vmul.f32 %v6494, %v6496
        %v6498 = vadd.f32 %v6494, %v6497
        %vm6499 = vweird.f32 %v2758
        %vm6500 = vweird.f32 %v6494
        %vm6501 = vmor %vm6499, %vm6500
        %v6502 = vsel %vm6501, %v6494, %v6498
        %v6503 = vand.u32 2147483647, %v2758
        %vm6504 = vcmp.eq.f32.partialorder %v6503, 8.507059e+37
        %v6505 = vand.u32 %v2758, 2147483648
        %v6506 = vor.u32 1.1754944e-38, %v6505
        %v6507 = vsel %vm6504, %v6506, %v6502
        %v6508 = vmul.f32 1.0, %v6507
        %v6509 = vrcp.pop %v2759
        %v6510 = vmul.f32 %v2759, %v6509
        %v6511 = vsub.f32 1.0, %v6510
        %v6512 = vmul.f32 %v6509, %v6511
        %v6513 = vadd.f32 %v6509, %v6512
        %vm6514 = vweird.f32 %v2759
        %vm6515 = vweird.f32 %v6509
        %vm6516 = vmor %vm6514, %vm6515
        %v6517 = vsel %vm6516, %v6509, %v6513
        %v6518 = vand.u32 2147483647, %v2759
        %vm6519 = vcmp.eq.f32.partialorder %v6518, 8.507059e+37
        %v6520 = vand.u32 %v2759, 2147483648
        %v6521 = vor.u32 1.1754944e-38, %v6520
        %v6522 = vsel %vm6519, %v6521, %v6517
        %v6523 = vmul.f32 1.0, %v6522
        %v6524 = vrcp.pop %v2760
        %v6525 = vmul.f32 %v2760, %v6524
        %v6526 = vsub.f32 1.0, %v6525
        %v6527 = vmul.f32 %v6524, %v6526
        %v6528 = vadd.f32 %v6524, %v6527
        %vm6529 = vweird.f32 %v2760
        %vm6530 = vweird.f32 %v6524
        %vm6531 = vmor %vm6529, %vm6530
        %v6532 = vsel %vm6531, %v6524, %v6528
        %v6533 = vand.u32 2147483647, %v2760
        %vm6534 = vcmp.eq.f32.partialorder %v6533, 8.507059e+37
        %v6535 = vand.u32 %v2760, 2147483648
        %v6536 = vor.u32 1.1754944e-38, %v6535
        %v6537 = vsel %vm6534, %v6536, %v6532
        %v6538 = vmul.f32 1.0, %v6537
        %v6539 = vrcp.pop %v2761
        %v6540 = vmul.f32 %v2761, %v6539
        %v6541 = vsub.f32 1.0, %v6540
        %v6542 = vmul.f32 %v6539, %v6541
        %v6543 = vadd.f32 %v6539, %v6542
        %vm6544 = vweird.f32 %v2761
        %vm6545 = vweird.f32 %v6539
        %vm6546 = vmor %vm6544, %vm6545
        %v6547 = vsel %vm6546, %v6539, %v6543
        %v6548 = vand.u32 2147483647, %v2761
        %vm6549 = vcmp.eq.f32.partialorder %v6548, 8.507059e+37
        %v6550 = vand.u32 %v2761, 2147483648
        %v6551 = vor.u32 1.1754944e-38, %v6550
        %v6552 = vsel %vm6549, %v6551, %v6547
        %v6553 = vmul.f32 1.0, %v6552
        %v6554 = vrcp.pop %v2762
        %v6555 = vmul.f32 %v2762, %v6554
        %v6556 = vsub.f32 1.0, %v6555
        %v6557 = vmul.f32 %v6554, %v6556
        %v6558 = vadd.f32 %v6554, %v6557
        %vm6559 = vweird.f32 %v2762
        %vm6560 = vweird.f32 %v6554
        %vm6561 = vmor %vm6559, %vm6560
        %v6562 = vsel %vm6561, %v6554, %v6558
        %v6563 = vand.u32 2147483647, %v2762
        %vm6564 = vcmp.eq.f32.partialorder %v6563, 8.507059e+37
        %v6565 = vand.u32 %v2762, 2147483648
        %v6566 = vor.u32 1.1754944e-38, %v6565
        %v6567 = vsel %vm6564, %v6566, %v6562
        %v6568 = vmul.f32 1.0, %v6567
        %v6569 = vrcp.pop %v2763
        %v6570 = vmul.f32 %v2763, %v6569
        %v6571 = vsub.f32 1.0, %v6570
        %v6572 = vmul.f32 %v6569, %v6571
        %v6573 = vadd.f32 %v6569, %v6572
        %vm6574 = vweird.f32 %v2763
        %vm6575 = vweird.f32 %v6569
        %vm6576 = vmor %vm6574, %vm6575
        %v6577 = vsel %vm6576, %v6569, %v6573
        %v6578 = vand.u32 2147483647, %v2763
        %vm6579 = vcmp.eq.f32.partialorder %v6578, 8.507059e+37
        %v6580 = vand.u32 %v2763, 2147483648
        %v6581 = vor.u32 1.1754944e-38, %v6580
        %v6582 = vsel %vm6579, %v6581, %v6577
        %v6583 = vmul.f32 1.0, %v6582
        %v6584 = vrcp.pop %v2764
        %v6585 = vmul.f32 %v2764, %v6584
        %v6586 = vsub.f32 1.0, %v6585
        %v6587 = vmul.f32 %v6584, %v6586
        %v6588 = vadd.f32 %v6584, %v6587
        %vm6589 = vweird.f32 %v2764
        %vm6590 = vweird.f32 %v6584
        %vm6591 = vmor %vm6589, %vm6590
        %v6592 = vsel %vm6591, %v6584, %v6588
        %v6593 = vand.u32 2147483647, %v2764
        %vm6594 = vcmp.eq.f32.partialorder %v6593, 8.507059e+37
        %v6595 = vand.u32 %v2764, 2147483648
        %v6596 = vor.u32 1.1754944e-38, %v6595
        %v6597 = vsel %vm6594, %v6596, %v6592
        %v6598 = vmul.f32 1.0, %v6597
        %v6599 = vrcp.pop %v2765
        %v6600 = vmul.f32 %v2765, %v6599
        %v6601 = vsub.f32 1.0, %v6600
        %v6602 = vmul.f32 %v6599, %v6601
        %v6603 = vadd.f32 %v6599, %v6602
        %vm6604 = vweird.f32 %v2765
        %vm6605 = vweird.f32 %v6599
        %vm6606 = vmor %vm6604, %vm6605
        %v6607 = vsel %vm6606, %v6599, %v6603
        %v6608 = vand.u32 2147483647, %v2765
        %vm6609 = vcmp.eq.f32.partialorder %v6608, 8.507059e+37
        %v6610 = vand.u32 %v2765, 2147483648
        %v6611 = vor.u32 1.1754944e-38, %v6610
        %v6612 = vsel %vm6609, %v6611, %v6607
        %v6613 = vmul.f32 1.0, %v6612
        %v6614 = vrcp.pop %v2766
        %v6615 = vmul.f32 %v2766, %v6614
        %v6616 = vsub.f32 1.0, %v6615
        %v6617 = vmul.f32 %v6614, %v6616
        %v6618 = vadd.f32 %v6614, %v6617
        %vm6619 = vweird.f32 %v2766
        %vm6620 = vweird.f32 %v6614
        %vm6621 = vmor %vm6619, %vm6620
        %v6622 = vsel %vm6621, %v6614, %v6618
        %v6623 = vand.u32 2147483647, %v2766
        %vm6624 = vcmp.eq.f32.partialorder %v6623, 8.507059e+37
        %v6625 = vand.u32 %v2766, 2147483648
        %v6626 = vor.u32 1.1754944e-38, %v6625
        %v6627 = vsel %vm6624, %v6626, %v6622
        %v6628 = vmul.f32 1.0, %v6627
        %v6629 = vrcp.pop %v2767
        %v6630 = vmul.f32 %v2767, %v6629
        %v6631 = vsub.f32 1.0, %v6630
        %v6632 = vmul.f32 %v6629, %v6631
        %v6633 = vadd.f32 %v6629, %v6632
        %vm6634 = vweird.f32 %v2767
        %vm6635 = vweird.f32 %v6629
        %vm6636 = vmor %vm6634, %vm6635
        %v6637 = vsel %vm6636, %v6629, %v6633
        %v6638 = vand.u32 2147483647, %v2767
        %vm6639 = vcmp.eq.f32.partialorder %v6638, 8.507059e+37
        %v6640 = vand.u32 %v2767, 2147483648
        %v6641 = vor.u32 1.1754944e-38, %v6640
        %v6642 = vsel %vm6639, %v6641, %v6637
        %v6643 = vmul.f32 1.0, %v6642
        %v6644 = vrcp.pop %v2768
        %v6645 = vmul.f32 %v2768, %v6644
        %v6646 = vsub.f32 1.0, %v6645
        %v6647 = vmul.f32 %v6644, %v6646
        %v6648 = vadd.f32 %v6644, %v6647
        %vm6649 = vweird.f32 %v2768
        %vm6650 = vweird.f32 %v6644
        %vm6651 = vmor %vm6649, %vm6650
        %v6652 = vsel %vm6651, %v6644, %v6648
        %v6653 = vand.u32 2147483647, %v2768
        %vm6654 = vcmp.eq.f32.partialorder %v6653, 8.507059e+37
        %v6655 = vand.u32 %v2768, 2147483648
        %v6656 = vor.u32 1.1754944e-38, %v6655
        %v6657 = vsel %vm6654, %v6656, %v6652
        %v6658 = vmul.f32 1.0, %v6657
        %v6659 = vrcp.pop %v2769
        %v6660 = vmul.f32 %v2769, %v6659
        %v6661 = vsub.f32 1.0, %v6660
        %v6662 = vmul.f32 %v6659, %v6661
        %v6663 = vadd.f32 %v6659, %v6662
        %vm6664 = vweird.f32 %v2769
        %vm6665 = vweird.f32 %v6659
        %vm6666 = vmor %vm6664, %vm6665
        %v6667 = vsel %vm6666, %v6659, %v6663
        %v6668 = vand.u32 2147483647, %v2769
        %vm6669 = vcmp.eq.f32.partialorder %v6668, 8.507059e+37
        %v6670 = vand.u32 %v2769, 2147483648
        %v6671 = vor.u32 1.1754944e-38, %v6670
        %v6672 = vsel %vm6669, %v6671, %v6667
        %v6673 = vmul.f32 1.0, %v6672
        %v6674 = vrcp.pop %v2770
        %v6675 = vmul.f32 %v2770, %v6674
        %v6676 = vsub.f32 1.0, %v6675
        %v6677 = vmul.f32 %v6674, %v6676
        %v6678 = vadd.f32 %v6674, %v6677
        %vm6679 = vweird.f32 %v2770
        %vm6680 = vweird.f32 %v6674
        %vm6681 = vmor %vm6679, %vm6680
        %v6682 = vsel %vm6681, %v6674, %v6678
        %v6683 = vand.u32 2147483647, %v2770
        %vm6684 = vcmp.eq.f32.partialorder %v6683, 8.507059e+37
        %v6685 = vand.u32 %v2770, 2147483648
        %v6686 = vor.u32 1.1754944e-38, %v6685
        %v6687 = vsel %vm6684, %v6686, %v6682
        %v6688 = vmul.f32 1.0, %v6687
        %v6689 = vrcp.pop %v2771
        %v6690 = vmul.f32 %v2771, %v6689
        %v6691 = vsub.f32 1.0, %v6690
        %v6692 = vmul.f32 %v6689, %v6691
        %v6693 = vadd.f32 %v6689, %v6692
        %vm6694 = vweird.f32 %v2771
        %vm6695 = vweird.f32 %v6689
        %vm6696 = vmor %vm6694, %vm6695
        %v6697 = vsel %vm6696, %v6689, %v6693
        %v6698 = vand.u32 2147483647, %v2771
        %vm6699 = vcmp.eq.f32.partialorder %v6698, 8.507059e+37
        %v6700 = vand.u32 %v2771, 2147483648
        %v6701 = vor.u32 1.1754944e-38, %v6700
        %v6702 = vsel %vm6699, %v6701, %v6697
        %v6703 = vmul.f32 1.0, %v6702
        %v6704 = vrcp.pop %v2772
        %v6705 = vmul.f32 %v2772, %v6704
        %v6706 = vsub.f32 1.0, %v6705
        %v6707 = vmul.f32 %v6704, %v6706
        %v6708 = vadd.f32 %v6704, %v6707
        %vm6709 = vweird.f32 %v2772
        %vm6710 = vweird.f32 %v6704
        %vm6711 = vmor %vm6709, %vm6710
        %v6712 = vsel %vm6711, %v6704, %v6708
        %v6713 = vand.u32 2147483647, %v2772
        %vm6714 = vcmp.eq.f32.partialorder %v6713, 8.507059e+37
        %v6715 = vand.u32 %v2772, 2147483648
        %v6716 = vor.u32 1.1754944e-38, %v6715
        %v6717 = vsel %vm6714, %v6716, %v6712
        %v6718 = vmul.f32 1.0, %v6717
        %v6719 = vrcp.pop %v2773
        %v6720 = vmul.f32 %v2773, %v6719
        %v6721 = vsub.f32 1.0, %v6720
        %v6722 = vmul.f32 %v6719, %v6721
        %v6723 = vadd.f32 %v6719, %v6722
        %vm6724 = vweird.f32 %v2773
        %vm6725 = vweird.f32 %v6719
        %vm6726 = vmor %vm6724, %vm6725
        %v6727 = vsel %vm6726, %v6719, %v6723
        %v6728 = vand.u32 2147483647, %v2773
        %vm6729 = vcmp.eq.f32.partialorder %v6728, 8.507059e+37
        %v6730 = vand.u32 %v2773, 2147483648
        %v6731 = vor.u32 1.1754944e-38, %v6730
        %v6732 = vsel %vm6729, %v6731, %v6727
        %v6733 = vmul.f32 1.0, %v6732
        %v6734 = vrcp.pop %v2774
        %v6735 = vmul.f32 %v2774, %v6734
        %v6736 = vsub.f32 1.0, %v6735
        %v6737 = vmul.f32 %v6734, %v6736
        %v6738 = vadd.f32 %v6734, %v6737
        %vm6739 = vweird.f32 %v2774
        %vm6740 = vweird.f32 %v6734
        %vm6741 = vmor %vm6739, %vm6740
        %v6742 = vsel %vm6741, %v6734, %v6738
        %v6743 = vand.u32 2147483647, %v2774
        %vm6744 = vcmp.eq.f32.partialorder %v6743, 8.507059e+37
        %v6745 = vand.u32 %v2774, 2147483648
        %v6746 = vor.u32 1.1754944e-38, %v6745
        %v6747 = vsel %vm6744, %v6746, %v6742
        %v6748 = vmul.f32 1.0, %v6747
        %v6749 = vrcp.pop %v2775
        %v6750 = vmul.f32 %v2775, %v6749
        %v6751 = vsub.f32 1.0, %v6750
        %v6752 = vmul.f32 %v6749, %v6751
        %v6753 = vadd.f32 %v6749, %v6752
        %vm6754 = vweird.f32 %v2775
        %vm6755 = vweird.f32 %v6749
        %vm6756 = vmor %vm6754, %vm6755
        %v6757 = vsel %vm6756, %v6749, %v6753
        %v6758 = vand.u32 2147483647, %v2775
        %vm6759 = vcmp.eq.f32.partialorder %v6758, 8.507059e+37
        %v6760 = vand.u32 %v2775, 2147483648
        %v6761 = vor.u32 1.1754944e-38, %v6760
        %v6762 = vsel %vm6759, %v6761, %v6757
        %v6763 = vmul.f32 1.0, %v6762
        %v6764 = vrcp.pop %v2776
        %v6765 = vmul.f32 %v2776, %v6764
        %v6766 = vsub.f32 1.0, %v6765
        %v6767 = vmul.f32 %v6764, %v6766
        %v6768 = vadd.f32 %v6764, %v6767
        %vm6769 = vweird.f32 %v2776
        %vm6770 = vweird.f32 %v6764
        %vm6771 = vmor %vm6769, %vm6770
        %v6772 = vsel %vm6771, %v6764, %v6768
        %v6773 = vand.u32 2147483647, %v2776
        %vm6774 = vcmp.eq.f32.partialorder %v6773, 8.507059e+37
        %v6775 = vand.u32 %v2776, 2147483648
        %v6776 = vor.u32 1.1754944e-38, %v6775
        %v6777 = vsel %vm6774, %v6776, %v6772
        %v6778 = vmul.f32 1.0, %v6777
        %v6779 = vrcp.pop %v2777
        %v6780 = vmul.f32 %v2777, %v6779
        %v6781 = vsub.f32 1.0, %v6780
        %v6782 = vmul.f32 %v6779, %v6781
        %v6783 = vadd.f32 %v6779, %v6782
        %vm6784 = vweird.f32 %v2777
        %vm6785 = vweird.f32 %v6779
        %vm6786 = vmor %vm6784, %vm6785
        %v6787 = vsel %vm6786, %v6779, %v6783
        %v6788 = vand.u32 2147483647, %v2777
        %vm6789 = vcmp.eq.f32.partialorder %v6788, 8.507059e+37
        %v6790 = vand.u32 %v2777, 2147483648
        %v6791 = vor.u32 1.1754944e-38, %v6790
        %v6792 = vsel %vm6789, %v6791, %v6787
        %v6793 = vmul.f32 1.0, %v6792
        %v6794 = vrcp.pop %v2778
        %v6795 = vmul.f32 %v2778, %v6794
        %v6796 = vsub.f32 1.0, %v6795
        %v6797 = vmul.f32 %v6794, %v6796
        %v6798 = vadd.f32 %v6794, %v6797
        %vm6799 = vweird.f32 %v2778
        %vm6800 = vweird.f32 %v6794
        %vm6801 = vmor %vm6799, %vm6800
        %v6802 = vsel %vm6801, %v6794, %v6798
        %v6803 = vand.u32 2147483647, %v2778
        %vm6804 = vcmp.eq.f32.partialorder %v6803, 8.507059e+37
        %v6805 = vand.u32 %v2778, 2147483648
        %v6806 = vor.u32 1.1754944e-38, %v6805
        %v6807 = vsel %vm6804, %v6806, %v6802
        %v6808 = vmul.f32 1.0, %v6807
        %v6809 = vrcp.pop %v2779
        %v6810 = vmul.f32 %v2779, %v6809
        %v6811 = vsub.f32 1.0, %v6810
        %v6812 = vmul.f32 %v6809, %v6811
        %v6813 = vadd.f32 %v6809, %v6812
        %vm6814 = vweird.f32 %v2779
        %vm6815 = vweird.f32 %v6809
        %vm6816 = vmor %vm6814, %vm6815
        %v6817 = vsel %vm6816, %v6809, %v6813
        %v6818 = vand.u32 2147483647, %v2779
        %vm6819 = vcmp.eq.f32.partialorder %v6818, 8.507059e+37
        %v6820 = vand.u32 %v2779, 2147483648
        %v6821 = vor.u32 1.1754944e-38, %v6820
        %v6822 = vsel %vm6819, %v6821, %v6817
        %v6823 = vmul.f32 1.0, %v6822
        %v6824 = vrcp.pop %v2780
        %v6825 = vmul.f32 %v2780, %v6824
        %v6826 = vsub.f32 1.0, %v6825
        %v6827 = vmul.f32 %v6824, %v6826
        %v6828 = vadd.f32 %v6824, %v6827
        %vm6829 = vweird.f32 %v2780
        %vm6830 = vweird.f32 %v6824
        %vm6831 = vmor %vm6829, %vm6830
        %v6832 = vsel %vm6831, %v6824, %v6828
        %v6833 = vand.u32 2147483647, %v2780
        %vm6834 = vcmp.eq.f32.partialorder %v6833, 8.507059e+37
        %v6835 = vand.u32 %v2780, 2147483648
        %v6836 = vor.u32 1.1754944e-38, %v6835
        %v6837 = vsel %vm6834, %v6836, %v6832
        %v6838 = vmul.f32 1.0, %v6837
        %v6839 = vrcp.pop %v2781
        %v6840 = vmul.f32 %v2781, %v6839
        %v6841 = vsub.f32 1.0, %v6840
        %v6842 = vmul.f32 %v6839, %v6841
        %v6843 = vadd.f32 %v6839, %v6842
        %vm6844 = vweird.f32 %v2781
        %vm6845 = vweird.f32 %v6839
        %vm6846 = vmor %vm6844, %vm6845
        %v6847 = vsel %vm6846, %v6839, %v6843
        %v6848 = vand.u32 2147483647, %v2781
        %vm6849 = vcmp.eq.f32.partialorder %v6848, 8.507059e+37
        %v6850 = vand.u32 %v2781, 2147483648
        %v6851 = vor.u32 1.1754944e-38, %v6850
        %v6852 = vsel %vm6849, %v6851, %v6847
        %v6853 = vmul.f32 1.0, %v6852
        %v6854 = vrcp.pop %v2782
        %v6855 = vmul.f32 %v2782, %v6854
        %v6856 = vsub.f32 1.0, %v6855
        %v6857 = vmul.f32 %v6854, %v6856
        %v6858 = vadd.f32 %v6854, %v6857
        %vm6859 = vweird.f32 %v2782
        %vm6860 = vweird.f32 %v6854
        %vm6861 = vmor %vm6859, %vm6860
        %v6862 = vsel %vm6861, %v6854, %v6858
        %v6863 = vand.u32 2147483647, %v2782
        %vm6864 = vcmp.eq.f32.partialorder %v6863, 8.507059e+37
        %v6865 = vand.u32 %v2782, 2147483648
        %v6866 = vor.u32 1.1754944e-38, %v6865
        %v6867 = vsel %vm6864, %v6866, %v6862
        %v6868 = vmul.f32 1.0, %v6867
        %v6869 = vrcp.pop %v2783
        %v6870 = vmul.f32 %v2783, %v6869
        %v6871 = vsub.f32 1.0, %v6870
        %v6872 = vmul.f32 %v6869, %v6871
        %v6873 = vadd.f32 %v6869, %v6872
        %vm6874 = vweird.f32 %v2783
        %vm6875 = vweird.f32 %v6869
        %vm6876 = vmor %vm6874, %vm6875
        %v6877 = vsel %vm6876, %v6869, %v6873
        %v6878 = vand.u32 2147483647, %v2783
        %vm6879 = vcmp.eq.f32.partialorder %v6878, 8.507059e+37
        %v6880 = vand.u32 %v2783, 2147483648
        %v6881 = vor.u32 1.1754944e-38, %v6880
        %v6882 = vsel %vm6879, %v6881, %v6877
        %v6883 = vmul.f32 1.0, %v6882
        %v6884 = vrcp.pop %v2784
        %v6885 = vmul.f32 %v2784, %v6884
        %v6886 = vsub.f32 1.0, %v6885
        %v6887 = vmul.f32 %v6884, %v6886
        %v6888 = vadd.f32 %v6884, %v6887
        %vm6889 = vweird.f32 %v2784
        %vm6890 = vweird.f32 %v6884
        %vm6891 = vmor %vm6889, %vm6890
        %v6892 = vsel %vm6891, %v6884, %v6888
        %v6893 = vand.u32 2147483647, %v2784
        %vm6894 = vcmp.eq.f32.partialorder %v6893, 8.507059e+37
        %v6895 = vand.u32 %v2784, 2147483648
        %v6896 = vor.u32 1.1754944e-38, %v6895
        %v6897 = vsel %vm6894, %v6896, %v6892
        %v6898 = vmul.f32 1.0, %v6897
        %v6899 = vrcp.pop %v2785
        %v6900 = vmul.f32 %v2785, %v6899
        %v6901 = vsub.f32 1.0, %v6900
        %v6902 = vmul.f32 %v6899, %v6901
        %v6903 = vadd.f32 %v6899, %v6902
        %vm6904 = vweird.f32 %v2785
        %vm6905 = vweird.f32 %v6899
        %vm6906 = vmor %vm6904, %vm6905
        %v6907 = vsel %vm6906, %v6899, %v6903
        %v6908 = vand.u32 2147483647, %v2785
        %vm6909 = vcmp.eq.f32.partialorder %v6908, 8.507059e+37
        %v6910 = vand.u32 %v2785, 2147483648
        %v6911 = vor.u32 1.1754944e-38, %v6910
        %v6912 = vsel %vm6909, %v6911, %v6907
        %v6913 = vmul.f32 1.0, %v6912
        %v6914 = vrcp.pop %v2786
        %v6915 = vmul.f32 %v2786, %v6914
        %v6916 = vsub.f32 1.0, %v6915
        %v6917 = vmul.f32 %v6914, %v6916
        %v6918 = vadd.f32 %v6914, %v6917
        %vm6919 = vweird.f32 %v2786
        %vm6920 = vweird.f32 %v6914
        %vm6921 = vmor %vm6919, %vm6920
        %v6922 = vsel %vm6921, %v6914, %v6918
        %v6923 = vand.u32 2147483647, %v2786
        %vm6924 = vcmp.eq.f32.partialorder %v6923, 8.507059e+37
        %v6925 = vand.u32 %v2786, 2147483648
        %v6926 = vor.u32 1.1754944e-38, %v6925
        %v6927 = vsel %vm6924, %v6926, %v6922
        %v6928 = vmul.f32 1.0, %v6927
        %v6929 = vrcp.pop %v2787
        %v6930 = vmul.f32 %v2787, %v6929
        %v6931 = vsub.f32 1.0, %v6930
        %v6932 = vmul.f32 %v6929, %v6931
        %v6933 = vadd.f32 %v6929, %v6932
        %vm6934 = vweird.f32 %v2787
        %vm6935 = vweird.f32 %v6929
        %vm6936 = vmor %vm6934, %vm6935
        %v6937 = vsel %vm6936, %v6929, %v6933
        %v6938 = vand.u32 2147483647, %v2787
        %vm6939 = vcmp.eq.f32.partialorder %v6938, 8.507059e+37
        %v6940 = vand.u32 %v2787, 2147483648
        %v6941 = vor.u32 1.1754944e-38, %v6940
        %v6942 = vsel %vm6939, %v6941, %v6937
        %v6943 = vmul.f32 1.0, %v6942
        %v6944 = vrcp.pop %v2788
        %v6945 = vmul.f32 %v2788, %v6944
        %v6946 = vsub.f32 1.0, %v6945
        %v6947 = vmul.f32 %v6944, %v6946
        %v6948 = vadd.f32 %v6944, %v6947
        %vm6949 = vweird.f32 %v2788
        %vm6950 = vweird.f32 %v6944
        %vm6951 = vmor %vm6949, %vm6950
        %v6952 = vsel %vm6951, %v6944, %v6948
        %v6953 = vand.u32 2147483647, %v2788
        %vm6954 = vcmp.eq.f32.partialorder %v6953, 8.507059e+37
        %v6955 = vand.u32 %v2788, 2147483648
        %v6956 = vor.u32 1.1754944e-38, %v6955
        %v6957 = vsel %vm6954, %v6956, %v6952
        %v6958 = vmul.f32 1.0, %v6957
        %v6959 = vrcp.pop %v2789
        %v6960 = vmul.f32 %v2789, %v6959
        %v6961 = vsub.f32 1.0, %v6960
        %v6962 = vmul.f32 %v6959, %v6961
        %v6963 = vadd.f32 %v6959, %v6962
        %vm6964 = vweird.f32 %v2789
        %vm6965 = vweird.f32 %v6959
        %vm6966 = vmor %vm6964, %vm6965
        %v6967 = vsel %vm6966, %v6959, %v6963
        %v6968 = vand.u32 2147483647, %v2789
        %vm6969 = vcmp.eq.f32.partialorder %v6968, 8.507059e+37
        %v6970 = vand.u32 %v2789, 2147483648
        %v6971 = vor.u32 1.1754944e-38, %v6970
        %v6972 = vsel %vm6969, %v6971, %v6967
        %v6973 = vmul.f32 1.0, %v6972
        %v6974 = vrcp.pop %v2790
        %v6975 = vmul.f32 %v2790, %v6974
        %v6976 = vsub.f32 1.0, %v6975
        %v6977 = vmul.f32 %v6974, %v6976
        %v6978 = vadd.f32 %v6974, %v6977
        %vm6979 = vweird.f32 %v2790
        %vm6980 = vweird.f32 %v6974
        %vm6981 = vmor %vm6979, %vm6980
        %v6982 = vsel %vm6981, %v6974, %v6978
        %v6983 = vand.u32 2147483647, %v2790
        %vm6984 = vcmp.eq.f32.partialorder %v6983, 8.507059e+37
        %v6985 = vand.u32 %v2790, 2147483648
        %v6986 = vor.u32 1.1754944e-38, %v6985
        %v6987 = vsel %vm6984, %v6986, %v6982
        %v6988 = vmul.f32 1.0, %v6987
        %v6989 = vrcp.pop %v2791
        %v6990 = vmul.f32 %v2791, %v6989
        %v6991 = vsub.f32 1.0, %v6990
        %v6992 = vmul.f32 %v6989, %v6991
        %v6993 = vadd.f32 %v6989, %v6992
        %vm6994 = vweird.f32 %v2791
        %vm6995 = vweird.f32 %v6989
        %vm6996 = vmor %vm6994, %vm6995
        %v6997 = vsel %vm6996, %v6989, %v6993
        %v6998 = vand.u32 2147483647, %v2791
        %vm6999 = vcmp.eq.f32.partialorder %v6998, 8.507059e+37
        %v7000 = vand.u32 %v2791, 2147483648
        %v7001 = vor.u32 1.1754944e-38, %v7000
        %v7002 = vsel %vm6999, %v7001, %v6997
        %v7003 = vmul.f32 1.0, %v7002
        %v7004 = vrcp.pop %v2792
        %v7005 = vmul.f32 %v2792, %v7004
        %v7006 = vsub.f32 1.0, %v7005
        %v7007 = vmul.f32 %v7004, %v7006
        %v7008 = vadd.f32 %v7004, %v7007
        %vm7009 = vweird.f32 %v2792
        %vm7010 = vweird.f32 %v7004
        %vm7011 = vmor %vm7009, %vm7010
        %v7012 = vsel %vm7011, %v7004, %v7008
        %v7013 = vand.u32 2147483647, %v2792
        %vm7014 = vcmp.eq.f32.partialorder %v7013, 8.507059e+37
        %v7015 = vand.u32 %v2792, 2147483648
        %v7016 = vor.u32 1.1754944e-38, %v7015
        %v7017 = vsel %vm7014, %v7016, %v7012
        %v7018 = vmul.f32 1.0, %v7017
        %v7019 = vrcp.pop %v2793
        %v7020 = vmul.f32 %v2793, %v7019
        %v7021 = vsub.f32 1.0, %v7020
        %v7022 = vmul.f32 %v7019, %v7021
        %v7023 = vadd.f32 %v7019, %v7022
        %vm7024 = vweird.f32 %v2793
        %vm7025 = vweird.f32 %v7019
        %vm7026 = vmor %vm7024, %vm7025
        %v7027 = vsel %vm7026, %v7019, %v7023
        %v7028 = vand.u32 2147483647, %v2793
        %vm7029 = vcmp.eq.f32.partialorder %v7028, 8.507059e+37
        %v7030 = vand.u32 %v2793, 2147483648
        %v7031 = vor.u32 1.1754944e-38, %v7030
        %v7032 = vsel %vm7029, %v7031, %v7027
        %v7033 = vmul.f32 1.0, %v7032
        %v7034 = vrcp.pop %v2794
        %v7035 = vmul.f32 %v2794, %v7034
        %v7036 = vsub.f32 1.0, %v7035
        %v7037 = vmul.f32 %v7034, %v7036
        %v7038 = vadd.f32 %v7034, %v7037
        %vm7039 = vweird.f32 %v2794
        %vm7040 = vweird.f32 %v7034
        %vm7041 = vmor %vm7039, %vm7040
        %v7042 = vsel %vm7041, %v7034, %v7038
        %v7043 = vand.u32 2147483647, %v2794
        %vm7044 = vcmp.eq.f32.partialorder %v7043, 8.507059e+37
        %v7045 = vand.u32 %v2794, 2147483648
        %v7046 = vor.u32 1.1754944e-38, %v7045
        %v7047 = vsel %vm7044, %v7046, %v7042
        %v7048 = vmul.f32 1.0, %v7047
        %v7049 = vrcp.pop %v2795
        %v7050 = vmul.f32 %v2795, %v7049
        %v7051 = vsub.f32 1.0, %v7050
        %v7052 = vmul.f32 %v7049, %v7051
        %v7053 = vadd.f32 %v7049, %v7052
        %vm7054 = vweird.f32 %v2795
        %vm7055 = vweird.f32 %v7049
        %vm7056 = vmor %vm7054, %vm7055
        %v7057 = vsel %vm7056, %v7049, %v7053
        %v7058 = vand.u32 2147483647, %v2795
        %vm7059 = vcmp.eq.f32.partialorder %v7058, 8.507059e+37
        %v7060 = vand.u32 %v2795, 2147483648
        %v7061 = vor.u32 1.1754944e-38, %v7060
        %v7062 = vsel %vm7059, %v7061, %v7057
        %v7063 = vmul.f32 1.0, %v7062
        %v7064 = vrcp.pop %v2796
        %v7065 = vmul.f32 %v2796, %v7064
        %v7066 = vsub.f32 1.0, %v7065
        %v7067 = vmul.f32 %v7064, %v7066
        %v7068 = vadd.f32 %v7064, %v7067
        %vm7069 = vweird.f32 %v2796
        %vm7070 = vweird.f32 %v7064
        %vm7071 = vmor %vm7069, %vm7070
        %v7072 = vsel %vm7071, %v7064, %v7068
        %v7073 = vand.u32 2147483647, %v2796
        %vm7074 = vcmp.eq.f32.partialorder %v7073, 8.507059e+37
        %v7075 = vand.u32 %v2796, 2147483648
        %v7076 = vor.u32 1.1754944e-38, %v7075
        %v7077 = vsel %vm7074, %v7076, %v7072
        %v7078 = vmul.f32 1.0, %v7077
        %v7079 = vrcp.pop %v2797
        %v7080 = vmul.f32 %v2797, %v7079
        %v7081 = vsub.f32 1.0, %v7080
        %v7082 = vmul.f32 %v7079, %v7081
        %v7083 = vadd.f32 %v7079, %v7082
        %vm7084 = vweird.f32 %v2797
        %vm7085 = vweird.f32 %v7079
        %vm7086 = vmor %vm7084, %vm7085
        %v7087 = vsel %vm7086, %v7079, %v7083
        %v7088 = vand.u32 2147483647, %v2797
        %vm7089 = vcmp.eq.f32.partialorder %v7088, 8.507059e+37
        %v7090 = vand.u32 %v2797, 2147483648
        %v7091 = vor.u32 1.1754944e-38, %v7090
        %v7092 = vsel %vm7089, %v7091, %v7087
        %v7093 = vmul.f32 1.0, %v7092
        %v7094 = vrcp.pop %v2798
        %v7095 = vmul.f32 %v2798, %v7094
        %v7096 = vsub.f32 1.0, %v7095
        %v7097 = vmul.f32 %v7094, %v7096
        %v7098 = vadd.f32 %v7094, %v7097
        %vm7099 = vweird.f32 %v2798
        %vm7100 = vweird.f32 %v7094
        %vm7101 = vmor %vm7099, %vm7100
        %v7102 = vsel %vm7101, %v7094, %v7098
        %v7103 = vand.u32 2147483647, %v2798
        %vm7104 = vcmp.eq.f32.partialorder %v7103, 8.507059e+37
        %v7105 = vand.u32 %v2798, 2147483648
        %v7106 = vor.u32 1.1754944e-38, %v7105
        %v7107 = vsel %vm7104, %v7106, %v7102
        %v7108 = vmul.f32 1.0, %v7107
        %v7109 = vrcp.pop %v2799
        %v7110 = vmul.f32 %v2799, %v7109
        %v7111 = vsub.f32 1.0, %v7110
        %v7112 = vmul.f32 %v7109, %v7111
        %v7113 = vadd.f32 %v7109, %v7112
        %vm7114 = vweird.f32 %v2799
        %vm7115 = vweird.f32 %v7109
        %vm7116 = vmor %vm7114, %vm7115
        %v7117 = vsel %vm7116, %v7109, %v7113
        %v7118 = vand.u32 2147483647, %v2799
        %vm7119 = vcmp.eq.f32.partialorder %v7118, 8.507059e+37
        %v7120 = vand.u32 %v2799, 2147483648
        %v7121 = vor.u32 1.1754944e-38, %v7120
        %v7122 = vsel %vm7119, %v7121, %v7117
        %v7123 = vmul.f32 1.0, %v7122
        %v7124 = vrcp.pop %v2800
        %v7125 = vmul.f32 %v2800, %v7124
        %v7126 = vsub.f32 1.0, %v7125
        %v7127 = vmul.f32 %v7124, %v7126
        %v7128 = vadd.f32 %v7124, %v7127
        %vm7129 = vweird.f32 %v2800
        %vm7130 = vweird.f32 %v7124
        %vm7131 = vmor %vm7129, %vm7130
        %v7132 = vsel %vm7131, %v7124, %v7128
        %v7133 = vand.u32 2147483647, %v2800
        %vm7134 = vcmp.eq.f32.partialorder %v7133, 8.507059e+37
        %v7135 = vand.u32 %v2800, 2147483648
        %v7136 = vor.u32 1.1754944e-38, %v7135
        %v7137 = vsel %vm7134, %v7136, %v7132
        %v7138 = vmul.f32 1.0, %v7137
        %v7139 = vrcp.pop %v2801
        %v7140 = vmul.f32 %v2801, %v7139
        %v7141 = vsub.f32 1.0, %v7140
        %v7142 = vmul.f32 %v7139, %v7141
        %v7143 = vadd.f32 %v7139, %v7142
        %vm7144 = vweird.f32 %v2801
        %vm7145 = vweird.f32 %v7139
        %vm7146 = vmor %vm7144, %vm7145
        %v7147 = vsel %vm7146, %v7139, %v7143
        %v7148 = vand.u32 2147483647, %v2801
        %vm7149 = vcmp.eq.f32.partialorder %v7148, 8.507059e+37
        %v7150 = vand.u32 %v2801, 2147483648
        %v7151 = vor.u32 1.1754944e-38, %v7150
        %v7152 = vsel %vm7149, %v7151, %v7147
        %v7153 = vmul.f32 1.0, %v7152
        %v7154 = vrcp.pop %v2802
        %v7155 = vmul.f32 %v2802, %v7154
        %v7156 = vsub.f32 1.0, %v7155
        %v7157 = vmul.f32 %v7154, %v7156
        %v7158 = vadd.f32 %v7154, %v7157
        %vm7159 = vweird.f32 %v2802
        %vm7160 = vweird.f32 %v7154
        %vm7161 = vmor %vm7159, %vm7160
        %v7162 = vsel %vm7161, %v7154, %v7158
        %v7163 = vand.u32 2147483647, %v2802
        %vm7164 = vcmp.eq.f32.partialorder %v7163, 8.507059e+37
        %v7165 = vand.u32 %v2802, 2147483648
        %v7166 = vor.u32 1.1754944e-38, %v7165
        %v7167 = vsel %vm7164, %v7166, %v7162
        %v7168 = vmul.f32 1.0, %v7167
        %v7169 = vrcp.pop %v2803
        %v7170 = vmul.f32 %v2803, %v7169
        %v7171 = vsub.f32 1.0, %v7170
        %v7172 = vmul.f32 %v7169, %v7171
        %v7173 = vadd.f32 %v7169, %v7172
        %vm7174 = vweird.f32 %v2803
        %vm7175 = vweird.f32 %v7169
        %vm7176 = vmor %vm7174, %vm7175
        %v7177 = vsel %vm7176, %v7169, %v7173
        %v7178 = vand.u32 2147483647, %v2803
        %vm7179 = vcmp.eq.f32.partialorder %v7178, 8.507059e+37
        %v7180 = vand.u32 %v2803, 2147483648
        %v7181 = vor.u32 1.1754944e-38, %v7180
        %v7182 = vsel %vm7179, %v7181, %v7177
        %v7183 = vmul.f32 1.0, %v7182
        %v7184 = vrcp.pop %v2804
        %v7185 = vmul.f32 %v2804, %v7184
        %v7186 = vsub.f32 1.0, %v7185
        %v7187 = vmul.f32 %v7184, %v7186
        %v7188 = vadd.f32 %v7184, %v7187
        %vm7189 = vweird.f32 %v2804
        %vm7190 = vweird.f32 %v7184
        %vm7191 = vmor %vm7189, %vm7190
        %v7192 = vsel %vm7191, %v7184, %v7188
        %v7193 = vand.u32 2147483647, %v2804
        %vm7194 = vcmp.eq.f32.partialorder %v7193, 8.507059e+37
        %v7195 = vand.u32 %v2804, 2147483648
        %v7196 = vor.u32 1.1754944e-38, %v7195
        %v7197 = vsel %vm7194, %v7196, %v7192
        %v7198 = vmul.f32 1.0, %v7197
        %v7199 = vrcp.pop %v2805
        %v7200 = vmul.f32 %v2805, %v7199
        %v7201 = vsub.f32 1.0, %v7200
        %v7202 = vmul.f32 %v7199, %v7201
        %v7203 = vadd.f32 %v7199, %v7202
        %vm7204 = vweird.f32 %v2805
        %vm7205 = vweird.f32 %v7199
        %vm7206 = vmor %vm7204, %vm7205
        %v7207 = vsel %vm7206, %v7199, %v7203
        %v7208 = vand.u32 2147483647, %v2805
        %vm7209 = vcmp.eq.f32.partialorder %v7208, 8.507059e+37
        %v7210 = vand.u32 %v2805, 2147483648
        %v7211 = vor.u32 1.1754944e-38, %v7210
        %v7212 = vsel %vm7209, %v7211, %v7207
        %v7213 = vmul.f32 1.0, %v7212
        %v7214 = vrcp.pop %v2806
        %v7215 = vmul.f32 %v2806, %v7214
        %v7216 = vsub.f32 1.0, %v7215
        %v7217 = vmul.f32 %v7214, %v7216
        %v7218 = vadd.f32 %v7214, %v7217
        %vm7219 = vweird.f32 %v2806
        %vm7220 = vweird.f32 %v7214
        %vm7221 = vmor %vm7219, %vm7220
        %v7222 = vsel %vm7221, %v7214, %v7218
        %v7223 = vand.u32 2147483647, %v2806
        %vm7224 = vcmp.eq.f32.partialorder %v7223, 8.507059e+37
        %v7225 = vand.u32 %v2806, 2147483648
        %v7226 = vor.u32 1.1754944e-38, %v7225
        %v7227 = vsel %vm7224, %v7226, %v7222
        %v7228 = vmul.f32 1.0, %v7227
        %v7229 = vrcp.pop %v2807
        %v7230 = vmul.f32 %v2807, %v7229
        %v7231 = vsub.f32 1.0, %v7230
        %v7232 = vmul.f32 %v7229, %v7231
        %v7233 = vadd.f32 %v7229, %v7232
        %vm7234 = vweird.f32 %v2807
        %vm7235 = vweird.f32 %v7229
        %vm7236 = vmor %vm7234, %vm7235
        %v7237 = vsel %vm7236, %v7229, %v7233
        %v7238 = vand.u32 2147483647, %v2807
        %vm7239 = vcmp.eq.f32.partialorder %v7238, 8.507059e+37
        %v7240 = vand.u32 %v2807, 2147483648
        %v7241 = vor.u32 1.1754944e-38, %v7240
        %v7242 = vsel %vm7239, %v7241, %v7237
        %v7243 = vmul.f32 1.0, %v7242
        %v7244 = vrcp.pop %v2808
        %v7245 = vmul.f32 %v2808, %v7244
        %v7246 = vsub.f32 1.0, %v7245
        %v7247 = vmul.f32 %v7244, %v7246
        %v7248 = vadd.f32 %v7244, %v7247
        %vm7249 = vweird.f32 %v2808
        %vm7250 = vweird.f32 %v7244
        %vm7251 = vmor %vm7249, %vm7250
        %v7252 = vsel %vm7251, %v7244, %v7248
        %v7253 = vand.u32 2147483647, %v2808
        %vm7254 = vcmp.eq.f32.partialorder %v7253, 8.507059e+37
        %v7255 = vand.u32 %v2808, 2147483648
        %v7256 = vor.u32 1.1754944e-38, %v7255
        %v7257 = vsel %vm7254, %v7256, %v7252
        %v7258 = vmul.f32 1.0, %v7257
        %v7259 = vrcp.pop %v2809
        %v7260 = vmul.f32 %v2809, %v7259
        %v7261 = vsub.f32 1.0, %v7260
        %v7262 = vmul.f32 %v7259, %v7261
        %v7263 = vadd.f32 %v7259, %v7262
        %vm7264 = vweird.f32 %v2809
        %vm7265 = vweird.f32 %v7259
        %vm7266 = vmor %vm7264, %vm7265
        %v7267 = vsel %vm7266, %v7259, %v7263
        %v7268 = vand.u32 2147483647, %v2809
        %vm7269 = vcmp.eq.f32.partialorder %v7268, 8.507059e+37
        %v7270 = vand.u32 %v2809, 2147483648
        %v7271 = vor.u32 1.1754944e-38, %v7270
        %v7272 = vsel %vm7269, %v7271, %v7267
        %v7273 = vmul.f32 1.0, %v7272
        %v7274 = vrcp.pop %v2810
        %v7275 = vmul.f32 %v2810, %v7274
        %v7276 = vsub.f32 1.0, %v7275
        %v7277 = vmul.f32 %v7274, %v7276
        %v7278 = vadd.f32 %v7274, %v7277
        %vm7279 = vweird.f32 %v2810
        %vm7280 = vweird.f32 %v7274
        %vm7281 = vmor %vm7279, %vm7280
        %v7282 = vsel %vm7281, %v7274, %v7278
        %v7283 = vand.u32 2147483647, %v2810
        %vm7284 = vcmp.eq.f32.partialorder %v7283, 8.507059e+37
        %v7285 = vand.u32 %v2810, 2147483648
        %v7286 = vor.u32 1.1754944e-38, %v7285
        %v7287 = vsel %vm7284, %v7286, %v7282
        %v7288 = vmul.f32 1.0, %v7287
        %v7289 = vrcp.pop %v2811
        %v7290 = vmul.f32 %v2811, %v7289
        %v7291 = vsub.f32 1.0, %v7290
        %v7292 = vmul.f32 %v7289, %v7291
        %v7293 = vadd.f32 %v7289, %v7292
        %vm7294 = vweird.f32 %v2811
        %vm7295 = vweird.f32 %v7289
        %vm7296 = vmor %vm7294, %vm7295
        %v7297 = vsel %vm7296, %v7289, %v7293
        %v7298 = vand.u32 2147483647, %v2811
        %vm7299 = vcmp.eq.f32.partialorder %v7298, 8.507059e+37
        %v7300 = vand.u32 %v2811, 2147483648
        %v7301 = vor.u32 1.1754944e-38, %v7300
        %v7302 = vsel %vm7299, %v7301, %v7297
        %v7303 = vmul.f32 1.0, %v7302
        %v7304 = vrcp.pop %v2812
        %v7305 = vmul.f32 %v2812, %v7304
        %v7306 = vsub.f32 1.0, %v7305
        %v7307 = vmul.f32 %v7304, %v7306
        %v7308 = vadd.f32 %v7304, %v7307
        %vm7309 = vweird.f32 %v2812
        %vm7310 = vweird.f32 %v7304
        %vm7311 = vmor %vm7309, %vm7310
        %v7312 = vsel %vm7311, %v7304, %v7308
        %v7313 = vand.u32 2147483647, %v2812
        %vm7314 = vcmp.eq.f32.partialorder %v7313, 8.507059e+37
        %v7315 = vand.u32 %v2812, 2147483648
        %v7316 = vor.u32 1.1754944e-38, %v7315
        %v7317 = vsel %vm7314, %v7316, %v7312
        %v7318 = vmul.f32 1.0, %v7317
        %v7319 = vrcp.pop %v2813
        %v7320 = vmul.f32 %v2813, %v7319
        %v7321 = vsub.f32 1.0, %v7320
        %v7322 = vmul.f32 %v7319, %v7321
        %v7323 = vadd.f32 %v7319, %v7322
        %vm7324 = vweird.f32 %v2813
        %vm7325 = vweird.f32 %v7319
        %vm7326 = vmor %vm7324, %vm7325
        %v7327 = vsel %vm7326, %v7319, %v7323
        %v7328 = vand.u32 2147483647, %v2813
        %vm7329 = vcmp.eq.f32.partialorder %v7328, 8.507059e+37
        %v7330 = vand.u32 %v2813, 2147483648
        %v7331 = vor.u32 1.1754944e-38, %v7330
        %v7332 = vsel %vm7329, %v7331, %v7327
        %v7333 = vmul.f32 1.0, %v7332
        %v7334 = vrcp.pop %v2814
        %v7335 = vmul.f32 %v2814, %v7334
        %v7336 = vsub.f32 1.0, %v7335
        %v7337 = vmul.f32 %v7334, %v7336
        %v7338 = vadd.f32 %v7334, %v7337
        %vm7339 = vweird.f32 %v2814
        %vm7340 = vweird.f32 %v7334
        %vm7341 = vmor %vm7339, %vm7340
        %v7342 = vsel %vm7341, %v7334, %v7338
        %v7343 = vand.u32 2147483647, %v2814
        %vm7344 = vcmp.eq.f32.partialorder %v7343, 8.507059e+37
        %v7345 = vand.u32 %v2814, 2147483648
        %v7346 = vor.u32 1.1754944e-38, %v7345
        %v7347 = vsel %vm7344, %v7346, %v7342
        %v7348 = vmul.f32 1.0, %v7347
        %v7349 = vrcp.pop %v2815
        %v7350 = vmul.f32 %v2815, %v7349
        %v7351 = vsub.f32 1.0, %v7350
        %v7352 = vmul.f32 %v7349, %v7351
        %v7353 = vadd.f32 %v7349, %v7352
        %vm7354 = vweird.f32 %v2815
        %vm7355 = vweird.f32 %v7349
        %vm7356 = vmor %vm7354, %vm7355
        %v7357 = vsel %vm7356, %v7349, %v7353
        %v7358 = vand.u32 2147483647, %v2815
        %vm7359 = vcmp.eq.f32.partialorder %v7358, 8.507059e+37
        %v7360 = vand.u32 %v2815, 2147483648
        %v7361 = vor.u32 1.1754944e-38, %v7360
        %v7362 = vsel %vm7359, %v7361, %v7357
        %v7363 = vmul.f32 1.0, %v7362
        %v7364 = vrcp.pop %v2816
        %v7365 = vmul.f32 %v2816, %v7364
        %v7366 = vsub.f32 1.0, %v7365
        %v7367 = vmul.f32 %v7364, %v7366
        %v7368 = vadd.f32 %v7364, %v7367
        %vm7369 = vweird.f32 %v2816
        %vm7370 = vweird.f32 %v7364
        %vm7371 = vmor %vm7369, %vm7370
        %v7372 = vsel %vm7371, %v7364, %v7368
        %v7373 = vand.u32 2147483647, %v2816
        %vm7374 = vcmp.eq.f32.partialorder %v7373, 8.507059e+37
        %v7375 = vand.u32 %v2816, 2147483648
        %v7376 = vor.u32 1.1754944e-38, %v7375
        %v7377 = vsel %vm7374, %v7376, %v7372
        %v7378 = vmul.f32 1.0, %v7377
        %v7379 = vrcp.pop %v2817
        %v7380 = vmul.f32 %v2817, %v7379
        %v7381 = vsub.f32 1.0, %v7380
        %v7382 = vmul.f32 %v7379, %v7381
        %v7383 = vadd.f32 %v7379, %v7382
        %vm7384 = vweird.f32 %v2817
        %vm7385 = vweird.f32 %v7379
        %vm7386 = vmor %vm7384, %vm7385
        %v7387 = vsel %vm7386, %v7379, %v7383
        %v7388 = vand.u32 2147483647, %v2817
        %vm7389 = vcmp.eq.f32.partialorder %v7388, 8.507059e+37
        %v7390 = vand.u32 %v2817, 2147483648
        %v7391 = vor.u32 1.1754944e-38, %v7390
        %v7392 = vsel %vm7389, %v7391, %v7387
        %v7393 = vmul.f32 1.0, %v7392
        %v7394 = vrcp.pop %v2818
        %v7395 = vmul.f32 %v2818, %v7394
        %v7396 = vsub.f32 1.0, %v7395
        %v7397 = vmul.f32 %v7394, %v7396
        %v7398 = vadd.f32 %v7394, %v7397
        %vm7399 = vweird.f32 %v2818
        %vm7400 = vweird.f32 %v7394
        %vm7401 = vmor %vm7399, %vm7400
        %v7402 = vsel %vm7401, %v7394, %v7398
        %v7403 = vand.u32 2147483647, %v2818
        %vm7404 = vcmp.eq.f32.partialorder %v7403, 8.507059e+37
        %v7405 = vand.u32 %v2818, 2147483648
        %v7406 = vor.u32 1.1754944e-38, %v7405
        %v7407 = vsel %vm7404, %v7406, %v7402
        %v7408 = vmul.f32 1.0, %v7407
        %v7409 = vrcp.pop %v2819
        %v7410 = vmul.f32 %v2819, %v7409
        %v7411 = vsub.f32 1.0, %v7410
        %v7412 = vmul.f32 %v7409, %v7411
        %v7413 = vadd.f32 %v7409, %v7412
        %vm7414 = vweird.f32 %v2819
        %vm7415 = vweird.f32 %v7409
        %vm7416 = vmor %vm7414, %vm7415
        %v7417 = vsel %vm7416, %v7409, %v7413
        %v7418 = vand.u32 2147483647, %v2819
        %vm7419 = vcmp.eq.f32.partialorder %v7418, 8.507059e+37
        %v7420 = vand.u32 %v2819, 2147483648
        %v7421 = vor.u32 1.1754944e-38, %v7420
        %v7422 = vsel %vm7419, %v7421, %v7417
        %v7423 = vmul.f32 1.0, %v7422
        %v7424 = vrcp.pop %v2820
        %v7425 = vmul.f32 %v2820, %v7424
        %v7426 = vsub.f32 1.0, %v7425
        %v7427 = vmul.f32 %v7424, %v7426
        %v7428 = vadd.f32 %v7424, %v7427
        %vm7429 = vweird.f32 %v2820
        %vm7430 = vweird.f32 %v7424
        %vm7431 = vmor %vm7429, %vm7430
        %v7432 = vsel %vm7431, %v7424, %v7428
        %v7433 = vand.u32 2147483647, %v2820
        %vm7434 = vcmp.eq.f32.partialorder %v7433, 8.507059e+37
        %v7435 = vand.u32 %v2820, 2147483648
        %v7436 = vor.u32 1.1754944e-38, %v7435
        %v7437 = vsel %vm7434, %v7436, %v7432
        %v7438 = vmul.f32 1.0, %v7437
        %v7439 = vrcp.pop %v2821
        %v7440 = vmul.f32 %v2821, %v7439
        %v7441 = vsub.f32 1.0, %v7440
        %v7442 = vmul.f32 %v7439, %v7441
        %v7443 = vadd.f32 %v7439, %v7442
        %vm7444 = vweird.f32 %v2821
        %vm7445 = vweird.f32 %v7439
        %vm7446 = vmor %vm7444, %vm7445
        %v7447 = vsel %vm7446, %v7439, %v7443
        %v7448 = vand.u32 2147483647, %v2821
        %vm7449 = vcmp.eq.f32.partialorder %v7448, 8.507059e+37
        %v7450 = vand.u32 %v2821, 2147483648
        %v7451 = vor.u32 1.1754944e-38, %v7450
        %v7452 = vsel %vm7449, %v7451, %v7447
        %v7453 = vmul.f32 1.0, %v7452
        %v7454 = vrcp.pop %v2822
        %v7455 = vmul.f32 %v2822, %v7454
        %v7456 = vsub.f32 1.0, %v7455
        %v7457 = vmul.f32 %v7454, %v7456
        %v7458 = vadd.f32 %v7454, %v7457
        %vm7459 = vweird.f32 %v2822
        %vm7460 = vweird.f32 %v7454
        %vm7461 = vmor %vm7459, %vm7460
        %v7462 = vsel %vm7461, %v7454, %v7458
        %v7463 = vand.u32 2147483647, %v2822
        %vm7464 = vcmp.eq.f32.partialorder %v7463, 8.507059e+37
        %v7465 = vand.u32 %v2822, 2147483648
        %v7466 = vor.u32 1.1754944e-38, %v7465
        %v7467 = vsel %vm7464, %v7466, %v7462
        %v7468 = vmul.f32 1.0, %v7467
        %v7469 = vrcp.pop %v2823
        %v7470 = vmul.f32 %v2823, %v7469
        %v7471 = vsub.f32 1.0, %v7470
        %v7472 = vmul.f32 %v7469, %v7471
        %v7473 = vadd.f32 %v7469, %v7472
        %vm7474 = vweird.f32 %v2823
        %vm7475 = vweird.f32 %v7469
        %vm7476 = vmor %vm7474, %vm7475
        %v7477 = vsel %vm7476, %v7469, %v7473
        %v7478 = vand.u32 2147483647, %v2823
        %vm7479 = vcmp.eq.f32.partialorder %v7478, 8.507059e+37
        %v7480 = vand.u32 %v2823, 2147483648
        %v7481 = vor.u32 1.1754944e-38, %v7480
        %v7482 = vsel %vm7479, %v7481, %v7477
        %v7483 = vmul.f32 1.0, %v7482
        %v7484 = vrcp.pop %v2824
        %v7485 = vmul.f32 %v2824, %v7484
        %v7486 = vsub.f32 1.0, %v7485
        %v7487 = vmul.f32 %v7484, %v7486
        %v7488 = vadd.f32 %v7484, %v7487
        %vm7489 = vweird.f32 %v2824
        %vm7490 = vweird.f32 %v7484
        %vm7491 = vmor %vm7489, %vm7490
        %v7492 = vsel %vm7491, %v7484, %v7488
        %v7493 = vand.u32 2147483647, %v2824
        %vm7494 = vcmp.eq.f32.partialorder %v7493, 8.507059e+37
        %v7495 = vand.u32 %v2824, 2147483648
        %v7496 = vor.u32 1.1754944e-38, %v7495
        %v7497 = vsel %vm7494, %v7496, %v7492
        %v7498 = vmul.f32 1.0, %v7497
        %v7499 = vrcp.pop %v2825
        %v7500 = vmul.f32 %v2825, %v7499
        %v7501 = vsub.f32 1.0, %v7500
        %v7502 = vmul.f32 %v7499, %v7501
        %v7503 = vadd.f32 %v7499, %v7502
        %vm7504 = vweird.f32 %v2825
        %vm7505 = vweird.f32 %v7499
        %vm7506 = vmor %vm7504, %vm7505
        %v7507 = vsel %vm7506, %v7499, %v7503
        %v7508 = vand.u32 2147483647, %v2825
        %vm7509 = vcmp.eq.f32.partialorder %v7508, 8.507059e+37
        %v7510 = vand.u32 %v2825, 2147483648
        %v7511 = vor.u32 1.1754944e-38, %v7510
        %v7512 = vsel %vm7509, %v7511, %v7507
        %v7513 = vmul.f32 1.0, %v7512
        %v7514 = vrcp.pop %v2826
        %v7515 = vmul.f32 %v2826, %v7514
        %v7516 = vsub.f32 1.0, %v7515
        %v7517 = vmul.f32 %v7514, %v7516
        %v7518 = vadd.f32 %v7514, %v7517
        %vm7519 = vweird.f32 %v2826
        %vm7520 = vweird.f32 %v7514
        %vm7521 = vmor %vm7519, %vm7520
        %v7522 = vsel %vm7521, %v7514, %v7518
        %v7523 = vand.u32 2147483647, %v2826
        %vm7524 = vcmp.eq.f32.partialorder %v7523, 8.507059e+37
        %v7525 = vand.u32 %v2826, 2147483648
        %v7526 = vor.u32 1.1754944e-38, %v7525
        %v7527 = vsel %vm7524, %v7526, %v7522
        %v7528 = vmul.f32 1.0, %v7527
        %v7529 = vrcp.pop %v2827
        %v7530 = vmul.f32 %v2827, %v7529
        %v7531 = vsub.f32 1.0, %v7530
        %v7532 = vmul.f32 %v7529, %v7531
        %v7533 = vadd.f32 %v7529, %v7532
        %vm7534 = vweird.f32 %v2827
        %vm7535 = vweird.f32 %v7529
        %vm7536 = vmor %vm7534, %vm7535
        %v7537 = vsel %vm7536, %v7529, %v7533
        %v7538 = vand.u32 2147483647, %v2827
        %vm7539 = vcmp.eq.f32.partialorder %v7538, 8.507059e+37
        %v7540 = vand.u32 %v2827, 2147483648
        %v7541 = vor.u32 1.1754944e-38, %v7540
        %v7542 = vsel %vm7539, %v7541, %v7537
        %v7543 = vmul.f32 1.0, %v7542
        %v7544 = vrcp.pop %v2828
        %v7545 = vmul.f32 %v2828, %v7544
        %v7546 = vsub.f32 1.0, %v7545
        %v7547 = vmul.f32 %v7544, %v7546
        %v7548 = vadd.f32 %v7544, %v7547
        %vm7549 = vweird.f32 %v2828
        %vm7550 = vweird.f32 %v7544
        %vm7551 = vmor %vm7549, %vm7550
        %v7552 = vsel %vm7551, %v7544, %v7548
        %v7553 = vand.u32 2147483647, %v2828
        %vm7554 = vcmp.eq.f32.partialorder %v7553, 8.507059e+37
        %v7555 = vand.u32 %v2828, 2147483648
        %v7556 = vor.u32 1.1754944e-38, %v7555
        %v7557 = vsel %vm7554, %v7556, %v7552
        %v7558 = vmul.f32 1.0, %v7557
        %v7559 = vrcp.pop %v2829
        %v7560 = vmul.f32 %v2829, %v7559
        %v7561 = vsub.f32 1.0, %v7560
        %v7562 = vmul.f32 %v7559, %v7561
        %v7563 = vadd.f32 %v7559, %v7562
        %vm7564 = vweird.f32 %v2829
        %vm7565 = vweird.f32 %v7559
        %vm7566 = vmor %vm7564, %vm7565
        %v7567 = vsel %vm7566, %v7559, %v7563
        %v7568 = vand.u32 2147483647, %v2829
        %vm7569 = vcmp.eq.f32.partialorder %v7568, 8.507059e+37
        %v7570 = vand.u32 %v2829, 2147483648
        %v7571 = vor.u32 1.1754944e-38, %v7570
        %v7572 = vsel %vm7569, %v7571, %v7567
        %v7573 = vmul.f32 1.0, %v7572
        %v7574 = vrcp.pop %v2830
        %v7575 = vmul.f32 %v2830, %v7574
        %v7576 = vsub.f32 1.0, %v7575
        %v7577 = vmul.f32 %v7574, %v7576
        %v7578 = vadd.f32 %v7574, %v7577
        %vm7579 = vweird.f32 %v2830
        %vm7580 = vweird.f32 %v7574
        %vm7581 = vmor %vm7579, %vm7580
        %v7582 = vsel %vm7581, %v7574, %v7578
        %v7583 = vand.u32 2147483647, %v2830
        %vm7584 = vcmp.eq.f32.partialorder %v7583, 8.507059e+37
        %v7585 = vand.u32 %v2830, 2147483648
        %v7586 = vor.u32 1.1754944e-38, %v7585
        %v7587 = vsel %vm7584, %v7586, %v7582
        %v7588 = vmul.f32 1.0, %v7587
        %v7589 = vrcp.pop %v2831
        %v7590 = vmul.f32 %v2831, %v7589
        %v7591 = vsub.f32 1.0, %v7590
        %v7592 = vmul.f32 %v7589, %v7591
        %v7593 = vadd.f32 %v7589, %v7592
        %vm7594 = vweird.f32 %v2831
        %vm7595 = vweird.f32 %v7589
        %vm7596 = vmor %vm7594, %vm7595
        %v7597 = vsel %vm7596, %v7589, %v7593
        %v7598 = vand.u32 2147483647, %v2831
        %vm7599 = vcmp.eq.f32.partialorder %v7598, 8.507059e+37
        %v7600 = vand.u32 %v2831, 2147483648
        %v7601 = vor.u32 1.1754944e-38, %v7600
        %v7602 = vsel %vm7599, %v7601, %v7597
        %v7603 = vmul.f32 1.0, %v7602
        %v7604 = vrcp.pop %v2832
        %v7605 = vmul.f32 %v2832, %v7604
        %v7606 = vsub.f32 1.0, %v7605
        %v7607 = vmul.f32 %v7604, %v7606
        %v7608 = vadd.f32 %v7604, %v7607
        %vm7609 = vweird.f32 %v2832
        %vm7610 = vweird.f32 %v7604
        %vm7611 = vmor %vm7609, %vm7610
        %v7612 = vsel %vm7611, %v7604, %v7608
        %v7613 = vand.u32 2147483647, %v2832
        %vm7614 = vcmp.eq.f32.partialorder %v7613, 8.507059e+37
        %v7615 = vand.u32 %v2832, 2147483648
        %v7616 = vor.u32 1.1754944e-38, %v7615
        %v7617 = vsel %vm7614, %v7616, %v7612
        %v7618 = vmul.f32 1.0, %v7617
        %v7619 = vrcp.pop %v2833
        %v7620 = vmul.f32 %v2833, %v7619
        %v7621 = vsub.f32 1.0, %v7620
        %v7622 = vmul.f32 %v7619, %v7621
        %v7623 = vadd.f32 %v7619, %v7622
        %vm7624 = vweird.f32 %v2833
        %vm7625 = vweird.f32 %v7619
        %vm7626 = vmor %vm7624, %vm7625
        %v7627 = vsel %vm7626, %v7619, %v7623
        %v7628 = vand.u32 2147483647, %v2833
        %vm7629 = vcmp.eq.f32.partialorder %v7628, 8.507059e+37
        %v7630 = vand.u32 %v2833, 2147483648
        %v7631 = vor.u32 1.1754944e-38, %v7630
        %v7632 = vsel %vm7629, %v7631, %v7627
        %v7633 = vmul.f32 1.0, %v7632
        %v7634 = vmul.f32 %v442, %v2848
        %v7635 = vmul.f32 %v555, %v2863
        %v7636 = vmul.f32 %v668, %v2878
        %v7637 = vmul.f32 %v781, %v2893
        %v7638 = vmul.f32 %v894, %v2908
        %v7639 = vmul.f32 %v1007, %v2923
        %v7640 = vmul.f32 %v1120, %v2938
        %v7641 = vmul.f32 %v1233, %v2953
        %v7642 = vmul.f32 %v1346, %v2968
        %v7643 = vmul.f32 %v1459, %v2983
        %v7644 = vmul.f32 %v445, %v2998
        %v7645 = vmul.f32 %v558, %v3013
        %v7646 = vmul.f32 %v671, %v3028
        %v7647 = vmul.f32 %v784, %v3043
        %v7648 = vmul.f32 %v897, %v3058
        %v7649 = vmul.f32 %v1010, %v3073
        %v7650 = vmul.f32 %v1123, %v3088
        %v7651 = vmul.f32 %v1236, %v3103
        %v7652 = vmul.f32 %v1349, %v3118
        %v7653 = vmul.f32 %v1462, %v3133
        %v7654 = vmul.f32 %v448, %v3148
        %v7655 = vmul.f32 %v561, %v3163
        %v7656 = vmul.f32 %v674, %v3178
        %v7657 = vmul.f32 %v787, %v3193
        %v7658 = vmul.f32 %v900, %v3208
        %v7659 = vmul.f32 %v1013, %v3223
        %v7660 = vmul.f32 %v1126, %v3238
        %v7661 = vmul.f32 %v1239, %v3253
        %v7662 = vmul.f32 %v1352, %v3268
        %v7663 = vmul.f32 %v1465, %v3283
        %v7664 = vmul.f32 %v451, %v3298
        %v7665 = vmul.f32 %v564, %v3313
        %v7666 = vmul.f32 %v677, %v3328
        %v7667 = vmul.f32 %v790, %v3343
        %v7668 = vmul.f32 %v903, %v3358
        %v7669 = vmul.f32 %v1016, %v3373
        %v7670 = vmul.f32 %v1129, %v3388
        %v7671 = vmul.f32 %v1242, %v3403
        %v7672 = vmul.f32 %v1355, %v3418
        %v7673 = vmul.f32 %v1468, %v3433
        %v7674 = vmul.f32 %v454, %v3448
        %v7675 = vmul.f32 %v567, %v3463
        %v7676 = vmul.f32 %v680, %v3478
        %v7677 = vmul.f32 %v793, %v3493
        %v7678 = vmul.f32 %v906, %v3508
        %v7679 = vmul.f32 %v1019, %v3523
        %v7680 = vmul.f32 %v1132, %v3538
        %v7681 = vmul.f32 %v1245, %v3553
        %v7682 = vmul.f32 %v1358, %v3568
        %v7683 = vmul.f32 %v1471, %v3583
        %v7684 = vmul.f32 %v457, %v3598
        %v7685 = vmul.f32 %v570, %v3613
        %v7686 = vmul.f32 %v683, %v3628
        %v7687 = vmul.f32 %v796, %v3643
        %v7688 = vmul.f32 %v909, %v3658
        %v7689 = vmul.f32 %v1022, %v3673
        %v7690 = vmul.f32 %v1135, %v3688
        %v7691 = vmul.f32 %v1248, %v3703
        %v7692 = vmul.f32 %v1361, %v3718
        %v7693 = vmul.f32 %v1474, %v3733
        %v7694 = vmul.f32 %v460, %v3748
        %v7695 = vmul.f32 %v573, %v3763
        %v7696 = vmul.f32 %v686, %v3778
        %v7697 = vmul.f32 %v799, %v3793
        %v7698 = vmul.f32 %v912, %v3808
        %v7699 = vmul.f32 %v1025, %v3823
        %v7700 = vmul.f32 %v1138, %v3838
        %v7701 = vmul.f32 %v1251, %v3853
        %v7702 = vmul.f32 %v1364, %v3868
        %v7703 = vmul.f32 %v1477, %v3883
        %v7704 = vmul.f32 %v463, %v3898
        %v7705 = vmul.f32 %v576, %v3913
        %v7706 = vmul.f32 %v689, %v3928
        %v7707 = vmul.f32 %v802, %v3943
        %v7708 = vmul.f32 %v915, %v3958
        %v7709 = vmul.f32 %v1028, %v3973
        %v7710 = vmul.f32 %v1141, %v3988
        %v7711 = vmul.f32 %v1254, %v4003
        %v7712 = vmul.f32 %v1367, %v4018
        %v7713 = vmul.f32 %v1480, %v4033
        %v7714 = vmul.f32 %v466, %v4048
        %v7715 = vmul.f32 %v579, %v4063
        %v7716 = vmul.f32 %v692, %v4078
        %v7717 = vmul.f32 %v805, %v4093
        %v7718 = vmul.f32 %v918, %v4108
        %v7719 = vmul.f32 %v1031, %v4123
        %v7720 = vmul.f32 %v1144, %v4138
        %v7721 = vmul.f32 %v1257, %v4153
        %v7722 = vmul.f32 %v1370, %v4168
        %v7723 = vmul.f32 %v1483, %v4183
        %v7724 = vmul.f32 %v469, %v4198
        %v7725 = vmul.f32 %v582, %v4213
        %v7726 = vmul.f32 %v695, %v4228
        %v7727 = vmul.f32 %v808, %v4243
        %v7728 = vmul.f32 %v921, %v4258
        %v7729 = vmul.f32 %v1034, %v4273
        %v7730 = vmul.f32 %v1147, %v4288
        %v7731 = vmul.f32 %v1260, %v4303
        %v7732 = vmul.f32 %v1373, %v4318
        %v7733 = vmul.f32 %v1486, %v4333
        %v7734 = vmul.f32 %v472, %v4348
        %v7735 = vmul.f32 %v585, %v4363
        %v7736 = vmul.f32 %v698, %v4378
        %v7737 = vmul.f32 %v811, %v4393
        %v7738 = vmul.f32 %v924, %v4408
        %v7739 = vmul.f32 %v1037, %v4423
        %v7740 = vmul.f32 %v1150, %v4438
        %v7741 = vmul.f32 %v1263, %v4453
        %v7742 = vmul.f32 %v1376, %v4468
        %v7743 = vmul.f32 %v1489, %v4483
        %v7744 = vmul.f32 %v475, %v4498
        %v7745 = vmul.f32 %v588, %v4513
        %v7746 = vmul.f32 %v701, %v4528
        %v7747 = vmul.f32 %v814, %v4543
        %v7748 = vmul.f32 %v927, %v4558
        %v7749 = vmul.f32 %v1040, %v4573
        %v7750 = vmul.f32 %v1153, %v4588
        %v7751 = vmul.f32 %v1266, %v4603
        %v7752 = vmul.f32 %v1379, %v4618
        %v7753 = vmul.f32 %v1492, %v4633
        %v7754 = vmul.f32 %v478, %v4648
        %v7755 = vmul.f32 %v591, %v4663
        %v7756 = vmul.f32 %v704, %v4678
        %v7757 = vmul.f32 %v817, %v4693
        %v7758 = vmul.f32 %v930, %v4708
        %v7759 = vmul.f32 %v1043, %v4723
        %v7760 = vmul.f32 %v1156, %v4738
        %v7761 = vmul.f32 %v1269, %v4753
        %v7762 = vmul.f32 %v1382, %v4768
        %v7763 = vmul.f32 %v1495, %v4783
        %v7764 = vmul.f32 %v481, %v4798
        %v7765 = vmul.f32 %v594, %v4813
        %v7766 = vmul.f32 %v707, %v4828
        %v7767 = vmul.f32 %v820, %v4843
        %v7768 = vmul.f32 %v933, %v4858
        %v7769 = vmul.f32 %v1046, %v4873
        %v7770 = vmul.f32 %v1159, %v4888
        %v7771 = vmul.f32 %v1272, %v4903
        %v7772 = vmul.f32 %v1385, %v4918
        %v7773 = vmul.f32 %v1498, %v4933
        %v7774 = vmul.f32 %v484, %v4948
        %v7775 = vmul.f32 %v597, %v4963
        %v7776 = vmul.f32 %v710, %v4978
        %v7777 = vmul.f32 %v823, %v4993
        %v7778 = vmul.f32 %v936, %v5008
        %v7779 = vmul.f32 %v1049, %v5023
        %v7780 = vmul.f32 %v1162, %v5038
        %v7781 = vmul.f32 %v1275, %v5053
        %v7782 = vmul.f32 %v1388, %v5068
        %v7783 = vmul.f32 %v1501, %v5083
        %v7784 = vmul.f32 %v487, %v5098
        %v7785 = vmul.f32 %v600, %v5113
        %v7786 = vmul.f32 %v713, %v5128
        %v7787 = vmul.f32 %v826, %v5143
        %v7788 = vmul.f32 %v939, %v5158
        %v7789 = vmul.f32 %v1052, %v5173
        %v7790 = vmul.f32 %v1165, %v5188
        %v7791 = vmul.f32 %v1278, %v5203
        %v7792 = vmul.f32 %v1391, %v5218
        %v7793 = vmul.f32 %v1504, %v5233
        %v7794 = vmul.f32 %v490, %v5248
        %v7795 = vmul.f32 %v603, %v5263
        %v7796 = vmul.f32 %v716, %v5278
        %v7797 = vmul.f32 %v829, %v5293
        %v7798 = vmul.f32 %v942, %v5308
        %v7799 = vmul.f32 %v1055, %v5323
        %v7800 = vmul.f32 %v1168, %v5338
        %v7801 = vmul.f32 %v1281, %v5353
        %v7802 = vmul.f32 %v1394, %v5368
        %v7803 = vmul.f32 %v1507, %v5383
        %v7804 = vmul.f32 %v493, %v5398
        %v7805 = vmul.f32 %v606, %v5413
        %v7806 = vmul.f32 %v719, %v5428
        %v7807 = vmul.f32 %v832, %v5443
        %v7808 = vmul.f32 %v945, %v5458
        %v7809 = vmul.f32 %v1058, %v5473
        %v7810 = vmul.f32 %v1171, %v5488
        %v7811 = vmul.f32 %v1284, %v5503
        %v7812 = vmul.f32 %v1397, %v5518
        %v7813 = vmul.f32 %v1510, %v5533
        %v7814 = vmul.f32 %v496, %v5548
        %v7815 = vmul.f32 %v609, %v5563
        %v7816 = vmul.f32 %v722, %v5578
        %v7817 = vmul.f32 %v835, %v5593
        %v7818 = vmul.f32 %v948, %v5608
        %v7819 = vmul.f32 %v1061, %v5623
        %v7820 = vmul.f32 %v1174, %v5638
        %v7821 = vmul.f32 %v1287, %v5653
        %v7822 = vmul.f32 %v1400, %v5668
        %v7823 = vmul.f32 %v1513, %v5683
        %v7824 = vmul.f32 %v499, %v5698
        %v7825 = vmul.f32 %v612, %v5713
        %v7826 = vmul.f32 %v725, %v5728
        %v7827 = vmul.f32 %v838, %v5743
        %v7828 = vmul.f32 %v951, %v5758
        %v7829 = vmul.f32 %v1064, %v5773
        %v7830 = vmul.f32 %v1177, %v5788
        %v7831 = vmul.f32 %v1290, %v5803
        %v7832 = vmul.f32 %v1403, %v5818
        %v7833 = vmul.f32 %v1516, %v5833
        %v7834 = vmul.f32 %v502, %v5848
        %v7835 = vmul.f32 %v615, %v5863
        %v7836 = vmul.f32 %v728, %v5878
        %v7837 = vmul.f32 %v841, %v5893
        %v7838 = vmul.f32 %v954, %v5908
        %v7839 = vmul.f32 %v1067, %v5923
        %v7840 = vmul.f32 %v1180, %v5938
        %v7841 = vmul.f32 %v1293, %v5953
        %v7842 = vmul.f32 %v1406, %v5968
        %v7843 = vmul.f32 %v1519, %v5983
        %v7844 = vmul.f32 %v505, %v5998
        %v7845 = vmul.f32 %v618, %v6013
        %v7846 = vmul.f32 %v731, %v6028
        %v7847 = vmul.f32 %v844, %v6043
        %v7848 = vmul.f32 %v957, %v6058
        %v7849 = vmul.f32 %v1070, %v6073
        %v7850 = vmul.f32 %v1183, %v6088
        %v7851 = vmul.f32 %v1296, %v6103
        %v7852 = vmul.f32 %v1409, %v6118
        %v7853 = vmul.f32 %v1522, %v6133
        %v7854 = vmul.f32 %v508, %v6148
        %v7855 = vmul.f32 %v621, %v6163
        %v7856 = vmul.f32 %v734, %v6178
        %v7857 = vmul.f32 %v847, %v6193
        %v7858 = vmul.f32 %v960, %v6208
        %v7859 = vmul.f32 %v1073, %v6223
        %v7860 = vmul.f32 %v1186, %v6238
        %v7861 = vmul.f32 %v1299, %v6253
        %v7862 = vmul.f32 %v1412, %v6268
        %v7863 = vmul.f32 %v1525, %v6283
        %v7864 = vmul.f32 %v511, %v6298
        %v7865 = vmul.f32 %v624, %v6313
        %v7866 = vmul.f32 %v737, %v6328
        %v7867 = vmul.f32 %v850, %v6343
        %v7868 = vmul.f32 %v963, %v6358
        %v7869 = vmul.f32 %v1076, %v6373
        %v7870 = vmul.f32 %v1189, %v6388
        %v7871 = vmul.f32 %v1302, %v6403
        %v7872 = vmul.f32 %v1415, %v6418
        %v7873 = vmul.f32 %v1528, %v6433
        %v7874 = vmul.f32 %v514, %v6448
        %v7875 = vmul.f32 %v627, %v6463
        %v7876 = vmul.f32 %v740, %v6478
        %v7877 = vmul.f32 %v853, %v6493
        %v7878 = vmul.f32 %v966, %v6508
        %v7879 = vmul.f32 %v1079, %v6523
        %v7880 = vmul.f32 %v1192, %v6538
        %v7881 = vmul.f32 %v1305, %v6553
        %v7882 = vmul.f32 %v1418, %v6568
        %v7883 = vmul.f32 %v1531, %v6583
        %v7884 = vmul.f32 %v517, %v6598
        %v7885 = vmul.f32 %v630, %v6613
        %v7886 = vmul.f32 %v743, %v6628
        %v7887 = vmul.f32 %v856, %v6643
        %v7888 = vmul.f32 %v969, %v6658
        %v7889 = vmul.f32 %v1082, %v6673
        %v7890 = vmul.f32 %v1195, %v6688
        %v7891 = vmul.f32 %v1308, %v6703
        %v7892 = vmul.f32 %v1421, %v6718
        %v7893 = vmul.f32 %v1534, %v6733
        %v7894 = vmul.f32 %v520, %v6748
        %v7895 = vmul.f32 %v633, %v6763
        %v7896 = vmul.f32 %v746, %v6778
        %v7897 = vmul.f32 %v859, %v6793
        %v7898 = vmul.f32 %v972, %v6808
        %v7899 = vmul.f32 %v1085, %v6823
        %v7900 = vmul.f32 %v1198, %v6838
        %v7901 = vmul.f32 %v1311, %v6853
        %v7902 = vmul.f32 %v1424, %v6868
        %v7903 = vmul.f32 %v1537, %v6883
        %v7904 = vmul.f32 %v523, %v6898
        %v7905 = vmul.f32 %v636, %v6913
        %v7906 = vmul.f32 %v749, %v6928
        %v7907 = vmul.f32 %v862, %v6943
        %v7908 = vmul.f32 %v975, %v6958
        %v7909 = vmul.f32 %v1088, %v6973
        %v7910 = vmul.f32 %v1201, %v6988
        %v7911 = vmul.f32 %v1314, %v7003
        %v7912 = vmul.f32 %v1427, %v7018
        %v7913 = vmul.f32 %v1540, %v7033
        %v7914 = vmul.f32 %v526, %v7048
        %v7915 = vmul.f32 %v639, %v7063
        %v7916 = vmul.f32 %v752, %v7078
        %v7917 = vmul.f32 %v865, %v7093
        %v7918 = vmul.f32 %v978, %v7108
        %v7919 = vmul.f32 %v1091, %v7123
        %v7920 = vmul.f32 %v1204, %v7138
        %v7921 = vmul.f32 %v1317, %v7153
        %v7922 = vmul.f32 %v1430, %v7168
        %v7923 = vmul.f32 %v1543, %v7183
        %v7924 = vmul.f32 %v529, %v7198
        %v7925 = vmul.f32 %v642, %v7213
        %v7926 = vmul.f32 %v755, %v7228
        %v7927 = vmul.f32 %v868, %v7243
        %v7928 = vmul.f32 %v981, %v7258
        %v7929 = vmul.f32 %v1094, %v7273
        %v7930 = vmul.f32 %v1207, %v7288
        %v7931 = vmul.f32 %v1320, %v7303
        %v7932 = vmul.f32 %v1433, %v7318
        %v7933 = vmul.f32 %v1546, %v7333
        %v7934 = vmul.f32 %v532, %v7348
        %v7935 = vmul.f32 %v645, %v7363
        %v7936 = vmul.f32 %v758, %v7378
        %v7937 = vmul.f32 %v871, %v7393
        %v7938 = vmul.f32 %v984, %v7408
        %v7939 = vmul.f32 %v1097, %v7423
        %v7940 = vmul.f32 %v1210, %v7438
        %v7941 = vmul.f32 %v1323, %v7453
        %v7942 = vmul.f32 %v1436, %v7468
        %v7943 = vmul.f32 %v1549, %v7483
        %v7944 = vmul.f32 %v535, %v7498
        %v7945 = vmul.f32 %v648, %v7513
        %v7946 = vmul.f32 %v761, %v7528
        %v7947 = vmul.f32 %v874, %v7543
        %v7948 = vmul.f32 %v987, %v7558
        %v7949 = vmul.f32 %v1100, %v7573
        %v7950 = vmul.f32 %v1213, %v7588
        %v7951 = vmul.f32 %v1326, %v7603
        %v7952 = vmul.f32 %v1439, %v7618
        %v7953 = vmul.f32 %v1552, %v7633
        %7954 = vmatpush.msra.mxu0 %v7784
        %7955 = vmatpush.msra.mxu0 %v7774
        %7956 = vmatpush.msra.mxu0 %v7764
        %7957 = vmatpush.msra.mxu0 %v7754
        %7958 = vmatpush.msra.mxu0 %v7744
        %7959 = vmatpush.msra.mxu0 %v7734
        %7960 = vmatpush.msra.mxu0 %v7724
        %7961 = vmatpush.msra.mxu0 %v7714
        %7962 = vmatpush.msra.mxu0 %v7704
        %7963 = vmatpush.msra.mxu0 %v7694
        %7964 = vmatpush.msra.mxu0 %v7684
        %7965 = vmatpush.msra.mxu0 %v7674
        %7966 = vmatpush.msra.mxu0 %v7664
        %7967 = vmatpush.msra.mxu0 %v7654
        %7968 = vmatpush.msra.mxu0 %v7644
        %7969 = vmatpush.msra.mxu0 %v7634
        %7970 = vmatmul.f32.gmra.mxu0 0.00390625
        %v7971 = vpop.f32.mrf.mxu0
        %v7972 = vadd.f32 0.0, %v7971
        %7973 = vdwg.mxu0
        %7974 = vmatpush.msra.mxu0 %v7944
        %7975 = vmatpush.msra.mxu0 %v7934
        %7976 = vmatpush.msra.mxu0 %v7924
        %7977 = vmatpush.msra.mxu0 %v7914
        %7978 = vmatpush.msra.mxu0 %v7904
        %7979 = vmatpush.msra.mxu0 %v7894
        %7980 = vmatpush.msra.mxu0 %v7884
        %7981 = vmatpush.msra.mxu0 %v7874
        %7982 = vmatpush.msra.mxu0 %v7864
        %7983 = vmatpush.msra.mxu0 %v7854
        %7984 = vmatpush.msra.mxu0 %v7844
        %7985 = vmatpush.msra.mxu0 %v7834
        %7986 = vmatpush.msra.mxu0 %v7824
        %7987 = vmatpush.msra.mxu0 %v7814
        %7988 = vmatpush.msra.mxu0 %v7804
        %7989 = vmatpush.msra.mxu0 %v7794
        %7990 = vmatmul.f32.gmra.mxu0 0.00390625
        %v7991 = vpop.f32.mrf.mxu0
        %v7992 = vadd.f32 %v7972, %v7991
        %7993 = vdwg.mxu0
        %7994 = vmatpush.msra.mxu0 %v7785
        %7995 = vmatpush.msra.mxu0 %v7775
        %7996 = vmatpush.msra.mxu0 %v7765
        %7997 = vmatpush.msra.mxu0 %v7755
        %7998 = vmatpush.msra.mxu0 %v7745
        %7999 = vmatpush.msra.mxu0 %v7735
        %8000 = vmatpush.msra.mxu0 %v7725
        %8001 = vmatpush.msra.mxu0 %v7715
        %8002 = vmatpush.msra.mxu0 %v7705
        %8003 = vmatpush.msra.mxu0 %v7695
        %8004 = vmatpush.msra.mxu0 %v7685
        %8005 = vmatpush.msra.mxu0 %v7675
        %8006 = vmatpush.msra.mxu0 %v7665
        %8007 = vmatpush.msra.mxu0 %v7655
        %8008 = vmatpush.msra.mxu0 %v7645
        %8009 = vmatpush.msra.mxu0 %v7635
        %8010 = vmatmul.f32.gmra.mxu0 0.00390625
        %v8011 = vpop.f32.mrf.mxu0
        %v8012 = vadd.f32 0.0, %v8011
        %8013 = vdwg.mxu0
        %8014 = vmatpush.msra.mxu0 %v7945
        %8015 = vmatpush.msra.mxu0 %v7935
        %8016 = vmatpush.msra.mxu0 %v7925
        %8017 = vmatpush.msra.mxu0 %v7915
        %8018 = vmatpush.msra.mxu0 %v7905
        %8019 = vmatpush.msra.mxu0 %v7895
        %8020 = vmatpush.msra.mxu0 %v7885
        %8021 = vmatpush.msra.mxu0 %v7875
        %8022 = vmatpush.msra.mxu0 %v7865
        %8023 = vmatpush.msra.mxu0 %v7855
        %8024 = vmatpush.msra.mxu0 %v7845
        %8025 = vmatpush.msra.mxu0 %v7835
        %8026 = vmatpush.msra.mxu0 %v7825
        %8027 = vmatpush.msra.mxu0 %v7815
        %8028 = vmatpush.msra.mxu0 %v7805
        %8029 = vmatpush.msra.mxu0 %v7795
        %8030 = vmatmul.f32.gmra.mxu0 0.00390625
        %v8031 = vpop.f32.mrf.mxu0
        %v8032 = vadd.f32 %v8012, %v8031
        %8033 = vdwg.mxu0
        %8034 = vmatpush.msra.mxu0 %v7786
        %8035 = vmatpush.msra.mxu0 %v7776
        %8036 = vmatpush.msra.mxu0 %v7766
        %8037 = vmatpush.msra.mxu0 %v7756
        %8038 = vmatpush.msra.mxu0 %v7746
        %8039 = vmatpush.msra.mxu0 %v7736
        %8040 = vmatpush.msra.mxu0 %v7726
        %8041 = vmatpush.msra.mxu0 %v7716
        %8042 = vmatpush.msra.mxu0 %v7706
        %8043 = vmatpush.msra.mxu0 %v7696
        %8044 = vmatpush.msra.mxu0 %v7686
        %8045 = vmatpush.msra.mxu0 %v7676
        %8046 = vmatpush.msra.mxu0 %v7666
        %8047 = vmatpush.msra.mxu0 %v7656
        %8048 = vmatpush.msra.mxu0 %v7646
        %8049 = vmatpush.msra.mxu0 %v7636
        %8050 = vmatmul.f32.gmra.mxu0 0.00390625
        %v8051 = vpop.f32.mrf.mxu0
        %v8052 = vadd.f32 0.0, %v8051
        %8053 = vdwg.mxu0
        %8054 = vmatpush.msra.mxu0 %v7946
        %8055 = vmatpush.msra.mxu0 %v7936
        %8056 = vmatpush.msra.mxu0 %v7926
        %8057 = vmatpush.msra.mxu0 %v7916
        %8058 = vmatpush.msra.mxu0 %v7906
        %8059 = vmatpush.msra.mxu0 %v7896
        %8060 = vmatpush.msra.mxu0 %v7886
        %8061 = vmatpush.msra.mxu0 %v7876
        %8062 = vmatpush.msra.mxu0 %v7866
        %8063 = vmatpush.msra.mxu0 %v7856
        %8064 = vmatpush.msra.mxu0 %v7846
        %8065 = vmatpush.msra.mxu0 %v7836
        %8066 = vmatpush.msra.mxu0 %v7826
        %8067 = vmatpush.msra.mxu0 %v7816
        %8068 = vmatpush.msra.mxu0 %v7806
        %8069 = vmatpush.msra.mxu0 %v7796
        %8070 = vmatmul.f32.gmra.mxu0 0.00390625
        %v8071 = vpop.f32.mrf.mxu0
        %v8072 = vadd.f32 %v8052, %v8071
        %8073 = vdwg.mxu0
        %8074 = vmatpush.msra.mxu0 %v7787
        %8075 = vmatpush.msra.mxu0 %v7777
        %8076 = vmatpush.msra.mxu0 %v7767
        %8077 = vmatpush.msra.mxu0 %v7757
        %8078 = vmatpush.msra.mxu0 %v7747
        %8079 = vmatpush.msra.mxu0 %v7737
        %8080 = vmatpush.msra.mxu0 %v7727
        %8081 = vmatpush.msra.mxu0 %v7717
        %8082 = vmatpush.msra.mxu0 %v7707
        %8083 = vmatpush.msra.mxu0 %v7697
        %8084 = vmatpush.msra.mxu0 %v7687
        %8085 = vmatpush.msra.mxu0 %v7677
        %8086 = vmatpush.msra.mxu0 %v7667
        %8087 = vmatpush.msra.mxu0 %v7657
        %8088 = vmatpush.msra.mxu0 %v7647
        %8089 = vmatpush.msra.mxu0 %v7637
        %8090 = vmatmul.f32.gmra.mxu0 0.00390625
        %v8091 = vpop.f32.mrf.mxu0
        %v8092 = vadd.f32 0.0, %v8091
        %8093 = vdwg.mxu0
        %8094 = vmatpush.msra.mxu0 %v7947
        %8095 = vmatpush.msra.mxu0 %v7937
        %8096 = vmatpush.msra.mxu0 %v7927
        %8097 = vmatpush.msra.mxu0 %v7917
        %8098 = vmatpush.msra.mxu0 %v7907
        %8099 = vmatpush.msra.mxu0 %v7897
        %8100 = vmatpush.msra.mxu0 %v7887
        %8101 = vmatpush.msra.mxu0 %v7877
        %8102 = vmatpush.msra.mxu0 %v7867
        %8103 = vmatpush.msra.mxu0 %v7857
        %8104 = vmatpush.msra.mxu0 %v7847
        %8105 = vmatpush.msra.mxu0 %v7837
        %8106 = vmatpush.msra.mxu0 %v7827
        %8107 = vmatpush.msra.mxu0 %v7817
        %8108 = vmatpush.msra.mxu0 %v7807
        %8109 = vmatpush.msra.mxu0 %v7797
        %8110 = vmatmul.f32.gmra.mxu0 0.00390625
        %v8111 = vpop.f32.mrf.mxu0
        %v8112 = vadd.f32 %v8092, %v8111
        %8113 = vdwg.mxu0
        %8114 = vmatpush.msra.mxu0 %v7788
        %8115 = vmatpush.msra.mxu0 %v7778
        %8116 = vmatpush.msra.mxu0 %v7768
        %8117 = vmatpush.msra.mxu0 %v7758
        %8118 = vmatpush.msra.mxu0 %v7748
        %8119 = vmatpush.msra.mxu0 %v7738
        %8120 = vmatpush.msra.mxu0 %v7728
        %8121 = vmatpush.msra.mxu0 %v7718
        %8122 = vmatpush.msra.mxu0 %v7708
        %8123 = vmatpush.msra.mxu0 %v7698
        %8124 = vmatpush.msra.mxu0 %v7688
        %8125 = vmatpush.msra.mxu0 %v7678
        %8126 = vmatpush.msra.mxu0 %v7668
        %8127 = vmatpush.msra.mxu0 %v7658
        %8128 = vmatpush.msra.mxu0 %v7648
        %8129 = vmatpush.msra.mxu0 %v7638
        %8130 = vmatmul.f32.gmra.mxu0 0.00390625
        %v8131 = vpop.f32.mrf.mxu0
        %v8132 = vadd.f32 0.0, %v8131
        %8133 = vdwg.mxu0
        %8134 = vmatpush.msra.mxu0 %v7948
        %8135 = vmatpush.msra.mxu0 %v7938
        %8136 = vmatpush.msra.mxu0 %v7928
        %8137 = vmatpush.msra.mxu0 %v7918
        %8138 = vmatpush.msra.mxu0 %v7908
        %8139 = vmatpush.msra.mxu0 %v7898
        %8140 = vmatpush.msra.mxu0 %v7888
        %8141 = vmatpush.msra.mxu0 %v7878
        %8142 = vmatpush.msra.mxu0 %v7868
        %8143 = vmatpush.msra.mxu0 %v7858
        %8144 = vmatpush.msra.mxu0 %v7848
        %8145 = vmatpush.msra.mxu0 %v7838
        %8146 = vmatpush.msra.mxu0 %v7828
        %8147 = vmatpush.msra.mxu0 %v7818
        %8148 = vmatpush.msra.mxu0 %v7808
        %8149 = vmatpush.msra.mxu0 %v7798
        %8150 = vmatmul.f32.gmra.mxu0 0.00390625
        %v8151 = vpop.f32.mrf.mxu0
        %v8152 = vadd.f32 %v8132, %v8151
        %8153 = vdwg.mxu0
        %8154 = vmatpush.msra.mxu0 %v7789
        %8155 = vmatpush.msra.mxu0 %v7779
        %8156 = vmatpush.msra.mxu0 %v7769
        %8157 = vmatpush.msra.mxu0 %v7759
        %8158 = vmatpush.msra.mxu0 %v7749
        %8159 = vmatpush.msra.mxu0 %v7739
        %8160 = vmatpush.msra.mxu0 %v7729
        %8161 = vmatpush.msra.mxu0 %v7719
        %8162 = vmatpush.msra.mxu0 %v7709
        %8163 = vmatpush.msra.mxu0 %v7699
        %8164 = vmatpush.msra.mxu0 %v7689
        %8165 = vmatpush.msra.mxu0 %v7679
        %8166 = vmatpush.msra.mxu0 %v7669
        %8167 = vmatpush.msra.mxu0 %v7659
        %8168 = vmatpush.msra.mxu0 %v7649
        %8169 = vmatpush.msra.mxu0 %v7639
        %8170 = vmatmul.f32.gmra.mxu0 0.00390625
        %v8171 = vpop.f32.mrf.mxu0
        %v8172 = vadd.f32 0.0, %v8171
        %8173 = vdwg.mxu0
        %8174 = vmatpush.msra.mxu0 %v7949
        %8175 = vmatpush.msra.mxu0 %v7939
        %8176 = vmatpush.msra.mxu0 %v7929
        %8177 = vmatpush.msra.mxu0 %v7919
        %8178 = vmatpush.msra.mxu0 %v7909
        %8179 = vmatpush.msra.mxu0 %v7899
        %8180 = vmatpush.msra.mxu0 %v7889
        %8181 = vmatpush.msra.mxu0 %v7879
        %8182 = vmatpush.msra.mxu0 %v7869
        %8183 = vmatpush.msra.mxu0 %v7859
        %8184 = vmatpush.msra.mxu0 %v7849
        %8185 = vmatpush.msra.mxu0 %v7839
        %8186 = vmatpush.msra.mxu0 %v7829
        %8187 = vmatpush.msra.mxu0 %v7819
        %8188 = vmatpush.msra.mxu0 %v7809
        %8189 = vmatpush.msra.mxu0 %v7799
        %8190 = vmatmul.f32.gmra.mxu0 0.00390625
        %v8191 = vpop.f32.mrf.mxu0
        %v8192 = vadd.f32 %v8172, %v8191
        %8193 = vdwg.mxu0
        %8194 = vmatpush.msra.mxu0 %v7790
        %8195 = vmatpush.msra.mxu0 %v7780
        %8196 = vmatpush.msra.mxu0 %v7770
        %8197 = vmatpush.msra.mxu0 %v7760
        %8198 = vmatpush.msra.mxu0 %v7750
        %8199 = vmatpush.msra.mxu0 %v7740
        %8200 = vmatpush.msra.mxu0 %v7730
        %8201 = vmatpush.msra.mxu0 %v7720
        %8202 = vmatpush.msra.mxu0 %v7710
        %8203 = vmatpush.msra.mxu0 %v7700
        %8204 = vmatpush.msra.mxu0 %v7690
        %8205 = vmatpush.msra.mxu0 %v7680
        %8206 = vmatpush.msra.mxu0 %v7670
        %8207 = vmatpush.msra.mxu0 %v7660
        %8208 = vmatpush.msra.mxu0 %v7650
        %8209 = vmatpush.msra.mxu0 %v7640
        %8210 = vmatmul.f32.gmra.mxu0 0.00390625
        %v8211 = vpop.f32.mrf.mxu0
        %v8212 = vadd.f32 0.0, %v8211
        %8213 = vdwg.mxu0
        %8214 = vmatpush.msra.mxu0 %v7950
        %8215 = vmatpush.msra.mxu0 %v7940
        %8216 = vmatpush.msra.mxu0 %v7930
        %8217 = vmatpush.msra.mxu0 %v7920
        %8218 = vmatpush.msra.mxu0 %v7910
        %8219 = vmatpush.msra.mxu0 %v7900
        %8220 = vmatpush.msra.mxu0 %v7890
        %8221 = vmatpush.msra.mxu0 %v7880
        %8222 = vmatpush.msra.mxu0 %v7870
        %8223 = vmatpush.msra.mxu0 %v7860
        %8224 = vmatpush.msra.mxu0 %v7850
        %8225 = vmatpush.msra.mxu0 %v7840
        %8226 = vmatpush.msra.mxu0 %v7830
        %8227 = vmatpush.msra.mxu0 %v7820
        %8228 = vmatpush.msra.mxu0 %v7810
        %8229 = vmatpush.msra.mxu0 %v7800
        %8230 = vmatmul.f32.gmra.mxu0 0.00390625
        %v8231 = vpop.f32.mrf.mxu0
        %v8232 = vadd.f32 %v8212, %v8231
        %8233 = vdwg.mxu0
        %8234 = vmatpush.msra.mxu0 %v7791
        %8235 = vmatpush.msra.mxu0 %v7781
        %8236 = vmatpush.msra.mxu0 %v7771
        %8237 = vmatpush.msra.mxu0 %v7761
        %8238 = vmatpush.msra.mxu0 %v7751
        %8239 = vmatpush.msra.mxu0 %v7741
        %8240 = vmatpush.msra.mxu0 %v7731
        %8241 = vmatpush.msra.mxu0 %v7721
        %8242 = vmatpush.msra.mxu0 %v7711
        %8243 = vmatpush.msra.mxu0 %v7701
        %8244 = vmatpush.msra.mxu0 %v7691
        %8245 = vmatpush.msra.mxu0 %v7681
        %8246 = vmatpush.msra.mxu0 %v7671
        %8247 = vmatpush.msra.mxu0 %v7661
        %8248 = vmatpush.msra.mxu0 %v7651
        %8249 = vmatpush.msra.mxu0 %v7641
        %8250 = vmatmul.f32.gmra.mxu0 0.00390625
        %v8251 = vpop.f32.mrf.mxu0
        %v8252 = vadd.f32 0.0, %v8251
        %8253 = vdwg.mxu0
        %8254 = vmatpush.msra.mxu0 %v7951
        %8255 = vmatpush.msra.mxu0 %v7941
        %8256 = vmatpush.msra.mxu0 %v7931
        %8257 = vmatpush.msra.mxu0 %v7921
        %8258 = vmatpush.msra.mxu0 %v7911
        %8259 = vmatpush.msra.mxu0 %v7901
        %8260 = vmatpush.msra.mxu0 %v7891
        %8261 = vmatpush.msra.mxu0 %v7881
        %8262 = vmatpush.msra.mxu0 %v7871
        %8263 = vmatpush.msra.mxu0 %v7861
        %8264 = vmatpush.msra.mxu0 %v7851
        %8265 = vmatpush.msra.mxu0 %v7841
        %8266 = vmatpush.msra.mxu0 %v7831
        %8267 = vmatpush.msra.mxu0 %v7821
        %8268 = vmatpush.msra.mxu0 %v7811
        %8269 = vmatpush.msra.mxu0 %v7801
        %8270 = vmatmul.f32.gmra.mxu0 0.00390625
        %v8271 = vpop.f32.mrf.mxu0
        %v8272 = vadd.f32 %v8252, %v8271
        %8273 = vdwg.mxu0
        %8274 = vmatpush.msra.mxu0 %v7792
        %8275 = vmatpush.msra.mxu0 %v7782
        %8276 = vmatpush.msra.mxu0 %v7772
        %8277 = vmatpush.msra.mxu0 %v7762
        %8278 = vmatpush.msra.mxu0 %v7752
        %8279 = vmatpush.msra.mxu0 %v7742
        %8280 = vmatpush.msra.mxu0 %v7732
        %8281 = vmatpush.msra.mxu0 %v7722
        %8282 = vmatpush.msra.mxu0 %v7712
        %8283 = vmatpush.msra.mxu0 %v7702
        %8284 = vmatpush.msra.mxu0 %v7692
        %8285 = vmatpush.msra.mxu0 %v7682
        %8286 = vmatpush.msra.mxu0 %v7672
        %8287 = vmatpush.msra.mxu0 %v7662
        %8288 = vmatpush.msra.mxu0 %v7652
        %8289 = vmatpush.msra.mxu0 %v7642
        %8290 = vmatmul.f32.gmra.mxu0 0.00390625
        %v8291 = vpop.f32.mrf.mxu0
        %v8292 = vadd.f32 0.0, %v8291
        %8293 = vdwg.mxu0
        %8294 = vmatpush.msra.mxu0 %v7952
        %8295 = vmatpush.msra.mxu0 %v7942
        %8296 = vmatpush.msra.mxu0 %v7932
        %8297 = vmatpush.msra.mxu0 %v7922
        %8298 = vmatpush.msra.mxu0 %v7912
        %8299 = vmatpush.msra.mxu0 %v7902
        %8300 = vmatpush.msra.mxu0 %v7892
        %8301 = vmatpush.msra.mxu0 %v7882
        %8302 = vmatpush.msra.mxu0 %v7872
        %8303 = vmatpush.msra.mxu0 %v7862
        %8304 = vmatpush.msra.mxu0 %v7852
        %8305 = vmatpush.msra.mxu0 %v7842
        %8306 = vmatpush.msra.mxu0 %v7832
        %8307 = vmatpush.msra.mxu0 %v7822
        %8308 = vmatpush.msra.mxu0 %v7812
        %8309 = vmatpush.msra.mxu0 %v7802
        %8310 = vmatmul.f32.gmra.mxu0 0.00390625
        %v8311 = vpop.f32.mrf.mxu0
        %v8312 = vadd.f32 %v8292, %v8311
        %8313 = vdwg.mxu0
        %8314 = vmatpush.msra.mxu0 %v7793
        %8315 = vmatpush.msra.mxu0 %v7783
        %8316 = vmatpush.msra.mxu0 %v7773
        %8317 = vmatpush.msra.mxu0 %v7763
        %8318 = vmatpush.msra.mxu0 %v7753
        %8319 = vmatpush.msra.mxu0 %v7743
        %8320 = vmatpush.msra.mxu0 %v7733
        %8321 = vmatpush.msra.mxu0 %v7723
        %8322 = vmatpush.msra.mxu0 %v7713
        %8323 = vmatpush.msra.mxu0 %v7703
        %8324 = vmatpush.msra.mxu0 %v7693
        %8325 = vmatpush.msra.mxu0 %v7683
        %8326 = vmatpush.msra.mxu0 %v7673
        %8327 = vmatpush.msra.mxu0 %v7663
        %8328 = vmatpush.msra.mxu0 %v7653
        %8329 = vmatpush.msra.mxu0 %v7643
        %8330 = vmatmul.f32.gmra.mxu0 0.00390625
        %v8331 = vpop.f32.mrf.mxu0
        %v8332 = vadd.f32 0.0, %v8331
        %8333 = vdwg.mxu0
        %8334 = vmatpush.msra.mxu0 %v7953
        %8335 = vmatpush.msra.mxu0 %v7943
        %8336 = vmatpush.msra.mxu0 %v7933
        %8337 = vmatpush.msra.mxu0 %v7923
        %8338 = vmatpush.msra.mxu0 %v7913
        %8339 = vmatpush.msra.mxu0 %v7903
        %8340 = vmatpush.msra.mxu0 %v7893
        %8341 = vmatpush.msra.mxu0 %v7883
        %8342 = vmatpush.msra.mxu0 %v7873
        %8343 = vmatpush.msra.mxu0 %v7863
        %8344 = vmatpush.msra.mxu0 %v7853
        %8345 = vmatpush.msra.mxu0 %v7843
        %8346 = vmatpush.msra.mxu0 %v7833
        %8347 = vmatpush.msra.mxu0 %v7823
        %8348 = vmatpush.msra.mxu0 %v7813
        %8349 = vmatpush.msra.mxu0 %v7803
        %8350 = vmatmul.f32.gmra.mxu0 0.00390625
        %v8351 = vpop.f32.mrf.mxu0
        %v8352 = vadd.f32 %v8332, %v8351
        %8353 = vdwg.mxu0
        %v8354 = vld [vmem:[%s3] sm:$0xff]
        %v8355 = vld [vmem:[%s3 + $0x8] sm:$0xff]
        %v8356 = vld [vmem:[%s3 + $0x10] sm:$0xff]
        %v8357 = vld [vmem:[%s3 + $0x18] sm:$0xff]
        %v8358 = vld [vmem:[%s3 + $0x20] sm:$0xff]
        %v8359 = vld [vmem:[%s3 + $0x28] sm:$0xff]
        %v8360 = vld [vmem:[%s3 + $0x30] sm:$0xff]
        %v8361 = vld [vmem:[%s3 + $0x38] sm:$0xff]
        %v8362 = vld [vmem:[%s3 + $0x40] sm:$0xff]
        %v8363 = vld [vmem:[%s3 + $0x48] sm:$0xff]
        %v8364 = vld [vmem:[%s3 + $0x50] sm:$0xff]
        %v8365 = vld [vmem:[%s3 + $0x58] sm:$0xff]
        %v8366 = vld [vmem:[%s3 + $0x60] sm:$0xff]
        %v8367 = vld [vmem:[%s3 + $0x68] sm:$0xff]
        %v8368 = vld [vmem:[%s3 + $0x70] sm:$0xff]
        %v8369 = vld [vmem:[%s3 + $0x78] sm:$0xff]
        %v8370 = vld [vmem:[%s3 + $0x80] sm:$0xff]
        %v8371 = vld [vmem:[%s3 + $0x88] sm:$0xff]
        %v8372 = vld [vmem:[%s3 + $0x90] sm:$0xff]
        %v8373 = vld [vmem:[%s3 + $0x98] sm:$0xff]
        %v8374 = vld [vmem:[%s3 + $0xa0] sm:$0xff]
        %v8375 = vld [vmem:[%s3 + $0xa8] sm:$0xff]
        %v8376 = vld [vmem:[%s3 + $0xb0] sm:$0xff]
        %v8377 = vld [vmem:[%s3 + $0xb8] sm:$0xff]
        %v8378 = vld [vmem:[%s3 + $0xc0] sm:$0xff]
        %v8379 = vld [vmem:[%s3 + $0xc8] sm:$0xff]
        %v8380 = vld [vmem:[%s3 + $0xd0] sm:$0xff]
        %v8381 = vld [vmem:[%s3 + $0xd8] sm:$0xff]
        %v8382 = vld [vmem:[%s3 + $0xe0] sm:$0xff]
        %v8383 = vld [vmem:[%s3 + $0xe8] sm:$0xff]
        %v8384 = vld [vmem:[%s3 + $0xf0] sm:$0xff]
        %v8385 = vld [vmem:[%s3 + $0xf8] sm:$0xff]
        %v8386 = vld [vmem:[%s3 + $0x100] sm:$0xff]
        %v8387 = vld [vmem:[%s3 + $0x108] sm:$0xff]
        %v8388 = vld [vmem:[%s3 + $0x110] sm:$0xff]
        %v8389 = vld [vmem:[%s3 + $0x118] sm:$0xff]
        %v8390 = vld [vmem:[%s3 + $0x120] sm:$0xff]
        %v8391 = vld [vmem:[%s3 + $0x128] sm:$0xff]
        %v8392 = vld [vmem:[%s3 + $0x130] sm:$0xff]
        %v8393 = vld [vmem:[%s3 + $0x138] sm:$0xff]
        %v8394 = vld [vmem:[%s3 + $0x140] sm:$0xff]
        %v8395 = vld [vmem:[%s3 + $0x148] sm:$0xff]
        %v8396 = vld [vmem:[%s3 + $0x150] sm:$0xff]
        %v8397 = vld [vmem:[%s3 + $0x158] sm:$0xff]
        %v8398 = vld [vmem:[%s3 + $0x160] sm:$0xff]
        %v8399 = vld [vmem:[%s3 + $0x168] sm:$0xff]
        %v8400 = vld [vmem:[%s3 + $0x170] sm:$0xff]
        %v8401 = vld [vmem:[%s3 + $0x178] sm:$0xff]
        %v8402 = vld [vmem:[%s3 + $0x180] sm:$0xff]
        %v8403 = vld [vmem:[%s3 + $0x188] sm:$0xff]
        %v8404 = vld [vmem:[%s3 + $0x190] sm:$0xff]
        %v8405 = vld [vmem:[%s3 + $0x198] sm:$0xff]
        %v8406 = vld [vmem:[%s3 + $0x1a0] sm:$0xff]
        %v8407 = vld [vmem:[%s3 + $0x1a8] sm:$0xff]
        %v8408 = vld [vmem:[%s3 + $0x1b0] sm:$0xff]
        %v8409 = vld [vmem:[%s3 + $0x1b8] sm:$0xff]
        %v8410 = vld [vmem:[%s3 + $0x1c0] sm:$0xff]
        %v8411 = vld [vmem:[%s3 + $0x1c8] sm:$0xff]
        %v8412 = vld [vmem:[%s3 + $0x1d0] sm:$0xff]
        %v8413 = vld [vmem:[%s3 + $0x1d8] sm:$0xff]
        %v8414 = vld [vmem:[%s3 + $0x1e0] sm:$0xff]
        %v8415 = vld [vmem:[%s3 + $0x1e8] sm:$0xff]
        %v8416 = vld [vmem:[%s3 + $0x1f0] sm:$0xff]
        %v8417 = vld [vmem:[%s3 + $0x1f8] sm:$0xff]
        %v8418 = vld [vmem:[%s3 + $0x200] sm:$0xff]
        %v8419 = vld [vmem:[%s3 + $0x208] sm:$0xff]
        %v8420 = vld [vmem:[%s3 + $0x210] sm:$0xff]
        %v8421 = vld [vmem:[%s3 + $0x218] sm:$0xff]
        %v8422 = vld [vmem:[%s3 + $0x220] sm:$0xff]
        %v8423 = vld [vmem:[%s3 + $0x228] sm:$0xff]
        %v8424 = vld [vmem:[%s3 + $0x230] sm:$0xff]
        %v8425 = vld [vmem:[%s3 + $0x238] sm:$0xff]
        %v8426 = vld [vmem:[%s3 + $0x240] sm:$0xff]
        %v8427 = vld [vmem:[%s3 + $0x248] sm:$0xff]
        %v8428 = vld [vmem:[%s3 + $0x250] sm:$0xff]
        %v8429 = vld [vmem:[%s3 + $0x258] sm:$0xff]
        %v8430 = vld [vmem:[%s3 + $0x260] sm:$0xff]
        %v8431 = vld [vmem:[%s3 + $0x268] sm:$0xff]
        %v8432 = vld [vmem:[%s3 + $0x270] sm:$0xff]
        %v8433 = vld [vmem:[%s3 + $0x278] sm:$0xff]
        %v8434 = vld [vmem:[%s3 + $0x280] sm:$0xff]
        %v8435 = vld [vmem:[%s3 + $0x288] sm:$0xff]
        %v8436 = vld [vmem:[%s3 + $0x290] sm:$0xff]
        %v8437 = vld [vmem:[%s3 + $0x298] sm:$0xff]
        %v8438 = vld [vmem:[%s3 + $0x2a0] sm:$0xff]
        %v8439 = vld [vmem:[%s3 + $0x2a8] sm:$0xff]
        %v8440 = vld [vmem:[%s3 + $0x2b0] sm:$0xff]
        %v8441 = vld [vmem:[%s3 + $0x2b8] sm:$0xff]
        %v8442 = vld [vmem:[%s3 + $0x2c0] sm:$0xff]
        %v8443 = vld [vmem:[%s3 + $0x2c8] sm:$0xff]
        %v8444 = vld [vmem:[%s3 + $0x2d0] sm:$0xff]
        %v8445 = vld [vmem:[%s3 + $0x2d8] sm:$0xff]
        %v8446 = vld [vmem:[%s3 + $0x2e0] sm:$0xff]
        %v8447 = vld [vmem:[%s3 + $0x2e8] sm:$0xff]
        %v8448 = vld [vmem:[%s3 + $0x2f0] sm:$0xff]
        %v8449 = vld [vmem:[%s3 + $0x2f8] sm:$0xff]
        %v8450 = vld [vmem:[%s3 + $0x300] sm:$0xff]
        %v8451 = vld [vmem:[%s3 + $0x308] sm:$0xff]
        %v8452 = vld [vmem:[%s3 + $0x310] sm:$0xff]
        %v8453 = vld [vmem:[%s3 + $0x318] sm:$0xff]
        %v8454 = vld [vmem:[%s3 + $0x320] sm:$0xff]
        %v8455 = vld [vmem:[%s3 + $0x328] sm:$0xff]
        %v8456 = vld [vmem:[%s3 + $0x330] sm:$0xff]
        %v8457 = vld [vmem:[%s3 + $0x338] sm:$0xff]
        %v8458 = vld [vmem:[%s3 + $0x340] sm:$0xff]
        %v8459 = vld [vmem:[%s3 + $0x348] sm:$0xff]
        %v8460 = vld [vmem:[%s3 + $0x350] sm:$0xff]
        %v8461 = vld [vmem:[%s3 + $0x358] sm:$0xff]
        %v8462 = vld [vmem:[%s3 + $0x360] sm:$0xff]
        %v8463 = vld [vmem:[%s3 + $0x368] sm:$0xff]
        %v8464 = vld [vmem:[%s3 + $0x370] sm:$0xff]
        %v8465 = vld [vmem:[%s3 + $0x378] sm:$0xff]
        %v8466 = vld [vmem:[%s3 + $0x380] sm:$0xff]
        %v8467 = vld [vmem:[%s3 + $0x388] sm:$0xff]
        %v8468 = vld [vmem:[%s3 + $0x390] sm:$0xff]
        %v8469 = vld [vmem:[%s3 + $0x398] sm:$0xff]
        %v8470 = vld [vmem:[%s3 + $0x3a0] sm:$0xff]
        %v8471 = vld [vmem:[%s3 + $0x3a8] sm:$0xff]
        %v8472 = vld [vmem:[%s3 + $0x3b0] sm:$0xff]
        %v8473 = vld [vmem:[%s3 + $0x3b8] sm:$0xff]
        %v8474 = vld [vmem:[%s3 + $0x3c0] sm:$0xff]
        %v8475 = vld [vmem:[%s3 + $0x3c8] sm:$0xff]
        %v8476 = vld [vmem:[%s3 + $0x3d0] sm:$0xff]
        %v8477 = vld [vmem:[%s3 + $0x3d8] sm:$0xff]
        %v8478 = vld [vmem:[%s3 + $0x3e0] sm:$0xff]
        %v8479 = vld [vmem:[%s3 + $0x3e8] sm:$0xff]
        %v8480 = vld [vmem:[%s3 + $0x3f0] sm:$0xff]
        %v8481 = vld [vmem:[%s3 + $0x3f8] sm:$0xff]
        %v8482 = vld [vmem:[%s3 + $0x400] sm:$0xff]
        %v8483 = vld [vmem:[%s3 + $0x408] sm:$0xff]
        %v8484 = vld [vmem:[%s3 + $0x410] sm:$0xff]
        %v8485 = vld [vmem:[%s3 + $0x418] sm:$0xff]
        %v8486 = vld [vmem:[%s3 + $0x420] sm:$0xff]
        %v8487 = vld [vmem:[%s3 + $0x428] sm:$0xff]
        %v8488 = vld [vmem:[%s3 + $0x430] sm:$0xff]
        %v8489 = vld [vmem:[%s3 + $0x438] sm:$0xff]
        %v8490 = vld [vmem:[%s3 + $0x440] sm:$0xff]
        %v8491 = vld [vmem:[%s3 + $0x448] sm:$0xff]
        %v8492 = vld [vmem:[%s3 + $0x450] sm:$0xff]
        %v8493 = vld [vmem:[%s3 + $0x458] sm:$0xff]
        %v8494 = vld [vmem:[%s3 + $0x460] sm:$0xff]
        %v8495 = vld [vmem:[%s3 + $0x468] sm:$0xff]
        %v8496 = vld [vmem:[%s3 + $0x470] sm:$0xff]
        %v8497 = vld [vmem:[%s3 + $0x478] sm:$0xff]
        %v8498 = vld [vmem:[%s3 + $0x480] sm:$0xff]
        %v8499 = vld [vmem:[%s3 + $0x488] sm:$0xff]
        %v8500 = vld [vmem:[%s3 + $0x490] sm:$0xff]
        %v8501 = vld [vmem:[%s3 + $0x498] sm:$0xff]
        %v8502 = vld [vmem:[%s3 + $0x4a0] sm:$0xff]
        %v8503 = vld [vmem:[%s3 + $0x4a8] sm:$0xff]
        %v8504 = vld [vmem:[%s3 + $0x4b0] sm:$0xff]
        %v8505 = vld [vmem:[%s3 + $0x4b8] sm:$0xff]
        %v8506 = vld [vmem:[%s3 + $0x4c0] sm:$0xff]
        %v8507 = vld [vmem:[%s3 + $0x4c8] sm:$0xff]
        %v8508 = vld [vmem:[%s3 + $0x4d0] sm:$0xff]
        %v8509 = vld [vmem:[%s3 + $0x4d8] sm:$0xff]
        %v8510 = vld [vmem:[%s3 + $0x4e0] sm:$0xff]
        %v8511 = vld [vmem:[%s3 + $0x4e8] sm:$0xff]
        %v8512 = vld [vmem:[%s3 + $0x4f0] sm:$0xff]
        %v8513 = vld [vmem:[%s3 + $0x4f8] sm:$0xff]
        %v8514 = vld [vmem:[%s4] sm:$0x1]
        %8515 = vmatpush.msra.mxu0 %v8369
        %8516 = vmatpush.msra.mxu0 %v8368
        %8517 = vmatpush.msra.mxu0 %v8367
        %8518 = vmatpush.msra.mxu0 %v8366
        %8519 = vmatpush.msra.mxu0 %v8365
        %8520 = vmatpush.msra.mxu0 %v8364
        %8521 = vmatpush.msra.mxu0 %v8363
        %8522 = vmatpush.msra.mxu0 %v8362
        %8523 = vmatpush.msra.mxu0 %v8361
        %8524 = vmatpush.msra.mxu0 %v8360
        %8525 = vmatpush.msra.mxu0 %v8359
        %8526 = vmatpush.msra.mxu0 %v8358
        %8527 = vmatpush.msra.mxu0 %v8357
        %8528 = vmatpush.msra.mxu0 %v8356
        %8529 = vmatpush.msra.mxu0 %v8355
        %8530 = vmatpush.msra.mxu0 %v8354
        %8531 = vmatmul.f32.gmra.mxu0 %v7992
        %v8532 = vpop.f32.mrf.mxu0
        %v8533 = vadd.f32 %v8514, %v8532
        %8534 = vdwg.mxu0
        %8535 = vmatpush.msra.mxu0 %v8385
        %8536 = vmatpush.msra.mxu0 %v8384
        %8537 = vmatpush.msra.mxu0 %v8383
        %8538 = vmatpush.msra.mxu0 %v8382
        %8539 = vmatpush.msra.mxu0 %v8381
        %8540 = vmatpush.msra.mxu0 %v8380
        %8541 = vmatpush.msra.mxu0 %v8379
        %8542 = vmatpush.msra.mxu0 %v8378
        %8543 = vmatpush.msra.mxu0 %v8377
        %8544 = vmatpush.msra.mxu0 %v8376
        %8545 = vmatpush.msra.mxu0 %v8375
        %8546 = vmatpush.msra.mxu0 %v8374
        %8547 = vmatpush.msra.mxu0 %v8373
        %8548 = vmatpush.msra.mxu0 %v8372
        %8549 = vmatpush.msra.mxu0 %v8371
        %8550 = vmatpush.msra.mxu0 %v8370
        %8551 = vmatmul.f32.gmra.mxu0 %v8032
        %v8552 = vpop.f32.mrf.mxu0
        %v8553 = vadd.f32 %v8533, %v8552
        %8554 = vdwg.mxu0
        %8555 = vmatpush.msra.mxu0 %v8401
        %8556 = vmatpush.msra.mxu0 %v8400
        %8557 = vmatpush.msra.mxu0 %v8399
        %8558 = vmatpush.msra.mxu0 %v8398
        %8559 = vmatpush.msra.mxu0 %v8397
        %8560 = vmatpush.msra.mxu0 %v8396
        %8561 = vmatpush.msra.mxu0 %v8395
        %8562 = vmatpush.msra.mxu0 %v8394
        %8563 = vmatpush.msra.mxu0 %v8393
        %8564 = vmatpush.msra.mxu0 %v8392
        %8565 = vmatpush.msra.mxu0 %v8391
        %8566 = vmatpush.msra.mxu0 %v8390
        %8567 = vmatpush.msra.mxu0 %v8389
        %8568 = vmatpush.msra.mxu0 %v8388
        %8569 = vmatpush.msra.mxu0 %v8387
        %8570 = vmatpush.msra.mxu0 %v8386
        %8571 = vmatmul.f32.gmra.mxu0 %v8072
        %v8572 = vpop.f32.mrf.mxu0
        %v8573 = vadd.f32 %v8553, %v8572
        %8574 = vdwg.mxu0
        %8575 = vmatpush.msra.mxu0 %v8417
        %8576 = vmatpush.msra.mxu0 %v8416
        %8577 = vmatpush.msra.mxu0 %v8415
        %8578 = vmatpush.msra.mxu0 %v8414
        %8579 = vmatpush.msra.mxu0 %v8413
        %8580 = vmatpush.msra.mxu0 %v8412
        %8581 = vmatpush.msra.mxu0 %v8411
        %8582 = vmatpush.msra.mxu0 %v8410
        %8583 = vmatpush.msra.mxu0 %v8409
        %8584 = vmatpush.msra.mxu0 %v8408
        %8585 = vmatpush.msra.mxu0 %v8407
        %8586 = vmatpush.msra.mxu0 %v8406
        %8587 = vmatpush.msra.mxu0 %v8405
        %8588 = vmatpush.msra.mxu0 %v8404
        %8589 = vmatpush.msra.mxu0 %v8403
        %8590 = vmatpush.msra.mxu0 %v8402
        %8591 = vmatmul.f32.gmra.mxu0 %v8112
        %v8592 = vpop.f32.mrf.mxu0
        %v8593 = vadd.f32 %v8573, %v8592
        %8594 = vdwg.mxu0
        %8595 = vmatpush.msra.mxu0 %v8433
        %8596 = vmatpush.msra.mxu0 %v8432
        %8597 = vmatpush.msra.mxu0 %v8431
        %8598 = vmatpush.msra.mxu0 %v8430
        %8599 = vmatpush.msra.mxu0 %v8429
        %8600 = vmatpush.msra.mxu0 %v8428
        %8601 = vmatpush.msra.mxu0 %v8427
        %8602 = vmatpush.msra.mxu0 %v8426
        %8603 = vmatpush.msra.mxu0 %v8425
        %8604 = vmatpush.msra.mxu0 %v8424
        %8605 = vmatpush.msra.mxu0 %v8423
        %8606 = vmatpush.msra.mxu0 %v8422
        %8607 = vmatpush.msra.mxu0 %v8421
        %8608 = vmatpush.msra.mxu0 %v8420
        %8609 = vmatpush.msra.mxu0 %v8419
        %8610 = vmatpush.msra.mxu0 %v8418
        %8611 = vmatmul.f32.gmra.mxu0 %v8152
        %v8612 = vpop.f32.mrf.mxu0
        %v8613 = vadd.f32 %v8593, %v8612
        %8614 = vdwg.mxu0
        %8615 = vmatpush.msra.mxu0 %v8449
        %8616 = vmatpush.msra.mxu0 %v8448
        %8617 = vmatpush.msra.mxu0 %v8447
        %8618 = vmatpush.msra.mxu0 %v8446
        %8619 = vmatpush.msra.mxu0 %v8445
        %8620 = vmatpush.msra.mxu0 %v8444
        %8621 = vmatpush.msra.mxu0 %v8443
        %8622 = vmatpush.msra.mxu0 %v8442
        %8623 = vmatpush.msra.mxu0 %v8441
        %8624 = vmatpush.msra.mxu0 %v8440
        %8625 = vmatpush.msra.mxu0 %v8439
        %8626 = vmatpush.msra.mxu0 %v8438
        %8627 = vmatpush.msra.mxu0 %v8437
        %8628 = vmatpush.msra.mxu0 %v8436
        %8629 = vmatpush.msra.mxu0 %v8435
        %8630 = vmatpush.msra.mxu0 %v8434
        %8631 = vmatmul.f32.gmra.mxu0 %v8192
        %v8632 = vpop.f32.mrf.mxu0
        %v8633 = vadd.f32 %v8613, %v8632
        %8634 = vdwg.mxu0
        %8635 = vmatpush.msra.mxu0 %v8465
        %8636 = vmatpush.msra.mxu0 %v8464
        %8637 = vmatpush.msra.mxu0 %v8463
        %8638 = vmatpush.msra.mxu0 %v8462
        %8639 = vmatpush.msra.mxu0 %v8461
        %8640 = vmatpush.msra.mxu0 %v8460
        %8641 = vmatpush.msra.mxu0 %v8459
        %8642 = vmatpush.msra.mxu0 %v8458
        %8643 = vmatpush.msra.mxu0 %v8457
        %8644 = vmatpush.msra.mxu0 %v8456
        %8645 = vmatpush.msra.mxu0 %v8455
        %8646 = vmatpush.msra.mxu0 %v8454
        %8647 = vmatpush.msra.mxu0 %v8453
        %8648 = vmatpush.msra.mxu0 %v8452
        %8649 = vmatpush.msra.mxu0 %v8451
        %8650 = vmatpush.msra.mxu0 %v8450
        %8651 = vmatmul.f32.gmra.mxu0 %v8232
        %v8652 = vpop.f32.mrf.mxu0
        %v8653 = vadd.f32 %v8633, %v8652
        %8654 = vdwg.mxu0
        %8655 = vmatpush.msra.mxu0 %v8481
        %8656 = vmatpush.msra.mxu0 %v8480
        %8657 = vmatpush.msra.mxu0 %v8479
        %8658 = vmatpush.msra.mxu0 %v8478
        %8659 = vmatpush.msra.mxu0 %v8477
        %8660 = vmatpush.msra.mxu0 %v8476
        %8661 = vmatpush.msra.mxu0 %v8475
        %8662 = vmatpush.msra.mxu0 %v8474
        %8663 = vmatpush.msra.mxu0 %v8473
        %8664 = vmatpush.msra.mxu0 %v8472
        %8665 = vmatpush.msra.mxu0 %v8471
        %8666 = vmatpush.msra.mxu0 %v8470
        %8667 = vmatpush.msra.mxu0 %v8469
        %8668 = vmatpush.msra.mxu0 %v8468
        %8669 = vmatpush.msra.mxu0 %v8467
        %8670 = vmatpush.msra.mxu0 %v8466
        %8671 = vmatmul.f32.gmra.mxu0 %v8272
        %v8672 = vpop.f32.mrf.mxu0
        %v8673 = vadd.f32 %v8653, %v8672
        %8674 = vdwg.mxu0
        %8675 = vmatpush.msra.mxu0 %v8497
        %8676 = vmatpush.msra.mxu0 %v8496
        %8677 = vmatpush.msra.mxu0 %v8495
        %8678 = vmatpush.msra.mxu0 %v8494
        %8679 = vmatpush.msra.mxu0 %v8493
        %8680 = vmatpush.msra.mxu0 %v8492
        %8681 = vmatpush.msra.mxu0 %v8491
        %8682 = vmatpush.msra.mxu0 %v8490
        %8683 = vmatpush.msra.mxu0 %v8489
        %8684 = vmatpush.msra.mxu0 %v8488
        %8685 = vmatpush.msra.mxu0 %v8487
        %8686 = vmatpush.msra.mxu0 %v8486
        %8687 = vmatpush.msra.mxu0 %v8485
        %8688 = vmatpush.msra.mxu0 %v8484
        %8689 = vmatpush.msra.mxu0 %v8483
        %8690 = vmatpush.msra.mxu0 %v8482
        %8691 = vmatmul.f32.gmra.mxu0 %v8312
        %v8692 = vpop.f32.mrf.mxu0
        %v8693 = vadd.f32 %v8673, %v8692
        %8694 = vdwg.mxu0
        %8695 = vmatpush.msra.mxu0 %v8513
        %8696 = vmatpush.msra.mxu0 %v8512
        %8697 = vmatpush.msra.mxu0 %v8511
        %8698 = vmatpush.msra.mxu0 %v8510
        %8699 = vmatpush.msra.mxu0 %v8509
        %8700 = vmatpush.msra.mxu0 %v8508
        %8701 = vmatpush.msra.mxu0 %v8507
        %8702 = vmatpush.msra.mxu0 %v8506
        %8703 = vmatpush.msra.mxu0 %v8505
        %8704 = vmatpush.msra.mxu0 %v8504
        %8705 = vmatpush.msra.mxu0 %v8503
        %8706 = vmatpush.msra.mxu0 %v8502
        %8707 = vmatpush.msra.mxu0 %v8501
        %8708 = vmatpush.msra.mxu0 %v8500
        %8709 = vmatpush.msra.mxu0 %v8499
        %8710 = vmatpush.msra.mxu0 %v8498
        %8711 = vmatmul.f32.gmra.mxu0 %v8352
        %v8712 = vpop.f32.mrf.mxu0
        %v8713 = vadd.f32 %v8693, %v8712
        %8714 = vdwg.mxu0
        %vm8715 = vcmask 253952
        %v8716 = vsel %vm8715, %v8713, -inf
        %8717 = vmax.xlane.f32.xlu0 %v8716
        %v8718 = vpop.xlane.xlu0 %8717
        %v8719 = vsub.f32 %v8713, %v8718
        %v8720 = vmul.f32 %v8719, 1.442695
        %v8721 = vpow.pop %v8720
        %v8722 = vsel %vm8715, %v8721, 0.0
        %8723 = vadd.xlane.f32.xlu0 %v8722
        %v8724 = vpop.xlane.xlu0 %8723
        %v8725 = vrcp.pop %v8724
        %v8726 = vmul.f32 %v8724, %v8725
        %v8727 = vsub.f32 1.0, %v8726
        %v8728 = vmul.f32 %v8725, %v8727
        %v8729 = vadd.f32 %v8725, %v8728
        %vm8730 = vweird.f32 %v8724
        %vm8731 = vweird.f32 %v8725
        %vm8732 = vmor %vm8730, %vm8731
        %v8733 = vsel %vm8732, %v8725, %v8729
        %v8734 = vand.u32 2147483647, %v8724
        %vm8735 = vcmp.eq.f32.partialorder %v8734, 8.507059e+37
        %v8736 = vand.u32 %v8724, 2147483648
        %v8737 = vor.u32 1.1754944e-38, %v8736
        %v8738 = vsel %vm8735, %v8737, %v8733
        %v8739 = vmul.f32 %v8721, %v8738
        %8740 = vst.msk [vmem:[%s216] sm:$0x1] %vm8715, %v8739
        %s8741 = sand.u32 %s137, 1
        %s8742 = scalar_lea.sflag [#allocation3], %s8741
        %s8743 = sand.u32 %s137, 1
        %s8744 = scalar_lea.vmem [#allocation2], %s8743
        // Predicated region
        $region41: #{tpu_custom_call.1} parent=39 // pred_check
          %p8745 = pneg %p147
        $region42: #{tpu_custom_call.1} parent=39 // pred_check_branch
          %8747 = sbr.rel (%p8745) target = $region44
        $region43: #{tpu_custom_call.1} parent=39 // pred_region
          %8749 = vsyncadd %s8742, 0
          %s8750 = scalar_lea.hbm %s5, %s19
          %s8752 = sshll.u32 %s8744, 4
          %s8753 = int_to_ptr.vmem [resolvable:$true] %s8752
          %s8754 = sshll.u32 %s8750, 4
          %s8755 = int_to_ptr.hbm [resolvable:$true] %s8754
          %8757 = dma.vmem_to_hbm [thread:$0]  %s8753, 16, %s8755, %s8742
        $region44: #{tpu_custom_call.1} parent=39 // pred_fallthru
          _
      $region40: #{tpu_custom_call.1} parent=5 // pred_fallthru
        _
      %p8758 = scmp.le.s32.totalorder 2, %s14
      // Predicated region
      $region45: #{tpu_custom_call.1} parent=5 // pred_check
        %p8759 = pneg %p8758
      $region46: #{tpu_custom_call.1} parent=5 // pred_check_branch
        %8761 = sbr.rel (%p8759) target = $region48
      $region47: #{tpu_custom_call.1} parent=5 // pred_region
        %s8762 = ssub.s32 %s14, 2
        // Predicated region
        $region49: #{tpu_custom_call.1} parent=47 // pred_check
          %p8763 = pneg %p153
        $region50: #{tpu_custom_call.1} parent=47 // pred_check_branch
          %8765 = sbr.rel (%p8763) target = $region52
        $region51: #{tpu_custom_call.1} parent=47 // pred_region
          %s8766 = sand.u32 %s138, 1
          %s8767 = scalar_lea.sflag [#allocation3], %s8766
          %s8768 = sand.u32 %s138, 1
          %s8769 = scalar_lea.vmem [#allocation2], %s8768
          %8771 = dma.done %s8767, 16
        $region52: #{tpu_custom_call.1} parent=47 // pred_fallthru
          _
      $region48: #{tpu_custom_call.1} parent=5 // pred_fallthru
        _
    $region6: #{tpu_custom_call.1} parent=1 // loop_footer
      %s18 = sadd.s32 1, %s14
    $region7: #{tpu_custom_call.1} parent=1 // loop_footer_branch
      %13 = sbr.rel target = $region3
    $region8: #{tpu_custom_call.1} parent=1 // loop_exit
      _
    %8772 = vsyncpa [#allocation3], 1
    %s8773 = scalar_lea.sflag [#allocation3], 1
    %8774 = vsyncpa %s8773, 1

</llo_original>
